<compile_context>
chip_gen: v7x
topology: tpu7x:2x2x1
jax: 0.10.0
libtpu: 0.0.40
codegen_flags: <defaults>
</compile_context>

<pallas_src>
import jax
import jax.numpy as jnp
from jax import lax
from jax.experimental import pallas as pl
from jax.experimental.pallas import tpu as pltpu


CFG = dict(num_classes=10, lstm_dim=32, g_outdim=48, cnn_out=512, cnn_mid=16)
LANE = 128   # narrow feature dims (16, 64, 48, 10) are zero-padded to one lane group
KP = 32      # im2col K = 3*3*3 = 27 padded to a sublane multiple


def _round_up(x, m):
    return ((x + m - 1) // m) * m


# ----------------------------------------------------------------------------
# Kernel 1: CNN stand-in — conv3x3(s2) + ReLU + GAP + fc + ReLU, fully fused
# ----------------------------------------------------------------------------
def _cnn_fused_kernel(p_ref, wc_ref, bc_ref, wf_ref, bf_ref, o_ref):
    F = o_ref.shape[0]
    P = p_ref.shape[0] // F
    Cm = wc_ref.shape[1]
    conv = jnp.dot(p_ref[...], wc_ref[...], preferred_element_type=jnp.float32)
    conv = jnp.maximum(conv + bc_ref[...], 0.0)                     # (F*P, 128) lane-dense
    # GAP over the P patches of each frame: P is a multiple of 8 -> layout-safe split
    gap = jnp.mean(conv.reshape(F, P, Cm), axis=1)                  # (F, 128)
    out = jnp.dot(gap.astype(jnp.bfloat16), wf_ref[...],
                  preferred_element_type=jnp.float32) + bf_ref[...]
    o_ref[...] = jnp.maximum(out, 0.0).astype(o_ref.dtype)


def cnn_fused(patches, wc, bc, wf, bf, frames_pad, P):
    FP, Kp = patches.shape
    Cm = wc.shape[1]
    Co = wf.shape[1]
    steps = 2                         # 2 fat parallel steps (v7x megacore); cheap on v5e/v6e
    F = frames_pad // steps
    flops = 2 * FP * Kp * Cm + 2 * frames_pad * Cm * Co
    bytes_acc = (patches.size * 2 + wc.size * 2 + wf.size * 2
                 + (bc.size + bf.size) * 4 + frames_pad * Co * 2)
    return pl.pallas_call(
        _cnn_fused_kernel,
        out_shape=jax.ShapeDtypeStruct((frames_pad, Co), jnp.bfloat16),
        grid=(steps,),
        in_specs=[
            pl.BlockSpec((F * P, Kp), lambda i: (i, 0)),
            pl.BlockSpec((Kp, Cm), lambda i: (0, 0)),
            pl.BlockSpec((1, Cm), lambda i: (0, 0)),
            pl.BlockSpec((Cm, Co), lambda i: (0, 0)),
            pl.BlockSpec((1, Co), lambda i: (0, 0)),
        ],
        out_specs=pl.BlockSpec((F, Co), lambda i: (i, 0)),
        compiler_params=pltpu.CompilerParams(dimension_semantics=("parallel",)),
        cost_estimate=pl.CostEstimate(flops=int(flops), transcendentals=0,
                                      bytes_accessed=int(bytes_acc)),
    )(patches, wc, bc, wf, bf)


# ----------------------------------------------------------------------------
# Kernel 2: TemporalConv (K5,P2,K5,P2 + BN + ReLU) + GCN + BN + ReLU + classifier
# ----------------------------------------------------------------------------
def _tail_kernel(x_ref, w1_ref, b1_ref, g1_ref, be1_ref,
                 w2_ref, b2_ref, g2_ref, be2_ref,
                 wg_ref, bg_ref, gg_ref, beg_ref,
                 wc_ref, bc_ref, o_ref, pool_scr):
    f32 = jnp.float32
    bf16 = jnp.bfloat16
    B, T, _ = x_ref.shape
    KT = w1_ref.shape[0]            # 5 temporal taps
    H = w1_ref.shape[2]             # hidden padded to 128 lanes
    G = wg_ref.shape[1]             # g_outdim padded to 128 lanes
    Tm1 = T - (KT - 1)
    T2 = Tm1 // 2
    Tm2 = T2 - (KT - 1)
    Tp = Tm2 // 2

    def bn_relu(ys, n_rows, gamma, beta):
        # exact batch statistics over all batches/timesteps (everything in one block)
        s = sum(y.sum(axis=0, keepdims=True) for y in ys)
        ss = sum((y * y).sum(axis=0, keepdims=True) for y in ys)
        mean = s * (1.0 / n_rows)
        var = ss * (1.0 / n_rows) - mean * mean
        scale = lax.rsqrt(var + 1e-5) * gamma
        shift = beta - mean * scale
        return [jnp.maximum(y * scale + shift, 0.0) for y in ys]

    def maxpool2(y, t_out):
        # MaxPool1d(2,2) via strided VMEM reads; no reshapes, lane-dense
        rows = y.shape[0]
        pool_scr[0:rows, :] = y
        even = pool_scr[pl.ds(0, t_out, stride=2), :]
        odd = pool_scr[pl.ds(1, t_out, stride=2), :]
        return jnp.maximum(even, odd)

    # ---- stage 1: K5 temporal conv as 5 shifted accumulated dots + BN + ReLU + P2 ----
    y1 = []
    for b in range(B):
        acc = jnp.zeros((Tm1, H), f32)
        for k in range(KT):
            acc += jnp.dot(x_ref[b, k:k + Tm1, :], w1_ref[k],
                           preferred_element_type=f32)
        y1.append(acc + b1_ref[...])
    y1 = bn_relu(y1, float(B * Tm1), g1_ref[...], be1_ref[...])
    h1 = [maxpool2(y1[b], T2) for b in range(B)]                     # (T2, H) per batch

    # ---- stage 2: K5 + BN + ReLU + P2 ----
    y2 = []
    for b in range(B):
        hb = h1[b].astype(bf16)
        acc = jnp.zeros((Tm2, H), f32)
        for k in range(KT):
            acc += jnp.dot(hb[k:k + Tm2, :], w2_ref[k], preferred_element_type=f32)
        y2.append(acc + b2_ref[...])
    y2 = bn_relu(y2, float(B * Tm2), g2_ref[...], be2_ref[...])
    h2 = [maxpool2(y2[b], Tp) for b in range(B)]                     # (Tp, H) per batch

    # ---- GCN: row-normalized self+neighbor band adjacency as shifted adds ----
    rid = lax.broadcasted_iota(jnp.int32, (Tp, 1), 0)
    cnt = 1.0 + (rid > 0).astype(f32) + (rid < Tp - 1).astype(f32)
    inv_cnt = 1.0 / cnt
    gs = []
    for b in range(B):
        xw = jnp.dot(h2[b].astype(bf16), wg_ref[...], preferred_element_type=f32)
        prev = jnp.concatenate([jnp.zeros((1, G), f32), xw[:Tp - 1, :]], axis=0)
        nxt = jnp.concatenate([xw[1:, :], jnp.zeros((1, G), f32)], axis=0)
        gs.append((xw + prev + nxt) * inv_cnt + bg_ref[...])
    gs = bn_relu(gs, float(B * Tp), gg_ref[...], beg_ref[...])

    # ---- classifier (output padded to 128 lanes; sliced to num_classes outside) ----
    for b in range(B):
        o_ref[b] = (jnp.dot(gs[b].astype(bf16), wc_ref[...],
                            preferred_element_type=f32) + bc_ref[...])


def tconv_gcn_cls(x_t, w1, b1, g1, be1, w2, b2, g2, be2, wg, bg, gg, beg, wcls, bcls):
    B, T, C = x_t.shape
    KT, _, H = w1.shape
    G = wg.shape[1]
    NCp = wcls.shape[1]
    Tm1 = T - (KT - 1)
    T2 = Tm1 // 2
    Tm2 = T2 - (KT - 1)
    Tp = Tm2 // 2
    assert Tm1 >= 2 and Tm2 >= 2 and Tp >= 2, "sequence too short for K5,P2,K5,P2 + band GCN"

    def full(shape):
        n = len(shape)
        return pl.BlockSpec(tuple(shape), lambda i, n=n: (0,) * n)

    args = (x_t, w1, b1, g1, be1, w2, b2, g2, be2, wg, bg, gg, beg, wcls, bcls)
    flops = 2 * B * (KT * Tm1 * C * H + KT * Tm2 * H * H + Tp * H * G + Tp * G * NCp)
    bytes_acc = sum(int(a.size) * a.dtype.itemsize for a in args) + B * Tp * NCp * 4
    return pl.pallas_call(
        _tail_kernel,
        out_shape=jax.ShapeDtypeStruct((B, Tp, NCp), jnp.float32),
        grid=(1,),
        in_specs=[full(a.shape) for a in args],
        out_specs=full((B, Tp, NCp)),
        scratch_shapes=[pltpu.VMEM((Tm1, H), jnp.float32)],
        compiler_params=pltpu.CompilerParams(dimension_semantics=("arbitrary",)),
        cost_estimate=pl.CostEstimate(flops=int(flops), transcendentals=0,
                                      bytes_accessed=int(bytes_acc)),
    )(*args)


# ----------------------------------------------------------------------------
# Glue (pure data movement; fused by XLA under jit)
# ----------------------------------------------------------------------------
def im2col(x, k=3, stride=2, pad=1):
    """x:(N,C,H,W) -> patches:(N*Ho*Wo, C*k*k), rows frame-major then spatial."""
    N, C, H, W = x.shape
    xp = jnp.pad(x, ((0, 0), (0, 0), (pad, pad), (pad, pad)))
    Ho = (H + 2 * pad - k) // stride + 1
    Wo = (W + 2 * pad - k) // stride + 1
    cols = []
    for di in range(k):
        for dj in range(k):
            cols.append(xp[:, :, di:di + stride * Ho:stride, dj:dj + stride * Wo:stride])
    p = jnp.stack(cols, axis=1)                      # (N, k*k, C, Ho, Wo)
    p = p.transpose(0, 3, 4, 2, 1).reshape(N * Ho * Wo, C * k * k)
    return p, Ho, Wo


# ----------------------------------------------------------------------------
# Parameters
# ----------------------------------------------------------------------------
def init_params(seed=42):
    hidden = CFG["lstm_dim"] * 2
    shapes = {
        "cnn_conv_w": (27, CFG["cnn_mid"]), "cnn_conv_b": (CFG["cnn_mid"],),
        "cnn_fc_w": (CFG["cnn_mid"], CFG["cnn_out"]), "cnn_fc_b": (CFG["cnn_out"],),
        "tconv_w1": (5 * CFG["cnn_out"], hidden), "tconv_b1": (hidden,),
        "tconv_w2": (5 * hidden, hidden), "tconv_b2": (hidden,),
        # conv_logits fc omitted: dead work in the key=False path
        "gcn_w": (hidden, CFG["g_outdim"]), "gcn_b": (CFG["g_outdim"],),
        "cls_w": (CFG["g_outdim"], CFG["num_classes"]), "cls_b": (CFG["num_classes"],),
    }
    key = jax.random.PRNGKey(seed)
    params = {}
    for name, shp in shapes.items():
        key, sub = jax.random.split(key)
        params[name] = jax.random.normal(sub, shp, jnp.float32) / jnp.sqrt(shp[0])
    params["tconv_g1"] = jnp.ones((hidden,), jnp.float32)
    params["tconv_be1"] = jnp.zeros((hidden,), jnp.float32)
    params["tconv_g2"] = jnp.ones((hidden,), jnp.float32)
    params["tconv_be2"] = jnp.zeros((hidden,), jnp.float32)
    params["gcn_g"] = jnp.ones((CFG["g_outdim"],), jnp.float32)
    params["gcn_be"] = jnp.zeros((CFG["g_outdim"],), jnp.float32)
    return params


def _pad2(a, rows, cols):
    return jnp.pad(a, ((0, rows - a.shape[0]), (0, cols - a.shape[1])))


def _row(v, cols):
    return jnp.pad(v.reshape(1, -1), ((0, 0), (0, cols - v.shape[0])))


def prepare_params(params):
    """Pad narrow dims to 128 lanes, stack temporal taps, cast matmul weights to bf16.
    Done ONCE outside the jitted forward (no per-call weight cast/pad traffic)."""
    hidden = CFG["lstm_dim"] * 2
    C = CFG["cnn_out"]
    bf16 = jnp.bfloat16
    p = {}
    # CNN stand-in
    p["cnn_wc"] = _pad2(params["cnn_conv_w"], KP, LANE).astype(bf16)           # (32, 128)
    p["cnn_bc"] = _row(params["cnn_conv_b"], LANE)                             # (1, 128)
    p["cnn_wf"] = jnp.pad(params["cnn_fc_w"],
                          ((0, LANE - CFG["cnn_mid"]), (0, 0))).astype(bf16)   # (128, 512)
    p["cnn_bf"] = params["cnn_fc_b"].reshape(1, C)                             # (1, 512)
    # temporal conv stages: (5*Cin, H) -> (5, Cin_pad, 128) zero-padded, bf16
    w1 = params["tconv_w1"].reshape(5, C, hidden)
    p["t_w1"] = jnp.pad(w1, ((0, 0), (0, 0), (0, LANE - hidden))).astype(bf16)
    w2 = params["tconv_w2"].reshape(5, hidden, hidden)
    p["t_w2"] = jnp.pad(w2, ((0, 0), (0, LANE - hidden), (0, LANE - hidden))).astype(bf16)
    for i in ("1", "2"):
        p["t_b" + i] = _row(params["tconv_b" + i], LANE)
        p["t_g" + i] = _row(params["tconv_g" + i], LANE)
        p["t_be" + i] = _row(params["tconv_be" + i], LANE)
    # GCN + classifier
    p["g_w"] = _pad2(params["gcn_w"], LANE, LANE).astype(bf16)
    p["g_b"] = _row(params["gcn_b"], LANE)
    p["g_g"] = _row(params["gcn_g"], LANE)
    p["g_be"] = _row(params["gcn_be"], LANE)
    p["c_w"] = _pad2(params["cls_w"], LANE, LANE).astype(bf16)
    p["c_b"] = _row(params["cls_b"], LANE)
    return p


# ----------------------------------------------------------------------------
# Forward pass (mirrors CombinedModel_tconv.forward with key=False)
# ----------------------------------------------------------------------------
def combined_model_tconv_forward(prep, x, prob_sizes):
    B = len(prob_sizes)
    assert all(s == prob_sizes[0] for s in prob_sizes)  # TODO(synk): ragged batches need padding
    T = prob_sizes[0]
    frames = x.shape[0]

    # --- CNN stand-in: conv3x3 s2 + ReLU + GAP + fc + ReLU, one fused kernel ---
    patches, Ho, Wo = im2col(x, k=3, stride=2, pad=1)
    P = Ho * Wo
    Kc = patches.shape[1]
    frames_pad = _round_up(frames, 16)                 # 2 grid steps, F stays a multiple of 8
    patches = jnp.pad(patches, ((0, (frames_pad - frames) * P),
                                (0, KP - Kc))).astype(jnp.bfloat16)
    feat = cnn_fused(patches, prep["cnn_wc"], prep["cnn_bc"],
                     prep["cnn_wf"], prep["cnn_bf"], frames_pad, P)   # (frames_pad, 512) bf16
    x_t = feat[:frames].reshape(B, T, CFG["cnn_out"])

    # --- TemporalConv + GCN + classifier, one fused kernel (key=False: conv_logits skipped) ---
    logit_pad = tconv_gcn_cls(
        x_t, prep["t_w1"], prep["t_b1"], prep["t_g1"], prep["t_be1"],
        prep["t_w2"], prep["t_b2"], prep["t_g2"], prep["t_be2"],
        prep["g_w"], prep["g_b"], prep["g_g"], prep["g_be"],
        prep["c_w"], prep["c_b"])                       # (B, T', 128) f32
    logit = logit_pad[..., :CFG["num_classes"]]

    feat_len = jnp.array([((s - 4) // 2 - 4) // 2 for s in prob_sizes], jnp.int32)
    return {"logit": logit, "key_logit": None, "vid_len": feat_len}


# ----------------------------------------------------------------------------
if __name__ == "__main__":
    B, T, C, H, W = 2, 24, 3, 16, 16
    prob_sizes = (T,) * B
    x = jax.random.normal(jax.random.PRNGKey(0), (B * T, C, H, W), jnp.float32)

    params = init_params(seed=42)
    prep = prepare_params(params)

    fwd = jax.jit(combined_model_tconv_forward, static_argnums=2)
    out = fwd(prep, x, prob_sizes)
    logit = jax.block_until_ready(out["logit"])
    vid_len = jax.block_until_ready(out["vid_len"])

    assert logit.shape == (B, 3, CFG["num_classes"]), logit.shape
    assert bool(jnp.all(vid_len == 3))
    assert bool(jnp.all(jnp.isfinite(logit)))
    print("KERNEL_OK")
</pallas_src>

<mosaic_0001>
module attributes {stable_mosaic.version = 11 : i64} {
  func.func @_cnn_fused_kernel(%arg0: i32, %arg1: memref<1536x32xbf16, #tpu.memory_space<vmem>>, %arg2: memref<32x128xbf16, #tpu.memory_space<vmem>>, %arg3: memref<1x128xf32, #tpu.memory_space<vmem>>, %arg4: memref<128x512xbf16, #tpu.memory_space<vmem>>, %arg5: memref<1x512xf32, #tpu.memory_space<vmem>>, %arg6: memref<24x512xbf16, #tpu.memory_space<vmem>>) attributes {dimension_semantics = [#tpu.dimension_semantics<parallel>], iteration_bounds = array<i64: 2>, scalar_prefetch = 0 : i64, scratch_operands = 0 : i64, tpu.core_type = #tpu.core_type<tc>, window_params = [{transform_indices = @transform_0, window_bounds = array<i64: 1536, 32>}, {pipeline_mode = #tpu.pipeline_mode<synchronous>, transform_indices = @transform_1, window_bounds = array<i64: 32, 128>}, {pipeline_mode = #tpu.pipeline_mode<synchronous>, transform_indices = @transform_2, window_bounds = array<i64: 1, 128>}, {pipeline_mode = #tpu.pipeline_mode<synchronous>, transform_indices = @transform_3, window_bounds = array<i64: 128, 512>}, {pipeline_mode = #tpu.pipeline_mode<synchronous>, transform_indices = @transform_4, window_bounds = array<i64: 1, 512>}, {transform_indices = @transform_5, window_bounds = array<i64: 24, 512>}]} {
    %c0 = arith.constant 0 : index
    %c0_0 = arith.constant 0 : index
    %0 = vector.load %arg1[%c0, %c0_0] : memref<1536x32xbf16, #tpu.memory_space<vmem>>, vector<1536x32xbf16>
    %c0_1 = arith.constant 0 : index
    %c0_2 = arith.constant 0 : index
    %1 = vector.load %arg2[%c0_1, %c0_2] : memref<32x128xbf16, #tpu.memory_space<vmem>>, vector<32x128xbf16>
    %cst = arith.constant dense<0.000000e+00> : vector<1536x128xf32>
    %2 = tpu.matmul %0, %1, %cst {dimension_numbers = #tpu.dot_dimension_numbers<[1], [0], [0], [1], [0, 0, 1, 1], [], []>} : vector<1536x32xbf16>, vector<32x128xbf16>, vector<1536x128xf32> -> vector<1536x128xf32>
    %c0_3 = arith.constant 0 : index
    %c0_4 = arith.constant 0 : index
    %3 = vector.load %arg3[%c0_3, %c0_4] : memref<1x128xf32, #tpu.memory_space<vmem>>, vector<1x128xf32>
    %4 = vector.broadcast %3 : vector<1x128xf32> to vector<1536x128xf32>
    %5 = arith.addf %2, %4 : vector<1536x128xf32>
    %cst_5 = arith.constant 0.000000e+00 : f32
    %6 = vector.broadcast %cst_5 : f32 to vector<1536x128xf32>
    %7 = arith.maximumf %5, %6 : vector<1536x128xf32>
    %8 = vector.shape_cast %7 : vector<1536x128xf32> to vector<24x64x128xf32>
    %cst_6 = arith.constant dense<0.000000e+00> : vector<24x128xf32>
    %9 = vector.multi_reduction <add>, %8, %cst_6 [1] : vector<24x64x128xf32> to vector<24x128xf32>
    %cst_7 = arith.constant 6.400000e+01 : f32
    %10 = vector.broadcast %cst_7 : f32 to vector<24x128xf32>
    %11 = arith.divf %9, %10 : vector<24x128xf32>
    %12 = arith.truncf %11 : vector<24x128xf32> to vector<24x128xbf16>
    %c0_8 = arith.constant 0 : index
    %c0_9 = arith.constant 0 : index
    %13 = vector.load %arg4[%c0_8, %c0_9] : memref<128x512xbf16, #tpu.memory_space<vmem>>, vector<128x512xbf16>
    %cst_10 = arith.constant dense<0.000000e+00> : vector<24x512xf32>
    %14 = tpu.matmul %12, %13, %cst_10 {dimension_numbers = #tpu.dot_dimension_numbers<[1], [0], [0], [1], [0, 0, 1, 1], [], []>} : vector<24x128xbf16>, vector<128x512xbf16>, vector<24x512xf32> -> vector<24x512xf32>
    %c0_11 = arith.constant 0 : index
    %c0_12 = arith.constant 0 : index
    %15 = vector.load %arg5[%c0_11, %c0_12] : memref<1x512xf32, #tpu.memory_space<vmem>>, vector<1x512xf32>
    %16 = vector.broadcast %15 : vector<1x512xf32> to vector<24x512xf32>
    %17 = arith.addf %14, %16 : vector<24x512xf32>
    %cst_13 = arith.constant 0.000000e+00 : f32
    %18 = vector.broadcast %cst_13 : f32 to vector<24x512xf32>
    %19 = arith.maximumf %17, %18 : vector<24x512xf32>
    %20 = arith.truncf %19 : vector<24x512xf32> to vector<24x512xbf16>
    %c0_14 = arith.constant 0 : index
    %c0_15 = arith.constant 0 : index
    %21 = vector.load %arg6[%c0_14, %c0_15] : memref<24x512xbf16, #tpu.memory_space<vmem>>, vector<24x512xbf16>
    tpu.vector_store %arg6[%c0_14, %c0_15], %20 {strides = array<i32>} : memref<24x512xbf16, #tpu.memory_space<vmem>>, vector<24x512xbf16>,
    return
  }
  func.func @transform_0(%arg0: i32) -> (i32, i32) {
    %c0_i32 = arith.constant 0 : i32
    %c0_i32_0 = arith.constant 0 : i32
    return %arg0, %c0_i32 : i32, i32
  }
  func.func @transform_1(%arg0: i32) -> (i32, i32) {
    %c0_i32 = arith.constant 0 : i32
    %c0_i32_0 = arith.constant 0 : i32
    %c0_i32_1 = arith.constant 0 : i32
    return %c0_i32, %c0_i32_0 : i32, i32
  }
  func.func @transform_2(%arg0: i32) -> (i32, i32) {
    %c0_i32 = arith.constant 0 : i32
    %c0_i32_0 = arith.constant 0 : i32
    %c0_i32_1 = arith.constant 0 : i32
    return %c0_i32, %c0_i32_0 : i32, i32
  }
  func.func @transform_3(%arg0: i32) -> (i32, i32) {
    %c0_i32 = arith.constant 0 : i32
    %c0_i32_0 = arith.constant 0 : i32
    %c0_i32_1 = arith.constant 0 : i32
    return %c0_i32, %c0_i32_0 : i32, i32
  }
  func.func @transform_4(%arg0: i32) -> (i32, i32) {
    %c0_i32 = arith.constant 0 : i32
    %c0_i32_0 = arith.constant 0 : i32
    %c0_i32_1 = arith.constant 0 : i32
    return %c0_i32, %c0_i32_0 : i32, i32
  }
  func.func @transform_5(%arg0: i32) -> (i32, i32) {
    %c0_i32 = arith.constant 0 : i32
    %c0_i32_0 = arith.constant 0 : i32
    return %arg0, %c0_i32 : i32, i32
  }
}

module attributes {stable_mosaic.version = 11 : i64} {
  func.func @_tail_kernel(%arg0: i32, %arg1: memref<2x24x512xbf16, #tpu.memory_space<vmem>>, %arg2: memref<5x512x128xbf16, #tpu.memory_space<vmem>>, %arg3: memref<1x128xf32, #tpu.memory_space<vmem>>, %arg4: memref<1x128xf32, #tpu.memory_space<vmem>>, %arg5: memref<1x128xf32, #tpu.memory_space<vmem>>, %arg6: memref<5x128x128xbf16, #tpu.memory_space<vmem>>, %arg7: memref<1x128xf32, #tpu.memory_space<vmem>>, %arg8: memref<1x128xf32, #tpu.memory_space<vmem>>, %arg9: memref<1x128xf32, #tpu.memory_space<vmem>>, %arg10: memref<128x128xbf16, #tpu.memory_space<vmem>>, %arg11: memref<1x128xf32, #tpu.memory_space<vmem>>, %arg12: memref<1x128xf32, #tpu.memory_space<vmem>>, %arg13: memref<1x128xf32, #tpu.memory_space<vmem>>, %arg14: memref<128x128xbf16, #tpu.memory_space<vmem>>, %arg15: memref<1x128xf32, #tpu.memory_space<vmem>>, %arg16: memref<2x3x128xf32, #tpu.memory_space<vmem>>, %arg17: memref<20x128xf32, #tpu.memory_space<vmem>>) attributes {dimension_semantics = [#tpu.dimension_semantics<arbitrary>], iteration_bounds = array<i64: 1>, scalar_prefetch = 0 : i64, scratch_operands = 1 : i64, tpu.core_type = #tpu.core_type<tc>, window_params = [{pipeline_mode = #tpu.pipeline_mode<synchronous>, transform_indices = @transform_0, window_bounds = array<i64: 2, 24, 512>}, {pipeline_mode = #tpu.pipeline_mode<synchronous>, transform_indices = @transform_1, window_bounds = array<i64: 5, 512, 128>}, {pipeline_mode = #tpu.pipeline_mode<synchronous>, transform_indices = @transform_2, window_bounds = array<i64: 1, 128>}, {pipeline_mode = #tpu.pipeline_mode<synchronous>, transform_indices = @transform_3, window_bounds = array<i64: 1, 128>}, {pipeline_mode = #tpu.pipeline_mode<synchronous>, transform_indices = @transform_4, window_bounds = array<i64: 1, 128>}, {pipeline_mode = #tpu.pipeline_mode<synchronous>, transform_indices = @transform_5, window_bounds = array<i64: 5, 128, 128>}, {pipeline_mode = #tpu.pipeline_mode<synchronous>, transform_indices = @transform_6, window_bounds = array<i64: 1, 128>}, {pipeline_mode = #tpu.pipeline_mode<synchronous>, transform_indices = @transform_7, window_bounds = array<i64: 1, 128>}, {pipeline_mode = #tpu.pipeline_mode<synchronous>, transform_indices = @transform_8, window_bounds = array<i64: 1, 128>}, {pipeline_mode = #tpu.pipeline_mode<synchronous>, transform_indices = @transform_9, window_bounds = array<i64: 128, 128>}, {pipeline_mode = #tpu.pipeline_mode<synchronous>, transform_indices = @transform_10, window_bounds = array<i64: 1, 128>}, {pipeline_mode = #tpu.pipeline_mode<synchronous>, transform_indices = @transform_11, window_bounds = array<i64: 1, 128>}, {pipeline_mode = #tpu.pipeline_mode<synchronous>, transform_indices = @transform_12, window_bounds = array<i64: 1, 128>}, {pipeline_mode = #tpu.pipeline_mode<synchronous>, transform_indices = @transform_13, window_bounds = array<i64: 128, 128>}, {pipeline_mode = #tpu.pipeline_mode<synchronous>, transform_indices = @transform_14, window_bounds = array<i64: 1, 128>}, {pipeline_mode = #tpu.pipeline_mode<synchronous>, transform_indices = @transform_15, window_bounds = array<i64: 2, 3, 128>}]} {
    %cst = arith.constant 0.000000e+00 : f32
    %0 = vector.broadcast %cst : f32 to vector<20x128xf32>
    %c0 = arith.constant 0 : index
    %c0_0 = arith.constant 0 : index
    %c0_1 = arith.constant 0 : index
    %1 = vector.load %arg1[%c0, %c0_0, %c0_1] : memref<2x24x512xbf16, #tpu.memory_space<vmem>>, vector<1x20x512xbf16>
    %2 = vector.shape_cast %1 : vector<1x20x512xbf16> to vector<20x512xbf16>
    %c0_2 = arith.constant 0 : index
    %c0_3 = arith.constant 0 : index
    %c0_4 = arith.constant 0 : index
    %3 = vector.load %arg2[%c0_2, %c0_3, %c0_4] : memref<5x512x128xbf16, #tpu.memory_space<vmem>>, vector<1x512x128xbf16>
    %4 = vector.shape_cast %3 : vector<1x512x128xbf16> to vector<512x128xbf16>
    %cst_5 = arith.constant dense<0.000000e+00> : vector<20x128xf32>
    %5 = tpu.matmul %2, %4, %cst_5 {dimension_numbers = #tpu.dot_dimension_numbers<[1], [0], [0], [1], [0, 0, 1, 1], [], []>} : vector<20x512xbf16>, vector<512x128xbf16>, vector<20x128xf32> -> vector<20x128xf32>
    %6 = arith.addf %0, %5 : vector<20x128xf32>
    %c0_6 = arith.constant 0 : index
    %c1 = arith.constant 1 : index
    %c0_7 = arith.constant 0 : index
    %7 = vector.load %arg1[%c0_6, %c1, %c0_7] : memref<2x24x512xbf16, #tpu.memory_space<vmem>>, vector<1x20x512xbf16>
    %8 = vector.shape_cast %7 : vector<1x20x512xbf16> to vector<20x512xbf16>
    %c1_8 = arith.constant 1 : index
    %c0_9 = arith.constant 0 : index
    %c0_10 = arith.constant 0 : index
    %9 = vector.load %arg2[%c1_8, %c0_9, %c0_10] : memref<5x512x128xbf16, #tpu.memory_space<vmem>>, vector<1x512x128xbf16>
    %10 = vector.shape_cast %9 : vector<1x512x128xbf16> to vector<512x128xbf16>
    %cst_11 = arith.constant dense<0.000000e+00> : vector<20x128xf32>
    %11 = tpu.matmul %8, %10, %cst_11 {dimension_numbers = #tpu.dot_dimension_numbers<[1], [0], [0], [1], [0, 0, 1, 1], [], []>} : vector<20x512xbf16>, vector<512x128xbf16>, vector<20x128xf32> -> vector<20x128xf32>
    %12 = arith.addf %6, %11 : vector<20x128xf32>
    %c0_12 = arith.constant 0 : index
    %c2 = arith.constant 2 : index
    %c0_13 = arith.constant 0 : index
    %13 = vector.load %arg1[%c0_12, %c2, %c0_13] : memref<2x24x512xbf16, #tpu.memory_space<vmem>>, vector<1x20x512xbf16>
    %14 = vector.shape_cast %13 : vector<1x20x512xbf16> to vector<20x512xbf16>
    %c2_14 = arith.constant 2 : index
    %c0_15 = arith.constant 0 : index
    %c0_16 = arith.constant 0 : index
    %15 = vector.load %arg2[%c2_14, %c0_15, %c0_16] : memref<5x512x128xbf16, #tpu.memory_space<vmem>>, vector<1x512x128xbf16>
    %16 = vector.shape_cast %15 : vector<1x512x128xbf16> to vector<512x128xbf16>
    %cst_17 = arith.constant dense<0.000000e+00> : vector<20x128xf32>
    %17 = tpu.matmul %14, %16, %cst_17 {dimension_numbers = #tpu.dot_dimension_numbers<[1], [0], [0], [1], [0, 0, 1, 1], [], []>} : vector<20x512xbf16>, vector<512x128xbf16>, vector<20x128xf32> -> vector<20x128xf32>
    %18 = arith.addf %12, %17 : vector<20x128xf32>
    %c0_18 = arith.constant 0 : index
    %c3 = arith.constant 3 : index
    %c0_19 = arith.constant 0 : index
    %19 = vector.load %arg1[%c0_18, %c3, %c0_19] : memref<2x24x512xbf16, #tpu.memory_space<vmem>>, vector<1x20x512xbf16>
    %20 = vector.shape_cast %19 : vector<1x20x512xbf16> to vector<20x512xbf16>
    %c3_20 = arith.constant 3 : index
    %c0_21 = arith.constant 0 : index
    %c0_22 = arith.constant 0 : index
    %21 = vector.load %arg2[%c3_20, %c0_21, %c0_22] : memref<5x512x128xbf16, #tpu.memory_space<vmem>>, vector<1x512x128xbf16>
    %22 = vector.shape_cast %21 : vector<1x512x128xbf16> to vector<512x128xbf16>
    %cst_23 = arith.constant dense<0.000000e+00> : vector<20x128xf32>
    %23 = tpu.matmul %20, %22, %cst_23 {dimension_numbers = #tpu.dot_dimension_numbers<[1], [0], [0], [1], [0, 0, 1, 1], [], []>} : vector<20x512xbf16>, vector<512x128xbf16>, vector<20x128xf32> -> vector<20x128xf32>
    %24 = arith.addf %18, %23 : vector<20x128xf32>
    %c0_24 = arith.constant 0 : index
    %c4 = arith.constant 4 : index
    %c0_25 = arith.constant 0 : index
    %25 = vector.load %arg1[%c0_24, %c4, %c0_25] : memref<2x24x512xbf16, #tpu.memory_space<vmem>>, vector<1x20x512xbf16>
    %26 = vector.shape_cast %25 : vector<1x20x512xbf16> to vector<20x512xbf16>
    %c4_26 = arith.constant 4 : index
    %c0_27 = arith.constant 0 : index
    %c0_28 = arith.constant 0 : index
    %27 = vector.load %arg2[%c4_26, %c0_27, %c0_28] : memref<5x512x128xbf16, #tpu.memory_space<vmem>>, vector<1x512x128xbf16>
    %28 = vector.shape_cast %27 : vector<1x512x128xbf16> to vector<512x128xbf16>
    %cst_29 = arith.constant dense<0.000000e+00> : vector<20x128xf32>
    %29 = tpu.matmul %26, %28, %cst_29 {dimension_numbers = #tpu.dot_dimension_numbers<[1], [0], [0], [1], [0, 0, 1, 1], [], []>} : vector<20x512xbf16>, vector<512x128xbf16>, vector<20x128xf32> -> vector<20x128xf32>
    %30 = arith.addf %24, %29 : vector<20x128xf32>
    %c0_30 = arith.constant 0 : index
    %c0_31 = arith.constant 0 : index
    %31 = vector.load %arg3[%c0_30, %c0_31] : memref<1x128xf32, #tpu.memory_space<vmem>>, vector<1x128xf32>
    %32 = vector.broadcast %31 : vector<1x128xf32> to vector<20x128xf32>
    %33 = arith.addf %30, %32 : vector<20x128xf32>
    %cst_32 = arith.constant 0.000000e+00 : f32
    %34 = vector.broadcast %cst_32 : f32 to vector<20x128xf32>
    %c1_33 = arith.constant 1 : index
    %c0_34 = arith.constant 0 : index
    %c0_35 = arith.constant 0 : index
    %35 = vector.load %arg1[%c1_33, %c0_34, %c0_35] : memref<2x24x512xbf16, #tpu.memory_space<vmem>>, vector<1x20x512xbf16>
    %36 = vector.shape_cast %35 : vector<1x20x512xbf16> to vector<20x512xbf16>
    %c0_36 = arith.constant 0 : index
    %c0_37 = arith.constant 0 : index
    %c0_38 = arith.constant 0 : index
    %37 = vector.load %arg2[%c0_36, %c0_37, %c0_38] : memref<5x512x128xbf16, #tpu.memory_space<vmem>>, vector<1x512x128xbf16>
    %38 = vector.shape_cast %37 : vector<1x512x128xbf16> to vector<512x128xbf16>
    %cst_39 = arith.constant dense<0.000000e+00> : vector<20x128xf32>
    %39 = tpu.matmul %36, %38, %cst_39 {dimension_numbers = #tpu.dot_dimension_numbers<[1], [0], [0], [1], [0, 0, 1, 1], [], []>} : vector<20x512xbf16>, vector<512x128xbf16>, vector<20x128xf32> -> vector<20x128xf32>
    %40 = arith.addf %34, %39 : vector<20x128xf32>
    %c1_40 = arith.constant 1 : index
    %c1_41 = arith.constant 1 : index
    %c0_42 = arith.constant 0 : index
    %41 = vector.load %arg1[%c1_40, %c1_41, %c0_42] : memref<2x24x512xbf16, #tpu.memory_space<vmem>>, vector<1x20x512xbf16>
    %42 = vector.shape_cast %41 : vector<1x20x512xbf16> to vector<20x512xbf16>
    %c1_43 = arith.constant 1 : index
    %c0_44 = arith.constant 0 : index
    %c0_45 = arith.constant 0 : index
    %43 = vector.load %arg2[%c1_43, %c0_44, %c0_45] : memref<5x512x128xbf16, #tpu.memory_space<vmem>>, vector<1x512x128xbf16>
    %44 = vector.shape_cast %43 : vector<1x512x128xbf16> to vector<512x128xbf16>
    %cst_46 = arith.constant dense<0.000000e+00> : vector<20x128xf32>
    %45 = tpu.matmul %42, %44, %cst_46 {dimension_numbers = #tpu.dot_dimension_numbers<[1], [0], [0], [1], [0, 0, 1, 1], [], []>} : vector<20x512xbf16>, vector<512x128xbf16>, vector<20x128xf32> -> vector<20x128xf32>
    %46 = arith.addf %40, %45 : vector<20x128xf32>
    %c1_47 = arith.constant 1 : index
    %c2_48 = arith.constant 2 : index
    %c0_49 = arith.constant 0 : index
    %47 = vector.load %arg1[%c1_47, %c2_48, %c0_49] : memref<2x24x512xbf16, #tpu.memory_space<vmem>>, vector<1x20x512xbf16>
    %48 = vector.shape_cast %47 : vector<1x20x512xbf16> to vector<20x512xbf16>
    %c2_50 = arith.constant 2 : index
    %c0_51 = arith.constant 0 : index
    %c0_52 = arith.constant 0 : index
    %49 = vector.load %arg2[%c2_50, %c0_51, %c0_52] : memref<5x512x128xbf16, #tpu.memory_space<vmem>>, vector<1x512x128xbf16>
    %50 = vector.shape_cast %49 : vector<1x512x128xbf16> to vector<512x128xbf16>
    %cst_53 = arith.constant dense<0.000000e+00> : vector<20x128xf32>
    %51 = tpu.matmul %48, %50, %cst_53 {dimension_numbers = #tpu.dot_dimension_numbers<[1], [0], [0], [1], [0, 0, 1, 1], [], []>} : vector<20x512xbf16>, vector<512x128xbf16>, vector<20x128xf32> -> vector<20x128xf32>
    %52 = arith.addf %46, %51 : vector<20x128xf32>
    %c1_54 = arith.constant 1 : index
    %c3_55 = arith.constant 3 : index
    %c0_56 = arith.constant 0 : index
    %53 = vector.load %arg1[%c1_54, %c3_55, %c0_56] : memref<2x24x512xbf16, #tpu.memory_space<vmem>>, vector<1x20x512xbf16>
    %54 = vector.shape_cast %53 : vector<1x20x512xbf16> to vector<20x512xbf16>
    %c3_57 = arith.constant 3 : index
    %c0_58 = arith.constant 0 : index
    %c0_59 = arith.constant 0 : index
    %55 = vector.load %arg2[%c3_57, %c0_58, %c0_59] : memref<5x512x128xbf16, #tpu.memory_space<vmem>>, vector<1x512x128xbf16>
    %56 = vector.shape_cast %55 : vector<1x512x128xbf16> to vector<512x128xbf16>
    %cst_60 = arith.constant dense<0.000000e+00> : vector<20x128xf32>
    %57 = tpu.matmul %54, %56, %cst_60 {dimension_numbers = #tpu.dot_dimension_numbers<[1], [0], [0], [1], [0, 0, 1, 1], [], []>} : vector<20x512xbf16>, vector<512x128xbf16>, vector<20x128xf32> -> vector<20x128xf32>
    %58 = arith.addf %52, %57 : vector<20x128xf32>
    %c1_61 = arith.constant 1 : index
    %c4_62 = arith.constant 4 : index
    %c0_63 = arith.constant 0 : index
    %59 = vector.load %arg1[%c1_61, %c4_62, %c0_63] : memref<2x24x512xbf16, #tpu.memory_space<vmem>>, vector<1x20x512xbf16>
    %60 = vector.shape_cast %59 : vector<1x20x512xbf16> to vector<20x512xbf16>
    %c4_64 = arith.constant 4 : index
    %c0_65 = arith.constant 0 : index
    %c0_66 = arith.constant 0 : index
    %61 = vector.load %arg2[%c4_64, %c0_65, %c0_66] : memref<5x512x128xbf16, #tpu.memory_space<vmem>>, vector<1x512x128xbf16>
    %62 = vector.shape_cast %61 : vector<1x512x128xbf16> to vector<512x128xbf16>
    %cst_67 = arith.constant dense<0.000000e+00> : vector<20x128xf32>
    %63 = tpu.matmul %60, %62, %cst_67 {dimension_numbers = #tpu.dot_dimension_numbers<[1], [0], [0], [1], [0, 0, 1, 1], [], []>} : vector<20x512xbf16>, vector<512x128xbf16>, vector<20x128xf32> -> vector<20x128xf32>
    %64 = arith.addf %58, %63 : vector<20x128xf32>
    %c0_68 = arith.constant 0 : index
    %c0_69 = arith.constant 0 : index
    %65 = vector.load %arg3[%c0_68, %c0_69] : memref<1x128xf32, #tpu.memory_space<vmem>>, vector<1x128xf32>
    %66 = vector.broadcast %65 : vector<1x128xf32> to vector<20x128xf32>
    %67 = arith.addf %64, %66 : vector<20x128xf32>
    %c0_70 = arith.constant 0 : index
    %c0_71 = arith.constant 0 : index
    %68 = vector.load %arg4[%c0_70, %c0_71] : memref<1x128xf32, #tpu.memory_space<vmem>>, vector<1x128xf32>
    %c0_72 = arith.constant 0 : index
    %c0_73 = arith.constant 0 : index
    %69 = vector.load %arg5[%c0_72, %c0_73] : memref<1x128xf32, #tpu.memory_space<vmem>>, vector<1x128xf32>
    %cst_74 = arith.constant dense<0.000000e+00> : vector<128xf32>
    %70 = vector.multi_reduction <add>, %33, %cst_74 [0] : vector<20x128xf32> to vector<128xf32>
    %71 = vector.shape_cast %70 : vector<128xf32> to vector<1x128xf32>
    %cst_75 = arith.constant 0.000000e+00 : f32
    %72 = vector.broadcast %cst_75 : f32 to vector<1x128xf32>
    %73 = arith.addf %72, %71 : vector<1x128xf32>
    %cst_76 = arith.constant dense<0.000000e+00> : vector<128xf32>
    %74 = vector.multi_reduction <add>, %67, %cst_76 [0] : vector<20x128xf32> to vector<128xf32>
    %75 = vector.shape_cast %74 : vector<128xf32> to vector<1x128xf32>
    %76 = arith.addf %73, %75 : vector<1x128xf32>
    %77 = arith.mulf %33, %33 : vector<20x128xf32>
    %cst_77 = arith.constant dense<0.000000e+00> : vector<128xf32>
    %78 = vector.multi_reduction <add>, %77, %cst_77 [0] : vector<20x128xf32> to vector<128xf32>
    %79 = vector.shape_cast %78 : vector<128xf32> to vector<1x128xf32>
    %cst_78 = arith.constant 0.000000e+00 : f32
    %80 = vector.broadcast %cst_78 : f32 to vector<1x128xf32>
    %81 = arith.addf %80, %79 : vector<1x128xf32>
    %82 = arith.mulf %67, %67 : vector<20x128xf32>
    %cst_79 = arith.constant dense<0.000000e+00> : vector<128xf32>
    %83 = vector.multi_reduction <add>, %82, %cst_79 [0] : vector<20x128xf32> to vector<128xf32>
    %84 = vector.shape_cast %83 : vector<128xf32> to vector<1x128xf32>
    %85 = arith.addf %81, %84 : vector<1x128xf32>
    %cst_80 = arith.constant 2.500000e-02 : f32
    %86 = vector.broadcast %cst_80 : f32 to vector<1x128xf32>
    %87 = arith.mulf %76, %86 : vector<1x128xf32>
    %cst_81 = arith.constant 2.500000e-02 : f32
    %88 = vector.broadcast %cst_81 : f32 to vector<1x128xf32>
    %89 = arith.mulf %85, %88 : vector<1x128xf32>
    %90 = arith.mulf %87, %87 : vector<1x128xf32>
    %91 = arith.subf %89, %90 : vector<1x128xf32>
    %cst_82 = arith.constant 9.99999974E-6 : f32
    %92 = vector.broadcast %cst_82 : f32 to vector<1x128xf32>
    %93 = arith.addf %91, %92 : vector<1x128xf32>
    %94 = math.rsqrt %93 : vector<1x128xf32>
    %95 = arith.mulf %94, %68 : vector<1x128xf32>
    %96 = arith.mulf %87, %95 : vector<1x128xf32>
    %97 = arith.subf %69, %96 : vector<1x128xf32>
    %98 = vector.broadcast %95 : vector<1x128xf32> to vector<20x128xf32>
    %99 = arith.mulf %33, %98 : vector<20x128xf32>
    %100 = vector.broadcast %97 : vector<1x128xf32> to vector<20x128xf32>
    %101 = arith.addf %99, %100 : vector<20x128xf32>
    %cst_83 = arith.constant 0.000000e+00 : f32
    %102 = vector.broadcast %cst_83 : f32 to vector<20x128xf32>
    %103 = arith.maximumf %101, %102 : vector<20x128xf32>
    %104 = vector.broadcast %95 : vector<1x128xf32> to vector<20x128xf32>
    %105 = arith.mulf %67, %104 : vector<20x128xf32>
    %106 = vector.broadcast %97 : vector<1x128xf32> to vector<20x128xf32>
    %107 = arith.addf %105, %106 : vector<20x128xf32>
    %cst_84 = arith.constant 0.000000e+00 : f32
    %108 = vector.broadcast %cst_84 : f32 to vector<20x128xf32>
    %109 = arith.maximumf %107, %108 : vector<20x128xf32>
    %c0_85 = arith.constant 0 : index
    %c0_86 = arith.constant 0 : index
    %110 = vector.load %arg17[%c0_85, %c0_86] : memref<20x128xf32, #tpu.memory_space<vmem>>, vector<20x128xf32>
    tpu.vector_store %arg17[%c0_85, %c0_86], %103 {strides = array<i32>} : memref<20x128xf32, #tpu.memory_space<vmem>>, vector<20x128xf32>,
    %c0_87 = arith.constant 0 : index
    %c0_88 = arith.constant 0 : index
    %111 = tpu.strided_load %arg17[%c0_87, %c0_88] {strides = array<i32: 2, 1>} : memref<20x128xf32, #tpu.memory_space<vmem>>, vector<10x128xf32>
    %c1_89 = arith.constant 1 : index
    %c0_90 = arith.constant 0 : index
    %112 = tpu.strided_load %arg17[%c1_89, %c0_90] {strides = array<i32: 2, 1>} : memref<20x128xf32, #tpu.memory_space<vmem>>, vector<10x128xf32>
    %113 = arith.maximumf %111, %112 : vector<10x128xf32>
    %c0_91 = arith.constant 0 : index
    %c0_92 = arith.constant 0 : index
    %114 = vector.load %arg17[%c0_91, %c0_92] : memref<20x128xf32, #tpu.memory_space<vmem>>, vector<20x128xf32>
    tpu.vector_store %arg17[%c0_91, %c0_92], %109 {strides = array<i32>} : memref<20x128xf32, #tpu.memory_space<vmem>>, vector<20x128xf32>,
    %c0_93 = arith.constant 0 : index
    %c0_94 = arith.constant 0 : index
    %115 = tpu.strided_load %arg17[%c0_93, %c0_94] {strides = array<i32: 2, 1>} : memref<20x128xf32, #tpu.memory_space<vmem>>, vector<10x128xf32>
    %c1_95 = arith.constant 1 : index
    %c0_96 = arith.constant 0 : index
    %116 = tpu.strided_load %arg17[%c1_95, %c0_96] {strides = array<i32: 2, 1>} : memref<20x128xf32, #tpu.memory_space<vmem>>, vector<10x128xf32>
    %117 = arith.maximumf %115, %116 : vector<10x128xf32>
    %118 = arith.truncf %113 : vector<10x128xf32> to vector<10x128xbf16>
    %cst_97 = arith.constant 0.000000e+00 : f32
    %119 = vector.broadcast %cst_97 : f32 to vector<6x128xf32>
    %120 = vector.extract_strided_slice %118 {offsets = [0, 0], sizes = [6, 128], strides = [1, 1]} : vector<10x128xbf16> to vector<6x128xbf16>
    %c0_98 = arith.constant 0 : index
    %c0_99 = arith.constant 0 : index
    %c0_100 = arith.constant 0 : index
    %121 = vector.load %arg6[%c0_98, %c0_99, %c0_100] : memref<5x128x128xbf16, #tpu.memory_space<vmem>>, vector<1x128x128xbf16>
    %122 = vector.shape_cast %121 : vector<1x128x128xbf16> to vector<128x128xbf16>
    %cst_101 = arith.constant dense<0.000000e+00> : vector<6x128xf32>
    %123 = tpu.matmul %120, %122, %cst_101 {dimension_numbers = #tpu.dot_dimension_numbers<[1], [0], [0], [1], [0, 0, 1, 1], [], []>} : vector<6x128xbf16>, vector<128x128xbf16>, vector<6x128xf32> -> vector<6x128xf32>
    %124 = arith.addf %119, %123 : vector<6x128xf32>
    %125 = vector.extract_strided_slice %118 {offsets = [1, 0], sizes = [6, 128], strides = [1, 1]} : vector<10x128xbf16> to vector<6x128xbf16>
    %c1_102 = arith.constant 1 : index
    %c0_103 = arith.constant 0 : index
    %c0_104 = arith.constant 0 : index
    %126 = vector.load %arg6[%c1_102, %c0_103, %c0_104] : memref<5x128x128xbf16, #tpu.memory_space<vmem>>, vector<1x128x128xbf16>
    %127 = vector.shape_cast %126 : vector<1x128x128xbf16> to vector<128x128xbf16>
    %cst_105 = arith.constant dense<0.000000e+00> : vector<6x128xf32>
    %128 = tpu.matmul %125, %127, %cst_105 {dimension_numbers = #tpu.dot_dimension_numbers<[1], [0], [0], [1], [0, 0, 1, 1], [], []>} : vector<6x128xbf16>, vector<128x128xbf16>, vector<6x128xf32> -> vector<6x128xf32>
    %129 = arith.addf %124, %128 : vector<6x128xf32>
    %130 = vector.extract_strided_slice %118 {offsets = [2, 0], sizes = [6, 128], strides = [1, 1]} : vector<10x128xbf16> to vector<6x128xbf16>
    %c2_106 = arith.constant 2 : index
    %c0_107 = arith.constant 0 : index
    %c0_108 = arith.constant 0 : index
    %131 = vector.load %arg6[%c2_106, %c0_107, %c0_108] : memref<5x128x128xbf16, #tpu.memory_space<vmem>>, vector<1x128x128xbf16>
    %132 = vector.shape_cast %131 : vector<1x128x128xbf16> to vector<128x128xbf16>
    %cst_109 = arith.constant dense<0.000000e+00> : vector<6x128xf32>
    %133 = tpu.matmul %130, %132, %cst_109 {dimension_numbers = #tpu.dot_dimension_numbers<[1], [0], [0], [1], [0, 0, 1, 1], [], []>} : vector<6x128xbf16>, vector<128x128xbf16>, vector<6x128xf32> -> vector<6x128xf32>
    %134 = arith.addf %129, %133 : vector<6x128xf32>
    %135 = vector.extract_strided_slice %118 {offsets = [3, 0], sizes = [6, 128], strides = [1, 1]} : vector<10x128xbf16> to vector<6x128xbf16>
    %c3_110 = arith.constant 3 : index
    %c0_111 = arith.constant 0 : index
    %c0_112 = arith.constant 0 : index
    %136 = vector.load %arg6[%c3_110, %c0_111, %c0_112] : memref<5x128x128xbf16, #tpu.memory_space<vmem>>, vector<1x128x128xbf16>
    %137 = vector.shape_cast %136 : vector<1x128x128xbf16> to vector<128x128xbf16>
    %cst_113 = arith.constant dense<0.000000e+00> : vector<6x128xf32>
    %138 = tpu.matmul %135, %137, %cst_113 {dimension_numbers = #tpu.dot_dimension_numbers<[1], [0], [0], [1], [0, 0, 1, 1], [], []>} : vector<6x128xbf16>, vector<128x128xbf16>, vector<6x128xf32> -> vector<6x128xf32>
    %139 = arith.addf %134, %138 : vector<6x128xf32>
    %140 = vector.extract_strided_slice %118 {offsets = [4, 0], sizes = [6, 128], strides = [1, 1]} : vector<10x128xbf16> to vector<6x128xbf16>
    %c4_114 = arith.constant 4 : index
    %c0_115 = arith.constant 0 : index
    %c0_116 = arith.constant 0 : index
    %141 = vector.load %arg6[%c4_114, %c0_115, %c0_116] : memref<5x128x128xbf16, #tpu.memory_space<vmem>>, vector<1x128x128xbf16>
    %142 = vector.shape_cast %141 : vector<1x128x128xbf16> to vector<128x128xbf16>
    %cst_117 = arith.constant dense<0.000000e+00> : vector<6x128xf32>
    %143 = tpu.matmul %140, %142, %cst_117 {dimension_numbers = #tpu.dot_dimension_numbers<[1], [0], [0], [1], [0, 0, 1, 1], [], []>} : vector<6x128xbf16>, vector<128x128xbf16>, vector<6x128xf32> -> vector<6x128xf32>
    %144 = arith.addf %139, %143 : vector<6x128xf32>
    %c0_118 = arith.constant 0 : index
    %c0_119 = arith.constant 0 : index
    %145 = vector.load %arg7[%c0_118, %c0_119] : memref<1x128xf32, #tpu.memory_space<vmem>>, vector<1x128xf32>
    %146 = vector.broadcast %145 : vector<1x128xf32> to vector<6x128xf32>
    %147 = arith.addf %144, %146 : vector<6x128xf32>
    %148 = arith.truncf %117 : vector<10x128xf32> to vector<10x128xbf16>
    %cst_120 = arith.constant 0.000000e+00 : f32
    %149 = vector.broadcast %cst_120 : f32 to vector<6x128xf32>
    %150 = vector.extract_strided_slice %148 {offsets = [0, 0], sizes = [6, 128], strides = [1, 1]} : vector<10x128xbf16> to vector<6x128xbf16>
    %c0_121 = arith.constant 0 : index
    %c0_122 = arith.constant 0 : index
    %c0_123 = arith.constant 0 : index
    %151 = vector.load %arg6[%c0_121, %c0_122, %c0_123] : memref<5x128x128xbf16, #tpu.memory_space<vmem>>, vector<1x128x128xbf16>
    %152 = vector.shape_cast %151 : vector<1x128x128xbf16> to vector<128x128xbf16>
    %cst_124 = arith.constant dense<0.000000e+00> : vector<6x128xf32>
    %153 = tpu.matmul %150, %152, %cst_124 {dimension_numbers = #tpu.dot_dimension_numbers<[1], [0], [0], [1], [0, 0, 1, 1], [], []>} : vector<6x128xbf16>, vector<128x128xbf16>, vector<6x128xf32> -> vector<6x128xf32>
    %154 = arith.addf %149, %153 : vector<6x128xf32>
    %155 = vector.extract_strided_slice %148 {offsets = [1, 0], sizes = [6, 128], strides = [1, 1]} : vector<10x128xbf16> to vector<6x128xbf16>
    %c1_125 = arith.constant 1 : index
    %c0_126 = arith.constant 0 : index
    %c0_127 = arith.constant 0 : index
    %156 = vector.load %arg6[%c1_125, %c0_126, %c0_127] : memref<5x128x128xbf16, #tpu.memory_space<vmem>>, vector<1x128x128xbf16>
    %157 = vector.shape_cast %156 : vector<1x128x128xbf16> to vector<128x128xbf16>
    %cst_128 = arith.constant dense<0.000000e+00> : vector<6x128xf32>
    %158 = tpu.matmul %155, %157, %cst_128 {dimension_numbers = #tpu.dot_dimension_numbers<[1], [0], [0], [1], [0, 0, 1, 1], [], []>} : vector<6x128xbf16>, vector<128x128xbf16>, vector<6x128xf32> -> vector<6x128xf32>
    %159 = arith.addf %154, %158 : vector<6x128xf32>
    %160 = vector.extract_strided_slice %148 {offsets = [2, 0], sizes = [6, 128], strides = [1, 1]} : vector<10x128xbf16> to vector<6x128xbf16>
    %c2_129 = arith.constant 2 : index
    %c0_130 = arith.constant 0 : index
    %c0_131 = arith.constant 0 : index
    %161 = vector.load %arg6[%c2_129, %c0_130, %c0_131] : memref<5x128x128xbf16, #tpu.memory_space<vmem>>, vector<1x128x128xbf16>
    %162 = vector.shape_cast %161 : vector<1x128x128xbf16> to vector<128x128xbf16>
    %cst_132 = arith.constant dense<0.000000e+00> : vector<6x128xf32>
    %163 = tpu.matmul %160, %162, %cst_132 {dimension_numbers = #tpu.dot_dimension_numbers<[1], [0], [0], [1], [0, 0, 1, 1], [], []>} : vector<6x128xbf16>, vector<128x128xbf16>, vector<6x128xf32> -> vector<6x128xf32>
    %164 = arith.addf %159, %163 : vector<6x128xf32>
    %165 = vector.extract_strided_slice %148 {offsets = [3, 0], sizes = [6, 128], strides = [1, 1]} : vector<10x128xbf16> to vector<6x128xbf16>
    %c3_133 = arith.constant 3 : index
    %c0_134 = arith.constant 0 : index
    %c0_135 = arith.constant 0 : index
    %166 = vector.load %arg6[%c3_133, %c0_134, %c0_135] : memref<5x128x128xbf16, #tpu.memory_space<vmem>>, vector<1x128x128xbf16>
    %167 = vector.shape_cast %166 : vector<1x128x128xbf16> to vector<128x128xbf16>
    %cst_136 = arith.constant dense<0.000000e+00> : vector<6x128xf32>
    %168 = tpu.matmul %165, %167, %cst_136 {dimension_numbers = #tpu.dot_dimension_numbers<[1], [0], [0], [1], [0, 0, 1, 1], [], []>} : vector<6x128xbf16>, vector<128x128xbf16>, vector<6x128xf32> -> vector<6x128xf32>
    %169 = arith.addf %164, %168 : vector<6x128xf32>
    %170 = vector.extract_strided_slice %148 {offsets = [4, 0], sizes = [6, 128], strides = [1, 1]} : vector<10x128xbf16> to vector<6x128xbf16>
    %c4_137 = arith.constant 4 : index
    %c0_138 = arith.constant 0 : index
    %c0_139 = arith.constant 0 : index
    %171 = vector.load %arg6[%c4_137, %c0_138, %c0_139] : memref<5x128x128xbf16, #tpu.memory_space<vmem>>, vector<1x128x128xbf16>
    %172 = vector.shape_cast %171 : vector<1x128x128xbf16> to vector<128x128xbf16>
    %cst_140 = arith.constant dense<0.000000e+00> : vector<6x128xf32>
    %173 = tpu.matmul %170, %172, %cst_140 {dimension_numbers = #tpu.dot_dimension_numbers<[1], [0], [0], [1], [0, 0, 1, 1], [], []>} : vector<6x128xbf16>, vector<128x128xbf16>, vector<6x128xf32> -> vector<6x128xf32>
    %174 = arith.addf %169, %173 : vector<6x128xf32>
    %c0_141 = arith.constant 0 : index
    %c0_142 = arith.constant 0 : index
    %175 = vector.load %arg7[%c0_141, %c0_142] : memref<1x128xf32, #tpu.memory_space<vmem>>, vector<1x128xf32>
    %176 = vector.broadcast %175 : vector<1x128xf32> to vector<6x128xf32>
    %177 = arith.addf %174, %176 : vector<6x128xf32>
    %c0_143 = arith.constant 0 : index
    %c0_144 = arith.constant 0 : index
    %178 = vector.load %arg8[%c0_143, %c0_144] : memref<1x128xf32, #tpu.memory_space<vmem>>, vector<1x128xf32>
    %c0_145 = arith.constant 0 : index
    %c0_146 = arith.constant 0 : index
    %179 = vector.load %arg9[%c0_145, %c0_146] : memref<1x128xf32, #tpu.memory_space<vmem>>, vector<1x128xf32>
    %cst_147 = arith.constant dense<0.000000e+00> : vector<128xf32>
    %180 = vector.multi_reduction <add>, %147, %cst_147 [0] : vector<6x128xf32> to vector<128xf32>
    %181 = vector.shape_cast %180 : vector<128xf32> to vector<1x128xf32>
    %cst_148 = arith.constant 0.000000e+00 : f32
    %182 = vector.broadcast %cst_148 : f32 to vector<1x128xf32>
    %183 = arith.addf %182, %181 : vector<1x128xf32>
    %cst_149 = arith.constant dense<0.000000e+00> : vector<128xf32>
    %184 = vector.multi_reduction <add>, %177, %cst_149 [0] : vector<6x128xf32> to vector<128xf32>
    %185 = vector.shape_cast %184 : vector<128xf32> to vector<1x128xf32>
    %186 = arith.addf %183, %185 : vector<1x128xf32>
    %187 = arith.mulf %147, %147 : vector<6x128xf32>
    %cst_150 = arith.constant dense<0.000000e+00> : vector<128xf32>
    %188 = vector.multi_reduction <add>, %187, %cst_150 [0] : vector<6x128xf32> to vector<128xf32>
    %189 = vector.shape_cast %188 : vector<128xf32> to vector<1x128xf32>
    %cst_151 = arith.constant 0.000000e+00 : f32
    %190 = vector.broadcast %cst_151 : f32 to vector<1x128xf32>
    %191 = arith.addf %190, %189 : vector<1x128xf32>
    %192 = arith.mulf %177, %177 : vector<6x128xf32>
    %cst_152 = arith.constant dense<0.000000e+00> : vector<128xf32>
    %193 = vector.multi_reduction <add>, %192, %cst_152 [0] : vector<6x128xf32> to vector<128xf32>
    %194 = vector.shape_cast %193 : vector<128xf32> to vector<1x128xf32>
    %195 = arith.addf %191, %194 : vector<1x128xf32>
    %cst_153 = arith.constant 0.0833333358 : f32
    %196 = vector.broadcast %cst_153 : f32 to vector<1x128xf32>
    %197 = arith.mulf %186, %196 : vector<1x128xf32>
    %cst_154 = arith.constant 0.0833333358 : f32
    %198 = vector.broadcast %cst_154 : f32 to vector<1x128xf32>
    %199 = arith.mulf %195, %198 : vector<1x128xf32>
    %200 = arith.mulf %197, %197 : vector<1x128xf32>
    %201 = arith.subf %199, %200 : vector<1x128xf32>
    %cst_155 = arith.constant 9.99999974E-6 : f32
    %202 = vector.broadcast %cst_155 : f32 to vector<1x128xf32>
    %203 = arith.addf %201, %202 : vector<1x128xf32>
    %204 = math.rsqrt %203 : vector<1x128xf32>
    %205 = arith.mulf %204, %178 : vector<1x128xf32>
    %206 = arith.mulf %197, %205 : vector<1x128xf32>
    %207 = arith.subf %179, %206 : vector<1x128xf32>
    %208 = vector.broadcast %205 : vector<1x128xf32> to vector<6x128xf32>
    %209 = arith.mulf %147, %208 : vector<6x128xf32>
    %210 = vector.broadcast %207 : vector<1x128xf32> to vector<6x128xf32>
    %211 = arith.addf %209, %210 : vector<6x128xf32>
    %cst_156 = arith.constant 0.000000e+00 : f32
    %212 = vector.broadcast %cst_156 : f32 to vector<6x128xf32>
    %213 = arith.maximumf %211, %212 : vector<6x128xf32>
    %214 = vector.broadcast %205 : vector<1x128xf32> to vector<6x128xf32>
    %215 = arith.mulf %177, %214 : vector<6x128xf32>
    %216 = vector.broadcast %207 : vector<1x128xf32> to vector<6x128xf32>
    %217 = arith.addf %215, %216 : vector<6x128xf32>
    %cst_157 = arith.constant 0.000000e+00 : f32
    %218 = vector.broadcast %cst_157 : f32 to vector<6x128xf32>
    %219 = arith.maximumf %217, %218 : vector<6x128xf32>
    %c0_158 = arith.constant 0 : index
    %c0_159 = arith.constant 0 : index
    %220 = vector.load %arg17[%c0_158, %c0_159] : memref<20x128xf32, #tpu.memory_space<vmem>>, vector<6x128xf32>
    tpu.vector_store %arg17[%c0_158, %c0_159], %213 {strides = array<i32>} : memref<20x128xf32, #tpu.memory_space<vmem>>, vector<6x128xf32>,
    %c0_160 = arith.constant 0 : index
    %c0_161 = arith.constant 0 : index
    %221 = tpu.strided_load %arg17[%c0_160, %c0_161] {strides = array<i32: 2, 1>} : memref<20x128xf32, #tpu.memory_space<vmem>>, vector<3x128xf32>
    %c1_162 = arith.constant 1 : index
    %c0_163 = arith.constant 0 : index
    %222 = tpu.strided_load %arg17[%c1_162, %c0_163] {strides = array<i32: 2, 1>} : memref<20x128xf32, #tpu.memory_space<vmem>>, vector<3x128xf32>
    %223 = arith.maximumf %221, %222 : vector<3x128xf32>
    %c0_164 = arith.constant 0 : index
    %c0_165 = arith.constant 0 : index
    %224 = vector.load %arg17[%c0_164, %c0_165] : memref<20x128xf32, #tpu.memory_space<vmem>>, vector<6x128xf32>
    tpu.vector_store %arg17[%c0_164, %c0_165], %219 {strides = array<i32>} : memref<20x128xf32, #tpu.memory_space<vmem>>, vector<6x128xf32>,
    %c0_166 = arith.constant 0 : index
    %c0_167 = arith.constant 0 : index
    %225 = tpu.strided_load %arg17[%c0_166, %c0_167] {strides = array<i32: 2, 1>} : memref<20x128xf32, #tpu.memory_space<vmem>>, vector<3x128xf32>
    %c1_168 = arith.constant 1 : index
    %c0_169 = arith.constant 0 : index
    %226 = tpu.strided_load %arg17[%c1_168, %c0_169] {strides = array<i32: 2, 1>} : memref<20x128xf32, #tpu.memory_space<vmem>>, vector<3x128xf32>
    %227 = arith.maximumf %225, %226 : vector<3x128xf32>
    %228 = tpu.iota {dimensions = array<i32: 0>} : vector<3x1xi32>
    %c0_i32 = arith.constant 0 : i32
    %229 = vector.broadcast %c0_i32 : i32 to vector<3x1xi32>
    %230 = arith.cmpi sgt, %228, %229 : vector<3x1xi32>
    %231 = arith.extui %230 : vector<3x1xi1> to vector<3x1xi32>
    %232 = arith.sitofp %231 : vector<3x1xi32> to vector<3x1xf32>
    %cst_170 = arith.constant 1.000000e+00 : f32
    %233 = vector.broadcast %cst_170 : f32 to vector<3x1xf32>
    %234 = arith.addf %233, %232 : vector<3x1xf32>
    %c2_i32 = arith.constant 2 : i32
    %235 = vector.broadcast %c2_i32 : i32 to vector<3x1xi32>
    %236 = arith.cmpi slt, %228, %235 : vector<3x1xi32>
    %237 = arith.extui %236 : vector<3x1xi1> to vector<3x1xi32>
    %238 = arith.sitofp %237 : vector<3x1xi32> to vector<3x1xf32>
    %239 = arith.addf %234, %238 : vector<3x1xf32>
    %cst_171 = arith.constant 1.000000e+00 : f32
    %240 = vector.broadcast %cst_171 : f32 to vector<3x1xf32>
    %241 = arith.divf %240, %239 : vector<3x1xf32>
    %242 = arith.truncf %223 : vector<3x128xf32> to vector<3x128xbf16>
    %c0_172 = arith.constant 0 : index
    %c0_173 = arith.constant 0 : index
    %243 = vector.load %arg10[%c0_172, %c0_173] : memref<128x128xbf16, #tpu.memory_space<vmem>>, vector<128x128xbf16>
    %cst_174 = arith.constant dense<0.000000e+00> : vector<3x128xf32>
    %244 = tpu.matmul %242, %243, %cst_174 {dimension_numbers = #tpu.dot_dimension_numbers<[1], [0], [0], [1], [0, 0, 1, 1], [], []>} : vector<3x128xbf16>, vector<128x128xbf16>, vector<3x128xf32> -> vector<3x128xf32>
    %cst_175 = arith.constant 0.000000e+00 : f32
    %245 = vector.broadcast %cst_175 : f32 to vector<1x128xf32>
    %246 = vector.extract_strided_slice %244 {offsets = [0, 0], sizes = [2, 128], strides = [1, 1]} : vector<3x128xf32> to vector<2x128xf32>
    %247 = tpu.concatenate %245, %246 in 0 : vector<1x128xf32>, vector<2x128xf32> -> vector<3x128xf32>
    %248 = vector.extract_strided_slice %244 {offsets = [1, 0], sizes = [2, 128], strides = [1, 1]} : vector<3x128xf32> to vector<2x128xf32>
    %cst_176 = arith.constant 0.000000e+00 : f32
    %249 = vector.broadcast %cst_176 : f32 to vector<1x128xf32>
    %250 = tpu.concatenate %248, %249 in 0 : vector<2x128xf32>, vector<1x128xf32> -> vector<3x128xf32>
    %251 = arith.addf %244, %247 : vector<3x128xf32>
    %252 = arith.addf %251, %250 : vector<3x128xf32>
    %253 = vector.broadcast %241 : vector<3x1xf32> to vector<3x128xf32>
    %254 = arith.mulf %252, %253 : vector<3x128xf32>
    %c0_177 = arith.constant 0 : index
    %c0_178 = arith.constant 0 : index
    %255 = vector.load %arg11[%c0_177, %c0_178] : memref<1x128xf32, #tpu.memory_space<vmem>>, vector<1x128xf32>
    %256 = vector.broadcast %255 : vector<1x128xf32> to vector<3x128xf32>
    %257 = arith.addf %254, %256 : vector<3x128xf32>
    %258 = arith.truncf %227 : vector<3x128xf32> to vector<3x128xbf16>
    %c0_179 = arith.constant 0 : index
    %c0_180 = arith.constant 0 : index
    %259 = vector.load %arg10[%c0_179, %c0_180] : memref<128x128xbf16, #tpu.memory_space<vmem>>, vector<128x128xbf16>
    %cst_181 = arith.constant dense<0.000000e+00> : vector<3x128xf32>
    %260 = tpu.matmul %258, %259, %cst_181 {dimension_numbers = #tpu.dot_dimension_numbers<[1], [0], [0], [1], [0, 0, 1, 1], [], []>} : vector<3x128xbf16>, vector<128x128xbf16>, vector<3x128xf32> -> vector<3x128xf32>
    %cst_182 = arith.constant 0.000000e+00 : f32
    %261 = vector.broadcast %cst_182 : f32 to vector<1x128xf32>
    %262 = vector.extract_strided_slice %260 {offsets = [0, 0], sizes = [2, 128], strides = [1, 1]} : vector<3x128xf32> to vector<2x128xf32>
    %263 = tpu.concatenate %261, %262 in 0 : vector<1x128xf32>, vector<2x128xf32> -> vector<3x128xf32>
    %264 = vector.extract_strided_slice %260 {offsets = [1, 0], sizes = [2, 128], strides = [1, 1]} : vector<3x128xf32> to vector<2x128xf32>
    %cst_183 = arith.constant 0.000000e+00 : f32
    %265 = vector.broadcast %cst_183 : f32 to vector<1x128xf32>
    %266 = tpu.concatenate %264, %265 in 0 : vector<2x128xf32>, vector<1x128xf32> -> vector<3x128xf32>
    %267 = arith.addf %260, %263 : vector<3x128xf32>
    %268 = arith.addf %267, %266 : vector<3x128xf32>
    %269 = vector.broadcast %241 : vector<3x1xf32> to vector<3x128xf32>
    %270 = arith.mulf %268, %269 : vector<3x128xf32>
    %c0_184 = arith.constant 0 : index
    %c0_185 = arith.constant 0 : index
    %271 = vector.load %arg11[%c0_184, %c0_185] : memref<1x128xf32, #tpu.memory_space<vmem>>, vector<1x128xf32>
    %272 = vector.broadcast %271 : vector<1x128xf32> to vector<3x128xf32>
    %273 = arith.addf %270, %272 : vector<3x128xf32>
    %c0_186 = arith.constant 0 : index
    %c0_187 = arith.constant 0 : index
    %274 = vector.load %arg12[%c0_186, %c0_187] : memref<1x128xf32, #tpu.memory_space<vmem>>, vector<1x128xf32>
    %c0_188 = arith.constant 0 : index
    %c0_189 = arith.constant 0 : index
    %275 = vector.load %arg13[%c0_188, %c0_189] : memref<1x128xf32, #tpu.memory_space<vmem>>, vector<1x128xf32>
    %cst_190 = arith.constant dense<0.000000e+00> : vector<128xf32>
    %276 = vector.multi_reduction <add>, %257, %cst_190 [0] : vector<3x128xf32> to vector<128xf32>
    %277 = vector.shape_cast %276 : vector<128xf32> to vector<1x128xf32>
    %cst_191 = arith.constant 0.000000e+00 : f32
    %278 = vector.broadcast %cst_191 : f32 to vector<1x128xf32>
    %279 = arith.addf %278, %277 : vector<1x128xf32>
    %cst_192 = arith.constant dense<0.000000e+00> : vector<128xf32>
    %280 = vector.multi_reduction <add>, %273, %cst_192 [0] : vector<3x128xf32> to vector<128xf32>
    %281 = vector.shape_cast %280 : vector<128xf32> to vector<1x128xf32>
    %282 = arith.addf %279, %281 : vector<1x128xf32>
    %283 = arith.mulf %257, %257 : vector<3x128xf32>
    %cst_193 = arith.constant dense<0.000000e+00> : vector<128xf32>
    %284 = vector.multi_reduction <add>, %283, %cst_193 [0] : vector<3x128xf32> to vector<128xf32>
    %285 = vector.shape_cast %284 : vector<128xf32> to vector<1x128xf32>
    %cst_194 = arith.constant 0.000000e+00 : f32
    %286 = vector.broadcast %cst_194 : f32 to vector<1x128xf32>
    %287 = arith.addf %286, %285 : vector<1x128xf32>
    %288 = arith.mulf %273, %273 : vector<3x128xf32>
    %cst_195 = arith.constant dense<0.000000e+00> : vector<128xf32>
    %289 = vector.multi_reduction <add>, %288, %cst_195 [0] : vector<3x128xf32> to vector<128xf32>
    %290 = vector.shape_cast %289 : vector<128xf32> to vector<1x128xf32>
    %291 = arith.addf %287, %290 : vector<1x128xf32>
    %cst_196 = arith.constant 0.166666672 : f32
    %292 = vector.broadcast %cst_196 : f32 to vector<1x128xf32>
    %293 = arith.mulf %282, %292 : vector<1x128xf32>
    %cst_197 = arith.constant 0.166666672 : f32
    %294 = vector.broadcast %cst_197 : f32 to vector<1x128xf32>
    %295 = arith.mulf %291, %294 : vector<1x128xf32>
    %296 = arith.mulf %293, %293 : vector<1x128xf32>
    %297 = arith.subf %295, %296 : vector<1x128xf32>
    %cst_198 = arith.constant 9.99999974E-6 : f32
    %298 = vector.broadcast %cst_198 : f32 to vector<1x128xf32>
    %299 = arith.addf %297, %298 : vector<1x128xf32>
    %300 = math.rsqrt %299 : vector<1x128xf32>
    %301 = arith.mulf %300, %274 : vector<1x128xf32>
    %302 = arith.mulf %293, %301 : vector<1x128xf32>
    %303 = arith.subf %275, %302 : vector<1x128xf32>
    %304 = vector.broadcast %301 : vector<1x128xf32> to vector<3x128xf32>
    %305 = arith.mulf %257, %304 : vector<3x128xf32>
    %306 = vector.broadcast %303 : vector<1x128xf32> to vector<3x128xf32>
    %307 = arith.addf %305, %306 : vector<3x128xf32>
    %cst_199 = arith.constant 0.000000e+00 : f32
    %308 = vector.broadcast %cst_199 : f32 to vector<3x128xf32>
    %309 = arith.maximumf %307, %308 : vector<3x128xf32>
    %310 = vector.broadcast %301 : vector<1x128xf32> to vector<3x128xf32>
    %311 = arith.mulf %273, %310 : vector<3x128xf32>
    %312 = vector.broadcast %303 : vector<1x128xf32> to vector<3x128xf32>
    %313 = arith.addf %311, %312 : vector<3x128xf32>
    %cst_200 = arith.constant 0.000000e+00 : f32
    %314 = vector.broadcast %cst_200 : f32 to vector<3x128xf32>
    %315 = arith.maximumf %313, %314 : vector<3x128xf32>
    %316 = arith.truncf %309 : vector<3x128xf32> to vector<3x128xbf16>
    %c0_201 = arith.constant 0 : index
    %c0_202 = arith.constant 0 : index
    %317 = vector.load %arg14[%c0_201, %c0_202] : memref<128x128xbf16, #tpu.memory_space<vmem>>, vector<128x128xbf16>
    %cst_203 = arith.constant dense<0.000000e+00> : vector<3x128xf32>
    %318 = tpu.matmul %316, %317, %cst_203 {dimension_numbers = #tpu.dot_dimension_numbers<[1], [0], [0], [1], [0, 0, 1, 1], [], []>} : vector<3x128xbf16>, vector<128x128xbf16>, vector<3x128xf32> -> vector<3x128xf32>
    %c0_204 = arith.constant 0 : index
    %c0_205 = arith.constant 0 : index
    %319 = vector.load %arg15[%c0_204, %c0_205] : memref<1x128xf32, #tpu.memory_space<vmem>>, vector<1x128xf32>
    %320 = vector.broadcast %319 : vector<1x128xf32> to vector<3x128xf32>
    %321 = arith.addf %318, %320 : vector<3x128xf32>
    %c0_206 = arith.constant 0 : index
    %c0_207 = arith.constant 0 : index
    %c0_208 = arith.constant 0 : index
    %322 = vector.load %arg16[%c0_206, %c0_207, %c0_208] : memref<2x3x128xf32, #tpu.memory_space<vmem>>, vector<1x3x128xf32>
    %323 = vector.shape_cast %322 : vector<1x3x128xf32> to vector<3x128xf32>
    %324 = vector.shape_cast %321 : vector<3x128xf32> to vector<1x3x128xf32>
    tpu.vector_store %arg16[%c0_206, %c0_207, %c0_208], %324 {strides = array<i32>} : memref<2x3x128xf32, #tpu.memory_space<vmem>>, vector<1x3x128xf32>,
    %325 = arith.truncf %315 : vector<3x128xf32> to vector<3x128xbf16>
    %c0_209 = arith.constant 0 : index
    %c0_210 = arith.constant 0 : index
    %326 = vector.load %arg14[%c0_209, %c0_210] : memref<128x128xbf16, #tpu.memory_space<vmem>>, vector<128x128xbf16>
    %cst_211 = arith.constant dense<0.000000e+00> : vector<3x128xf32>
    %327 = tpu.matmul %325, %326, %cst_211 {dimension_numbers = #tpu.dot_dimension_numbers<[1], [0], [0], [1], [0, 0, 1, 1], [], []>} : vector<3x128xbf16>, vector<128x128xbf16>, vector<3x128xf32> -> vector<3x128xf32>
    %c0_212 = arith.constant 0 : index
    %c0_213 = arith.constant 0 : index
    %328 = vector.load %arg15[%c0_212, %c0_213] : memref<1x128xf32, #tpu.memory_space<vmem>>, vector<1x128xf32>
    %329 = vector.broadcast %328 : vector<1x128xf32> to vector<3x128xf32>
    %330 = arith.addf %327, %329 : vector<3x128xf32>
    %c1_214 = arith.constant 1 : index
    %c0_215 = arith.constant 0 : index
    %c0_216 = arith.constant 0 : index
    %331 = vector.load %arg16[%c1_214, %c0_215, %c0_216] : memref<2x3x128xf32, #tpu.memory_space<vmem>>, vector<1x3x128xf32>
    %332 = vector.shape_cast %331 : vector<1x3x128xf32> to vector<3x128xf32>
    %333 = vector.shape_cast %330 : vector<3x128xf32> to vector<1x3x128xf32>
    tpu.vector_store %arg16[%c1_214, %c0_215, %c0_216], %333 {strides = array<i32>} : memref<2x3x128xf32, #tpu.memory_space<vmem>>, vector<1x3x128xf32>,
    return
  }
  func.func @transform_0(%arg0: i32) -> (i32, i32, i32) {
    %c0_i32 = arith.constant 0 : i32
    %c0_i32_0 = arith.constant 0 : i32
    %c0_i32_1 = arith.constant 0 : i32
    %c0_i32_2 = arith.constant 0 : i32
    return %c0_i32, %c0_i32_0, %c0_i32_1 : i32, i32, i32
  }
  func.func @transform_1(%arg0: i32) -> (i32, i32, i32) {
    %c0_i32 = arith.constant 0 : i32
    %c0_i32_0 = arith.constant 0 : i32
    %c0_i32_1 = arith.constant 0 : i32
    %c0_i32_2 = arith.constant 0 : i32
    return %c0_i32, %c0_i32_0, %c0_i32_1 : i32, i32, i32
  }
  func.func @transform_2(%arg0: i32) -> (i32, i32) {
    %c0_i32 = arith.constant 0 : i32
    %c0_i32_0 = arith.constant 0 : i32
    %c0_i32_1 = arith.constant 0 : i32
    return %c0_i32, %c0_i32_0 : i32, i32
  }
  func.func @transform_3(%arg0: i32) -> (i32, i32) {
    %c0_i32 = arith.constant 0 : i32
    %c0_i32_0 = arith.constant 0 : i32
    %c0_i32_1 = arith.constant 0 : i32
    return %c0_i32, %c0_i32_0 : i32, i32
  }
  func.func @transform_4(%arg0: i32) -> (i32, i32) {
    %c0_i32 = arith.constant 0 : i32
    %c0_i32_0 = arith.constant 0 : i32
    %c0_i32_1 = arith.constant 0 : i32
    return %c0_i32, %c0_i32_0 : i32, i32
  }
  func.func @transform_5(%arg0: i32) -> (i32, i32, i32) {
    %c0_i32 = arith.constant 0 : i32
    %c0_i32_0 = arith.constant 0 : i32
    %c0_i32_1 = arith.constant 0 : i32
    %c0_i32_2 = arith.constant 0 : i32
    return %c0_i32, %c0_i32_0, %c0_i32_1 : i32, i32, i32
  }
  func.func @transform_6(%arg0: i32) -> (i32, i32) {
    %c0_i32 = arith.constant 0 : i32
    %c0_i32_0 = arith.constant 0 : i32
    %c0_i32_1 = arith.constant 0 : i32
    return %c0_i32, %c0_i32_0 : i32, i32
  }
  func.func @transform_7(%arg0: i32) -> (i32, i32) {
    %c0_i32 = arith.constant 0 : i32
    %c0_i32_0 = arith.constant 0 : i32
    %c0_i32_1 = arith.constant 0 : i32
    return %c0_i32, %c0_i32_0 : i32, i32
  }
  func.func @transform_8(%arg0: i32) -> (i32, i32) {
    %c0_i32 = arith.constant 0 : i32
    %c0_i32_0 = arith.constant 0 : i32
    %c0_i32_1 = arith.constant 0 : i32
    return %c0_i32, %c0_i32_0 : i32, i32
  }
  func.func @transform_9(%arg0: i32) -> (i32, i32) {
    %c0_i32 = arith.constant 0 : i32
    %c0_i32_0 = arith.constant 0 : i32
    %c0_i32_1 = arith.constant 0 : i32
    return %c0_i32, %c0_i32_0 : i32, i32
  }
  func.func @transform_10(%arg0: i32) -> (i32, i32) {
    %c0_i32 = arith.constant 0 : i32
    %c0_i32_0 = arith.constant 0 : i32
    %c0_i32_1 = arith.constant 0 : i32
    return %c0_i32, %c0_i32_0 : i32, i32
  }
  func.func @transform_11(%arg0: i32) -> (i32, i32) {
    %c0_i32 = arith.constant 0 : i32
    %c0_i32_0 = arith.constant 0 : i32
    %c0_i32_1 = arith.constant 0 : i32
    return %c0_i32, %c0_i32_0 : i32, i32
  }
  func.func @transform_12(%arg0: i32) -> (i32, i32) {
    %c0_i32 = arith.constant 0 : i32
    %c0_i32_0 = arith.constant 0 : i32
    %c0_i32_1 = arith.constant 0 : i32
    return %c0_i32, %c0_i32_0 : i32, i32
  }
  func.func @transform_13(%arg0: i32) -> (i32, i32) {
    %c0_i32 = arith.constant 0 : i32
    %c0_i32_0 = arith.constant 0 : i32
    %c0_i32_1 = arith.constant 0 : i32
    return %c0_i32, %c0_i32_0 : i32, i32
  }
  func.func @transform_14(%arg0: i32) -> (i32, i32) {
    %c0_i32 = arith.constant 0 : i32
    %c0_i32_0 = arith.constant 0 : i32
    %c0_i32_1 = arith.constant 0 : i32
    return %c0_i32, %c0_i32_0 : i32, i32
  }
  func.func @transform_15(%arg0: i32) -> (i32, i32, i32) {
    %c0_i32 = arith.constant 0 : i32
    %c0_i32_0 = arith.constant 0 : i32
    %c0_i32_1 = arith.constant 0 : i32
    %c0_i32_2 = arith.constant 0 : i32
    return %c0_i32, %c0_i32_0, %c0_i32_1 : i32, i32, i32
  }
}

</mosaic_0001>

<llo_original>
// kernel: combined_model_tconv_forward.2
$region0: #{combined_model_tconv_forward.2}
  #allocation0 [shape = 'u32[]', space=smem, size = 0x4, offset = 0x4, fixed_abs, tag = 'smem constant byte address 0x4 - core index']
  #allocation1 [shape = 'u32[144,128]{1,0:T(1,128)}', space=vmem, size = 0x12000, scoped, tag = 'internal scratch']
  %s0 = inlined_call_operand.vmem [shape: bf16[3072,32], index: 0, kind: input, shape index: {}]
  %s1 = inlined_call_operand.vmem [shape: bf16[32,128], index: 1, kind: input, shape index: {}]
  %s2 = inlined_call_operand.vmem [shape: f32[1,128], index: 2, kind: input, shape index: {}]
  %s3 = inlined_call_operand.vmem [shape: bf16[128,512], index: 3, kind: input, shape index: {}]
  %s4 = inlined_call_operand.vmem [shape: f32[1,512], index: 4, kind: input, shape index: {}]
  %s5 = inlined_call_operand.vmem [shape: bf16[48,512], index: 5, kind: output, shape index: {}]
  %s6 = sld [smem:[#allocation0]]
  $region53: #{combined_model_tconv_forward.2} parent=0
    _
  %s8 = ssub.s32 1, %s6
  %s9 = scalar_select 0, %s8, %s6
  loop: start=0, step=1, limit=4
  $region2: #{combined_model_tconv_forward.2} parent=0 // loop_pre_header
    _
  $region3: #{combined_model_tconv_forward.2} parent=0 // loop_header
    %s11 = sphi 0, %s15
    %p12 = scmp.ge.s32.totalorder %s11, 4
    %s21 = sphi 0, %s23
    %s24 = sphi 0, %s21
    %s25 = sphi 0, %s24
    %s41 = sphi 0, %s25
    %s45 = sphi 0, %s45
    %s47 = sphi 0, %s45
    %s48 = sphi 0, %s47
    %s62 = sphi 0, %s48
    %s66 = sphi 0, %s66
    %s68 = sphi 0, %s66
    %s69 = sphi 0, %s68
    %s83 = sphi 0, %s69
    %s87 = sphi 0, %s87
    %s89 = sphi 0, %s87
    %s90 = sphi 0, %s89
    %s104 = sphi 0, %s90
    %s108 = sphi 0, %s108
    %s110 = sphi 0, %s108
    %s111 = sphi 0, %s110
    %s125 = sphi 0, %s111
    %s131 = sphi 0, %s133
    %s134 = sphi 0, %s131
    %s135 = sphi 0, %s134
    %s151 = sphi 0, %s135
  $region4: #{combined_model_tconv_forward.2} parent=0 // loop_header_branch
    %14 = sbr.rel (%p12) target = $region8
  $region5: #{combined_model_tconv_forward.2} parent=0 // loop_body
    %s16 = ssub.s32 %s11, 1
    %s17 = ssub.s32 %s11, 2
    %s18 = sadd.s32 %s11, 1
    %s19 = ssub.s32 %s11, %s18
    %p20 = scmp.eq.s32.totalorder %s19, 0
    %s22 = sadd.s32 %s21, 1
    %s23 = scalar_select %p20, %s21, %s22
    %p26 = pneg %p20
    %p27 = scmp.eq.s32.totalorder %s11, 1
    %p28 = por %p26, %p27
    %p29 = scmp.ne.s32.totalorder %s21, %s24
    %p30 = scmp.eq.s32.totalorder %s11, 0
    %p31 = por %p29, %p30
    %p32 = scmp.ne.s32.totalorder %s21, %s24
    %p33 = scmp.eq.s32.totalorder %s16, 1
    %p34 = por %p32, %p33
    %p35 = scmp.ne.s32.totalorder %s24, %s25
    %p36 = scmp.eq.s32.totalorder %s16, 0
    %p37 = por %p35, %p36
    %p38 = scmp.ne.s32.totalorder %s24, %s25
    %p39 = scmp.eq.s32.totalorder %s17, 1
    %p40 = por %p38, %p39
    %p42 = scmp.ne.s32.totalorder %s25, %s41
    %p43 = scmp.eq.s32.totalorder %s17, 0
    %p44 = por %p42, %p43
    %s46 = sadd.s32 %s45, 1
    %p49 = scmp.eq.s32.totalorder %s11, 1
    %p50 = scmp.ne.s32.totalorder %s45, %s47
    %p51 = scmp.eq.s32.totalorder %s11, 0
    %p52 = por %p50, %p51
    %p53 = scmp.ne.s32.totalorder %s45, %s47
    %p54 = scmp.eq.s32.totalorder %s16, 1
    %p55 = por %p53, %p54
    %p56 = scmp.ne.s32.totalorder %s47, %s48
    %p57 = scmp.eq.s32.totalorder %s16, 0
    %p58 = por %p56, %p57
    %p59 = scmp.ne.s32.totalorder %s47, %s48
    %p60 = scmp.eq.s32.totalorder %s17, 1
    %p61 = por %p59, %p60
    %p63 = scmp.ne.s32.totalorder %s48, %s62
    %p64 = scmp.eq.s32.totalorder %s17, 0
    %p65 = por %p63, %p64
    %s67 = sadd.s32 %s66, 1
    %p70 = scmp.eq.s32.totalorder %s11, 1
    %p71 = scmp.ne.s32.totalorder %s66, %s68
    %p72 = scmp.eq.s32.totalorder %s11, 0
    %p73 = por %p71, %p72
    %p74 = scmp.ne.s32.totalorder %s66, %s68
    %p75 = scmp.eq.s32.totalorder %s16, 1
    %p76 = por %p74, %p75
    %p77 = scmp.ne.s32.totalorder %s68, %s69
    %p78 = scmp.eq.s32.totalorder %s16, 0
    %p79 = por %p77, %p78
    %p80 = scmp.ne.s32.totalorder %s68, %s69
    %p81 = scmp.eq.s32.totalorder %s17, 1
    %p82 = por %p80, %p81
    %p84 = scmp.ne.s32.totalorder %s69, %s83
    %p85 = scmp.eq.s32.totalorder %s17, 0
    %p86 = por %p84, %p85
    %s88 = sadd.s32 %s87, 1
    %p91 = scmp.eq.s32.totalorder %s11, 1
    %p92 = scmp.ne.s32.totalorder %s87, %s89
    %p93 = scmp.eq.s32.totalorder %s11, 0
    %p94 = por %p92, %p93
    %p95 = scmp.ne.s32.totalorder %s87, %s89
    %p96 = scmp.eq.s32.totalorder %s16, 1
    %p97 = por %p95, %p96
    %p98 = scmp.ne.s32.totalorder %s89, %s90
    %p99 = scmp.eq.s32.totalorder %s16, 0
    %p100 = por %p98, %p99
    %p101 = scmp.ne.s32.totalorder %s89, %s90
    %p102 = scmp.eq.s32.totalorder %s17, 1
    %p103 = por %p101, %p102
    %p105 = scmp.ne.s32.totalorder %s90, %s104
    %p106 = scmp.eq.s32.totalorder %s17, 0
    %p107 = por %p105, %p106
    %s109 = sadd.s32 %s108, 1
    %p112 = scmp.eq.s32.totalorder %s11, 1
    %p113 = scmp.ne.s32.totalorder %s108, %s110
    %p114 = scmp.eq.s32.totalorder %s11, 0
    %p115 = por %p113, %p114
    %p116 = scmp.ne.s32.totalorder %s108, %s110
    %p117 = scmp.eq.s32.totalorder %s16, 1
    %p118 = por %p116, %p117
    %p119 = scmp.ne.s32.totalorder %s110, %s111
    %p120 = scmp.eq.s32.totalorder %s16, 0
    %p121 = por %p119, %p120
    %p122 = scmp.ne.s32.totalorder %s110, %s111
    %p123 = scmp.eq.s32.totalorder %s17, 1
    %p124 = por %p122, %p123
    %p126 = scmp.ne.s32.totalorder %s111, %s125
    %p127 = scmp.eq.s32.totalorder %s17, 0
    %p128 = por %p126, %p127
    %s129 = ssub.s32 %s11, %s18
    %p130 = scmp.eq.s32.totalorder %s129, 0
    %s132 = sadd.s32 %s131, 1
    %s133 = scalar_select %p130, %s131, %s132
    %p136 = pneg %p130
    %p137 = scmp.eq.s32.totalorder %s11, 1
    %p138 = por %p136, %p137
    %p139 = scmp.ne.s32.totalorder %s131, %s134
    %p140 = scmp.eq.s32.totalorder %s11, 0
    %p141 = por %p139, %p140
    %p142 = scmp.ne.s32.totalorder %s131, %s134
    %p143 = scmp.eq.s32.totalorder %s16, 1
    %p144 = por %p142, %p143
    %p145 = scmp.ne.s32.totalorder %s134, %s135
    %p146 = scmp.eq.s32.totalorder %s16, 0
    %p147 = por %p145, %p146
    %p148 = scmp.ne.s32.totalorder %s134, %s135
    %p149 = scmp.eq.s32.totalorder %s17, 1
    %p150 = por %p148, %p149
    %p152 = scmp.ne.s32.totalorder %s135, %s151
    %p153 = scmp.eq.s32.totalorder %s17, 0
    %p154 = por %p152, %p153
    %p155 = scmp.le.s32.totalorder 1, %s11
    %p156 = scmp.lt.s32.totalorder %s11, 3
    %p157 = pnand %p155, %p156
    %p158 = pneg %p157
    // Predicated region
    $region9: #{combined_model_tconv_forward.2} parent=5 // pred_check
      _
    $region10: #{combined_model_tconv_forward.2} parent=5 // pred_check_branch
      %160 = sbr.rel (%p157) target = $region12
    $region11: #{combined_model_tconv_forward.2} parent=5 // pred_region
      %s161 = ssub.s32 %s11, 1
      // Predicated region
      $region13: #{combined_model_tconv_forward.2} parent=11 // pred_check
        %p162 = pneg %p58
      $region14: #{combined_model_tconv_forward.2} parent=11 // pred_check_branch
        %164 = sbr.rel (%p162) target = $region16
      $region15: #{combined_model_tconv_forward.2} parent=11 // pred_region
        _
      $region16: #{combined_model_tconv_forward.2} parent=11 // pred_fallthru
        _
      // Predicated region
      $region17: #{combined_model_tconv_forward.2} parent=11 // pred_check
        %p165 = pneg %p79
      $region18: #{combined_model_tconv_forward.2} parent=11 // pred_check_branch
        %167 = sbr.rel (%p165) target = $region20
      $region19: #{combined_model_tconv_forward.2} parent=11 // pred_region
        _
      $region20: #{combined_model_tconv_forward.2} parent=11 // pred_fallthru
        _
      // Predicated region
      $region21: #{combined_model_tconv_forward.2} parent=11 // pred_check
        %p168 = pneg %p100
      $region22: #{combined_model_tconv_forward.2} parent=11 // pred_check_branch
        %170 = sbr.rel (%p168) target = $region24
      $region23: #{combined_model_tconv_forward.2} parent=11 // pred_region
        _
      $region24: #{combined_model_tconv_forward.2} parent=11 // pred_fallthru
        _
      // Predicated region
      $region25: #{combined_model_tconv_forward.2} parent=11 // pred_check
        %p171 = pneg %p121
      $region26: #{combined_model_tconv_forward.2} parent=11 // pred_check_branch
        %173 = sbr.rel (%p171) target = $region28
      $region27: #{combined_model_tconv_forward.2} parent=11 // pred_region
        _
      $region28: #{combined_model_tconv_forward.2} parent=11 // pred_fallthru
        _
    $region12: #{combined_model_tconv_forward.2} parent=5 // pred_fallthru
      _
    %p174 = scmp.lt.s32.totalorder %s11, 2
    // Predicated region
    $region29: #{combined_model_tconv_forward.2} parent=5 // pred_check
      %p175 = pneg %p174
    $region30: #{combined_model_tconv_forward.2} parent=5 // pred_check_branch
      %177 = sbr.rel (%p175) target = $region32
    $region31: #{combined_model_tconv_forward.2} parent=5 // pred_region
      // Predicated region
      $region33: #{combined_model_tconv_forward.2} parent=31 // pred_check
        %p178 = pneg %p31
      $region34: #{combined_model_tconv_forward.2} parent=31 // pred_check_branch
        %180 = sbr.rel (%p178) target = $region36
      $region35: #{combined_model_tconv_forward.2} parent=31 // pred_region
        %s181 = smul.u32 192, %s11
        %p182 = scmp.lt.s32.totalorder %s181, 383
        %s183 = scalar_select %p182, %s181, 383
        %s184 = smul.addr %s183, 4
        %s185 = scalar_lea.vmem %s0, %s184
        %s186 = smul.u32 192, %s11
      $region36: #{combined_model_tconv_forward.2} parent=31 // pred_fallthru
        _
    $region32: #{combined_model_tconv_forward.2} parent=5 // pred_fallthru
      _
    %p187 = scmp.le.s32.totalorder 1, %s11
    %p188 = scmp.lt.s32.totalorder %s11, 3
    %p189 = pnand %p187, %p188
    %p190 = pneg %p189
    // Predicated region
    $region37: #{combined_model_tconv_forward.2} parent=5 // pred_check
      _
    $region38: #{combined_model_tconv_forward.2} parent=5 // pred_check_branch
      %192 = sbr.rel (%p189) target = $region40
    $region39: #{combined_model_tconv_forward.2} parent=5 // pred_region
      %s193 = ssub.s32 %s11, 1
      %s194 = smul.u32 192, %s16
      %p195 = scmp.lt.s32.totalorder %s194, 383
      %s196 = scalar_select %p195, %s194, 383
      %s197 = smul.addr %s196, 4
      %s198 = scalar_lea.vmem %s0, %s197
      %p199 = pneg %p37
      %p200 = pneg %p34
      %p201 = pneg %p58
      %p202 = pneg %p55
      %p203 = pneg %p79
      %p204 = pneg %p76
      %p205 = pneg %p100
      %p206 = pneg %p97
      %p207 = pneg %p121
      %p208 = pneg %p118
      %p209 = pneg %p147
      %p210 = pneg %p144
      %s211 = smul.u32 3, %s16
      %p212 = scmp.lt.s32.totalorder %s211, 5
      %s213 = scalar_select %p212, %s211, 5
      %s214 = smul.addr %s213, 4
      %s215 = smul.addr %s214, 4
      %s216 = scalar_lea.vmem %s5, %s215
      %s217 = smul.u32 192, %s16
      %p218 = scmp.lt.s32.totalorder %s217, 383
      %s219 = scalar_select %p218, %s217, 383
      %s220 = smul.addr %s219, 4
      %s221 = scalar_lea.vmem %s0, %s220
      %s222 = smul.u32 192, %s16
      %s223 = smul.u32 3, %s16
      %p224 = scmp.lt.s32.totalorder %s223, 5
      %s225 = scalar_select %p224, %s223, 5
      %s226 = smul.addr %s225, 4
      %s227 = smul.addr %s226, 4
      %s228 = scalar_lea.vmem %s5, %s227
      %s229 = smul.u32 3, %s16
      %v231 = vld [vmem:[%s221] sm:$0xf]
      %v232 = vld [vmem:[%s221 + $0x4] sm:$0xf]
      %v233 = vld [vmem:[%s221 + $0x8] sm:$0xf]
      %v234 = vld [vmem:[%s221 + $0xc] sm:$0xf]
      %v235 = vld [vmem:[%s221 + $0x10] sm:$0xf]
      %v236 = vld [vmem:[%s221 + $0x14] sm:$0xf]
      %v237 = vld [vmem:[%s221 + $0x18] sm:$0xf]
      %v238 = vld [vmem:[%s221 + $0x1c] sm:$0xf]
      %v239 = vld [vmem:[%s221 + $0x20] sm:$0xf]
      %v240 = vld [vmem:[%s221 + $0x24] sm:$0xf]
      %v241 = vld [vmem:[%s221 + $0x28] sm:$0xf]
      %v242 = vld [vmem:[%s221 + $0x2c] sm:$0xf]
      %v243 = vld [vmem:[%s221 + $0x30] sm:$0xf]
      %v244 = vld [vmem:[%s221 + $0x34] sm:$0xf]
      %v245 = vld [vmem:[%s221 + $0x38] sm:$0xf]
      %v246 = vld [vmem:[%s221 + $0x3c] sm:$0xf]
      %v247 = vld [vmem:[%s221 + $0x40] sm:$0xf]
      %v248 = vld [vmem:[%s221 + $0x44] sm:$0xf]
      %v249 = vld [vmem:[%s221 + $0x48] sm:$0xf]
      %v250 = vld [vmem:[%s221 + $0x4c] sm:$0xf]
      %v251 = vld [vmem:[%s221 + $0x50] sm:$0xf]
      %v252 = vld [vmem:[%s221 + $0x54] sm:$0xf]
      %v253 = vld [vmem:[%s221 + $0x58] sm:$0xf]
      %v254 = vld [vmem:[%s221 + $0x5c] sm:$0xf]
      %v255 = vld [vmem:[%s221 + $0x60] sm:$0xf]
      %v256 = vld [vmem:[%s221 + $0x64] sm:$0xf]
      %v257 = vld [vmem:[%s221 + $0x68] sm:$0xf]
      %v258 = vld [vmem:[%s221 + $0x6c] sm:$0xf]
      %v259 = vld [vmem:[%s221 + $0x70] sm:$0xf]
      %v260 = vld [vmem:[%s221 + $0x74] sm:$0xf]
      %v261 = vld [vmem:[%s221 + $0x78] sm:$0xf]
      %v262 = vld [vmem:[%s221 + $0x7c] sm:$0xf]
      %v263 = vld [vmem:[%s221 + $0x80] sm:$0xf]
      %v264 = vld [vmem:[%s221 + $0x84] sm:$0xf]
      %v265 = vld [vmem:[%s221 + $0x88] sm:$0xf]
      %v266 = vld [vmem:[%s221 + $0x8c] sm:$0xf]
      %v267 = vld [vmem:[%s221 + $0x90] sm:$0xf]
      %v268 = vld [vmem:[%s221 + $0x94] sm:$0xf]
      %v269 = vld [vmem:[%s221 + $0x98] sm:$0xf]
      %v270 = vld [vmem:[%s221 + $0x9c] sm:$0xf]
      %v271 = vld [vmem:[%s221 + $0xa0] sm:$0xf]
      %v272 = vld [vmem:[%s221 + $0xa4] sm:$0xf]
      %v273 = vld [vmem:[%s221 + $0xa8] sm:$0xf]
      %v274 = vld [vmem:[%s221 + $0xac] sm:$0xf]
      %v275 = vld [vmem:[%s221 + $0xb0] sm:$0xf]
      %v276 = vld [vmem:[%s221 + $0xb4] sm:$0xf]
      %v277 = vld [vmem:[%s221 + $0xb8] sm:$0xf]
      %v278 = vld [vmem:[%s221 + $0xbc] sm:$0xf]
      %v279 = vld [vmem:[%s221 + $0xc0] sm:$0xf]
      %v280 = vld [vmem:[%s221 + $0xc4] sm:$0xf]
      %v281 = vld [vmem:[%s221 + $0xc8] sm:$0xf]
      %v282 = vld [vmem:[%s221 + $0xcc] sm:$0xf]
      %v283 = vld [vmem:[%s221 + $0xd0] sm:$0xf]
      %v284 = vld [vmem:[%s221 + $0xd4] sm:$0xf]
      %v285 = vld [vmem:[%s221 + $0xd8] sm:$0xf]
      %v286 = vld [vmem:[%s221 + $0xdc] sm:$0xf]
      %v287 = vld [vmem:[%s221 + $0xe0] sm:$0xf]
      %v288 = vld [vmem:[%s221 + $0xe4] sm:$0xf]
      %v289 = vld [vmem:[%s221 + $0xe8] sm:$0xf]
      %v290 = vld [vmem:[%s221 + $0xec] sm:$0xf]
      %v291 = vld [vmem:[%s221 + $0xf0] sm:$0xf]
      %v292 = vld [vmem:[%s221 + $0xf4] sm:$0xf]
      %v293 = vld [vmem:[%s221 + $0xf8] sm:$0xf]
      %v294 = vld [vmem:[%s221 + $0xfc] sm:$0xf]
      %v295 = vld [vmem:[%s221 + $0x100] sm:$0xf]
      %v296 = vld [vmem:[%s221 + $0x104] sm:$0xf]
      %v297 = vld [vmem:[%s221 + $0x108] sm:$0xf]
      %v298 = vld [vmem:[%s221 + $0x10c] sm:$0xf]
      %v299 = vld [vmem:[%s221 + $0x110] sm:$0xf]
      %v300 = vld [vmem:[%s221 + $0x114] sm:$0xf]
      %v301 = vld [vmem:[%s221 + $0x118] sm:$0xf]
      %v302 = vld [vmem:[%s221 + $0x11c] sm:$0xf]
      %v303 = vld [vmem:[%s221 + $0x120] sm:$0xf]
      %v304 = vld [vmem:[%s221 + $0x124] sm:$0xf]
      %v305 = vld [vmem:[%s221 + $0x128] sm:$0xf]
      %v306 = vld [vmem:[%s221 + $0x12c] sm:$0xf]
      %v307 = vld [vmem:[%s221 + $0x130] sm:$0xf]
      %v308 = vld [vmem:[%s221 + $0x134] sm:$0xf]
      %v309 = vld [vmem:[%s221 + $0x138] sm:$0xf]
      %v310 = vld [vmem:[%s221 + $0x13c] sm:$0xf]
      %v311 = vld [vmem:[%s221 + $0x140] sm:$0xf]
      %v312 = vld [vmem:[%s221 + $0x144] sm:$0xf]
      %v313 = vld [vmem:[%s221 + $0x148] sm:$0xf]
      %v314 = vld [vmem:[%s221 + $0x14c] sm:$0xf]
      %v315 = vld [vmem:[%s221 + $0x150] sm:$0xf]
      %v316 = vld [vmem:[%s221 + $0x154] sm:$0xf]
      %v317 = vld [vmem:[%s221 + $0x158] sm:$0xf]
      %v318 = vld [vmem:[%s221 + $0x15c] sm:$0xf]
      %v319 = vld [vmem:[%s221 + $0x160] sm:$0xf]
      %v320 = vld [vmem:[%s221 + $0x164] sm:$0xf]
      %v321 = vld [vmem:[%s221 + $0x168] sm:$0xf]
      %v322 = vld [vmem:[%s221 + $0x16c] sm:$0xf]
      %v323 = vld [vmem:[%s221 + $0x170] sm:$0xf]
      %v324 = vld [vmem:[%s221 + $0x174] sm:$0xf]
      %v325 = vld [vmem:[%s221 + $0x178] sm:$0xf]
      %v326 = vld [vmem:[%s221 + $0x17c] sm:$0xf]
      %v327 = vld [vmem:[%s221 + $0x180] sm:$0xf]
      %v328 = vld [vmem:[%s221 + $0x184] sm:$0xf]
      %v329 = vld [vmem:[%s221 + $0x188] sm:$0xf]
      %v330 = vld [vmem:[%s221 + $0x18c] sm:$0xf]
      %v331 = vld [vmem:[%s221 + $0x190] sm:$0xf]
      %v332 = vld [vmem:[%s221 + $0x194] sm:$0xf]
      %v333 = vld [vmem:[%s221 + $0x198] sm:$0xf]
      %v334 = vld [vmem:[%s221 + $0x19c] sm:$0xf]
      %v335 = vld [vmem:[%s221 + $0x1a0] sm:$0xf]
      %v336 = vld [vmem:[%s221 + $0x1a4] sm:$0xf]
      %v337 = vld [vmem:[%s221 + $0x1a8] sm:$0xf]
      %v338 = vld [vmem:[%s221 + $0x1ac] sm:$0xf]
      %v339 = vld [vmem:[%s221 + $0x1b0] sm:$0xf]
      %v340 = vld [vmem:[%s221 + $0x1b4] sm:$0xf]
      %v341 = vld [vmem:[%s221 + $0x1b8] sm:$0xf]
      %v342 = vld [vmem:[%s221 + $0x1bc] sm:$0xf]
      %v343 = vld [vmem:[%s221 + $0x1c0] sm:$0xf]
      %v344 = vld [vmem:[%s221 + $0x1c4] sm:$0xf]
      %v345 = vld [vmem:[%s221 + $0x1c8] sm:$0xf]
      %v346 = vld [vmem:[%s221 + $0x1cc] sm:$0xf]
      %v347 = vld [vmem:[%s221 + $0x1d0] sm:$0xf]
      %v348 = vld [vmem:[%s221 + $0x1d4] sm:$0xf]
      %v349 = vld [vmem:[%s221 + $0x1d8] sm:$0xf]
      %v350 = vld [vmem:[%s221 + $0x1dc] sm:$0xf]
      %v351 = vld [vmem:[%s221 + $0x1e0] sm:$0xf]
      %v352 = vld [vmem:[%s221 + $0x1e4] sm:$0xf]
      %v353 = vld [vmem:[%s221 + $0x1e8] sm:$0xf]
      %v354 = vld [vmem:[%s221 + $0x1ec] sm:$0xf]
      %v355 = vld [vmem:[%s221 + $0x1f0] sm:$0xf]
      %v356 = vld [vmem:[%s221 + $0x1f4] sm:$0xf]
      %v357 = vld [vmem:[%s221 + $0x1f8] sm:$0xf]
      %v358 = vld [vmem:[%s221 + $0x1fc] sm:$0xf]
      %v359 = vld [vmem:[%s221 + $0x200] sm:$0xf]
      %v360 = vld [vmem:[%s221 + $0x204] sm:$0xf]
      %v361 = vld [vmem:[%s221 + $0x208] sm:$0xf]
      %v362 = vld [vmem:[%s221 + $0x20c] sm:$0xf]
      %v363 = vld [vmem:[%s221 + $0x210] sm:$0xf]
      %v364 = vld [vmem:[%s221 + $0x214] sm:$0xf]
      %v365 = vld [vmem:[%s221 + $0x218] sm:$0xf]
      %v366 = vld [vmem:[%s221 + $0x21c] sm:$0xf]
      %v367 = vld [vmem:[%s221 + $0x220] sm:$0xf]
      %v368 = vld [vmem:[%s221 + $0x224] sm:$0xf]
      %v369 = vld [vmem:[%s221 + $0x228] sm:$0xf]
      %v370 = vld [vmem:[%s221 + $0x22c] sm:$0xf]
      %v371 = vld [vmem:[%s221 + $0x230] sm:$0xf]
      %v372 = vld [vmem:[%s221 + $0x234] sm:$0xf]
      %v373 = vld [vmem:[%s221 + $0x238] sm:$0xf]
      %v374 = vld [vmem:[%s221 + $0x23c] sm:$0xf]
      %v375 = vld [vmem:[%s221 + $0x240] sm:$0xf]
      %v376 = vld [vmem:[%s221 + $0x244] sm:$0xf]
      %v377 = vld [vmem:[%s221 + $0x248] sm:$0xf]
      %v378 = vld [vmem:[%s221 + $0x24c] sm:$0xf]
      %v379 = vld [vmem:[%s221 + $0x250] sm:$0xf]
      %v380 = vld [vmem:[%s221 + $0x254] sm:$0xf]
      %v381 = vld [vmem:[%s221 + $0x258] sm:$0xf]
      %v382 = vld [vmem:[%s221 + $0x25c] sm:$0xf]
      %v383 = vld [vmem:[%s221 + $0x260] sm:$0xf]
      %v384 = vld [vmem:[%s221 + $0x264] sm:$0xf]
      %v385 = vld [vmem:[%s221 + $0x268] sm:$0xf]
      %v386 = vld [vmem:[%s221 + $0x26c] sm:$0xf]
      %v387 = vld [vmem:[%s221 + $0x270] sm:$0xf]
      %v388 = vld [vmem:[%s221 + $0x274] sm:$0xf]
      %v389 = vld [vmem:[%s221 + $0x278] sm:$0xf]
      %v390 = vld [vmem:[%s221 + $0x27c] sm:$0xf]
      %v391 = vld [vmem:[%s221 + $0x280] sm:$0xf]
      %v392 = vld [vmem:[%s221 + $0x284] sm:$0xf]
      %v393 = vld [vmem:[%s221 + $0x288] sm:$0xf]
      %v394 = vld [vmem:[%s221 + $0x28c] sm:$0xf]
      %v395 = vld [vmem:[%s221 + $0x290] sm:$0xf]
      %v396 = vld [vmem:[%s221 + $0x294] sm:$0xf]
      %v397 = vld [vmem:[%s221 + $0x298] sm:$0xf]
      %v398 = vld [vmem:[%s221 + $0x29c] sm:$0xf]
      %v399 = vld [vmem:[%s221 + $0x2a0] sm:$0xf]
      %v400 = vld [vmem:[%s221 + $0x2a4] sm:$0xf]
      %v401 = vld [vmem:[%s221 + $0x2a8] sm:$0xf]
      %v402 = vld [vmem:[%s221 + $0x2ac] sm:$0xf]
      %v403 = vld [vmem:[%s221 + $0x2b0] sm:$0xf]
      %v404 = vld [vmem:[%s221 + $0x2b4] sm:$0xf]
      %v405 = vld [vmem:[%s221 + $0x2b8] sm:$0xf]
      %v406 = vld [vmem:[%s221 + $0x2bc] sm:$0xf]
      %v407 = vld [vmem:[%s221 + $0x2c0] sm:$0xf]
      %v408 = vld [vmem:[%s221 + $0x2c4] sm:$0xf]
      %v409 = vld [vmem:[%s221 + $0x2c8] sm:$0xf]
      %v410 = vld [vmem:[%s221 + $0x2cc] sm:$0xf]
      %v411 = vld [vmem:[%s221 + $0x2d0] sm:$0xf]
      %v412 = vld [vmem:[%s221 + $0x2d4] sm:$0xf]
      %v413 = vld [vmem:[%s221 + $0x2d8] sm:$0xf]
      %v414 = vld [vmem:[%s221 + $0x2dc] sm:$0xf]
      %v415 = vld [vmem:[%s221 + $0x2e0] sm:$0xf]
      %v416 = vld [vmem:[%s221 + $0x2e4] sm:$0xf]
      %v417 = vld [vmem:[%s221 + $0x2e8] sm:$0xf]
      %v418 = vld [vmem:[%s221 + $0x2ec] sm:$0xf]
      %v419 = vld [vmem:[%s221 + $0x2f0] sm:$0xf]
      %v420 = vld [vmem:[%s221 + $0x2f4] sm:$0xf]
      %v421 = vld [vmem:[%s221 + $0x2f8] sm:$0xf]
      %v422 = vld [vmem:[%s221 + $0x2fc] sm:$0xf]
      %v423 = vld [vmem:[%s1] sm:$0xf]
      %v424 = vld [vmem:[%s1 + $0x4] sm:$0xf]
      %v425 = vld [vmem:[%s1 + $0x8] sm:$0xf]
      %v426 = vld [vmem:[%s1 + $0xc] sm:$0xf]
      %v427 = vld [vmem:[%s2] sm:$0x1]
      %v429 = vlaneseq
      %v430 = vshrl.u32 %v429, 7
      %v431 = vsub.s32 0, %v430
      %v432 = vrot.slane %v427, %v431
      %v626 = vunpack.c.l.b16 %v231
      %v627 = vunpack.c.l.b16 %v232
      %v628 = vunpack.c.l.b16 %v233
      %v629 = vunpack.c.l.b16 %v234
      %v630 = vunpack.c.l.b16 %v235
      %v631 = vunpack.c.l.b16 %v236
      %v632 = vunpack.c.l.b16 %v237
      %v633 = vunpack.c.l.b16 %v238
      %v634 = vunpack.c.l.b16 %v239
      %v635 = vunpack.c.l.b16 %v240
      %v636 = vunpack.c.l.b16 %v241
      %v637 = vunpack.c.l.b16 %v242
      %v638 = vunpack.c.l.b16 %v243
      %v639 = vunpack.c.l.b16 %v244
      %v640 = vunpack.c.l.b16 %v245
      %v641 = vunpack.c.l.b16 %v246
      %v642 = vunpack.c.l.b16 %v247
      %v643 = vunpack.c.l.b16 %v248
      %v644 = vunpack.c.l.b16 %v249
      %v645 = vunpack.c.l.b16 %v250
      %v646 = vunpack.c.l.b16 %v251
      %v647 = vunpack.c.l.b16 %v252
      %v648 = vunpack.c.l.b16 %v253
      %v649 = vunpack.c.l.b16 %v254
      %v650 = vunpack.c.l.b16 %v255
      %v651 = vunpack.c.l.b16 %v256
      %v652 = vunpack.c.l.b16 %v257
      %v653 = vunpack.c.l.b16 %v258
      %v654 = vunpack.c.l.b16 %v259
      %v655 = vunpack.c.l.b16 %v260
      %v656 = vunpack.c.l.b16 %v261
      %v657 = vunpack.c.l.b16 %v262
      %v658 = vunpack.c.l.b16 %v263
      %v659 = vunpack.c.l.b16 %v264
      %v660 = vunpack.c.l.b16 %v265
      %v661 = vunpack.c.l.b16 %v266
      %v662 = vunpack.c.l.b16 %v267
      %v663 = vunpack.c.l.b16 %v268
      %v664 = vunpack.c.l.b16 %v269
      %v665 = vunpack.c.l.b16 %v270
      %v666 = vunpack.c.l.b16 %v271
      %v667 = vunpack.c.l.b16 %v272
      %v668 = vunpack.c.l.b16 %v273
      %v669 = vunpack.c.l.b16 %v274
      %v670 = vunpack.c.l.b16 %v275
      %v671 = vunpack.c.l.b16 %v276
      %v672 = vunpack.c.l.b16 %v277
      %v673 = vunpack.c.l.b16 %v278
      %v674 = vunpack.c.l.b16 %v279
      %v675 = vunpack.c.l.b16 %v280
      %v676 = vunpack.c.l.b16 %v281
      %v677 = vunpack.c.l.b16 %v282
      %v678 = vunpack.c.l.b16 %v283
      %v679 = vunpack.c.l.b16 %v284
      %v680 = vunpack.c.l.b16 %v285
      %v681 = vunpack.c.l.b16 %v286
      %v682 = vunpack.c.l.b16 %v287
      %v683 = vunpack.c.l.b16 %v288
      %v684 = vunpack.c.l.b16 %v289
      %v685 = vunpack.c.l.b16 %v290
      %v686 = vunpack.c.l.b16 %v291
      %v687 = vunpack.c.l.b16 %v292
      %v688 = vunpack.c.l.b16 %v293
      %v689 = vunpack.c.l.b16 %v294
      %v690 = vunpack.c.l.b16 %v295
      %v691 = vunpack.c.l.b16 %v296
      %v692 = vunpack.c.l.b16 %v297
      %v693 = vunpack.c.l.b16 %v298
      %v694 = vunpack.c.l.b16 %v299
      %v695 = vunpack.c.l.b16 %v300
      %v696 = vunpack.c.l.b16 %v301
      %v697 = vunpack.c.l.b16 %v302
      %v698 = vunpack.c.l.b16 %v303
      %v699 = vunpack.c.l.b16 %v304
      %v700 = vunpack.c.l.b16 %v305
      %v701 = vunpack.c.l.b16 %v306
      %v702 = vunpack.c.l.b16 %v307
      %v703 = vunpack.c.l.b16 %v308
      %v704 = vunpack.c.l.b16 %v309
      %v705 = vunpack.c.l.b16 %v310
      %v706 = vunpack.c.l.b16 %v311
      %v707 = vunpack.c.l.b16 %v312
      %v708 = vunpack.c.l.b16 %v313
      %v709 = vunpack.c.l.b16 %v314
      %v710 = vunpack.c.l.b16 %v315
      %v711 = vunpack.c.l.b16 %v316
      %v712 = vunpack.c.l.b16 %v317
      %v713 = vunpack.c.l.b16 %v318
      %v714 = vunpack.c.l.b16 %v319
      %v715 = vunpack.c.l.b16 %v320
      %v716 = vunpack.c.l.b16 %v321
      %v717 = vunpack.c.l.b16 %v322
      %v718 = vunpack.c.l.b16 %v323
      %v719 = vunpack.c.l.b16 %v324
      %v720 = vunpack.c.l.b16 %v325
      %v721 = vunpack.c.l.b16 %v326
      %v722 = vunpack.c.l.b16 %v327
      %v723 = vunpack.c.l.b16 %v328
      %v724 = vunpack.c.l.b16 %v329
      %v725 = vunpack.c.l.b16 %v330
      %v726 = vunpack.c.l.b16 %v331
      %v727 = vunpack.c.l.b16 %v332
      %v728 = vunpack.c.l.b16 %v333
      %v729 = vunpack.c.l.b16 %v334
      %v730 = vunpack.c.l.b16 %v335
      %v731 = vunpack.c.l.b16 %v336
      %v732 = vunpack.c.l.b16 %v337
      %v733 = vunpack.c.l.b16 %v338
      %v734 = vunpack.c.l.b16 %v339
      %v735 = vunpack.c.l.b16 %v340
      %v736 = vunpack.c.l.b16 %v341
      %v737 = vunpack.c.l.b16 %v342
      %v738 = vunpack.c.l.b16 %v343
      %v739 = vunpack.c.l.b16 %v344
      %v740 = vunpack.c.l.b16 %v345
      %v741 = vunpack.c.l.b16 %v346
      %v742 = vunpack.c.l.b16 %v347
      %v743 = vunpack.c.l.b16 %v348
      %v744 = vunpack.c.l.b16 %v349
      %v745 = vunpack.c.l.b16 %v350
      %v746 = vunpack.c.l.b16 %v351
      %v747 = vunpack.c.l.b16 %v352
      %v748 = vunpack.c.l.b16 %v353
      %v749 = vunpack.c.l.b16 %v354
      %v750 = vunpack.c.l.b16 %v355
      %v751 = vunpack.c.l.b16 %v356
      %v752 = vunpack.c.l.b16 %v357
      %v753 = vunpack.c.l.b16 %v358
      %v754 = vunpack.c.l.b16 %v359
      %v755 = vunpack.c.l.b16 %v360
      %v756 = vunpack.c.l.b16 %v361
      %v757 = vunpack.c.l.b16 %v362
      %v758 = vunpack.c.l.b16 %v363
      %v759 = vunpack.c.l.b16 %v364
      %v760 = vunpack.c.l.b16 %v365
      %v761 = vunpack.c.l.b16 %v366
      %v762 = vunpack.c.l.b16 %v367
      %v763 = vunpack.c.l.b16 %v368
      %v764 = vunpack.c.l.b16 %v369
      %v765 = vunpack.c.l.b16 %v370
      %v766 = vunpack.c.l.b16 %v371
      %v767 = vunpack.c.l.b16 %v372
      %v768 = vunpack.c.l.b16 %v373
      %v769 = vunpack.c.l.b16 %v374
      %v770 = vunpack.c.l.b16 %v375
      %v771 = vunpack.c.l.b16 %v376
      %v772 = vunpack.c.l.b16 %v377
      %v773 = vunpack.c.l.b16 %v378
      %v774 = vunpack.c.l.b16 %v379
      %v775 = vunpack.c.l.b16 %v380
      %v776 = vunpack.c.l.b16 %v381
      %v777 = vunpack.c.l.b16 %v382
      %v778 = vunpack.c.l.b16 %v383
      %v779 = vunpack.c.l.b16 %v384
      %v780 = vunpack.c.l.b16 %v385
      %v781 = vunpack.c.l.b16 %v386
      %v782 = vunpack.c.l.b16 %v387
      %v783 = vunpack.c.l.b16 %v388
      %v784 = vunpack.c.l.b16 %v389
      %v785 = vunpack.c.l.b16 %v390
      %v786 = vunpack.c.l.b16 %v391
      %v787 = vunpack.c.l.b16 %v392
      %v788 = vunpack.c.l.b16 %v393
      %v789 = vunpack.c.l.b16 %v394
      %v790 = vunpack.c.l.b16 %v395
      %v791 = vunpack.c.l.b16 %v396
      %v792 = vunpack.c.l.b16 %v397
      %v793 = vunpack.c.l.b16 %v398
      %v794 = vunpack.c.l.b16 %v399
      %v795 = vunpack.c.l.b16 %v400
      %v796 = vunpack.c.l.b16 %v401
      %v797 = vunpack.c.l.b16 %v402
      %v798 = vunpack.c.l.b16 %v403
      %v799 = vunpack.c.l.b16 %v404
      %v800 = vunpack.c.l.b16 %v405
      %v801 = vunpack.c.l.b16 %v406
      %v802 = vunpack.c.l.b16 %v407
      %v803 = vunpack.c.l.b16 %v408
      %v804 = vunpack.c.l.b16 %v409
      %v805 = vunpack.c.l.b16 %v410
      %v806 = vunpack.c.l.b16 %v411
      %v807 = vunpack.c.l.b16 %v412
      %v808 = vunpack.c.l.b16 %v413
      %v809 = vunpack.c.l.b16 %v414
      %v810 = vunpack.c.l.b16 %v415
      %v811 = vunpack.c.l.b16 %v416
      %v812 = vunpack.c.l.b16 %v417
      %v813 = vunpack.c.l.b16 %v418
      %v814 = vunpack.c.l.b16 %v419
      %v815 = vunpack.c.l.b16 %v420
      %v816 = vunpack.c.l.b16 %v421
      %v817 = vunpack.c.l.b16 %v422
      %v818 = vpack.c.b16 %v627, %v626
      %v819 = vpack.c.b16 %v629, %v628
      %v820 = vpack.c.b16 %v631, %v630
      %v821 = vpack.c.b16 %v633, %v632
      %v822 = vpack.c.b16 %v635, %v634
      %v823 = vpack.c.b16 %v637, %v636
      %v824 = vpack.c.b16 %v639, %v638
      %v825 = vpack.c.b16 %v641, %v640
      %v826 = vpack.c.b16 %v643, %v642
      %v827 = vpack.c.b16 %v645, %v644
      %v828 = vpack.c.b16 %v647, %v646
      %v829 = vpack.c.b16 %v649, %v648
      %v830 = vpack.c.b16 %v651, %v650
      %v831 = vpack.c.b16 %v653, %v652
      %v832 = vpack.c.b16 %v655, %v654
      %v833 = vpack.c.b16 %v657, %v656
      %v834 = vpack.c.b16 %v659, %v658
      %v835 = vpack.c.b16 %v661, %v660
      %v836 = vpack.c.b16 %v663, %v662
      %v837 = vpack.c.b16 %v665, %v664
      %v838 = vpack.c.b16 %v667, %v666
      %v839 = vpack.c.b16 %v669, %v668
      %v840 = vpack.c.b16 %v671, %v670
      %v841 = vpack.c.b16 %v673, %v672
      %v842 = vpack.c.b16 %v675, %v674
      %v843 = vpack.c.b16 %v677, %v676
      %v844 = vpack.c.b16 %v679, %v678
      %v845 = vpack.c.b16 %v681, %v680
      %v846 = vpack.c.b16 %v683, %v682
      %v847 = vpack.c.b16 %v685, %v684
      %v848 = vpack.c.b16 %v687, %v686
      %v849 = vpack.c.b16 %v689, %v688
      %v850 = vpack.c.b16 %v691, %v690
      %v851 = vpack.c.b16 %v693, %v692
      %v852 = vpack.c.b16 %v695, %v694
      %v853 = vpack.c.b16 %v697, %v696
      %v854 = vpack.c.b16 %v699, %v698
      %v855 = vpack.c.b16 %v701, %v700
      %v856 = vpack.c.b16 %v703, %v702
      %v857 = vpack.c.b16 %v705, %v704
      %v858 = vpack.c.b16 %v707, %v706
      %v859 = vpack.c.b16 %v709, %v708
      %v860 = vpack.c.b16 %v711, %v710
      %v861 = vpack.c.b16 %v713, %v712
      %v862 = vpack.c.b16 %v715, %v714
      %v863 = vpack.c.b16 %v717, %v716
      %v864 = vpack.c.b16 %v719, %v718
      %v865 = vpack.c.b16 %v721, %v720
      %v866 = vpack.c.b16 %v723, %v722
      %v867 = vpack.c.b16 %v725, %v724
      %v868 = vpack.c.b16 %v727, %v726
      %v869 = vpack.c.b16 %v729, %v728
      %v870 = vpack.c.b16 %v731, %v730
      %v871 = vpack.c.b16 %v733, %v732
      %v872 = vpack.c.b16 %v735, %v734
      %v873 = vpack.c.b16 %v737, %v736
      %v874 = vpack.c.b16 %v739, %v738
      %v875 = vpack.c.b16 %v741, %v740
      %v876 = vpack.c.b16 %v743, %v742
      %v877 = vpack.c.b16 %v745, %v744
      %v878 = vpack.c.b16 %v747, %v746
      %v879 = vpack.c.b16 %v749, %v748
      %v880 = vpack.c.b16 %v751, %v750
      %v881 = vpack.c.b16 %v753, %v752
      %v882 = vpack.c.b16 %v755, %v754
      %v883 = vpack.c.b16 %v757, %v756
      %v884 = vpack.c.b16 %v759, %v758
      %v885 = vpack.c.b16 %v761, %v760
      %v886 = vpack.c.b16 %v763, %v762
      %v887 = vpack.c.b16 %v765, %v764
      %v888 = vpack.c.b16 %v767, %v766
      %v889 = vpack.c.b16 %v769, %v768
      %v890 = vpack.c.b16 %v771, %v770
      %v891 = vpack.c.b16 %v773, %v772
      %v892 = vpack.c.b16 %v775, %v774
      %v893 = vpack.c.b16 %v777, %v776
      %v894 = vpack.c.b16 %v779, %v778
      %v895 = vpack.c.b16 %v781, %v780
      %v896 = vpack.c.b16 %v783, %v782
      %v897 = vpack.c.b16 %v785, %v784
      %v898 = vpack.c.b16 %v787, %v786
      %v899 = vpack.c.b16 %v789, %v788
      %v900 = vpack.c.b16 %v791, %v790
      %v901 = vpack.c.b16 %v793, %v792
      %v902 = vpack.c.b16 %v795, %v794
      %v903 = vpack.c.b16 %v797, %v796
      %v904 = vpack.c.b16 %v799, %v798
      %v905 = vpack.c.b16 %v801, %v800
      %v906 = vpack.c.b16 %v803, %v802
      %v907 = vpack.c.b16 %v805, %v804
      %v908 = vpack.c.b16 %v807, %v806
      %v909 = vpack.c.b16 %v809, %v808
      %v910 = vpack.c.b16 %v811, %v810
      %v911 = vpack.c.b16 %v813, %v812
      %v912 = vpack.c.b16 %v815, %v814
      %v913 = vpack.c.b16 %v817, %v816
      %v918 = vunpack.c.l.b16 %v423
      %v919 = vunpack.c.l.b16 %v424
      %v920 = vunpack.c.l.b16 %v425
      %v921 = vunpack.c.l.b16 %v426
      %v922 = vpack.c.b16 %v919, %v918
      %v923 = vpack.c.b16 %v921, %v920
      %vm926 = vcmask 261120
      %v928 = vsel %vm926, %v818, 0
      %v931 = vsel %vm926, %v819, 0
      %v934 = vsel %vm926, %v820, 0
      %v937 = vsel %vm926, %v821, 0
      %v940 = vsel %vm926, %v822, 0
      %v943 = vsel %vm926, %v823, 0
      %v946 = vsel %vm926, %v824, 0
      %v949 = vsel %vm926, %v825, 0
      %v952 = vsel %vm926, %v826, 0
      %v955 = vsel %vm926, %v827, 0
      %v958 = vsel %vm926, %v828, 0
      %v961 = vsel %vm926, %v829, 0
      %v964 = vsel %vm926, %v830, 0
      %v967 = vsel %vm926, %v831, 0
      %v970 = vsel %vm926, %v832, 0
      %v973 = vsel %vm926, %v833, 0
      %v976 = vsel %vm926, %v834, 0
      %v979 = vsel %vm926, %v835, 0
      %v982 = vsel %vm926, %v836, 0
      %v985 = vsel %vm926, %v837, 0
      %v988 = vsel %vm926, %v838, 0
      %v991 = vsel %vm926, %v839, 0
      %v994 = vsel %vm926, %v840, 0
      %v997 = vsel %vm926, %v841, 0
      %v1000 = vsel %vm926, %v842, 0
      %v1003 = vsel %vm926, %v843, 0
      %v1006 = vsel %vm926, %v844, 0
      %v1009 = vsel %vm926, %v845, 0
      %v1012 = vsel %vm926, %v846, 0
      %v1015 = vsel %vm926, %v847, 0
      %v1018 = vsel %vm926, %v848, 0
      %v1021 = vsel %vm926, %v849, 0
      %v1024 = vsel %vm926, %v850, 0
      %v1027 = vsel %vm926, %v851, 0
      %v1030 = vsel %vm926, %v852, 0
      %v1033 = vsel %vm926, %v853, 0
      %v1036 = vsel %vm926, %v854, 0
      %v1039 = vsel %vm926, %v855, 0
      %v1042 = vsel %vm926, %v856, 0
      %v1045 = vsel %vm926, %v857, 0
      %v1048 = vsel %vm926, %v858, 0
      %v1051 = vsel %vm926, %v859, 0
      %v1054 = vsel %vm926, %v860, 0
      %v1057 = vsel %vm926, %v861, 0
      %v1060 = vsel %vm926, %v862, 0
      %v1063 = vsel %vm926, %v863, 0
      %v1066 = vsel %vm926, %v864, 0
      %v1069 = vsel %vm926, %v865, 0
      %v1072 = vsel %vm926, %v866, 0
      %v1075 = vsel %vm926, %v867, 0
      %v1078 = vsel %vm926, %v868, 0
      %v1081 = vsel %vm926, %v869, 0
      %v1084 = vsel %vm926, %v870, 0
      %v1087 = vsel %vm926, %v871, 0
      %v1090 = vsel %vm926, %v872, 0
      %v1093 = vsel %vm926, %v873, 0
      %v1096 = vsel %vm926, %v874, 0
      %v1099 = vsel %vm926, %v875, 0
      %v1102 = vsel %vm926, %v876, 0
      %v1105 = vsel %vm926, %v877, 0
      %v1108 = vsel %vm926, %v878, 0
      %v1111 = vsel %vm926, %v879, 0
      %v1114 = vsel %vm926, %v880, 0
      %v1117 = vsel %vm926, %v881, 0
      %v1120 = vsel %vm926, %v882, 0
      %v1123 = vsel %vm926, %v883, 0
      %v1126 = vsel %vm926, %v884, 0
      %v1129 = vsel %vm926, %v885, 0
      %v1132 = vsel %vm926, %v886, 0
      %v1135 = vsel %vm926, %v887, 0
      %v1138 = vsel %vm926, %v888, 0
      %v1141 = vsel %vm926, %v889, 0
      %v1144 = vsel %vm926, %v890, 0
      %v1147 = vsel %vm926, %v891, 0
      %v1150 = vsel %vm926, %v892, 0
      %v1153 = vsel %vm926, %v893, 0
      %v1156 = vsel %vm926, %v894, 0
      %v1159 = vsel %vm926, %v895, 0
      %v1162 = vsel %vm926, %v896, 0
      %v1165 = vsel %vm926, %v897, 0
      %v1168 = vsel %vm926, %v898, 0
      %v1171 = vsel %vm926, %v899, 0
      %v1174 = vsel %vm926, %v900, 0
      %v1177 = vsel %vm926, %v901, 0
      %v1180 = vsel %vm926, %v902, 0
      %v1183 = vsel %vm926, %v903, 0
      %v1186 = vsel %vm926, %v904, 0
      %v1189 = vsel %vm926, %v905, 0
      %v1192 = vsel %vm926, %v906, 0
      %v1195 = vsel %vm926, %v907, 0
      %v1198 = vsel %vm926, %v908, 0
      %v1201 = vsel %vm926, %v909, 0
      %v1204 = vsel %vm926, %v910, 0
      %v1207 = vsel %vm926, %v911, 0
      %v1210 = vsel %vm926, %v912, 0
      %v1213 = vsel %vm926, %v913, 0
      %1215 = vmatprep.subr.bf16.mxu0 0
      %1216 = vmatpush1.bf16.msra.mxu0 %v922
      %1217 = vmatprep.subr.bf16.mxu0 0
      %1218 = vmatpush1.bf16.msra.mxu0 %v923
      %1219 = vmatprep.subr.bf16.mxu0 0
      %1220 = vmatpush1.bf16.msra.mxu0 0
      %1221 = vmatprep.subr.bf16.mxu0 0
      %1222 = vmatpush1.bf16.msra.mxu0 0
      %1223 = vmatprep.subr.bf16.mxu0 0
      %1224 = vmatpush1.bf16.msra.mxu0 0
      %1225 = vmatprep.subr.bf16.mxu0 0
      %1226 = vmatpush1.bf16.msra.mxu0 0
      %1227 = vmatprep.subr.bf16.mxu0 0
      %1228 = vmatpush1.bf16.msra.mxu0 0
      %1229 = vmatprep.subr.bf16.mxu0 0
      %1230 = vmatpush1.bf16.msra.mxu0 0
      %1231 = vmatprep.subr.bf16.mxu0 0
      %1232 = vmatpush1.bf16.msra.mxu0 0
      %1233 = vmatprep.subr.bf16.mxu0 0
      %1234 = vmatpush1.bf16.msra.mxu0 0
      %1235 = vmatprep.subr.bf16.mxu0 0
      %1236 = vmatpush1.bf16.msra.mxu0 0
      %1237 = vmatprep.subr.bf16.mxu0 0
      %1238 = vmatpush1.bf16.msra.mxu0 0
      %1239 = vmatprep.subr.bf16.mxu0 0
      %1240 = vmatpush1.bf16.msra.mxu0 0
      %1241 = vmatprep.subr.bf16.mxu0 0
      %1242 = vmatpush1.bf16.msra.mxu0 0
      %1243 = vmatprep.subr.bf16.mxu0 0
      %1244 = vmatpush1.bf16.msra.mxu0 0
      %1245 = vmatprep.subr.bf16.mxu0 0
      %1246 = vmatpush1.bf16.msra.mxu0 0
      %1247 = vmatprep.mubr.bf16.mxu0 0
      %1248 = vmatmul.mubr.bf16.gmra.mrb[0].mxu0 %v928
      %v1249 = vpop.f32.mrb[0].mxu0
      %v1250 = vadd.f32 %v432, %v1249
      %v1251 = vpop.f32.mrb[0].mxu0
      %v1252 = vpop.f32.mrb[0].mxu0
      %v1253 = vadd.f32 %v432, %v1252
      %v1254 = vpop.f32.mrb[0].mxu0
      %1255 = vmatprep.mubr.bf16.mxu0 0
      %1256 = vmatmul.mubr.bf16.gmra.mrb[0].mxu0 %v931
      %v1257 = vpop.f32.mrb[0].mxu0
      %v1258 = vadd.f32 %v432, %v1257
      %v1259 = vpop.f32.mrb[0].mxu0
      %v1260 = vpop.f32.mrb[0].mxu0
      %v1261 = vadd.f32 %v432, %v1260
      %v1262 = vpop.f32.mrb[0].mxu0
      %1263 = vmatprep.mubr.bf16.mxu0 0
      %1264 = vmatmul.mubr.bf16.gmra.mrb[0].mxu0 %v934
      %v1265 = vpop.f32.mrb[0].mxu0
      %v1266 = vadd.f32 %v432, %v1265
      %v1267 = vpop.f32.mrb[0].mxu0
      %v1268 = vpop.f32.mrb[0].mxu0
      %v1269 = vadd.f32 %v432, %v1268
      %v1270 = vpop.f32.mrb[0].mxu0
      %1271 = vmatprep.mubr.bf16.mxu0 0
      %1272 = vmatmul.mubr.bf16.gmra.mrb[0].mxu0 %v937
      %v1273 = vpop.f32.mrb[0].mxu0
      %v1274 = vadd.f32 %v432, %v1273
      %v1275 = vpop.f32.mrb[0].mxu0
      %v1276 = vpop.f32.mrb[0].mxu0
      %v1277 = vadd.f32 %v432, %v1276
      %v1278 = vpop.f32.mrb[0].mxu0
      %1279 = vmatprep.mubr.bf16.mxu0 0
      %1280 = vmatmul.mubr.bf16.gmra.mrb[0].mxu0 %v940
      %v1281 = vpop.f32.mrb[0].mxu0
      %v1282 = vadd.f32 %v432, %v1281
      %v1283 = vpop.f32.mrb[0].mxu0
      %v1284 = vpop.f32.mrb[0].mxu0
      %v1285 = vadd.f32 %v432, %v1284
      %v1286 = vpop.f32.mrb[0].mxu0
      %1287 = vmatprep.mubr.bf16.mxu0 0
      %1288 = vmatmul.mubr.bf16.gmra.mrb[0].mxu0 %v943
      %v1289 = vpop.f32.mrb[0].mxu0
      %v1290 = vadd.f32 %v432, %v1289
      %v1291 = vpop.f32.mrb[0].mxu0
      %v1292 = vpop.f32.mrb[0].mxu0
      %v1293 = vadd.f32 %v432, %v1292
      %v1294 = vpop.f32.mrb[0].mxu0
      %1295 = vmatprep.mubr.bf16.mxu0 0
      %1296 = vmatmul.mubr.bf16.gmra.mrb[0].mxu0 %v946
      %v1297 = vpop.f32.mrb[0].mxu0
      %v1298 = vadd.f32 %v432, %v1297
      %v1299 = vpop.f32.mrb[0].mxu0
      %v1300 = vpop.f32.mrb[0].mxu0
      %v1301 = vadd.f32 %v432, %v1300
      %v1302 = vpop.f32.mrb[0].mxu0
      %1303 = vmatprep.mubr.bf16.mxu0 0
      %1304 = vmatmul.mubr.bf16.gmra.mrb[0].mxu0 %v949
      %v1305 = vpop.f32.mrb[0].mxu0
      %v1306 = vadd.f32 %v432, %v1305
      %v1307 = vpop.f32.mrb[0].mxu0
      %v1308 = vpop.f32.mrb[0].mxu0
      %v1309 = vadd.f32 %v432, %v1308
      %v1310 = vpop.f32.mrb[0].mxu0
      %1311 = vmatprep.mubr.bf16.mxu0 0
      %1312 = vmatmul.mubr.bf16.gmra.mrb[0].mxu0 %v952
      %v1313 = vpop.f32.mrb[0].mxu0
      %v1314 = vadd.f32 %v432, %v1313
      %v1315 = vpop.f32.mrb[0].mxu0
      %v1316 = vpop.f32.mrb[0].mxu0
      %v1317 = vadd.f32 %v432, %v1316
      %v1318 = vpop.f32.mrb[0].mxu0
      %1319 = vmatprep.mubr.bf16.mxu0 0
      %1320 = vmatmul.mubr.bf16.gmra.mrb[0].mxu0 %v955
      %v1321 = vpop.f32.mrb[0].mxu0
      %v1322 = vadd.f32 %v432, %v1321
      %v1323 = vpop.f32.mrb[0].mxu0
      %v1324 = vpop.f32.mrb[0].mxu0
      %v1325 = vadd.f32 %v432, %v1324
      %v1326 = vpop.f32.mrb[0].mxu0
      %1327 = vmatprep.mubr.bf16.mxu0 0
      %1328 = vmatmul.mubr.bf16.gmra.mrb[0].mxu0 %v958
      %v1329 = vpop.f32.mrb[0].mxu0
      %v1330 = vadd.f32 %v432, %v1329
      %v1331 = vpop.f32.mrb[0].mxu0
      %v1332 = vpop.f32.mrb[0].mxu0
      %v1333 = vadd.f32 %v432, %v1332
      %v1334 = vpop.f32.mrb[0].mxu0
      %1335 = vmatprep.mubr.bf16.mxu0 0
      %1336 = vmatmul.mubr.bf16.gmra.mrb[0].mxu0 %v961
      %v1337 = vpop.f32.mrb[0].mxu0
      %v1338 = vadd.f32 %v432, %v1337
      %v1339 = vpop.f32.mrb[0].mxu0
      %v1340 = vpop.f32.mrb[0].mxu0
      %v1341 = vadd.f32 %v432, %v1340
      %v1342 = vpop.f32.mrb[0].mxu0
      %1343 = vmatprep.mubr.bf16.mxu0 0
      %1344 = vmatmul.mubr.bf16.gmra.mrb[0].mxu0 %v964
      %v1345 = vpop.f32.mrb[0].mxu0
      %v1346 = vadd.f32 %v432, %v1345
      %v1347 = vpop.f32.mrb[0].mxu0
      %v1348 = vpop.f32.mrb[0].mxu0
      %v1349 = vadd.f32 %v432, %v1348
      %v1350 = vpop.f32.mrb[0].mxu0
      %1351 = vmatprep.mubr.bf16.mxu0 0
      %1352 = vmatmul.mubr.bf16.gmra.mrb[0].mxu0 %v967
      %v1353 = vpop.f32.mrb[0].mxu0
      %v1354 = vadd.f32 %v432, %v1353
      %v1355 = vpop.f32.mrb[0].mxu0
      %v1356 = vpop.f32.mrb[0].mxu0
      %v1357 = vadd.f32 %v432, %v1356
      %v1358 = vpop.f32.mrb[0].mxu0
      %1359 = vmatprep.mubr.bf16.mxu0 0
      %1360 = vmatmul.mubr.bf16.gmra.mrb[0].mxu0 %v970
      %v1361 = vpop.f32.mrb[0].mxu0
      %v1362 = vadd.f32 %v432, %v1361
      %v1363 = vpop.f32.mrb[0].mxu0
      %v1364 = vpop.f32.mrb[0].mxu0
      %v1365 = vadd.f32 %v432, %v1364
      %v1366 = vpop.f32.mrb[0].mxu0
      %1367 = vmatprep.mubr.bf16.mxu0 0
      %1368 = vmatmul.mubr.bf16.gmra.mrb[0].mxu0 %v973
      %v1369 = vpop.f32.mrb[0].mxu0
      %v1370 = vadd.f32 %v432, %v1369
      %v1371 = vpop.f32.mrb[0].mxu0
      %v1372 = vpop.f32.mrb[0].mxu0
      %v1373 = vadd.f32 %v432, %v1372
      %v1374 = vpop.f32.mrb[0].mxu0
      %1375 = vmatprep.mubr.bf16.mxu0 0
      %1376 = vmatmul.mubr.bf16.gmra.mrb[0].mxu0 %v976
      %v1377 = vpop.f32.mrb[0].mxu0
      %v1378 = vadd.f32 %v432, %v1377
      %v1379 = vpop.f32.mrb[0].mxu0
      %v1380 = vpop.f32.mrb[0].mxu0
      %v1381 = vadd.f32 %v432, %v1380
      %v1382 = vpop.f32.mrb[0].mxu0
      %1383 = vmatprep.mubr.bf16.mxu0 0
      %1384 = vmatmul.mubr.bf16.gmra.mrb[0].mxu0 %v979
      %v1385 = vpop.f32.mrb[0].mxu0
      %v1386 = vadd.f32 %v432, %v1385
      %v1387 = vpop.f32.mrb[0].mxu0
      %v1388 = vpop.f32.mrb[0].mxu0
      %v1389 = vadd.f32 %v432, %v1388
      %v1390 = vpop.f32.mrb[0].mxu0
      %1391 = vmatprep.mubr.bf16.mxu0 0
      %1392 = vmatmul.mubr.bf16.gmra.mrb[0].mxu0 %v982
      %v1393 = vpop.f32.mrb[0].mxu0
      %v1394 = vadd.f32 %v432, %v1393
      %v1395 = vpop.f32.mrb[0].mxu0
      %v1396 = vpop.f32.mrb[0].mxu0
      %v1397 = vadd.f32 %v432, %v1396
      %v1398 = vpop.f32.mrb[0].mxu0
      %1399 = vmatprep.mubr.bf16.mxu0 0
      %1400 = vmatmul.mubr.bf16.gmra.mrb[0].mxu0 %v985
      %v1401 = vpop.f32.mrb[0].mxu0
      %v1402 = vadd.f32 %v432, %v1401
      %v1403 = vpop.f32.mrb[0].mxu0
      %v1404 = vpop.f32.mrb[0].mxu0
      %v1405 = vadd.f32 %v432, %v1404
      %v1406 = vpop.f32.mrb[0].mxu0
      %1407 = vmatprep.mubr.bf16.mxu0 0
      %1408 = vmatmul.mubr.bf16.gmra.mrb[0].mxu0 %v988
      %v1409 = vpop.f32.mrb[0].mxu0
      %v1410 = vadd.f32 %v432, %v1409
      %v1411 = vpop.f32.mrb[0].mxu0
      %v1412 = vpop.f32.mrb[0].mxu0
      %v1413 = vadd.f32 %v432, %v1412
      %v1414 = vpop.f32.mrb[0].mxu0
      %1415 = vmatprep.mubr.bf16.mxu0 0
      %1416 = vmatmul.mubr.bf16.gmra.mrb[0].mxu0 %v991
      %v1417 = vpop.f32.mrb[0].mxu0
      %v1418 = vadd.f32 %v432, %v1417
      %v1419 = vpop.f32.mrb[0].mxu0
      %v1420 = vpop.f32.mrb[0].mxu0
      %v1421 = vadd.f32 %v432, %v1420
      %v1422 = vpop.f32.mrb[0].mxu0
      %1423 = vmatprep.mubr.bf16.mxu0 0
      %1424 = vmatmul.mubr.bf16.gmra.mrb[0].mxu0 %v994
      %v1425 = vpop.f32.mrb[0].mxu0
      %v1426 = vadd.f32 %v432, %v1425
      %v1427 = vpop.f32.mrb[0].mxu0
      %v1428 = vpop.f32.mrb[0].mxu0
      %v1429 = vadd.f32 %v432, %v1428
      %v1430 = vpop.f32.mrb[0].mxu0
      %1431 = vmatprep.mubr.bf16.mxu0 0
      %1432 = vmatmul.mubr.bf16.gmra.mrb[0].mxu0 %v997
      %v1433 = vpop.f32.mrb[0].mxu0
      %v1434 = vadd.f32 %v432, %v1433
      %v1435 = vpop.f32.mrb[0].mxu0
      %v1436 = vpop.f32.mrb[0].mxu0
      %v1437 = vadd.f32 %v432, %v1436
      %v1438 = vpop.f32.mrb[0].mxu0
      %1439 = vmatprep.mubr.bf16.mxu0 0
      %1440 = vmatmul.mubr.bf16.gmra.mrb[0].mxu0 %v1000
      %v1441 = vpop.f32.mrb[0].mxu0
      %v1442 = vadd.f32 %v432, %v1441
      %v1443 = vpop.f32.mrb[0].mxu0
      %v1444 = vpop.f32.mrb[0].mxu0
      %v1445 = vadd.f32 %v432, %v1444
      %v1446 = vpop.f32.mrb[0].mxu0
      %1447 = vmatprep.mubr.bf16.mxu0 0
      %1448 = vmatmul.mubr.bf16.gmra.mrb[0].mxu0 %v1003
      %v1449 = vpop.f32.mrb[0].mxu0
      %v1450 = vadd.f32 %v432, %v1449
      %v1451 = vpop.f32.mrb[0].mxu0
      %v1452 = vpop.f32.mrb[0].mxu0
      %v1453 = vadd.f32 %v432, %v1452
      %v1454 = vpop.f32.mrb[0].mxu0
      %1455 = vmatprep.mubr.bf16.mxu0 0
      %1456 = vmatmul.mubr.bf16.gmra.mrb[0].mxu0 %v1006
      %v1457 = vpop.f32.mrb[0].mxu0
      %v1458 = vadd.f32 %v432, %v1457
      %v1459 = vpop.f32.mrb[0].mxu0
      %v1460 = vpop.f32.mrb[0].mxu0
      %v1461 = vadd.f32 %v432, %v1460
      %v1462 = vpop.f32.mrb[0].mxu0
      %1463 = vmatprep.mubr.bf16.mxu0 0
      %1464 = vmatmul.mubr.bf16.gmra.mrb[0].mxu0 %v1009
      %v1465 = vpop.f32.mrb[0].mxu0
      %v1466 = vadd.f32 %v432, %v1465
      %v1467 = vpop.f32.mrb[0].mxu0
      %v1468 = vpop.f32.mrb[0].mxu0
      %v1469 = vadd.f32 %v432, %v1468
      %v1470 = vpop.f32.mrb[0].mxu0
      %1471 = vmatprep.mubr.bf16.mxu0 0
      %1472 = vmatmul.mubr.bf16.gmra.mrb[0].mxu0 %v1012
      %v1473 = vpop.f32.mrb[0].mxu0
      %v1474 = vadd.f32 %v432, %v1473
      %v1475 = vpop.f32.mrb[0].mxu0
      %v1476 = vpop.f32.mrb[0].mxu0
      %v1477 = vadd.f32 %v432, %v1476
      %v1478 = vpop.f32.mrb[0].mxu0
      %1479 = vmatprep.mubr.bf16.mxu0 0
      %1480 = vmatmul.mubr.bf16.gmra.mrb[0].mxu0 %v1015
      %v1481 = vpop.f32.mrb[0].mxu0
      %v1482 = vadd.f32 %v432, %v1481
      %v1483 = vpop.f32.mrb[0].mxu0
      %v1484 = vpop.f32.mrb[0].mxu0
      %v1485 = vadd.f32 %v432, %v1484
      %v1486 = vpop.f32.mrb[0].mxu0
      %1487 = vmatprep.mubr.bf16.mxu0 0
      %1488 = vmatmul.mubr.bf16.gmra.mrb[0].mxu0 %v1018
      %v1489 = vpop.f32.mrb[0].mxu0
      %v1490 = vadd.f32 %v432, %v1489
      %v1491 = vpop.f32.mrb[0].mxu0
      %v1492 = vpop.f32.mrb[0].mxu0
      %v1493 = vadd.f32 %v432, %v1492
      %v1494 = vpop.f32.mrb[0].mxu0
      %1495 = vmatprep.mubr.bf16.mxu0 0
      %1496 = vmatmul.mubr.bf16.gmra.mrb[0].mxu0 %v1021
      %v1497 = vpop.f32.mrb[0].mxu0
      %v1498 = vadd.f32 %v432, %v1497
      %v1499 = vpop.f32.mrb[0].mxu0
      %v1500 = vpop.f32.mrb[0].mxu0
      %v1501 = vadd.f32 %v432, %v1500
      %v1502 = vpop.f32.mrb[0].mxu0
      %1503 = vmatprep.mubr.bf16.mxu0 0
      %1504 = vmatmul.mubr.bf16.gmra.mrb[0].mxu0 %v1024
      %v1505 = vpop.f32.mrb[0].mxu0
      %v1506 = vadd.f32 %v432, %v1505
      %v1507 = vpop.f32.mrb[0].mxu0
      %v1508 = vpop.f32.mrb[0].mxu0
      %v1509 = vadd.f32 %v432, %v1508
      %v1510 = vpop.f32.mrb[0].mxu0
      %1511 = vmatprep.mubr.bf16.mxu0 0
      %1512 = vmatmul.mubr.bf16.gmra.mrb[0].mxu0 %v1027
      %v1513 = vpop.f32.mrb[0].mxu0
      %v1514 = vadd.f32 %v432, %v1513
      %v1515 = vpop.f32.mrb[0].mxu0
      %v1516 = vpop.f32.mrb[0].mxu0
      %v1517 = vadd.f32 %v432, %v1516
      %v1518 = vpop.f32.mrb[0].mxu0
      %1519 = vmatprep.mubr.bf16.mxu0 0
      %1520 = vmatmul.mubr.bf16.gmra.mrb[0].mxu0 %v1030
      %v1521 = vpop.f32.mrb[0].mxu0
      %v1522 = vadd.f32 %v432, %v1521
      %v1523 = vpop.f32.mrb[0].mxu0
      %v1524 = vpop.f32.mrb[0].mxu0
      %v1525 = vadd.f32 %v432, %v1524
      %v1526 = vpop.f32.mrb[0].mxu0
      %1527 = vmatprep.mubr.bf16.mxu0 0
      %1528 = vmatmul.mubr.bf16.gmra.mrb[0].mxu0 %v1033
      %v1529 = vpop.f32.mrb[0].mxu0
      %v1530 = vadd.f32 %v432, %v1529
      %v1531 = vpop.f32.mrb[0].mxu0
      %v1532 = vpop.f32.mrb[0].mxu0
      %v1533 = vadd.f32 %v432, %v1532
      %v1534 = vpop.f32.mrb[0].mxu0
      %1535 = vmatprep.mubr.bf16.mxu0 0
      %1536 = vmatmul.mubr.bf16.gmra.mrb[0].mxu0 %v1036
      %v1537 = vpop.f32.mrb[0].mxu0
      %v1538 = vadd.f32 %v432, %v1537
      %v1539 = vpop.f32.mrb[0].mxu0
      %v1540 = vpop.f32.mrb[0].mxu0
      %v1541 = vadd.f32 %v432, %v1540
      %v1542 = vpop.f32.mrb[0].mxu0
      %1543 = vmatprep.mubr.bf16.mxu0 0
      %1544 = vmatmul.mubr.bf16.gmra.mrb[0].mxu0 %v1039
      %v1545 = vpop.f32.mrb[0].mxu0
      %v1546 = vadd.f32 %v432, %v1545
      %v1547 = vpop.f32.mrb[0].mxu0
      %v1548 = vpop.f32.mrb[0].mxu0
      %v1549 = vadd.f32 %v432, %v1548
      %v1550 = vpop.f32.mrb[0].mxu0
      %1551 = vmatprep.mubr.bf16.mxu0 0
      %1552 = vmatmul.mubr.bf16.gmra.mrb[0].mxu0 %v1042
      %v1553 = vpop.f32.mrb[0].mxu0
      %v1554 = vadd.f32 %v432, %v1553
      %v1555 = vpop.f32.mrb[0].mxu0
      %v1556 = vpop.f32.mrb[0].mxu0
      %v1557 = vadd.f32 %v432, %v1556
      %v1558 = vpop.f32.mrb[0].mxu0
      %1559 = vmatprep.mubr.bf16.mxu0 0
      %1560 = vmatmul.mubr.bf16.gmra.mrb[0].mxu0 %v1045
      %v1561 = vpop.f32.mrb[0].mxu0
      %v1562 = vadd.f32 %v432, %v1561
      %v1563 = vpop.f32.mrb[0].mxu0
      %v1564 = vpop.f32.mrb[0].mxu0
      %v1565 = vadd.f32 %v432, %v1564
      %v1566 = vpop.f32.mrb[0].mxu0
      %1567 = vmatprep.mubr.bf16.mxu0 0
      %1568 = vmatmul.mubr.bf16.gmra.mrb[0].mxu0 %v1048
      %v1569 = vpop.f32.mrb[0].mxu0
      %v1570 = vadd.f32 %v432, %v1569
      %v1571 = vpop.f32.mrb[0].mxu0
      %v1572 = vpop.f32.mrb[0].mxu0
      %v1573 = vadd.f32 %v432, %v1572
      %v1574 = vpop.f32.mrb[0].mxu0
      %1575 = vmatprep.mubr.bf16.mxu0 0
      %1576 = vmatmul.mubr.bf16.gmra.mrb[0].mxu0 %v1051
      %v1577 = vpop.f32.mrb[0].mxu0
      %v1578 = vadd.f32 %v432, %v1577
      %v1579 = vpop.f32.mrb[0].mxu0
      %v1580 = vpop.f32.mrb[0].mxu0
      %v1581 = vadd.f32 %v432, %v1580
      %v1582 = vpop.f32.mrb[0].mxu0
      %1583 = vmatprep.mubr.bf16.mxu0 0
      %1584 = vmatmul.mubr.bf16.gmra.mrb[0].mxu0 %v1054
      %v1585 = vpop.f32.mrb[0].mxu0
      %v1586 = vadd.f32 %v432, %v1585
      %v1587 = vpop.f32.mrb[0].mxu0
      %v1588 = vpop.f32.mrb[0].mxu0
      %v1589 = vadd.f32 %v432, %v1588
      %v1590 = vpop.f32.mrb[0].mxu0
      %1591 = vmatprep.mubr.bf16.mxu0 0
      %1592 = vmatmul.mubr.bf16.gmra.mrb[0].mxu0 %v1057
      %v1593 = vpop.f32.mrb[0].mxu0
      %v1594 = vadd.f32 %v432, %v1593
      %v1595 = vpop.f32.mrb[0].mxu0
      %v1596 = vpop.f32.mrb[0].mxu0
      %v1597 = vadd.f32 %v432, %v1596
      %v1598 = vpop.f32.mrb[0].mxu0
      %1599 = vmatprep.mubr.bf16.mxu0 0
      %1600 = vmatmul.mubr.bf16.gmra.mrb[0].mxu0 %v1060
      %v1601 = vpop.f32.mrb[0].mxu0
      %v1602 = vadd.f32 %v432, %v1601
      %v1603 = vpop.f32.mrb[0].mxu0
      %v1604 = vpop.f32.mrb[0].mxu0
      %v1605 = vadd.f32 %v432, %v1604
      %v1606 = vpop.f32.mrb[0].mxu0
      %1607 = vmatprep.mubr.bf16.mxu0 0
      %1608 = vmatmul.mubr.bf16.gmra.mrb[0].mxu0 %v1063
      %v1609 = vpop.f32.mrb[0].mxu0
      %v1610 = vadd.f32 %v432, %v1609
      %v1611 = vpop.f32.mrb[0].mxu0
      %v1612 = vpop.f32.mrb[0].mxu0
      %v1613 = vadd.f32 %v432, %v1612
      %v1614 = vpop.f32.mrb[0].mxu0
      %1615 = vmatprep.mubr.bf16.mxu0 0
      %1616 = vmatmul.mubr.bf16.gmra.mrb[0].mxu0 %v1066
      %v1617 = vpop.f32.mrb[0].mxu0
      %v1618 = vadd.f32 %v432, %v1617
      %v1619 = vpop.f32.mrb[0].mxu0
      %v1620 = vpop.f32.mrb[0].mxu0
      %v1621 = vadd.f32 %v432, %v1620
      %v1622 = vpop.f32.mrb[0].mxu0
      %1623 = vmatprep.mubr.bf16.mxu0 0
      %1624 = vmatmul.mubr.bf16.gmra.mrb[0].mxu0 %v1069
      %v1625 = vpop.f32.mrb[0].mxu0
      %v1626 = vadd.f32 %v432, %v1625
      %v1627 = vpop.f32.mrb[0].mxu0
      %v1628 = vpop.f32.mrb[0].mxu0
      %v1629 = vadd.f32 %v432, %v1628
      %v1630 = vpop.f32.mrb[0].mxu0
      %1631 = vmatprep.mubr.bf16.mxu0 0
      %1632 = vmatmul.mubr.bf16.gmra.mrb[0].mxu0 %v1072
      %v1633 = vpop.f32.mrb[0].mxu0
      %v1634 = vadd.f32 %v432, %v1633
      %v1635 = vpop.f32.mrb[0].mxu0
      %v1636 = vpop.f32.mrb[0].mxu0
      %v1637 = vadd.f32 %v432, %v1636
      %v1638 = vpop.f32.mrb[0].mxu0
      %1639 = vmatprep.mubr.bf16.mxu0 0
      %1640 = vmatmul.mubr.bf16.gmra.mrb[0].mxu0 %v1075
      %v1641 = vpop.f32.mrb[0].mxu0
      %v1642 = vadd.f32 %v432, %v1641
      %v1643 = vpop.f32.mrb[0].mxu0
      %v1644 = vpop.f32.mrb[0].mxu0
      %v1645 = vadd.f32 %v432, %v1644
      %v1646 = vpop.f32.mrb[0].mxu0
      %1647 = vmatprep.mubr.bf16.mxu0 0
      %1648 = vmatmul.mubr.bf16.gmra.mrb[0].mxu0 %v1078
      %v1649 = vpop.f32.mrb[0].mxu0
      %v1650 = vadd.f32 %v432, %v1649
      %v1651 = vpop.f32.mrb[0].mxu0
      %v1652 = vpop.f32.mrb[0].mxu0
      %v1653 = vadd.f32 %v432, %v1652
      %v1654 = vpop.f32.mrb[0].mxu0
      %1655 = vmatprep.mubr.bf16.mxu0 0
      %1656 = vmatmul.mubr.bf16.gmra.mrb[0].mxu0 %v1081
      %v1657 = vpop.f32.mrb[0].mxu0
      %v1658 = vadd.f32 %v432, %v1657
      %v1659 = vpop.f32.mrb[0].mxu0
      %v1660 = vpop.f32.mrb[0].mxu0
      %v1661 = vadd.f32 %v432, %v1660
      %v1662 = vpop.f32.mrb[0].mxu0
      %1663 = vmatprep.mubr.bf16.mxu0 0
      %1664 = vmatmul.mubr.bf16.gmra.mrb[0].mxu0 %v1084
      %v1665 = vpop.f32.mrb[0].mxu0
      %v1666 = vadd.f32 %v432, %v1665
      %v1667 = vpop.f32.mrb[0].mxu0
      %v1668 = vpop.f32.mrb[0].mxu0
      %v1669 = vadd.f32 %v432, %v1668
      %v1670 = vpop.f32.mrb[0].mxu0
      %1671 = vmatprep.mubr.bf16.mxu0 0
      %1672 = vmatmul.mubr.bf16.gmra.mrb[0].mxu0 %v1087
      %v1673 = vpop.f32.mrb[0].mxu0
      %v1674 = vadd.f32 %v432, %v1673
      %v1675 = vpop.f32.mrb[0].mxu0
      %v1676 = vpop.f32.mrb[0].mxu0
      %v1677 = vadd.f32 %v432, %v1676
      %v1678 = vpop.f32.mrb[0].mxu0
      %1679 = vmatprep.mubr.bf16.mxu0 0
      %1680 = vmatmul.mubr.bf16.gmra.mrb[0].mxu0 %v1090
      %v1681 = vpop.f32.mrb[0].mxu0
      %v1682 = vadd.f32 %v432, %v1681
      %v1683 = vpop.f32.mrb[0].mxu0
      %v1684 = vpop.f32.mrb[0].mxu0
      %v1685 = vadd.f32 %v432, %v1684
      %v1686 = vpop.f32.mrb[0].mxu0
      %1687 = vmatprep.mubr.bf16.mxu0 0
      %1688 = vmatmul.mubr.bf16.gmra.mrb[0].mxu0 %v1093
      %v1689 = vpop.f32.mrb[0].mxu0
      %v1690 = vadd.f32 %v432, %v1689
      %v1691 = vpop.f32.mrb[0].mxu0
      %v1692 = vpop.f32.mrb[0].mxu0
      %v1693 = vadd.f32 %v432, %v1692
      %v1694 = vpop.f32.mrb[0].mxu0
      %1695 = vmatprep.mubr.bf16.mxu0 0
      %1696 = vmatmul.mubr.bf16.gmra.mrb[0].mxu0 %v1096
      %v1697 = vpop.f32.mrb[0].mxu0
      %v1698 = vadd.f32 %v432, %v1697
      %v1699 = vpop.f32.mrb[0].mxu0
      %v1700 = vpop.f32.mrb[0].mxu0
      %v1701 = vadd.f32 %v432, %v1700
      %v1702 = vpop.f32.mrb[0].mxu0
      %1703 = vmatprep.mubr.bf16.mxu0 0
      %1704 = vmatmul.mubr.bf16.gmra.mrb[0].mxu0 %v1099
      %v1705 = vpop.f32.mrb[0].mxu0
      %v1706 = vadd.f32 %v432, %v1705
      %v1707 = vpop.f32.mrb[0].mxu0
      %v1708 = vpop.f32.mrb[0].mxu0
      %v1709 = vadd.f32 %v432, %v1708
      %v1710 = vpop.f32.mrb[0].mxu0
      %1711 = vmatprep.mubr.bf16.mxu0 0
      %1712 = vmatmul.mubr.bf16.gmra.mrb[0].mxu0 %v1102
      %v1713 = vpop.f32.mrb[0].mxu0
      %v1714 = vadd.f32 %v432, %v1713
      %v1715 = vpop.f32.mrb[0].mxu0
      %v1716 = vpop.f32.mrb[0].mxu0
      %v1717 = vadd.f32 %v432, %v1716
      %v1718 = vpop.f32.mrb[0].mxu0
      %1719 = vmatprep.mubr.bf16.mxu0 0
      %1720 = vmatmul.mubr.bf16.gmra.mrb[0].mxu0 %v1105
      %v1721 = vpop.f32.mrb[0].mxu0
      %v1722 = vadd.f32 %v432, %v1721
      %v1723 = vpop.f32.mrb[0].mxu0
      %v1724 = vpop.f32.mrb[0].mxu0
      %v1725 = vadd.f32 %v432, %v1724
      %v1726 = vpop.f32.mrb[0].mxu0
      %1727 = vmatprep.mubr.bf16.mxu0 0
      %1728 = vmatmul.mubr.bf16.gmra.mrb[0].mxu0 %v1108
      %v1729 = vpop.f32.mrb[0].mxu0
      %v1730 = vadd.f32 %v432, %v1729
      %v1731 = vpop.f32.mrb[0].mxu0
      %v1732 = vpop.f32.mrb[0].mxu0
      %v1733 = vadd.f32 %v432, %v1732
      %v1734 = vpop.f32.mrb[0].mxu0
      %1735 = vmatprep.mubr.bf16.mxu0 0
      %1736 = vmatmul.mubr.bf16.gmra.mrb[0].mxu0 %v1111
      %v1737 = vpop.f32.mrb[0].mxu0
      %v1738 = vadd.f32 %v432, %v1737
      %v1739 = vpop.f32.mrb[0].mxu0
      %v1740 = vpop.f32.mrb[0].mxu0
      %v1741 = vadd.f32 %v432, %v1740
      %v1742 = vpop.f32.mrb[0].mxu0
      %1743 = vmatprep.mubr.bf16.mxu0 0
      %1744 = vmatmul.mubr.bf16.gmra.mrb[0].mxu0 %v1114
      %v1745 = vpop.f32.mrb[0].mxu0
      %v1746 = vadd.f32 %v432, %v1745
      %v1747 = vpop.f32.mrb[0].mxu0
      %v1748 = vpop.f32.mrb[0].mxu0
      %v1749 = vadd.f32 %v432, %v1748
      %v1750 = vpop.f32.mrb[0].mxu0
      %1751 = vmatprep.mubr.bf16.mxu0 0
      %1752 = vmatmul.mubr.bf16.gmra.mrb[0].mxu0 %v1117
      %v1753 = vpop.f32.mrb[0].mxu0
      %v1754 = vadd.f32 %v432, %v1753
      %v1755 = vpop.f32.mrb[0].mxu0
      %v1756 = vpop.f32.mrb[0].mxu0
      %v1757 = vadd.f32 %v432, %v1756
      %v1758 = vpop.f32.mrb[0].mxu0
      %1759 = vmatprep.mubr.bf16.mxu0 0
      %1760 = vmatmul.mubr.bf16.gmra.mrb[0].mxu0 %v1120
      %v1761 = vpop.f32.mrb[0].mxu0
      %v1762 = vadd.f32 %v432, %v1761
      %v1763 = vpop.f32.mrb[0].mxu0
      %v1764 = vpop.f32.mrb[0].mxu0
      %v1765 = vadd.f32 %v432, %v1764
      %v1766 = vpop.f32.mrb[0].mxu0
      %1767 = vmatprep.mubr.bf16.mxu0 0
      %1768 = vmatmul.mubr.bf16.gmra.mrb[0].mxu0 %v1123
      %v1769 = vpop.f32.mrb[0].mxu0
      %v1770 = vadd.f32 %v432, %v1769
      %v1771 = vpop.f32.mrb[0].mxu0
      %v1772 = vpop.f32.mrb[0].mxu0
      %v1773 = vadd.f32 %v432, %v1772
      %v1774 = vpop.f32.mrb[0].mxu0
      %1775 = vmatprep.mubr.bf16.mxu0 0
      %1776 = vmatmul.mubr.bf16.gmra.mrb[0].mxu0 %v1126
      %v1777 = vpop.f32.mrb[0].mxu0
      %v1778 = vadd.f32 %v432, %v1777
      %v1779 = vpop.f32.mrb[0].mxu0
      %v1780 = vpop.f32.mrb[0].mxu0
      %v1781 = vadd.f32 %v432, %v1780
      %v1782 = vpop.f32.mrb[0].mxu0
      %1783 = vmatprep.mubr.bf16.mxu0 0
      %1784 = vmatmul.mubr.bf16.gmra.mrb[0].mxu0 %v1129
      %v1785 = vpop.f32.mrb[0].mxu0
      %v1786 = vadd.f32 %v432, %v1785
      %v1787 = vpop.f32.mrb[0].mxu0
      %v1788 = vpop.f32.mrb[0].mxu0
      %v1789 = vadd.f32 %v432, %v1788
      %v1790 = vpop.f32.mrb[0].mxu0
      %1791 = vmatprep.mubr.bf16.mxu0 0
      %1792 = vmatmul.mubr.bf16.gmra.mrb[0].mxu0 %v1132
      %v1793 = vpop.f32.mrb[0].mxu0
      %v1794 = vadd.f32 %v432, %v1793
      %v1795 = vpop.f32.mrb[0].mxu0
      %v1796 = vpop.f32.mrb[0].mxu0
      %v1797 = vadd.f32 %v432, %v1796
      %v1798 = vpop.f32.mrb[0].mxu0
      %1799 = vmatprep.mubr.bf16.mxu0 0
      %1800 = vmatmul.mubr.bf16.gmra.mrb[0].mxu0 %v1135
      %v1801 = vpop.f32.mrb[0].mxu0
      %v1802 = vadd.f32 %v432, %v1801
      %v1803 = vpop.f32.mrb[0].mxu0
      %v1804 = vpop.f32.mrb[0].mxu0
      %v1805 = vadd.f32 %v432, %v1804
      %v1806 = vpop.f32.mrb[0].mxu0
      %1807 = vmatprep.mubr.bf16.mxu0 0
      %1808 = vmatmul.mubr.bf16.gmra.mrb[0].mxu0 %v1138
      %v1809 = vpop.f32.mrb[0].mxu0
      %v1810 = vadd.f32 %v432, %v1809
      %v1811 = vpop.f32.mrb[0].mxu0
      %v1812 = vpop.f32.mrb[0].mxu0
      %v1813 = vadd.f32 %v432, %v1812
      %v1814 = vpop.f32.mrb[0].mxu0
      %1815 = vmatprep.mubr.bf16.mxu0 0
      %1816 = vmatmul.mubr.bf16.gmra.mrb[0].mxu0 %v1141
      %v1817 = vpop.f32.mrb[0].mxu0
      %v1818 = vadd.f32 %v432, %v1817
      %v1819 = vpop.f32.mrb[0].mxu0
      %v1820 = vpop.f32.mrb[0].mxu0
      %v1821 = vadd.f32 %v432, %v1820
      %v1822 = vpop.f32.mrb[0].mxu0
      %1823 = vmatprep.mubr.bf16.mxu0 0
      %1824 = vmatmul.mubr.bf16.gmra.mrb[0].mxu0 %v1144
      %v1825 = vpop.f32.mrb[0].mxu0
      %v1826 = vadd.f32 %v432, %v1825
      %v1827 = vpop.f32.mrb[0].mxu0
      %v1828 = vpop.f32.mrb[0].mxu0
      %v1829 = vadd.f32 %v432, %v1828
      %v1830 = vpop.f32.mrb[0].mxu0
      %1831 = vmatprep.mubr.bf16.mxu0 0
      %1832 = vmatmul.mubr.bf16.gmra.mrb[0].mxu0 %v1147
      %v1833 = vpop.f32.mrb[0].mxu0
      %v1834 = vadd.f32 %v432, %v1833
      %v1835 = vpop.f32.mrb[0].mxu0
      %v1836 = vpop.f32.mrb[0].mxu0
      %v1837 = vadd.f32 %v432, %v1836
      %v1838 = vpop.f32.mrb[0].mxu0
      %1839 = vmatprep.mubr.bf16.mxu0 0
      %1840 = vmatmul.mubr.bf16.gmra.mrb[0].mxu0 %v1150
      %v1841 = vpop.f32.mrb[0].mxu0
      %v1842 = vadd.f32 %v432, %v1841
      %v1843 = vpop.f32.mrb[0].mxu0
      %v1844 = vpop.f32.mrb[0].mxu0
      %v1845 = vadd.f32 %v432, %v1844
      %v1846 = vpop.f32.mrb[0].mxu0
      %1847 = vmatprep.mubr.bf16.mxu0 0
      %1848 = vmatmul.mubr.bf16.gmra.mrb[0].mxu0 %v1153
      %v1849 = vpop.f32.mrb[0].mxu0
      %v1850 = vadd.f32 %v432, %v1849
      %v1851 = vpop.f32.mrb[0].mxu0
      %v1852 = vpop.f32.mrb[0].mxu0
      %v1853 = vadd.f32 %v432, %v1852
      %v1854 = vpop.f32.mrb[0].mxu0
      %1855 = vmatprep.mubr.bf16.mxu0 0
      %1856 = vmatmul.mubr.bf16.gmra.mrb[0].mxu0 %v1156
      %v1857 = vpop.f32.mrb[0].mxu0
      %v1858 = vadd.f32 %v432, %v1857
      %v1859 = vpop.f32.mrb[0].mxu0
      %v1860 = vpop.f32.mrb[0].mxu0
      %v1861 = vadd.f32 %v432, %v1860
      %v1862 = vpop.f32.mrb[0].mxu0
      %1863 = vmatprep.mubr.bf16.mxu0 0
      %1864 = vmatmul.mubr.bf16.gmra.mrb[0].mxu0 %v1159
      %v1865 = vpop.f32.mrb[0].mxu0
      %v1866 = vadd.f32 %v432, %v1865
      %v1867 = vpop.f32.mrb[0].mxu0
      %v1868 = vpop.f32.mrb[0].mxu0
      %v1869 = vadd.f32 %v432, %v1868
      %v1870 = vpop.f32.mrb[0].mxu0
      %1871 = vmatprep.mubr.bf16.mxu0 0
      %1872 = vmatmul.mubr.bf16.gmra.mrb[0].mxu0 %v1162
      %v1873 = vpop.f32.mrb[0].mxu0
      %v1874 = vadd.f32 %v432, %v1873
      %v1875 = vpop.f32.mrb[0].mxu0
      %v1876 = vpop.f32.mrb[0].mxu0
      %v1877 = vadd.f32 %v432, %v1876
      %v1878 = vpop.f32.mrb[0].mxu0
      %1879 = vmatprep.mubr.bf16.mxu0 0
      %1880 = vmatmul.mubr.bf16.gmra.mrb[0].mxu0 %v1165
      %v1881 = vpop.f32.mrb[0].mxu0
      %v1882 = vadd.f32 %v432, %v1881
      %v1883 = vpop.f32.mrb[0].mxu0
      %v1884 = vpop.f32.mrb[0].mxu0
      %v1885 = vadd.f32 %v432, %v1884
      %v1886 = vpop.f32.mrb[0].mxu0
      %1887 = vmatprep.mubr.bf16.mxu0 0
      %1888 = vmatmul.mubr.bf16.gmra.mrb[0].mxu0 %v1168
      %v1889 = vpop.f32.mrb[0].mxu0
      %v1890 = vadd.f32 %v432, %v1889
      %v1891 = vpop.f32.mrb[0].mxu0
      %v1892 = vpop.f32.mrb[0].mxu0
      %v1893 = vadd.f32 %v432, %v1892
      %v1894 = vpop.f32.mrb[0].mxu0
      %1895 = vmatprep.mubr.bf16.mxu0 0
      %1896 = vmatmul.mubr.bf16.gmra.mrb[0].mxu0 %v1171
      %v1897 = vpop.f32.mrb[0].mxu0
      %v1898 = vadd.f32 %v432, %v1897
      %v1899 = vpop.f32.mrb[0].mxu0
      %v1900 = vpop.f32.mrb[0].mxu0
      %v1901 = vadd.f32 %v432, %v1900
      %v1902 = vpop.f32.mrb[0].mxu0
      %1903 = vmatprep.mubr.bf16.mxu0 0
      %1904 = vmatmul.mubr.bf16.gmra.mrb[0].mxu0 %v1174
      %v1905 = vpop.f32.mrb[0].mxu0
      %v1906 = vadd.f32 %v432, %v1905
      %v1907 = vpop.f32.mrb[0].mxu0
      %v1908 = vpop.f32.mrb[0].mxu0
      %v1909 = vadd.f32 %v432, %v1908
      %v1910 = vpop.f32.mrb[0].mxu0
      %1911 = vmatprep.mubr.bf16.mxu0 0
      %1912 = vmatmul.mubr.bf16.gmra.mrb[0].mxu0 %v1177
      %v1913 = vpop.f32.mrb[0].mxu0
      %v1914 = vadd.f32 %v432, %v1913
      %v1915 = vpop.f32.mrb[0].mxu0
      %v1916 = vpop.f32.mrb[0].mxu0
      %v1917 = vadd.f32 %v432, %v1916
      %v1918 = vpop.f32.mrb[0].mxu0
      %1919 = vmatprep.mubr.bf16.mxu0 0
      %1920 = vmatmul.mubr.bf16.gmra.mrb[0].mxu0 %v1180
      %v1921 = vpop.f32.mrb[0].mxu0
      %v1922 = vadd.f32 %v432, %v1921
      %v1923 = vpop.f32.mrb[0].mxu0
      %v1924 = vpop.f32.mrb[0].mxu0
      %v1925 = vadd.f32 %v432, %v1924
      %v1926 = vpop.f32.mrb[0].mxu0
      %1927 = vmatprep.mubr.bf16.mxu0 0
      %1928 = vmatmul.mubr.bf16.gmra.mrb[0].mxu0 %v1183
      %v1929 = vpop.f32.mrb[0].mxu0
      %v1930 = vadd.f32 %v432, %v1929
      %v1931 = vpop.f32.mrb[0].mxu0
      %v1932 = vpop.f32.mrb[0].mxu0
      %v1933 = vadd.f32 %v432, %v1932
      %v1934 = vpop.f32.mrb[0].mxu0
      %1935 = vmatprep.mubr.bf16.mxu0 0
      %1936 = vmatmul.mubr.bf16.gmra.mrb[0].mxu0 %v1186
      %v1937 = vpop.f32.mrb[0].mxu0
      %v1938 = vadd.f32 %v432, %v1937
      %v1939 = vpop.f32.mrb[0].mxu0
      %v1940 = vpop.f32.mrb[0].mxu0
      %v1941 = vadd.f32 %v432, %v1940
      %v1942 = vpop.f32.mrb[0].mxu0
      %1943 = vmatprep.mubr.bf16.mxu0 0
      %1944 = vmatmul.mubr.bf16.gmra.mrb[0].mxu0 %v1189
      %v1945 = vpop.f32.mrb[0].mxu0
      %v1946 = vadd.f32 %v432, %v1945
      %v1947 = vpop.f32.mrb[0].mxu0
      %v1948 = vpop.f32.mrb[0].mxu0
      %v1949 = vadd.f32 %v432, %v1948
      %v1950 = vpop.f32.mrb[0].mxu0
      %1951 = vmatprep.mubr.bf16.mxu0 0
      %1952 = vmatmul.mubr.bf16.gmra.mrb[0].mxu0 %v1192
      %v1953 = vpop.f32.mrb[0].mxu0
      %v1954 = vadd.f32 %v432, %v1953
      %v1955 = vpop.f32.mrb[0].mxu0
      %v1956 = vpop.f32.mrb[0].mxu0
      %v1957 = vadd.f32 %v432, %v1956
      %v1958 = vpop.f32.mrb[0].mxu0
      %1959 = vmatprep.mubr.bf16.mxu0 0
      %1960 = vmatmul.mubr.bf16.gmra.mrb[0].mxu0 %v1195
      %v1961 = vpop.f32.mrb[0].mxu0
      %v1962 = vadd.f32 %v432, %v1961
      %v1963 = vpop.f32.mrb[0].mxu0
      %v1964 = vpop.f32.mrb[0].mxu0
      %v1965 = vadd.f32 %v432, %v1964
      %v1966 = vpop.f32.mrb[0].mxu0
      %1967 = vmatprep.mubr.bf16.mxu0 0
      %1968 = vmatmul.mubr.bf16.gmra.mrb[0].mxu0 %v1198
      %v1969 = vpop.f32.mrb[0].mxu0
      %v1970 = vadd.f32 %v432, %v1969
      %v1971 = vpop.f32.mrb[0].mxu0
      %v1972 = vpop.f32.mrb[0].mxu0
      %v1973 = vadd.f32 %v432, %v1972
      %v1974 = vpop.f32.mrb[0].mxu0
      %1975 = vmatprep.mubr.bf16.mxu0 0
      %1976 = vmatmul.mubr.bf16.gmra.mrb[0].mxu0 %v1201
      %v1977 = vpop.f32.mrb[0].mxu0
      %v1978 = vadd.f32 %v432, %v1977
      %v1979 = vpop.f32.mrb[0].mxu0
      %v1980 = vpop.f32.mrb[0].mxu0
      %v1981 = vadd.f32 %v432, %v1980
      %v1982 = vpop.f32.mrb[0].mxu0
      %1983 = vmatprep.mubr.bf16.mxu0 0
      %1984 = vmatmul.mubr.bf16.gmra.mrb[0].mxu0 %v1204
      %v1985 = vpop.f32.mrb[0].mxu0
      %v1986 = vadd.f32 %v432, %v1985
      %v1987 = vpop.f32.mrb[0].mxu0
      %v1988 = vpop.f32.mrb[0].mxu0
      %v1989 = vadd.f32 %v432, %v1988
      %v1990 = vpop.f32.mrb[0].mxu0
      %1991 = vmatprep.mubr.bf16.mxu0 0
      %1992 = vmatmul.mubr.bf16.gmra.mrb[0].mxu0 %v1207
      %v1993 = vpop.f32.mrb[0].mxu0
      %v1994 = vadd.f32 %v432, %v1993
      %v1995 = vpop.f32.mrb[0].mxu0
      %v1996 = vpop.f32.mrb[0].mxu0
      %v1997 = vadd.f32 %v432, %v1996
      %v1998 = vpop.f32.mrb[0].mxu0
      %1999 = vmatprep.mubr.bf16.mxu0 0
      %2000 = vmatmul.mubr.bf16.gmra.mrb[0].mxu0 %v1210
      %v2001 = vpop.f32.mrb[0].mxu0
      %v2002 = vadd.f32 %v432, %v2001
      %v2003 = vpop.f32.mrb[0].mxu0
      %v2004 = vpop.f32.mrb[0].mxu0
      %v2005 = vadd.f32 %v432, %v2004
      %v2006 = vpop.f32.mrb[0].mxu0
      %2007 = vmatprep.mubr.bf16.mxu0 0
      %2008 = vmatmul.mubr.bf16.gmra.mrb[0].mxu0 %v1213
      %v2009 = vpop.f32.mrb[0].mxu0
      %v2010 = vadd.f32 %v432, %v2009
      %v2011 = vpop.f32.mrb[0].mxu0
      %v2012 = vpop.f32.mrb[0].mxu0
      %v2013 = vadd.f32 %v432, %v2012
      %v2014 = vpop.f32.mrb[0].mxu0
      %2015 = vdwg.mxu0
      %v2016 = vmax.f32 %v1250, 0.0
      %v2017 = vmax.f32 %v1253, 0.0
      %v2018 = vmax.f32 %v1258, 0.0
      %v2019 = vmax.f32 %v1261, 0.0
      %v2020 = vmax.f32 %v1266, 0.0
      %v2021 = vmax.f32 %v1269, 0.0
      %v2022 = vmax.f32 %v1274, 0.0
      %v2023 = vmax.f32 %v1277, 0.0
      %v2024 = vmax.f32 %v1282, 0.0
      %v2025 = vmax.f32 %v1285, 0.0
      %v2026 = vmax.f32 %v1290, 0.0
      %v2027 = vmax.f32 %v1293, 0.0
      %v2028 = vmax.f32 %v1298, 0.0
      %v2029 = vmax.f32 %v1301, 0.0
      %v2030 = vmax.f32 %v1306, 0.0
      %v2031 = vmax.f32 %v1309, 0.0
      %v2032 = vmax.f32 %v1314, 0.0
      %v2033 = vmax.f32 %v1317, 0.0
      %v2034 = vmax.f32 %v1322, 0.0
      %v2035 = vmax.f32 %v1325, 0.0
      %v2036 = vmax.f32 %v1330, 0.0
      %v2037 = vmax.f32 %v1333, 0.0
      %v2038 = vmax.f32 %v1338, 0.0
      %v2039 = vmax.f32 %v1341, 0.0
      %v2040 = vmax.f32 %v1346, 0.0
      %v2041 = vmax.f32 %v1349, 0.0
      %v2042 = vmax.f32 %v1354, 0.0
      %v2043 = vmax.f32 %v1357, 0.0
      %v2044 = vmax.f32 %v1362, 0.0
      %v2045 = vmax.f32 %v1365, 0.0
      %v2046 = vmax.f32 %v1370, 0.0
      %v2047 = vmax.f32 %v1373, 0.0
      %v2048 = vmax.f32 %v1378, 0.0
      %v2049 = vmax.f32 %v1381, 0.0
      %v2050 = vmax.f32 %v1386, 0.0
      %v2051 = vmax.f32 %v1389, 0.0
      %v2052 = vmax.f32 %v1394, 0.0
      %v2053 = vmax.f32 %v1397, 0.0
      %v2054 = vmax.f32 %v1402, 0.0
      %v2055 = vmax.f32 %v1405, 0.0
      %v2056 = vmax.f32 %v1410, 0.0
      %v2057 = vmax.f32 %v1413, 0.0
      %v2058 = vmax.f32 %v1418, 0.0
      %v2059 = vmax.f32 %v1421, 0.0
      %v2060 = vmax.f32 %v1426, 0.0
      %v2061 = vmax.f32 %v1429, 0.0
      %v2062 = vmax.f32 %v1434, 0.0
      %v2063 = vmax.f32 %v1437, 0.0
      %v2064 = vmax.f32 %v1442, 0.0
      %v2065 = vmax.f32 %v1445, 0.0
      %v2066 = vmax.f32 %v1450, 0.0
      %v2067 = vmax.f32 %v1453, 0.0
      %v2068 = vmax.f32 %v1458, 0.0
      %v2069 = vmax.f32 %v1461, 0.0
      %v2070 = vmax.f32 %v1466, 0.0
      %v2071 = vmax.f32 %v1469, 0.0
      %v2072 = vmax.f32 %v1474, 0.0
      %v2073 = vmax.f32 %v1477, 0.0
      %v2074 = vmax.f32 %v1482, 0.0
      %v2075 = vmax.f32 %v1485, 0.0
      %v2076 = vmax.f32 %v1490, 0.0
      %v2077 = vmax.f32 %v1493, 0.0
      %v2078 = vmax.f32 %v1498, 0.0
      %v2079 = vmax.f32 %v1501, 0.0
      %v2080 = vmax.f32 %v1506, 0.0
      %v2081 = vmax.f32 %v1509, 0.0
      %v2082 = vmax.f32 %v1514, 0.0
      %v2083 = vmax.f32 %v1517, 0.0
      %v2084 = vmax.f32 %v1522, 0.0
      %v2085 = vmax.f32 %v1525, 0.0
      %v2086 = vmax.f32 %v1530, 0.0
      %v2087 = vmax.f32 %v1533, 0.0
      %v2088 = vmax.f32 %v1538, 0.0
      %v2089 = vmax.f32 %v1541, 0.0
      %v2090 = vmax.f32 %v1546, 0.0
      %v2091 = vmax.f32 %v1549, 0.0
      %v2092 = vmax.f32 %v1554, 0.0
      %v2093 = vmax.f32 %v1557, 0.0
      %v2094 = vmax.f32 %v1562, 0.0
      %v2095 = vmax.f32 %v1565, 0.0
      %v2096 = vmax.f32 %v1570, 0.0
      %v2097 = vmax.f32 %v1573, 0.0
      %v2098 = vmax.f32 %v1578, 0.0
      %v2099 = vmax.f32 %v1581, 0.0
      %v2100 = vmax.f32 %v1586, 0.0
      %v2101 = vmax.f32 %v1589, 0.0
      %v2102 = vmax.f32 %v1594, 0.0
      %v2103 = vmax.f32 %v1597, 0.0
      %v2104 = vmax.f32 %v1602, 0.0
      %v2105 = vmax.f32 %v1605, 0.0
      %v2106 = vmax.f32 %v1610, 0.0
      %v2107 = vmax.f32 %v1613, 0.0
      %v2108 = vmax.f32 %v1618, 0.0
      %v2109 = vmax.f32 %v1621, 0.0
      %v2110 = vmax.f32 %v1626, 0.0
      %v2111 = vmax.f32 %v1629, 0.0
      %v2112 = vmax.f32 %v1634, 0.0
      %v2113 = vmax.f32 %v1637, 0.0
      %v2114 = vmax.f32 %v1642, 0.0
      %v2115 = vmax.f32 %v1645, 0.0
      %v2116 = vmax.f32 %v1650, 0.0
      %v2117 = vmax.f32 %v1653, 0.0
      %v2118 = vmax.f32 %v1658, 0.0
      %v2119 = vmax.f32 %v1661, 0.0
      %v2120 = vmax.f32 %v1666, 0.0
      %v2121 = vmax.f32 %v1669, 0.0
      %v2122 = vmax.f32 %v1674, 0.0
      %v2123 = vmax.f32 %v1677, 0.0
      %v2124 = vmax.f32 %v1682, 0.0
      %v2125 = vmax.f32 %v1685, 0.0
      %v2126 = vmax.f32 %v1690, 0.0
      %v2127 = vmax.f32 %v1693, 0.0
      %v2128 = vmax.f32 %v1698, 0.0
      %v2129 = vmax.f32 %v1701, 0.0
      %v2130 = vmax.f32 %v1706, 0.0
      %v2131 = vmax.f32 %v1709, 0.0
      %v2132 = vmax.f32 %v1714, 0.0
      %v2133 = vmax.f32 %v1717, 0.0
      %v2134 = vmax.f32 %v1722, 0.0
      %v2135 = vmax.f32 %v1725, 0.0
      %v2136 = vmax.f32 %v1730, 0.0
      %v2137 = vmax.f32 %v1733, 0.0
      %v2138 = vmax.f32 %v1738, 0.0
      %v2139 = vmax.f32 %v1741, 0.0
      %v2140 = vmax.f32 %v1746, 0.0
      %v2141 = vmax.f32 %v1749, 0.0
      %v2142 = vmax.f32 %v1754, 0.0
      %v2143 = vmax.f32 %v1757, 0.0
      %v2144 = vmax.f32 %v1762, 0.0
      %v2145 = vmax.f32 %v1765, 0.0
      %v2146 = vmax.f32 %v1770, 0.0
      %v2147 = vmax.f32 %v1773, 0.0
      %v2148 = vmax.f32 %v1778, 0.0
      %v2149 = vmax.f32 %v1781, 0.0
      %v2150 = vmax.f32 %v1786, 0.0
      %v2151 = vmax.f32 %v1789, 0.0
      %v2152 = vmax.f32 %v1794, 0.0
      %v2153 = vmax.f32 %v1797, 0.0
      %v2154 = vmax.f32 %v1802, 0.0
      %v2155 = vmax.f32 %v1805, 0.0
      %v2156 = vmax.f32 %v1810, 0.0
      %v2157 = vmax.f32 %v1813, 0.0
      %v2158 = vmax.f32 %v1818, 0.0
      %v2159 = vmax.f32 %v1821, 0.0
      %v2160 = vmax.f32 %v1826, 0.0
      %v2161 = vmax.f32 %v1829, 0.0
      %v2162 = vmax.f32 %v1834, 0.0
      %v2163 = vmax.f32 %v1837, 0.0
      %v2164 = vmax.f32 %v1842, 0.0
      %v2165 = vmax.f32 %v1845, 0.0
      %v2166 = vmax.f32 %v1850, 0.0
      %v2167 = vmax.f32 %v1853, 0.0
      %v2168 = vmax.f32 %v1858, 0.0
      %v2169 = vmax.f32 %v1861, 0.0
      %v2170 = vmax.f32 %v1866, 0.0
      %v2171 = vmax.f32 %v1869, 0.0
      %v2172 = vmax.f32 %v1874, 0.0
      %v2173 = vmax.f32 %v1877, 0.0
      %v2174 = vmax.f32 %v1882, 0.0
      %v2175 = vmax.f32 %v1885, 0.0
      %v2176 = vmax.f32 %v1890, 0.0
      %v2177 = vmax.f32 %v1893, 0.0
      %v2178 = vmax.f32 %v1898, 0.0
      %v2179 = vmax.f32 %v1901, 0.0
      %v2180 = vmax.f32 %v1906, 0.0
      %v2181 = vmax.f32 %v1909, 0.0
      %v2182 = vmax.f32 %v1914, 0.0
      %v2183 = vmax.f32 %v1917, 0.0
      %v2184 = vmax.f32 %v1922, 0.0
      %v2185 = vmax.f32 %v1925, 0.0
      %v2186 = vmax.f32 %v1930, 0.0
      %v2187 = vmax.f32 %v1933, 0.0
      %v2188 = vmax.f32 %v1938, 0.0
      %v2189 = vmax.f32 %v1941, 0.0
      %v2190 = vmax.f32 %v1946, 0.0
      %v2191 = vmax.f32 %v1949, 0.0
      %v2192 = vmax.f32 %v1954, 0.0
      %v2193 = vmax.f32 %v1957, 0.0
      %v2194 = vmax.f32 %v1962, 0.0
      %v2195 = vmax.f32 %v1965, 0.0
      %v2196 = vmax.f32 %v1970, 0.0
      %v2197 = vmax.f32 %v1973, 0.0
      %v2198 = vmax.f32 %v1978, 0.0
      %v2199 = vmax.f32 %v1981, 0.0
      %v2200 = vmax.f32 %v1986, 0.0
      %v2201 = vmax.f32 %v1989, 0.0
      %v2202 = vmax.f32 %v1994, 0.0
      %v2203 = vmax.f32 %v1997, 0.0
      %v2204 = vmax.f32 %v2002, 0.0
      %v2205 = vmax.f32 %v2005, 0.0
      %v2206 = vmax.f32 %v2010, 0.0
      %v2207 = vmax.f32 %v2013, 0.0
      %v2208 = vadd.f32 %v2016, %v2017
      %v2209 = vadd.f32 %v2208, %v2018
      %v2210 = vadd.f32 %v2209, %v2019
      %v2211 = vadd.f32 %v2210, %v2020
      %v2212 = vadd.f32 %v2211, %v2021
      %v2213 = vadd.f32 %v2212, %v2022
      %v2214 = vadd.f32 %v2213, %v2023
      %v2215 = vrot.slane %v2214, 4
      %v2216 = vadd.f32 %v2214, %v2215
      %v2217 = vrot.slane %v2216, 2
      %v2218 = vadd.f32 %v2216, %v2217
      %v2219 = vrot.slane %v2218, 1
      %v2220 = vadd.f32 %v2218, %v2219
      %v2221 = vadd.f32 %v2024, %v2025
      %v2222 = vadd.f32 %v2221, %v2026
      %v2223 = vadd.f32 %v2222, %v2027
      %v2224 = vadd.f32 %v2223, %v2028
      %v2225 = vadd.f32 %v2224, %v2029
      %v2226 = vadd.f32 %v2225, %v2030
      %v2227 = vadd.f32 %v2226, %v2031
      %v2228 = vrot.slane %v2227, 4
      %v2229 = vadd.f32 %v2227, %v2228
      %v2230 = vrot.slane %v2229, 2
      %v2231 = vadd.f32 %v2229, %v2230
      %v2232 = vrot.slane %v2231, 1
      %v2233 = vadd.f32 %v2231, %v2232
      %v2234 = vadd.f32 %v2032, %v2033
      %v2235 = vadd.f32 %v2234, %v2034
      %v2236 = vadd.f32 %v2235, %v2035
      %v2237 = vadd.f32 %v2236, %v2036
      %v2238 = vadd.f32 %v2237, %v2037
      %v2239 = vadd.f32 %v2238, %v2038
      %v2240 = vadd.f32 %v2239, %v2039
      %v2241 = vrot.slane %v2240, 4
      %v2242 = vadd.f32 %v2240, %v2241
      %v2243 = vrot.slane %v2242, 2
      %v2244 = vadd.f32 %v2242, %v2243
      %v2245 = vrot.slane %v2244, 1
      %v2246 = vadd.f32 %v2244, %v2245
      %v2247 = vadd.f32 %v2040, %v2041
      %v2248 = vadd.f32 %v2247, %v2042
      %v2249 = vadd.f32 %v2248, %v2043
      %v2250 = vadd.f32 %v2249, %v2044
      %v2251 = vadd.f32 %v2250, %v2045
      %v2252 = vadd.f32 %v2251, %v2046
      %v2253 = vadd.f32 %v2252, %v2047
      %v2254 = vrot.slane %v2253, 4
      %v2255 = vadd.f32 %v2253, %v2254
      %v2256 = vrot.slane %v2255, 2
      %v2257 = vadd.f32 %v2255, %v2256
      %v2258 = vrot.slane %v2257, 1
      %v2259 = vadd.f32 %v2257, %v2258
      %v2260 = vadd.f32 %v2048, %v2049
      %v2261 = vadd.f32 %v2260, %v2050
      %v2262 = vadd.f32 %v2261, %v2051
      %v2263 = vadd.f32 %v2262, %v2052
      %v2264 = vadd.f32 %v2263, %v2053
      %v2265 = vadd.f32 %v2264, %v2054
      %v2266 = vadd.f32 %v2265, %v2055
      %v2267 = vrot.slane %v2266, 4
      %v2268 = vadd.f32 %v2266, %v2267
      %v2269 = vrot.slane %v2268, 2
      %v2270 = vadd.f32 %v2268, %v2269
      %v2271 = vrot.slane %v2270, 1
      %v2272 = vadd.f32 %v2270, %v2271
      %v2273 = vadd.f32 %v2056, %v2057
      %v2274 = vadd.f32 %v2273, %v2058
      %v2275 = vadd.f32 %v2274, %v2059
      %v2276 = vadd.f32 %v2275, %v2060
      %v2277 = vadd.f32 %v2276, %v2061
      %v2278 = vadd.f32 %v2277, %v2062
      %v2279 = vadd.f32 %v2278, %v2063
      %v2280 = vrot.slane %v2279, 4
      %v2281 = vadd.f32 %v2279, %v2280
      %v2282 = vrot.slane %v2281, 2
      %v2283 = vadd.f32 %v2281, %v2282
      %v2284 = vrot.slane %v2283, 1
      %v2285 = vadd.f32 %v2283, %v2284
      %v2286 = vadd.f32 %v2064, %v2065
      %v2287 = vadd.f32 %v2286, %v2066
      %v2288 = vadd.f32 %v2287, %v2067
      %v2289 = vadd.f32 %v2288, %v2068
      %v2290 = vadd.f32 %v2289, %v2069
      %v2291 = vadd.f32 %v2290, %v2070
      %v2292 = vadd.f32 %v2291, %v2071
      %v2293 = vrot.slane %v2292, 4
      %v2294 = vadd.f32 %v2292, %v2293
      %v2295 = vrot.slane %v2294, 2
      %v2296 = vadd.f32 %v2294, %v2295
      %v2297 = vrot.slane %v2296, 1
      %v2298 = vadd.f32 %v2296, %v2297
      %v2299 = vadd.f32 %v2072, %v2073
      %v2300 = vadd.f32 %v2299, %v2074
      %v2301 = vadd.f32 %v2300, %v2075
      %v2302 = vadd.f32 %v2301, %v2076
      %v2303 = vadd.f32 %v2302, %v2077
      %v2304 = vadd.f32 %v2303, %v2078
      %v2305 = vadd.f32 %v2304, %v2079
      %v2306 = vrot.slane %v2305, 4
      %v2307 = vadd.f32 %v2305, %v2306
      %v2308 = vrot.slane %v2307, 2
      %v2309 = vadd.f32 %v2307, %v2308
      %v2310 = vrot.slane %v2309, 1
      %v2311 = vadd.f32 %v2309, %v2310
      %v2312 = vadd.f32 %v2080, %v2081
      %v2313 = vadd.f32 %v2312, %v2082
      %v2314 = vadd.f32 %v2313, %v2083
      %v2315 = vadd.f32 %v2314, %v2084
      %v2316 = vadd.f32 %v2315, %v2085
      %v2317 = vadd.f32 %v2316, %v2086
      %v2318 = vadd.f32 %v2317, %v2087
      %v2319 = vrot.slane %v2318, 4
      %v2320 = vadd.f32 %v2318, %v2319
      %v2321 = vrot.slane %v2320, 2
      %v2322 = vadd.f32 %v2320, %v2321
      %v2323 = vrot.slane %v2322, 1
      %v2324 = vadd.f32 %v2322, %v2323
      %v2325 = vadd.f32 %v2088, %v2089
      %v2326 = vadd.f32 %v2325, %v2090
      %v2327 = vadd.f32 %v2326, %v2091
      %v2328 = vadd.f32 %v2327, %v2092
      %v2329 = vadd.f32 %v2328, %v2093
      %v2330 = vadd.f32 %v2329, %v2094
      %v2331 = vadd.f32 %v2330, %v2095
      %v2332 = vrot.slane %v2331, 4
      %v2333 = vadd.f32 %v2331, %v2332
      %v2334 = vrot.slane %v2333, 2
      %v2335 = vadd.f32 %v2333, %v2334
      %v2336 = vrot.slane %v2335, 1
      %v2337 = vadd.f32 %v2335, %v2336
      %v2338 = vadd.f32 %v2096, %v2097
      %v2339 = vadd.f32 %v2338, %v2098
      %v2340 = vadd.f32 %v2339, %v2099
      %v2341 = vadd.f32 %v2340, %v2100
      %v2342 = vadd.f32 %v2341, %v2101
      %v2343 = vadd.f32 %v2342, %v2102
      %v2344 = vadd.f32 %v2343, %v2103
      %v2345 = vrot.slane %v2344, 4
      %v2346 = vadd.f32 %v2344, %v2345
      %v2347 = vrot.slane %v2346, 2
      %v2348 = vadd.f32 %v2346, %v2347
      %v2349 = vrot.slane %v2348, 1
      %v2350 = vadd.f32 %v2348, %v2349
      %v2351 = vadd.f32 %v2104, %v2105
      %v2352 = vadd.f32 %v2351, %v2106
      %v2353 = vadd.f32 %v2352, %v2107
      %v2354 = vadd.f32 %v2353, %v2108
      %v2355 = vadd.f32 %v2354, %v2109
      %v2356 = vadd.f32 %v2355, %v2110
      %v2357 = vadd.f32 %v2356, %v2111
      %v2358 = vrot.slane %v2357, 4
      %v2359 = vadd.f32 %v2357, %v2358
      %v2360 = vrot.slane %v2359, 2
      %v2361 = vadd.f32 %v2359, %v2360
      %v2362 = vrot.slane %v2361, 1
      %v2363 = vadd.f32 %v2361, %v2362
      %v2364 = vadd.f32 %v2112, %v2113
      %v2365 = vadd.f32 %v2364, %v2114
      %v2366 = vadd.f32 %v2365, %v2115
      %v2367 = vadd.f32 %v2366, %v2116
      %v2368 = vadd.f32 %v2367, %v2117
      %v2369 = vadd.f32 %v2368, %v2118
      %v2370 = vadd.f32 %v2369, %v2119
      %v2371 = vrot.slane %v2370, 4
      %v2372 = vadd.f32 %v2370, %v2371
      %v2373 = vrot.slane %v2372, 2
      %v2374 = vadd.f32 %v2372, %v2373
      %v2375 = vrot.slane %v2374, 1
      %v2376 = vadd.f32 %v2374, %v2375
      %v2377 = vadd.f32 %v2120, %v2121
      %v2378 = vadd.f32 %v2377, %v2122
      %v2379 = vadd.f32 %v2378, %v2123
      %v2380 = vadd.f32 %v2379, %v2124
      %v2381 = vadd.f32 %v2380, %v2125
      %v2382 = vadd.f32 %v2381, %v2126
      %v2383 = vadd.f32 %v2382, %v2127
      %v2384 = vrot.slane %v2383, 4
      %v2385 = vadd.f32 %v2383, %v2384
      %v2386 = vrot.slane %v2385, 2
      %v2387 = vadd.f32 %v2385, %v2386
      %v2388 = vrot.slane %v2387, 1
      %v2389 = vadd.f32 %v2387, %v2388
      %v2390 = vadd.f32 %v2128, %v2129
      %v2391 = vadd.f32 %v2390, %v2130
      %v2392 = vadd.f32 %v2391, %v2131
      %v2393 = vadd.f32 %v2392, %v2132
      %v2394 = vadd.f32 %v2393, %v2133
      %v2395 = vadd.f32 %v2394, %v2134
      %v2396 = vadd.f32 %v2395, %v2135
      %v2397 = vrot.slane %v2396, 4
      %v2398 = vadd.f32 %v2396, %v2397
      %v2399 = vrot.slane %v2398, 2
      %v2400 = vadd.f32 %v2398, %v2399
      %v2401 = vrot.slane %v2400, 1
      %v2402 = vadd.f32 %v2400, %v2401
      %v2403 = vadd.f32 %v2136, %v2137
      %v2404 = vadd.f32 %v2403, %v2138
      %v2405 = vadd.f32 %v2404, %v2139
      %v2406 = vadd.f32 %v2405, %v2140
      %v2407 = vadd.f32 %v2406, %v2141
      %v2408 = vadd.f32 %v2407, %v2142
      %v2409 = vadd.f32 %v2408, %v2143
      %v2410 = vrot.slane %v2409, 4
      %v2411 = vadd.f32 %v2409, %v2410
      %v2412 = vrot.slane %v2411, 2
      %v2413 = vadd.f32 %v2411, %v2412
      %v2414 = vrot.slane %v2413, 1
      %v2415 = vadd.f32 %v2413, %v2414
      %v2416 = vadd.f32 %v2144, %v2145
      %v2417 = vadd.f32 %v2416, %v2146
      %v2418 = vadd.f32 %v2417, %v2147
      %v2419 = vadd.f32 %v2418, %v2148
      %v2420 = vadd.f32 %v2419, %v2149
      %v2421 = vadd.f32 %v2420, %v2150
      %v2422 = vadd.f32 %v2421, %v2151
      %v2423 = vrot.slane %v2422, 4
      %v2424 = vadd.f32 %v2422, %v2423
      %v2425 = vrot.slane %v2424, 2
      %v2426 = vadd.f32 %v2424, %v2425
      %v2427 = vrot.slane %v2426, 1
      %v2428 = vadd.f32 %v2426, %v2427
      %v2429 = vadd.f32 %v2152, %v2153
      %v2430 = vadd.f32 %v2429, %v2154
      %v2431 = vadd.f32 %v2430, %v2155
      %v2432 = vadd.f32 %v2431, %v2156
      %v2433 = vadd.f32 %v2432, %v2157
      %v2434 = vadd.f32 %v2433, %v2158
      %v2435 = vadd.f32 %v2434, %v2159
      %v2436 = vrot.slane %v2435, 4
      %v2437 = vadd.f32 %v2435, %v2436
      %v2438 = vrot.slane %v2437, 2
      %v2439 = vadd.f32 %v2437, %v2438
      %v2440 = vrot.slane %v2439, 1
      %v2441 = vadd.f32 %v2439, %v2440
      %v2442 = vadd.f32 %v2160, %v2161
      %v2443 = vadd.f32 %v2442, %v2162
      %v2444 = vadd.f32 %v2443, %v2163
      %v2445 = vadd.f32 %v2444, %v2164
      %v2446 = vadd.f32 %v2445, %v2165
      %v2447 = vadd.f32 %v2446, %v2166
      %v2448 = vadd.f32 %v2447, %v2167
      %v2449 = vrot.slane %v2448, 4
      %v2450 = vadd.f32 %v2448, %v2449
      %v2451 = vrot.slane %v2450, 2
      %v2452 = vadd.f32 %v2450, %v2451
      %v2453 = vrot.slane %v2452, 1
      %v2454 = vadd.f32 %v2452, %v2453
      %v2455 = vadd.f32 %v2168, %v2169
      %v2456 = vadd.f32 %v2455, %v2170
      %v2457 = vadd.f32 %v2456, %v2171
      %v2458 = vadd.f32 %v2457, %v2172
      %v2459 = vadd.f32 %v2458, %v2173
      %v2460 = vadd.f32 %v2459, %v2174
      %v2461 = vadd.f32 %v2460, %v2175
      %v2462 = vrot.slane %v2461, 4
      %v2463 = vadd.f32 %v2461, %v2462
      %v2464 = vrot.slane %v2463, 2
      %v2465 = vadd.f32 %v2463, %v2464
      %v2466 = vrot.slane %v2465, 1
      %v2467 = vadd.f32 %v2465, %v2466
      %v2468 = vadd.f32 %v2176, %v2177
      %v2469 = vadd.f32 %v2468, %v2178
      %v2470 = vadd.f32 %v2469, %v2179
      %v2471 = vadd.f32 %v2470, %v2180
      %v2472 = vadd.f32 %v2471, %v2181
      %v2473 = vadd.f32 %v2472, %v2182
      %v2474 = vadd.f32 %v2473, %v2183
      %v2475 = vrot.slane %v2474, 4
      %v2476 = vadd.f32 %v2474, %v2475
      %v2477 = vrot.slane %v2476, 2
      %v2478 = vadd.f32 %v2476, %v2477
      %v2479 = vrot.slane %v2478, 1
      %v2480 = vadd.f32 %v2478, %v2479
      %v2481 = vadd.f32 %v2184, %v2185
      %v2482 = vadd.f32 %v2481, %v2186
      %v2483 = vadd.f32 %v2482, %v2187
      %v2484 = vadd.f32 %v2483, %v2188
      %v2485 = vadd.f32 %v2484, %v2189
      %v2486 = vadd.f32 %v2485, %v2190
      %v2487 = vadd.f32 %v2486, %v2191
      %v2488 = vrot.slane %v2487, 4
      %v2489 = vadd.f32 %v2487, %v2488
      %v2490 = vrot.slane %v2489, 2
      %v2491 = vadd.f32 %v2489, %v2490
      %v2492 = vrot.slane %v2491, 1
      %v2493 = vadd.f32 %v2491, %v2492
      %v2494 = vadd.f32 %v2192, %v2193
      %v2495 = vadd.f32 %v2494, %v2194
      %v2496 = vadd.f32 %v2495, %v2195
      %v2497 = vadd.f32 %v2496, %v2196
      %v2498 = vadd.f32 %v2497, %v2197
      %v2499 = vadd.f32 %v2498, %v2198
      %v2500 = vadd.f32 %v2499, %v2199
      %v2501 = vrot.slane %v2500, 4
      %v2502 = vadd.f32 %v2500, %v2501
      %v2503 = vrot.slane %v2502, 2
      %v2504 = vadd.f32 %v2502, %v2503
      %v2505 = vrot.slane %v2504, 1
      %v2506 = vadd.f32 %v2504, %v2505
      %v2507 = vadd.f32 %v2200, %v2201
      %v2508 = vadd.f32 %v2507, %v2202
      %v2509 = vadd.f32 %v2508, %v2203
      %v2510 = vadd.f32 %v2509, %v2204
      %v2511 = vadd.f32 %v2510, %v2205
      %v2512 = vadd.f32 %v2511, %v2206
      %v2513 = vadd.f32 %v2512, %v2207
      %v2514 = vrot.slane %v2513, 4
      %v2515 = vadd.f32 %v2513, %v2514
      %v2516 = vrot.slane %v2515, 2
      %v2517 = vadd.f32 %v2515, %v2516
      %v2518 = vrot.slane %v2517, 1
      %v2519 = vadd.f32 %v2517, %v2518
      %v2520 = vrcp.pop 64.0
      %v2521 = vmul.f32 %v2220, %v2520
      %v2522 = vmul.f32 %v2233, %v2520
      %v2523 = vmul.f32 %v2246, %v2520
      %v2524 = vmul.f32 %v2259, %v2520
      %v2525 = vmul.f32 %v2272, %v2520
      %v2526 = vmul.f32 %v2285, %v2520
      %v2527 = vmul.f32 %v2298, %v2520
      %v2528 = vmul.f32 %v2311, %v2520
      %v2529 = vmul.f32 %v2324, %v2520
      %v2530 = vmul.f32 %v2337, %v2520
      %v2531 = vmul.f32 %v2350, %v2520
      %v2532 = vmul.f32 %v2363, %v2520
      %v2533 = vmul.f32 %v2376, %v2520
      %v2534 = vmul.f32 %v2389, %v2520
      %v2535 = vmul.f32 %v2402, %v2520
      %v2536 = vmul.f32 %v2415, %v2520
      %v2537 = vmul.f32 %v2428, %v2520
      %v2538 = vmul.f32 %v2441, %v2520
      %v2539 = vmul.f32 %v2454, %v2520
      %v2540 = vmul.f32 %v2467, %v2520
      %v2541 = vmul.f32 %v2480, %v2520
      %v2542 = vmul.f32 %v2493, %v2520
      %v2543 = vmul.f32 %v2506, %v2520
      %v2544 = vmul.f32 %v2519, %v2520
      %v2545 = vpack.c.bf16 %v2521, %v2521
      %v2546 = vpack.c.bf16 %v2522, %v2522
      %v2547 = vpack.c.bf16 %v2523, %v2523
      %v2548 = vpack.c.bf16 %v2524, %v2524
      %v2549 = vpack.c.bf16 %v2525, %v2525
      %v2550 = vpack.c.bf16 %v2526, %v2526
      %v2551 = vpack.c.bf16 %v2527, %v2527
      %v2552 = vpack.c.bf16 %v2528, %v2528
      %v2553 = vpack.c.bf16 %v2529, %v2529
      %v2554 = vpack.c.bf16 %v2530, %v2530
      %v2555 = vpack.c.bf16 %v2531, %v2531
      %v2556 = vpack.c.bf16 %v2532, %v2532
      %v2557 = vpack.c.bf16 %v2533, %v2533
      %v2558 = vpack.c.bf16 %v2534, %v2534
      %v2559 = vpack.c.bf16 %v2535, %v2535
      %v2560 = vpack.c.bf16 %v2536, %v2536
      %v2561 = vpack.c.bf16 %v2537, %v2537
      %v2562 = vpack.c.bf16 %v2538, %v2538
      %v2563 = vpack.c.bf16 %v2539, %v2539
      %v2564 = vpack.c.bf16 %v2540, %v2540
      %v2565 = vpack.c.bf16 %v2541, %v2541
      %v2566 = vpack.c.bf16 %v2542, %v2542
      %v2567 = vpack.c.bf16 %v2543, %v2543
      %v2568 = vpack.c.bf16 %v2544, %v2544
      %v2569 = vld [vmem:[%s3] sm:$0xff]
      %v2570 = vld [vmem:[%s3 + $0x8] sm:$0xff]
      %v2571 = vld [vmem:[%s3 + $0x10] sm:$0xff]
      %v2572 = vld [vmem:[%s3 + $0x18] sm:$0xff]
      %v2573 = vld [vmem:[%s3 + $0x20] sm:$0xff]
      %v2574 = vld [vmem:[%s3 + $0x28] sm:$0xff]
      %v2575 = vld [vmem:[%s3 + $0x30] sm:$0xff]
      %v2576 = vld [vmem:[%s3 + $0x38] sm:$0xff]
      %v2577 = vld [vmem:[%s3 + $0x40] sm:$0xff]
      %v2578 = vld [vmem:[%s3 + $0x48] sm:$0xff]
      %v2579 = vld [vmem:[%s3 + $0x50] sm:$0xff]
      %v2580 = vld [vmem:[%s3 + $0x58] sm:$0xff]
      %v2581 = vld [vmem:[%s3 + $0x60] sm:$0xff]
      %v2582 = vld [vmem:[%s3 + $0x68] sm:$0xff]
      %v2583 = vld [vmem:[%s3 + $0x70] sm:$0xff]
      %v2584 = vld [vmem:[%s3 + $0x78] sm:$0xff]
      %v2585 = vld [vmem:[%s3 + $0x80] sm:$0xff]
      %v2586 = vld [vmem:[%s3 + $0x88] sm:$0xff]
      %v2587 = vld [vmem:[%s3 + $0x90] sm:$0xff]
      %v2588 = vld [vmem:[%s3 + $0x98] sm:$0xff]
      %v2589 = vld [vmem:[%s3 + $0xa0] sm:$0xff]
      %v2590 = vld [vmem:[%s3 + $0xa8] sm:$0xff]
      %v2591 = vld [vmem:[%s3 + $0xb0] sm:$0xff]
      %v2592 = vld [vmem:[%s3 + $0xb8] sm:$0xff]
      %v2593 = vld [vmem:[%s3 + $0xc0] sm:$0xff]
      %v2594 = vld [vmem:[%s3 + $0xc8] sm:$0xff]
      %v2595 = vld [vmem:[%s3 + $0xd0] sm:$0xff]
      %v2596 = vld [vmem:[%s3 + $0xd8] sm:$0xff]
      %v2597 = vld [vmem:[%s3 + $0xe0] sm:$0xff]
      %v2598 = vld [vmem:[%s3 + $0xe8] sm:$0xff]
      %v2599 = vld [vmem:[%s3 + $0xf0] sm:$0xff]
      %v2600 = vld [vmem:[%s3 + $0xf8] sm:$0xff]
      %v2601 = vld [vmem:[%s4] sm:$0xf]
      %v2603 = vlaneseq
      %v2604 = vshrl.u32 %v2603, 7
      %v2605 = vsub.s32 0, %v2604
      %v2606 = vrot.slane %v2601, %v2605
      %v2607 = vlaneseq
      %v2608 = vshrl.u32 %v2607, 7
      %v2609 = vsub.s32 1, %v2608
      %v2610 = vrot.slane %v2601, %v2609
      %v2611 = vlaneseq
      %v2612 = vshrl.u32 %v2611, 7
      %v2613 = vsub.s32 2, %v2612
      %v2614 = vrot.slane %v2601, %v2613
      %v2615 = vlaneseq
      %v2616 = vshrl.u32 %v2615, 7
      %v2617 = vsub.s32 3, %v2616
      %v2618 = vrot.slane %v2601, %v2617
      %v2647 = vunpack.c.l.b16 %v2545
      %v2648 = vunpack.c.l.b16 %v2546
      %v2649 = vunpack.c.l.b16 %v2547
      %v2650 = vunpack.c.l.b16 %v2548
      %v2651 = vunpack.c.l.b16 %v2549
      %v2652 = vunpack.c.l.b16 %v2550
      %v2653 = vunpack.c.l.b16 %v2551
      %v2654 = vunpack.c.l.b16 %v2552
      %v2655 = vunpack.c.l.b16 %v2553
      %v2656 = vunpack.c.l.b16 %v2554
      %v2657 = vunpack.c.l.b16 %v2555
      %v2658 = vunpack.c.l.b16 %v2556
      %v2659 = vunpack.c.l.b16 %v2557
      %v2660 = vunpack.c.l.b16 %v2558
      %v2661 = vunpack.c.l.b16 %v2559
      %v2662 = vunpack.c.l.b16 %v2560
      %v2663 = vunpack.c.l.b16 %v2561
      %v2664 = vunpack.c.l.b16 %v2562
      %v2665 = vunpack.c.l.b16 %v2563
      %v2666 = vunpack.c.l.b16 %v2564
      %v2667 = vunpack.c.l.b16 %v2565
      %v2668 = vunpack.c.l.b16 %v2566
      %v2669 = vunpack.c.l.b16 %v2567
      %v2670 = vunpack.c.l.b16 %v2568
      %vm2671 = vcmask 1041409
      %v2672 = vsel %vm2671, %v2648, %v2647
      %vm2673 = vcmask 1042434
      %v2674 = vsel %vm2673, %v2649, %v2672
      %vm2675 = vcmask 1043459
      %v2676 = vsel %vm2675, %v2650, %v2674
      %vm2677 = vcmask 1044484
      %v2678 = vsel %vm2677, %v2651, %v2676
      %vm2679 = vcmask 1045509
      %v2680 = vsel %vm2679, %v2652, %v2678
      %vm2681 = vcmask 1046534
      %v2682 = vsel %vm2681, %v2653, %v2680
      %vm2683 = vcmask 1047559
      %v2684 = vsel %vm2683, %v2654, %v2682
      %v2685 = vsel %vm2671, %v2656, %v2655
      %v2686 = vsel %vm2673, %v2657, %v2685
      %v2687 = vsel %vm2675, %v2658, %v2686
      %v2688 = vsel %vm2677, %v2659, %v2687
      %v2689 = vsel %vm2679, %v2660, %v2688
      %v2690 = vsel %vm2681, %v2661, %v2689
      %v2691 = vsel %vm2683, %v2662, %v2690
      %v2692 = vsel %vm2671, %v2664, %v2663
      %v2693 = vsel %vm2673, %v2665, %v2692
      %v2694 = vsel %vm2675, %v2666, %v2693
      %v2695 = vsel %vm2677, %v2667, %v2694
      %v2696 = vsel %vm2679, %v2668, %v2695
      %v2697 = vsel %vm2681, %v2669, %v2696
      %v2698 = vsel %vm2683, %v2670, %v2697
      %v2699 = vpack.c.b16 %v2691, %v2684
      %v2700 = vpack.c.b16 %v2698, %v2698
      %v2735 = vunpack.c.l.b16 %v2569
      %v2736 = vunpack.c.h.b16 %v2569
      %v2737 = vunpack.c.l.b16 %v2570
      %v2738 = vunpack.c.h.b16 %v2570
      %v2739 = vunpack.c.l.b16 %v2571
      %v2740 = vunpack.c.h.b16 %v2571
      %v2741 = vunpack.c.l.b16 %v2572
      %v2742 = vunpack.c.h.b16 %v2572
      %v2743 = vunpack.c.l.b16 %v2573
      %v2744 = vunpack.c.h.b16 %v2573
      %v2745 = vunpack.c.l.b16 %v2574
      %v2746 = vunpack.c.h.b16 %v2574
      %v2747 = vunpack.c.l.b16 %v2575
      %v2748 = vunpack.c.h.b16 %v2575
      %v2749 = vunpack.c.l.b16 %v2576
      %v2750 = vunpack.c.h.b16 %v2576
      %v2751 = vunpack.c.l.b16 %v2577
      %v2752 = vunpack.c.h.b16 %v2577
      %v2753 = vunpack.c.l.b16 %v2578
      %v2754 = vunpack.c.h.b16 %v2578
      %v2755 = vunpack.c.l.b16 %v2579
      %v2756 = vunpack.c.h.b16 %v2579
      %v2757 = vunpack.c.l.b16 %v2580
      %v2758 = vunpack.c.h.b16 %v2580
      %v2759 = vunpack.c.l.b16 %v2581
      %v2760 = vunpack.c.h.b16 %v2581
      %v2761 = vunpack.c.l.b16 %v2582
      %v2762 = vunpack.c.h.b16 %v2582
      %v2763 = vunpack.c.l.b16 %v2583
      %v2764 = vunpack.c.h.b16 %v2583
      %v2765 = vunpack.c.l.b16 %v2584
      %v2766 = vunpack.c.h.b16 %v2584
      %v2767 = vunpack.c.l.b16 %v2585
      %v2768 = vunpack.c.h.b16 %v2585
      %v2769 = vunpack.c.l.b16 %v2586
      %v2770 = vunpack.c.h.b16 %v2586
      %v2771 = vunpack.c.l.b16 %v2587
      %v2772 = vunpack.c.h.b16 %v2587
      %v2773 = vunpack.c.l.b16 %v2588
      %v2774 = vunpack.c.h.b16 %v2588
      %v2775 = vunpack.c.l.b16 %v2589
      %v2776 = vunpack.c.h.b16 %v2589
      %v2777 = vunpack.c.l.b16 %v2590
      %v2778 = vunpack.c.h.b16 %v2590
      %v2779 = vunpack.c.l.b16 %v2591
      %v2780 = vunpack.c.h.b16 %v2591
      %v2781 = vunpack.c.l.b16 %v2592
      %v2782 = vunpack.c.h.b16 %v2592
      %v2783 = vunpack.c.l.b16 %v2593
      %v2784 = vunpack.c.h.b16 %v2593
      %v2785 = vunpack.c.l.b16 %v2594
      %v2786 = vunpack.c.h.b16 %v2594
      %v2787 = vunpack.c.l.b16 %v2595
      %v2788 = vunpack.c.h.b16 %v2595
      %v2789 = vunpack.c.l.b16 %v2596
      %v2790 = vunpack.c.h.b16 %v2596
      %v2791 = vunpack.c.l.b16 %v2597
      %v2792 = vunpack.c.h.b16 %v2597
      %v2793 = vunpack.c.l.b16 %v2598
      %v2794 = vunpack.c.h.b16 %v2598
      %v2795 = vunpack.c.l.b16 %v2599
      %v2796 = vunpack.c.h.b16 %v2599
      %v2797 = vunpack.c.l.b16 %v2600
      %v2798 = vunpack.c.h.b16 %v2600
      %v2799 = vpack.c.b16 %v2739, %v2735
      %v2800 = vpack.c.b16 %v2740, %v2736
      %v2801 = vpack.c.b16 %v2741, %v2737
      %v2802 = vpack.c.b16 %v2742, %v2738
      %v2803 = vpack.c.b16 %v2747, %v2743
      %v2804 = vpack.c.b16 %v2748, %v2744
      %v2805 = vpack.c.b16 %v2749, %v2745
      %v2806 = vpack.c.b16 %v2750, %v2746
      %v2807 = vpack.c.b16 %v2755, %v2751
      %v2808 = vpack.c.b16 %v2756, %v2752
      %v2809 = vpack.c.b16 %v2757, %v2753
      %v2810 = vpack.c.b16 %v2758, %v2754
      %v2811 = vpack.c.b16 %v2763, %v2759
      %v2812 = vpack.c.b16 %v2764, %v2760
      %v2813 = vpack.c.b16 %v2765, %v2761
      %v2814 = vpack.c.b16 %v2766, %v2762
      %v2815 = vpack.c.b16 %v2771, %v2767
      %v2816 = vpack.c.b16 %v2772, %v2768
      %v2817 = vpack.c.b16 %v2773, %v2769
      %v2818 = vpack.c.b16 %v2774, %v2770
      %v2819 = vpack.c.b16 %v2779, %v2775
      %v2820 = vpack.c.b16 %v2780, %v2776
      %v2821 = vpack.c.b16 %v2781, %v2777
      %v2822 = vpack.c.b16 %v2782, %v2778
      %v2823 = vpack.c.b16 %v2787, %v2783
      %v2824 = vpack.c.b16 %v2788, %v2784
      %v2825 = vpack.c.b16 %v2789, %v2785
      %v2826 = vpack.c.b16 %v2790, %v2786
      %v2827 = vpack.c.b16 %v2795, %v2791
      %v2828 = vpack.c.b16 %v2796, %v2792
      %v2829 = vpack.c.b16 %v2797, %v2793
      %v2830 = vpack.c.b16 %v2798, %v2794
      %2863 = vmatprep.subr.bf16.mxu0 %v2800
      %2864 = vmatpush1.bf16.msra.mxu0 %v2799
      %2865 = vmatprep.subr.bf16.mxu0 %v2804
      %2866 = vmatpush1.bf16.msra.mxu0 %v2803
      %2867 = vmatprep.subr.bf16.mxu0 %v2808
      %2868 = vmatpush1.bf16.msra.mxu0 %v2807
      %2869 = vmatprep.subr.bf16.mxu0 %v2812
      %2870 = vmatpush1.bf16.msra.mxu0 %v2811
      %2871 = vmatprep.subr.bf16.mxu0 %v2816
      %2872 = vmatpush1.bf16.msra.mxu0 %v2815
      %2873 = vmatprep.subr.bf16.mxu0 %v2820
      %2874 = vmatpush1.bf16.msra.mxu0 %v2819
      %2875 = vmatprep.subr.bf16.mxu0 %v2824
      %2876 = vmatpush1.bf16.msra.mxu0 %v2823
      %2877 = vmatprep.subr.bf16.mxu0 %v2828
      %2878 = vmatpush1.bf16.msra.mxu0 %v2827
      %2879 = vmatprep.subr.bf16.mxu0 0
      %2880 = vmatpush1.bf16.msra.mxu0 0
      %2881 = vmatprep.subr.bf16.mxu0 0
      %2882 = vmatpush1.bf16.msra.mxu0 0
      %2883 = vmatprep.subr.bf16.mxu0 0
      %2884 = vmatpush1.bf16.msra.mxu0 0
      %2885 = vmatprep.subr.bf16.mxu0 0
      %2886 = vmatpush1.bf16.msra.mxu0 0
      %2887 = vmatprep.subr.bf16.mxu0 0
      %2888 = vmatpush1.bf16.msra.mxu0 0
      %2889 = vmatprep.subr.bf16.mxu0 0
      %2890 = vmatpush1.bf16.msra.mxu0 0
      %2891 = vmatprep.subr.bf16.mxu0 0
      %2892 = vmatpush1.bf16.msra.mxu0 0
      %2893 = vmatprep.subr.bf16.mxu0 0
      %2894 = vmatpush1.bf16.msra.mxu0 0
      %2895 = vmatprep.mubr.bf16.mxu0 0
      %2896 = vmatmul.mubr.bf16.gmra.mrb[0].mxu0 %v2699
      %v2897 = vpop.f32.mrb[0].mxu0
      %v2898 = vadd.f32 %v2606, %v2897
      %v2899 = vpop.f32.mrb[0].mxu0
      %v2900 = vadd.f32 %v2610, %v2899
      %v2901 = vpop.f32.mrb[0].mxu0
      %v2902 = vadd.f32 %v2606, %v2901
      %v2903 = vpop.f32.mrb[0].mxu0
      %v2904 = vadd.f32 %v2610, %v2903
      %2905 = vmatprep.mubr.bf16.mxu0 0
      %2906 = vmatmul.mubr.bf16.gmra.mrb[0].mxu0 %v2700
      %v2907 = vpop.f32.mrb[0].mxu0
      %v2908 = vadd.f32 %v2606, %v2907
      %v2909 = vpop.f32.mrb[0].mxu0
      %v2910 = vadd.f32 %v2610, %v2909
      %v2911 = vpop.f32.mrb[0].mxu0
      %v2912 = vpop.f32.mrb[0].mxu0
      %2913 = vdwg.mxu0
      %2914 = vmatprep.subr.bf16.mxu0 %v2802
      %2915 = vmatpush1.bf16.msra.mxu0 %v2801
      %2916 = vmatprep.subr.bf16.mxu0 %v2806
      %2917 = vmatpush1.bf16.msra.mxu0 %v2805
      %2918 = vmatprep.subr.bf16.mxu0 %v2810
      %2919 = vmatpush1.bf16.msra.mxu0 %v2809
      %2920 = vmatprep.subr.bf16.mxu0 %v2814
      %2921 = vmatpush1.bf16.msra.mxu0 %v2813
      %2922 = vmatprep.subr.bf16.mxu0 %v2818
      %2923 = vmatpush1.bf16.msra.mxu0 %v2817
      %2924 = vmatprep.subr.bf16.mxu0 %v2822
      %2925 = vmatpush1.bf16.msra.mxu0 %v2821
      %2926 = vmatprep.subr.bf16.mxu0 %v2826
      %2927 = vmatpush1.bf16.msra.mxu0 %v2825
      %2928 = vmatprep.subr.bf16.mxu0 %v2830
      %2929 = vmatpush1.bf16.msra.mxu0 %v2829
      %2930 = vmatprep.subr.bf16.mxu0 0
      %2931 = vmatpush1.bf16.msra.mxu0 0
      %2932 = vmatprep.subr.bf16.mxu0 0
      %2933 = vmatpush1.bf16.msra.mxu0 0
      %2934 = vmatprep.subr.bf16.mxu0 0
      %2935 = vmatpush1.bf16.msra.mxu0 0
      %2936 = vmatprep.subr.bf16.mxu0 0
      %2937 = vmatpush1.bf16.msra.mxu0 0
      %2938 = vmatprep.subr.bf16.mxu0 0
      %2939 = vmatpush1.bf16.msra.mxu0 0
      %2940 = vmatprep.subr.bf16.mxu0 0
      %2941 = vmatpush1.bf16.msra.mxu0 0
      %2942 = vmatprep.subr.bf16.mxu0 0
      %2943 = vmatpush1.bf16.msra.mxu0 0
      %2944 = vmatprep.subr.bf16.mxu0 0
      %2945 = vmatpush1.bf16.msra.mxu0 0
      %2946 = vmatprep.mubr.bf16.mxu0 0
      %2947 = vmatmul.mubr.bf16.gmra.mrb[0].mxu0 %v2699
      %v2948 = vpop.f32.mrb[0].mxu0
      %v2949 = vadd.f32 %v2614, %v2948
      %v2950 = vpop.f32.mrb[0].mxu0
      %v2951 = vadd.f32 %v2618, %v2950
      %v2952 = vpop.f32.mrb[0].mxu0
      %v2953 = vadd.f32 %v2614, %v2952
      %v2954 = vpop.f32.mrb[0].mxu0
      %v2955 = vadd.f32 %v2618, %v2954
      %2956 = vmatprep.mubr.bf16.mxu0 0
      %2957 = vmatmul.mubr.bf16.gmra.mrb[0].mxu0 %v2700
      %v2958 = vpop.f32.mrb[0].mxu0
      %v2959 = vadd.f32 %v2614, %v2958
      %v2960 = vpop.f32.mrb[0].mxu0
      %v2961 = vadd.f32 %v2618, %v2960
      %v2962 = vpop.f32.mrb[0].mxu0
      %v2963 = vpop.f32.mrb[0].mxu0
      %2964 = vdwg.mxu0
      %v2965 = vmax.f32 %v2898, 0.0
      %v2966 = vmax.f32 %v2900, 0.0
      %v2967 = vmax.f32 %v2949, 0.0
      %v2968 = vmax.f32 %v2951, 0.0
      %v2969 = vmax.f32 %v2902, 0.0
      %v2970 = vmax.f32 %v2904, 0.0
      %v2971 = vmax.f32 %v2953, 0.0
      %v2972 = vmax.f32 %v2955, 0.0
      %v2973 = vmax.f32 %v2908, 0.0
      %v2974 = vmax.f32 %v2910, 0.0
      %v2975 = vmax.f32 %v2959, 0.0
      %v2976 = vmax.f32 %v2961, 0.0
      %v2977 = vpack.c.bf16 %v2969, %v2965
      %v2978 = vpack.c.bf16 %v2970, %v2966
      %v2979 = vpack.c.bf16 %v2971, %v2967
      %v2980 = vpack.c.bf16 %v2972, %v2968
      %v2981 = vpack.c.bf16 %v2973, %v2973
      %v2982 = vpack.c.bf16 %v2974, %v2974
      %v2983 = vpack.c.bf16 %v2975, %v2975
      %v2984 = vpack.c.bf16 %v2976, %v2976
      %v2993 = vunpack.c.l.b16 %v2977
      %v2994 = vunpack.c.l.b16 %v2978
      %v2995 = vunpack.c.l.b16 %v2979
      %v2996 = vunpack.c.l.b16 %v2980
      %v2997 = vunpack.c.h.b16 %v2977
      %v2998 = vunpack.c.h.b16 %v2978
      %v2999 = vunpack.c.h.b16 %v2979
      %v3000 = vunpack.c.h.b16 %v2980
      %v3001 = vunpack.c.l.b16 %v2981
      %v3002 = vunpack.c.l.b16 %v2982
      %v3003 = vunpack.c.l.b16 %v2983
      %v3004 = vunpack.c.l.b16 %v2984
      %v3005 = vpack.c.b16 %v2994, %v2993
      %v3006 = vpack.c.b16 %v2996, %v2995
      %v3007 = vpack.c.b16 %v2998, %v2997
      %v3008 = vpack.c.b16 %v3000, %v2999
      %v3009 = vpack.c.b16 %v3002, %v3001
      %v3010 = vpack.c.b16 %v3004, %v3003
      %3017 = vst [vmem:[%s228] sm:$0xff] %v3005
      %3018 = vst [vmem:[%s228 + $0x8] sm:$0xff] %v3006
      %3019 = vst [vmem:[%s228 + $0x10] sm:$0xff] %v3007
      %3020 = vst [vmem:[%s228 + $0x18] sm:$0xff] %v3008
      %3021 = vst [vmem:[%s228 + $0x20] sm:$0xff] %v3009
      %3022 = vst [vmem:[%s228 + $0x28] sm:$0xff] %v3010
      %s3023 = smul.u32 3, %s16
      %p3024 = scmp.lt.s32.totalorder %s3023, 5
      %s3025 = scalar_select %p3024, %s3023, 5
      %s3026 = smul.addr %s3025, 4
      %s3027 = smul.addr %s3026, 4
      %s3028 = scalar_lea.vmem %s5, %s3027
      // Predicated region
      $region41: #{combined_model_tconv_forward.2} parent=39 // pred_check
        %p3029 = pneg %p144
      $region42: #{combined_model_tconv_forward.2} parent=39 // pred_check_branch
        %3031 = sbr.rel (%p3029) target = $region44
      $region43: #{combined_model_tconv_forward.2} parent=39 // pred_region
        %s3032 = smul.u32 3, %s16
      $region44: #{combined_model_tconv_forward.2} parent=39 // pred_fallthru
        _
    $region40: #{combined_model_tconv_forward.2} parent=5 // pred_fallthru
      _
    %p3033 = scmp.le.s32.totalorder 2, %s11
    // Predicated region
    $region45: #{combined_model_tconv_forward.2} parent=5 // pred_check
      %p3034 = pneg %p3033
    $region46: #{combined_model_tconv_forward.2} parent=5 // pred_check_branch
      %3036 = sbr.rel (%p3034) target = $region48
    $region47: #{combined_model_tconv_forward.2} parent=5 // pred_region
      %s3037 = ssub.s32 %s11, 2
      // Predicated region
      $region49: #{combined_model_tconv_forward.2} parent=47 // pred_check
        %p3038 = pneg %p150
      $region50: #{combined_model_tconv_forward.2} parent=47 // pred_check_branch
        %3040 = sbr.rel (%p3038) target = $region52
      $region51: #{combined_model_tconv_forward.2} parent=47 // pred_region
        %s3041 = smul.u32 3, %s17
        %p3042 = scmp.lt.s32.totalorder %s3041, 5
        %s3043 = scalar_select %p3042, %s3041, 5
        %s3044 = smul.addr %s3043, 4
        %s3045 = smul.addr %s3044, 4
        %s3046 = scalar_lea.vmem %s5, %s3045
      $region52: #{combined_model_tconv_forward.2} parent=47 // pred_fallthru
        _
    $region48: #{combined_model_tconv_forward.2} parent=5 // pred_fallthru
      _
  $region6: #{combined_model_tconv_forward.2} parent=0 // loop_footer
    %s15 = sadd.s32 1, %s11
  $region7: #{combined_model_tconv_forward.2} parent=0 // loop_footer_branch
    %10 = sbr.rel target = $region3
  $region8: #{combined_model_tconv_forward.2} parent=0 // loop_exit
    _

// kernel: combined_model_tconv_forward.3
$region0: #{combined_model_tconv_forward.3}
  #allocation0 [shape = 'u32[]', space=smem, size = 0x4, offset = 0x4, fixed_abs, tag = 'smem constant byte address 0x4 - core index']
  #allocation1 [shape = 'u32[144,128]{1,0:T(1,128)}', space=vmem, size = 0x12000, scoped, tag = 'internal scratch']
  #allocation2 [shape = 'f32[20,128]{1,0:T(8,128)}', space=vmem, size = 0x3000, scoped, tag = 'scratch operand']
  %s0 = inlined_call_operand.vmem [shape: bf16[2,24,512], index: 0, kind: input, shape index: {}]
  %s1 = inlined_call_operand.vmem [shape: bf16[5,512,128], index: 1, kind: input, shape index: {}]
  %s2 = inlined_call_operand.vmem [shape: f32[1,128], index: 2, kind: input, shape index: {}]
  %s3 = inlined_call_operand.vmem [shape: f32[1,128], index: 3, kind: input, shape index: {}]
  %s4 = inlined_call_operand.vmem [shape: f32[1,128], index: 4, kind: input, shape index: {}]
  %s5 = inlined_call_operand.vmem [shape: bf16[5,128,128], index: 5, kind: input, shape index: {}]
  %s6 = inlined_call_operand.vmem [shape: f32[1,128], index: 6, kind: input, shape index: {}]
  %s7 = inlined_call_operand.vmem [shape: f32[1,128], index: 7, kind: input, shape index: {}]
  %s8 = inlined_call_operand.vmem [shape: f32[1,128], index: 8, kind: input, shape index: {}]
  %s9 = inlined_call_operand.vmem [shape: bf16[128,128], index: 9, kind: input, shape index: {}]
  %s10 = inlined_call_operand.vmem [shape: f32[1,128], index: 10, kind: input, shape index: {}]
  %s11 = inlined_call_operand.vmem [shape: f32[1,128], index: 11, kind: input, shape index: {}]
  %s12 = inlined_call_operand.vmem [shape: f32[1,128], index: 12, kind: input, shape index: {}]
  %s13 = inlined_call_operand.vmem [shape: bf16[128,128], index: 13, kind: input, shape index: {}]
  %s14 = inlined_call_operand.vmem [shape: f32[1,128], index: 14, kind: input, shape index: {}]
  %s15 = inlined_call_operand.vmem [shape: f32[2,3,128], index: 15, kind: output, shape index: {}]
  %s16 = sld [smem:[#allocation0]]
  $region70: #{combined_model_tconv_forward.3} parent=0
    _
  %s18 = ssub.s32 1, %s16
  %s19 = scalar_select 0, %s18, %s16
  // Predicated region
  $region2: #{combined_model_tconv_forward.3} parent=0 // pred_check
    _
  $region3: #{combined_model_tconv_forward.3} parent=0 // pred_check_branch
    %21 = sbr.rel (0) target = $region5
  $region4: #{combined_model_tconv_forward.3} parent=0 // pred_region
    _
  $region5: #{combined_model_tconv_forward.3} parent=0 // pred_fallthru
    _
  // Predicated region
  $region6: #{combined_model_tconv_forward.3} parent=0 // pred_check
    _
  $region7: #{combined_model_tconv_forward.3} parent=0 // pred_check_branch
    %23 = sbr.rel (0) target = $region9
  $region8: #{combined_model_tconv_forward.3} parent=0 // pred_region
    _
  $region9: #{combined_model_tconv_forward.3} parent=0 // pred_fallthru
    _
  // Predicated region
  $region10: #{combined_model_tconv_forward.3} parent=0 // pred_check
    _
  $region11: #{combined_model_tconv_forward.3} parent=0 // pred_check_branch
    %25 = sbr.rel (0) target = $region13
  $region12: #{combined_model_tconv_forward.3} parent=0 // pred_region
    _
  $region13: #{combined_model_tconv_forward.3} parent=0 // pred_fallthru
    _
  // Predicated region
  $region14: #{combined_model_tconv_forward.3} parent=0 // pred_check
    _
  $region15: #{combined_model_tconv_forward.3} parent=0 // pred_check_branch
    %27 = sbr.rel (0) target = $region17
  $region16: #{combined_model_tconv_forward.3} parent=0 // pred_region
    _
  $region17: #{combined_model_tconv_forward.3} parent=0 // pred_fallthru
    _
  // Predicated region
  $region18: #{combined_model_tconv_forward.3} parent=0 // pred_check
    _
  $region19: #{combined_model_tconv_forward.3} parent=0 // pred_check_branch
    %29 = sbr.rel (0) target = $region21
  $region20: #{combined_model_tconv_forward.3} parent=0 // pred_region
    _
  $region21: #{combined_model_tconv_forward.3} parent=0 // pred_fallthru
    _
  // Predicated region
  $region22: #{combined_model_tconv_forward.3} parent=0 // pred_check
    _
  $region23: #{combined_model_tconv_forward.3} parent=0 // pred_check_branch
    %31 = sbr.rel (0) target = $region25
  $region24: #{combined_model_tconv_forward.3} parent=0 // pred_region
    _
  $region25: #{combined_model_tconv_forward.3} parent=0 // pred_fallthru
    _
  // Predicated region
  $region26: #{combined_model_tconv_forward.3} parent=0 // pred_check
    _
  $region27: #{combined_model_tconv_forward.3} parent=0 // pred_check_branch
    %33 = sbr.rel (0) target = $region29
  $region28: #{combined_model_tconv_forward.3} parent=0 // pred_region
    _
  $region29: #{combined_model_tconv_forward.3} parent=0 // pred_fallthru
    _
  // Predicated region
  $region30: #{combined_model_tconv_forward.3} parent=0 // pred_check
    _
  $region31: #{combined_model_tconv_forward.3} parent=0 // pred_check_branch
    %35 = sbr.rel (0) target = $region33
  $region32: #{combined_model_tconv_forward.3} parent=0 // pred_region
    _
  $region33: #{combined_model_tconv_forward.3} parent=0 // pred_fallthru
    _
  // Predicated region
  $region34: #{combined_model_tconv_forward.3} parent=0 // pred_check
    _
  $region35: #{combined_model_tconv_forward.3} parent=0 // pred_check_branch
    %37 = sbr.rel (0) target = $region37
  $region36: #{combined_model_tconv_forward.3} parent=0 // pred_region
    _
  $region37: #{combined_model_tconv_forward.3} parent=0 // pred_fallthru
    _
  // Predicated region
  $region38: #{combined_model_tconv_forward.3} parent=0 // pred_check
    _
  $region39: #{combined_model_tconv_forward.3} parent=0 // pred_check_branch
    %39 = sbr.rel (0) target = $region41
  $region40: #{combined_model_tconv_forward.3} parent=0 // pred_region
    _
  $region41: #{combined_model_tconv_forward.3} parent=0 // pred_fallthru
    _
  // Predicated region
  $region42: #{combined_model_tconv_forward.3} parent=0 // pred_check
    _
  $region43: #{combined_model_tconv_forward.3} parent=0 // pred_check_branch
    %41 = sbr.rel (0) target = $region45
  $region44: #{combined_model_tconv_forward.3} parent=0 // pred_region
    _
  $region45: #{combined_model_tconv_forward.3} parent=0 // pred_fallthru
    _
  // Predicated region
  $region46: #{combined_model_tconv_forward.3} parent=0 // pred_check
    _
  $region47: #{combined_model_tconv_forward.3} parent=0 // pred_check_branch
    %43 = sbr.rel (0) target = $region49
  $region48: #{combined_model_tconv_forward.3} parent=0 // pred_region
    _
  $region49: #{combined_model_tconv_forward.3} parent=0 // pred_fallthru
    _
  // Predicated region
  $region50: #{combined_model_tconv_forward.3} parent=0 // pred_check
    _
  $region51: #{combined_model_tconv_forward.3} parent=0 // pred_check_branch
    %45 = sbr.rel (0) target = $region53
  $region52: #{combined_model_tconv_forward.3} parent=0 // pred_region
    _
  $region53: #{combined_model_tconv_forward.3} parent=0 // pred_fallthru
    _
  // Predicated region
  $region54: #{combined_model_tconv_forward.3} parent=0 // pred_check
    _
  $region55: #{combined_model_tconv_forward.3} parent=0 // pred_check_branch
    %47 = sbr.rel (0) target = $region57
  $region56: #{combined_model_tconv_forward.3} parent=0 // pred_region
    _
  $region57: #{combined_model_tconv_forward.3} parent=0 // pred_fallthru
    _
  // Predicated region
  $region58: #{combined_model_tconv_forward.3} parent=0 // pred_check
    _
  $region59: #{combined_model_tconv_forward.3} parent=0 // pred_check_branch
    %49 = sbr.rel (0) target = $region61
  $region60: #{combined_model_tconv_forward.3} parent=0 // pred_region
    _
  $region61: #{combined_model_tconv_forward.3} parent=0 // pred_fallthru
    _
  %v51 = vld [vmem:[%s0] sm:$0xff]
  %v52 = vld [vmem:[%s0 + $0x8] sm:$0xff]
  %v53 = vld [vmem:[%s0 + $0x10] sm:$0xff]
  %v54 = vld [vmem:[%s0 + $0x18] sm:$0xff]
  %v55 = vld [vmem:[%s0 + $0x20] sm:$0x33]
  %v56 = vld [vmem:[%s0 + $0x28] sm:$0x33]
  %v57 = vld [vmem:[%s1] sm:$0xf]
  %v58 = vld [vmem:[%s1 + $0x4] sm:$0xf]
  %v59 = vld [vmem:[%s1 + $0x8] sm:$0xf]
  %v60 = vld [vmem:[%s1 + $0xc] sm:$0xf]
  %v61 = vld [vmem:[%s1 + $0x10] sm:$0xf]
  %v62 = vld [vmem:[%s1 + $0x14] sm:$0xf]
  %v63 = vld [vmem:[%s1 + $0x18] sm:$0xf]
  %v64 = vld [vmem:[%s1 + $0x1c] sm:$0xf]
  %v65 = vld [vmem:[%s1 + $0x20] sm:$0xf]
  %v66 = vld [vmem:[%s1 + $0x24] sm:$0xf]
  %v67 = vld [vmem:[%s1 + $0x28] sm:$0xf]
  %v68 = vld [vmem:[%s1 + $0x2c] sm:$0xf]
  %v69 = vld [vmem:[%s1 + $0x30] sm:$0xf]
  %v70 = vld [vmem:[%s1 + $0x34] sm:$0xf]
  %v71 = vld [vmem:[%s1 + $0x38] sm:$0xf]
  %v72 = vld [vmem:[%s1 + $0x3c] sm:$0xf]
  %v73 = vld [vmem:[%s1 + $0x40] sm:$0xf]
  %v74 = vld [vmem:[%s1 + $0x44] sm:$0xf]
  %v75 = vld [vmem:[%s1 + $0x48] sm:$0xf]
  %v76 = vld [vmem:[%s1 + $0x4c] sm:$0xf]
  %v77 = vld [vmem:[%s1 + $0x50] sm:$0xf]
  %v78 = vld [vmem:[%s1 + $0x54] sm:$0xf]
  %v79 = vld [vmem:[%s1 + $0x58] sm:$0xf]
  %v80 = vld [vmem:[%s1 + $0x5c] sm:$0xf]
  %v81 = vld [vmem:[%s1 + $0x60] sm:$0xf]
  %v82 = vld [vmem:[%s1 + $0x64] sm:$0xf]
  %v83 = vld [vmem:[%s1 + $0x68] sm:$0xf]
  %v84 = vld [vmem:[%s1 + $0x6c] sm:$0xf]
  %v85 = vld [vmem:[%s1 + $0x70] sm:$0xf]
  %v86 = vld [vmem:[%s1 + $0x74] sm:$0xf]
  %v87 = vld [vmem:[%s1 + $0x78] sm:$0xf]
  %v88 = vld [vmem:[%s1 + $0x7c] sm:$0xf]
  %v89 = vld [vmem:[%s1 + $0x80] sm:$0xf]
  %v90 = vld [vmem:[%s1 + $0x84] sm:$0xf]
  %v91 = vld [vmem:[%s1 + $0x88] sm:$0xf]
  %v92 = vld [vmem:[%s1 + $0x8c] sm:$0xf]
  %v93 = vld [vmem:[%s1 + $0x90] sm:$0xf]
  %v94 = vld [vmem:[%s1 + $0x94] sm:$0xf]
  %v95 = vld [vmem:[%s1 + $0x98] sm:$0xf]
  %v96 = vld [vmem:[%s1 + $0x9c] sm:$0xf]
  %v97 = vld [vmem:[%s1 + $0xa0] sm:$0xf]
  %v98 = vld [vmem:[%s1 + $0xa4] sm:$0xf]
  %v99 = vld [vmem:[%s1 + $0xa8] sm:$0xf]
  %v100 = vld [vmem:[%s1 + $0xac] sm:$0xf]
  %v101 = vld [vmem:[%s1 + $0xb0] sm:$0xf]
  %v102 = vld [vmem:[%s1 + $0xb4] sm:$0xf]
  %v103 = vld [vmem:[%s1 + $0xb8] sm:$0xf]
  %v104 = vld [vmem:[%s1 + $0xbc] sm:$0xf]
  %v105 = vld [vmem:[%s1 + $0xc0] sm:$0xf]
  %v106 = vld [vmem:[%s1 + $0xc4] sm:$0xf]
  %v107 = vld [vmem:[%s1 + $0xc8] sm:$0xf]
  %v108 = vld [vmem:[%s1 + $0xcc] sm:$0xf]
  %v109 = vld [vmem:[%s1 + $0xd0] sm:$0xf]
  %v110 = vld [vmem:[%s1 + $0xd4] sm:$0xf]
  %v111 = vld [vmem:[%s1 + $0xd8] sm:$0xf]
  %v112 = vld [vmem:[%s1 + $0xdc] sm:$0xf]
  %v113 = vld [vmem:[%s1 + $0xe0] sm:$0xf]
  %v114 = vld [vmem:[%s1 + $0xe4] sm:$0xf]
  %v115 = vld [vmem:[%s1 + $0xe8] sm:$0xf]
  %v116 = vld [vmem:[%s1 + $0xec] sm:$0xf]
  %v117 = vld [vmem:[%s1 + $0xf0] sm:$0xf]
  %v118 = vld [vmem:[%s1 + $0xf4] sm:$0xf]
  %v119 = vld [vmem:[%s1 + $0xf8] sm:$0xf]
  %v120 = vld [vmem:[%s1 + $0xfc] sm:$0xf]
  %v121 = vld [vmem:[%s0 + $0x20] sm:$0x77]
  %v122 = vld [vmem:[%s0 + $0x28] sm:$0x77]
  %s123 = scalar_lea.vmem %s1, 256
  %v124 = vld [vmem:[%s123] sm:$0xf]
  %v125 = vld [vmem:[%s123 + $0x4] sm:$0xf]
  %v126 = vld [vmem:[%s123 + $0x8] sm:$0xf]
  %v127 = vld [vmem:[%s123 + $0xc] sm:$0xf]
  %v128 = vld [vmem:[%s123 + $0x10] sm:$0xf]
  %v129 = vld [vmem:[%s123 + $0x14] sm:$0xf]
  %v130 = vld [vmem:[%s123 + $0x18] sm:$0xf]
  %v131 = vld [vmem:[%s123 + $0x1c] sm:$0xf]
  %v132 = vld [vmem:[%s123 + $0x20] sm:$0xf]
  %v133 = vld [vmem:[%s123 + $0x24] sm:$0xf]
  %v134 = vld [vmem:[%s123 + $0x28] sm:$0xf]
  %v135 = vld [vmem:[%s123 + $0x2c] sm:$0xf]
  %v136 = vld [vmem:[%s123 + $0x30] sm:$0xf]
  %v137 = vld [vmem:[%s123 + $0x34] sm:$0xf]
  %v138 = vld [vmem:[%s123 + $0x38] sm:$0xf]
  %v139 = vld [vmem:[%s123 + $0x3c] sm:$0xf]
  %v140 = vld [vmem:[%s123 + $0x40] sm:$0xf]
  %v141 = vld [vmem:[%s123 + $0x44] sm:$0xf]
  %v142 = vld [vmem:[%s123 + $0x48] sm:$0xf]
  %v143 = vld [vmem:[%s123 + $0x4c] sm:$0xf]
  %v144 = vld [vmem:[%s123 + $0x50] sm:$0xf]
  %v145 = vld [vmem:[%s123 + $0x54] sm:$0xf]
  %v146 = vld [vmem:[%s123 + $0x58] sm:$0xf]
  %v147 = vld [vmem:[%s123 + $0x5c] sm:$0xf]
  %v148 = vld [vmem:[%s123 + $0x60] sm:$0xf]
  %v149 = vld [vmem:[%s123 + $0x64] sm:$0xf]
  %v150 = vld [vmem:[%s123 + $0x68] sm:$0xf]
  %v151 = vld [vmem:[%s123 + $0x6c] sm:$0xf]
  %v152 = vld [vmem:[%s123 + $0x70] sm:$0xf]
  %v153 = vld [vmem:[%s123 + $0x74] sm:$0xf]
  %v154 = vld [vmem:[%s123 + $0x78] sm:$0xf]
  %v155 = vld [vmem:[%s123 + $0x7c] sm:$0xf]
  %v156 = vld [vmem:[%s123 + $0x80] sm:$0xf]
  %v157 = vld [vmem:[%s123 + $0x84] sm:$0xf]
  %v158 = vld [vmem:[%s123 + $0x88] sm:$0xf]
  %v159 = vld [vmem:[%s123 + $0x8c] sm:$0xf]
  %v160 = vld [vmem:[%s123 + $0x90] sm:$0xf]
  %v161 = vld [vmem:[%s123 + $0x94] sm:$0xf]
  %v162 = vld [vmem:[%s123 + $0x98] sm:$0xf]
  %v163 = vld [vmem:[%s123 + $0x9c] sm:$0xf]
  %v164 = vld [vmem:[%s123 + $0xa0] sm:$0xf]
  %v165 = vld [vmem:[%s123 + $0xa4] sm:$0xf]
  %v166 = vld [vmem:[%s123 + $0xa8] sm:$0xf]
  %v167 = vld [vmem:[%s123 + $0xac] sm:$0xf]
  %v168 = vld [vmem:[%s123 + $0xb0] sm:$0xf]
  %v169 = vld [vmem:[%s123 + $0xb4] sm:$0xf]
  %v170 = vld [vmem:[%s123 + $0xb8] sm:$0xf]
  %v171 = vld [vmem:[%s123 + $0xbc] sm:$0xf]
  %v172 = vld [vmem:[%s123 + $0xc0] sm:$0xf]
  %v173 = vld [vmem:[%s123 + $0xc4] sm:$0xf]
  %v174 = vld [vmem:[%s123 + $0xc8] sm:$0xf]
  %v175 = vld [vmem:[%s123 + $0xcc] sm:$0xf]
  %v176 = vld [vmem:[%s123 + $0xd0] sm:$0xf]
  %v177 = vld [vmem:[%s123 + $0xd4] sm:$0xf]
  %v178 = vld [vmem:[%s123 + $0xd8] sm:$0xf]
  %v179 = vld [vmem:[%s123 + $0xdc] sm:$0xf]
  %v180 = vld [vmem:[%s123 + $0xe0] sm:$0xf]
  %v181 = vld [vmem:[%s123 + $0xe4] sm:$0xf]
  %v182 = vld [vmem:[%s123 + $0xe8] sm:$0xf]
  %v183 = vld [vmem:[%s123 + $0xec] sm:$0xf]
  %v184 = vld [vmem:[%s123 + $0xf0] sm:$0xf]
  %v185 = vld [vmem:[%s123 + $0xf4] sm:$0xf]
  %v186 = vld [vmem:[%s123 + $0xf8] sm:$0xf]
  %v187 = vld [vmem:[%s123 + $0xfc] sm:$0xf]
  %v194 = vunpack.c.l.b16 %v51
  %v195 = vunpack.c.h.b16 %v51
  %v196 = vunpack.c.l.b16 %v52
  %v197 = vunpack.c.h.b16 %v52
  %v198 = vunpack.c.l.b16 %v53
  %v199 = vunpack.c.h.b16 %v53
  %v200 = vunpack.c.l.b16 %v54
  %v201 = vunpack.c.h.b16 %v54
  %v202 = vunpack.c.l.b16 %v121
  %v203 = vunpack.c.h.b16 %v121
  %v204 = vunpack.c.l.b16 %v122
  %v205 = vunpack.c.h.b16 %v122
  %v206 = vpack.c.b16 %v198, %v194
  %v207 = vpack.c.b16 %v199, %v195
  %v208 = vpack.c.b16 %v200, %v196
  %v209 = vpack.c.b16 %v201, %v197
  %v210 = vpack.c.b16 %v202, %v202
  %v211 = vpack.c.b16 %v203, %v203
  %v212 = vpack.c.b16 %v204, %v204
  %v213 = vpack.c.b16 %v205, %v205
  %vm214 = vsmask.f32 7424
  %v216 = vshrl.u32 %v206, 16
  %v218 = vshll.u32 %v206, 16
  %v220 = vrot.slane %v218, 1
  %v221 = vor.u32 %v216, %v220
  %v223 = vshll.u32 %v210, 16
  %v225 = vrot.slane %v223, 1
  %v226 = vsel %vm214, %v221, %v225
  %v228 = vshrl.u32 %v207, 16
  %v230 = vshll.u32 %v207, 16
  %v232 = vrot.slane %v230, 1
  %v233 = vor.u32 %v228, %v232
  %v235 = vshll.u32 %v211, 16
  %v237 = vrot.slane %v235, 1
  %v238 = vsel %vm214, %v233, %v237
  %v240 = vshrl.u32 %v208, 16
  %v242 = vshll.u32 %v208, 16
  %v244 = vrot.slane %v242, 1
  %v245 = vor.u32 %v240, %v244
  %v247 = vshll.u32 %v212, 16
  %v249 = vrot.slane %v247, 1
  %v250 = vsel %vm214, %v245, %v249
  %v252 = vshrl.u32 %v209, 16
  %v254 = vshll.u32 %v209, 16
  %v256 = vrot.slane %v254, 1
  %v257 = vor.u32 %v252, %v256
  %v259 = vshll.u32 %v213, 16
  %v261 = vrot.slane %v259, 1
  %v262 = vsel %vm214, %v257, %v261
  %v263 = vshrl.u32 %v210, 16
  %v265 = vor.u32 %v263, %v225
  %v266 = vshrl.u32 %v211, 16
  %v268 = vor.u32 %v266, %v237
  %v269 = vshrl.u32 %v212, 16
  %v271 = vor.u32 %v269, %v249
  %v272 = vshrl.u32 %v213, 16
  %v274 = vor.u32 %v272, %v261
  %v347 = vunpack.c.l.b16 %v124
  %v348 = vunpack.c.l.b16 %v125
  %v349 = vunpack.c.l.b16 %v126
  %v350 = vunpack.c.l.b16 %v127
  %v351 = vunpack.c.l.b16 %v128
  %v352 = vunpack.c.l.b16 %v129
  %v353 = vunpack.c.l.b16 %v130
  %v354 = vunpack.c.l.b16 %v131
  %v355 = vunpack.c.l.b16 %v132
  %v356 = vunpack.c.l.b16 %v133
  %v357 = vunpack.c.l.b16 %v134
  %v358 = vunpack.c.l.b16 %v135
  %v359 = vunpack.c.l.b16 %v136
  %v360 = vunpack.c.l.b16 %v137
  %v361 = vunpack.c.l.b16 %v138
  %v362 = vunpack.c.l.b16 %v139
  %v363 = vunpack.c.l.b16 %v140
  %v364 = vunpack.c.l.b16 %v141
  %v365 = vunpack.c.l.b16 %v142
  %v366 = vunpack.c.l.b16 %v143
  %v367 = vunpack.c.l.b16 %v144
  %v368 = vunpack.c.l.b16 %v145
  %v369 = vunpack.c.l.b16 %v146
  %v370 = vunpack.c.l.b16 %v147
  %v371 = vunpack.c.l.b16 %v148
  %v372 = vunpack.c.l.b16 %v149
  %v373 = vunpack.c.l.b16 %v150
  %v374 = vunpack.c.l.b16 %v151
  %v375 = vunpack.c.l.b16 %v152
  %v376 = vunpack.c.l.b16 %v153
  %v377 = vunpack.c.l.b16 %v154
  %v378 = vunpack.c.l.b16 %v155
  %v379 = vunpack.c.l.b16 %v156
  %v380 = vunpack.c.l.b16 %v157
  %v381 = vunpack.c.l.b16 %v158
  %v382 = vunpack.c.l.b16 %v159
  %v383 = vunpack.c.l.b16 %v160
  %v384 = vunpack.c.l.b16 %v161
  %v385 = vunpack.c.l.b16 %v162
  %v386 = vunpack.c.l.b16 %v163
  %v387 = vunpack.c.l.b16 %v164
  %v388 = vunpack.c.l.b16 %v165
  %v389 = vunpack.c.l.b16 %v166
  %v390 = vunpack.c.l.b16 %v167
  %v391 = vunpack.c.l.b16 %v168
  %v392 = vunpack.c.l.b16 %v169
  %v393 = vunpack.c.l.b16 %v170
  %v394 = vunpack.c.l.b16 %v171
  %v395 = vunpack.c.l.b16 %v172
  %v396 = vunpack.c.l.b16 %v173
  %v397 = vunpack.c.l.b16 %v174
  %v398 = vunpack.c.l.b16 %v175
  %v399 = vunpack.c.l.b16 %v176
  %v400 = vunpack.c.l.b16 %v177
  %v401 = vunpack.c.l.b16 %v178
  %v402 = vunpack.c.l.b16 %v179
  %v403 = vunpack.c.l.b16 %v180
  %v404 = vunpack.c.l.b16 %v181
  %v405 = vunpack.c.l.b16 %v182
  %v406 = vunpack.c.l.b16 %v183
  %v407 = vunpack.c.l.b16 %v184
  %v408 = vunpack.c.l.b16 %v185
  %v409 = vunpack.c.l.b16 %v186
  %v410 = vunpack.c.l.b16 %v187
  %v411 = vpack.c.b16 %v348, %v347
  %v412 = vpack.c.b16 %v350, %v349
  %v413 = vpack.c.b16 %v352, %v351
  %v414 = vpack.c.b16 %v354, %v353
  %v415 = vpack.c.b16 %v356, %v355
  %v416 = vpack.c.b16 %v358, %v357
  %v417 = vpack.c.b16 %v360, %v359
  %v418 = vpack.c.b16 %v362, %v361
  %v419 = vpack.c.b16 %v364, %v363
  %v420 = vpack.c.b16 %v366, %v365
  %v421 = vpack.c.b16 %v368, %v367
  %v422 = vpack.c.b16 %v370, %v369
  %v423 = vpack.c.b16 %v372, %v371
  %v424 = vpack.c.b16 %v374, %v373
  %v425 = vpack.c.b16 %v376, %v375
  %v426 = vpack.c.b16 %v378, %v377
  %v427 = vpack.c.b16 %v380, %v379
  %v428 = vpack.c.b16 %v382, %v381
  %v429 = vpack.c.b16 %v384, %v383
  %v430 = vpack.c.b16 %v386, %v385
  %v431 = vpack.c.b16 %v388, %v387
  %v432 = vpack.c.b16 %v390, %v389
  %v433 = vpack.c.b16 %v392, %v391
  %v434 = vpack.c.b16 %v394, %v393
  %v435 = vpack.c.b16 %v396, %v395
  %v436 = vpack.c.b16 %v398, %v397
  %v437 = vpack.c.b16 %v400, %v399
  %v438 = vpack.c.b16 %v402, %v401
  %v439 = vpack.c.b16 %v404, %v403
  %v440 = vpack.c.b16 %v406, %v405
  %v441 = vpack.c.b16 %v408, %v407
  %v442 = vpack.c.b16 %v410, %v409
  %475 = vmatprep.subr.bf16.mxu0 0
  %476 = vmatpush1.bf16.msra.mxu0 %v411
  %477 = vmatprep.subr.bf16.mxu0 0
  %478 = vmatpush1.bf16.msra.mxu0 %v412
  %479 = vmatprep.subr.bf16.mxu0 0
  %480 = vmatpush1.bf16.msra.mxu0 %v413
  %481 = vmatprep.subr.bf16.mxu0 0
  %482 = vmatpush1.bf16.msra.mxu0 %v414
  %483 = vmatprep.subr.bf16.mxu0 0
  %484 = vmatpush1.bf16.msra.mxu0 %v415
  %485 = vmatprep.subr.bf16.mxu0 0
  %486 = vmatpush1.bf16.msra.mxu0 %v416
  %487 = vmatprep.subr.bf16.mxu0 0
  %488 = vmatpush1.bf16.msra.mxu0 %v417
  %489 = vmatprep.subr.bf16.mxu0 0
  %490 = vmatpush1.bf16.msra.mxu0 %v418
  %491 = vmatprep.subr.bf16.mxu0 0
  %492 = vmatpush1.bf16.msra.mxu0 %v419
  %493 = vmatprep.subr.bf16.mxu0 0
  %494 = vmatpush1.bf16.msra.mxu0 %v420
  %495 = vmatprep.subr.bf16.mxu0 0
  %496 = vmatpush1.bf16.msra.mxu0 %v421
  %497 = vmatprep.subr.bf16.mxu0 0
  %498 = vmatpush1.bf16.msra.mxu0 %v422
  %499 = vmatprep.subr.bf16.mxu0 0
  %500 = vmatpush1.bf16.msra.mxu0 %v423
  %501 = vmatprep.subr.bf16.mxu0 0
  %502 = vmatpush1.bf16.msra.mxu0 %v424
  %503 = vmatprep.subr.bf16.mxu0 0
  %504 = vmatpush1.bf16.msra.mxu0 %v425
  %505 = vmatprep.subr.bf16.mxu0 0
  %506 = vmatpush1.bf16.msra.mxu0 %v426
  %507 = vmatprep.mubr.bf16.mxu0 %v238
  %508 = vmatmul.mubr.bf16.gmra.mrb[0].mxu0 %v226
  %v509 = vpop.f32.mrb[0].mxu0
  %v510 = vadd.f32 0.0, %v509
  %v511 = vpop.f32.mrb[0].mxu0
  %v512 = vpop.f32.mrb[0].mxu0
  %v513 = vadd.f32 0.0, %v512
  %v514 = vpop.f32.mrb[0].mxu0
  %515 = vmatprep.mubr.bf16.mxu0 %v268
  %516 = vmatmul.mubr.bf16.gmra.mrb[0].mxu0 %v265
  %v517 = vpop.f32.mrb[0].mxu0
  %v518 = vadd.f32 0.0, %v517
  %v519 = vpop.f32.mrb[0].mxu0
  %v520 = vpop.f32.mrb[0].mxu0
  %v521 = vpop.f32.mrb[0].mxu0
  %522 = vdwg.mxu0
  %523 = vmatprep.subr.bf16.mxu0 0
  %524 = vmatpush1.bf16.msra.mxu0 %v427
  %525 = vmatprep.subr.bf16.mxu0 0
  %526 = vmatpush1.bf16.msra.mxu0 %v428
  %527 = vmatprep.subr.bf16.mxu0 0
  %528 = vmatpush1.bf16.msra.mxu0 %v429
  %529 = vmatprep.subr.bf16.mxu0 0
  %530 = vmatpush1.bf16.msra.mxu0 %v430
  %531 = vmatprep.subr.bf16.mxu0 0
  %532 = vmatpush1.bf16.msra.mxu0 %v431
  %533 = vmatprep.subr.bf16.mxu0 0
  %534 = vmatpush1.bf16.msra.mxu0 %v432
  %535 = vmatprep.subr.bf16.mxu0 0
  %536 = vmatpush1.bf16.msra.mxu0 %v433
  %537 = vmatprep.subr.bf16.mxu0 0
  %538 = vmatpush1.bf16.msra.mxu0 %v434
  %539 = vmatprep.subr.bf16.mxu0 0
  %540 = vmatpush1.bf16.msra.mxu0 %v435
  %541 = vmatprep.subr.bf16.mxu0 0
  %542 = vmatpush1.bf16.msra.mxu0 %v436
  %543 = vmatprep.subr.bf16.mxu0 0
  %544 = vmatpush1.bf16.msra.mxu0 %v437
  %545 = vmatprep.subr.bf16.mxu0 0
  %546 = vmatpush1.bf16.msra.mxu0 %v438
  %547 = vmatprep.subr.bf16.mxu0 0
  %548 = vmatpush1.bf16.msra.mxu0 %v439
  %549 = vmatprep.subr.bf16.mxu0 0
  %550 = vmatpush1.bf16.msra.mxu0 %v440
  %551 = vmatprep.subr.bf16.mxu0 0
  %552 = vmatpush1.bf16.msra.mxu0 %v441
  %553 = vmatprep.subr.bf16.mxu0 0
  %554 = vmatpush1.bf16.msra.mxu0 %v442
  %555 = vmatprep.mubr.bf16.mxu0 %v262
  %556 = vmatmul.mubr.bf16.gmra.mrb[0].mxu0 %v250
  %v557 = vpop.f32.mrb[0].mxu0
  %v558 = vadd.f32 %v510, %v557
  %v559 = vpop.f32.mrb[0].mxu0
  %v560 = vpop.f32.mrb[0].mxu0
  %v561 = vadd.f32 %v513, %v560
  %v562 = vpop.f32.mrb[0].mxu0
  %563 = vmatprep.mubr.bf16.mxu0 %v274
  %564 = vmatmul.mubr.bf16.gmra.mrb[0].mxu0 %v271
  %v565 = vpop.f32.mrb[0].mxu0
  %v566 = vadd.f32 %v518, %v565
  %v567 = vpop.f32.mrb[0].mxu0
  %v568 = vpop.f32.mrb[0].mxu0
  %v569 = vpop.f32.mrb[0].mxu0
  %570 = vdwg.mxu0
  %v573 = vunpack.c.l.b16 %v55
  %v574 = vunpack.c.h.b16 %v55
  %v575 = vunpack.c.l.b16 %v56
  %v576 = vunpack.c.h.b16 %v56
  %v577 = vpack.c.b16 %v573, %v573
  %v578 = vpack.c.b16 %v574, %v574
  %v579 = vpack.c.b16 %v575, %v575
  %v580 = vpack.c.b16 %v576, %v576
  %v653 = vunpack.c.l.b16 %v57
  %v654 = vunpack.c.l.b16 %v58
  %v655 = vunpack.c.l.b16 %v59
  %v656 = vunpack.c.l.b16 %v60
  %v657 = vunpack.c.l.b16 %v61
  %v658 = vunpack.c.l.b16 %v62
  %v659 = vunpack.c.l.b16 %v63
  %v660 = vunpack.c.l.b16 %v64
  %v661 = vunpack.c.l.b16 %v65
  %v662 = vunpack.c.l.b16 %v66
  %v663 = vunpack.c.l.b16 %v67
  %v664 = vunpack.c.l.b16 %v68
  %v665 = vunpack.c.l.b16 %v69
  %v666 = vunpack.c.l.b16 %v70
  %v667 = vunpack.c.l.b16 %v71
  %v668 = vunpack.c.l.b16 %v72
  %v669 = vunpack.c.l.b16 %v73
  %v670 = vunpack.c.l.b16 %v74
  %v671 = vunpack.c.l.b16 %v75
  %v672 = vunpack.c.l.b16 %v76
  %v673 = vunpack.c.l.b16 %v77
  %v674 = vunpack.c.l.b16 %v78
  %v675 = vunpack.c.l.b16 %v79
  %v676 = vunpack.c.l.b16 %v80
  %v677 = vunpack.c.l.b16 %v81
  %v678 = vunpack.c.l.b16 %v82
  %v679 = vunpack.c.l.b16 %v83
  %v680 = vunpack.c.l.b16 %v84
  %v681 = vunpack.c.l.b16 %v85
  %v682 = vunpack.c.l.b16 %v86
  %v683 = vunpack.c.l.b16 %v87
  %v684 = vunpack.c.l.b16 %v88
  %v685 = vunpack.c.l.b16 %v89
  %v686 = vunpack.c.l.b16 %v90
  %v687 = vunpack.c.l.b16 %v91
  %v688 = vunpack.c.l.b16 %v92
  %v689 = vunpack.c.l.b16 %v93
  %v690 = vunpack.c.l.b16 %v94
  %v691 = vunpack.c.l.b16 %v95
  %v692 = vunpack.c.l.b16 %v96
  %v693 = vunpack.c.l.b16 %v97
  %v694 = vunpack.c.l.b16 %v98
  %v695 = vunpack.c.l.b16 %v99
  %v696 = vunpack.c.l.b16 %v100
  %v697 = vunpack.c.l.b16 %v101
  %v698 = vunpack.c.l.b16 %v102
  %v699 = vunpack.c.l.b16 %v103
  %v700 = vunpack.c.l.b16 %v104
  %v701 = vunpack.c.l.b16 %v105
  %v702 = vunpack.c.l.b16 %v106
  %v703 = vunpack.c.l.b16 %v107
  %v704 = vunpack.c.l.b16 %v108
  %v705 = vunpack.c.l.b16 %v109
  %v706 = vunpack.c.l.b16 %v110
  %v707 = vunpack.c.l.b16 %v111
  %v708 = vunpack.c.l.b16 %v112
  %v709 = vunpack.c.l.b16 %v113
  %v710 = vunpack.c.l.b16 %v114
  %v711 = vunpack.c.l.b16 %v115
  %v712 = vunpack.c.l.b16 %v116
  %v713 = vunpack.c.l.b16 %v117
  %v714 = vunpack.c.l.b16 %v118
  %v715 = vunpack.c.l.b16 %v119
  %v716 = vunpack.c.l.b16 %v120
  %v717 = vpack.c.b16 %v654, %v653
  %v718 = vpack.c.b16 %v656, %v655
  %v719 = vpack.c.b16 %v658, %v657
  %v720 = vpack.c.b16 %v660, %v659
  %v721 = vpack.c.b16 %v662, %v661
  %v722 = vpack.c.b16 %v664, %v663
  %v723 = vpack.c.b16 %v666, %v665
  %v724 = vpack.c.b16 %v668, %v667
  %v725 = vpack.c.b16 %v670, %v669
  %v726 = vpack.c.b16 %v672, %v671
  %v727 = vpack.c.b16 %v674, %v673
  %v728 = vpack.c.b16 %v676, %v675
  %v729 = vpack.c.b16 %v678, %v677
  %v730 = vpack.c.b16 %v680, %v679
  %v731 = vpack.c.b16 %v682, %v681
  %v732 = vpack.c.b16 %v684, %v683
  %v733 = vpack.c.b16 %v686, %v685
  %v734 = vpack.c.b16 %v688, %v687
  %v735 = vpack.c.b16 %v690, %v689
  %v736 = vpack.c.b16 %v692, %v691
  %v737 = vpack.c.b16 %v694, %v693
  %v738 = vpack.c.b16 %v696, %v695
  %v739 = vpack.c.b16 %v698, %v697
  %v740 = vpack.c.b16 %v700, %v699
  %v741 = vpack.c.b16 %v702, %v701
  %v742 = vpack.c.b16 %v704, %v703
  %v743 = vpack.c.b16 %v706, %v705
  %v744 = vpack.c.b16 %v708, %v707
  %v745 = vpack.c.b16 %v710, %v709
  %v746 = vpack.c.b16 %v712, %v711
  %v747 = vpack.c.b16 %v714, %v713
  %v748 = vpack.c.b16 %v716, %v715
  %781 = vmatprep.subr.bf16.mxu0 0
  %782 = vmatpush1.bf16.msra.mxu0 %v717
  %783 = vmatprep.subr.bf16.mxu0 0
  %784 = vmatpush1.bf16.msra.mxu0 %v718
  %785 = vmatprep.subr.bf16.mxu0 0
  %786 = vmatpush1.bf16.msra.mxu0 %v719
  %787 = vmatprep.subr.bf16.mxu0 0
  %788 = vmatpush1.bf16.msra.mxu0 %v720
  %789 = vmatprep.subr.bf16.mxu0 0
  %790 = vmatpush1.bf16.msra.mxu0 %v721
  %791 = vmatprep.subr.bf16.mxu0 0
  %792 = vmatpush1.bf16.msra.mxu0 %v722
  %793 = vmatprep.subr.bf16.mxu0 0
  %794 = vmatpush1.bf16.msra.mxu0 %v723
  %795 = vmatprep.subr.bf16.mxu0 0
  %796 = vmatpush1.bf16.msra.mxu0 %v724
  %797 = vmatprep.subr.bf16.mxu0 0
  %798 = vmatpush1.bf16.msra.mxu0 %v725
  %799 = vmatprep.subr.bf16.mxu0 0
  %800 = vmatpush1.bf16.msra.mxu0 %v726
  %801 = vmatprep.subr.bf16.mxu0 0
  %802 = vmatpush1.bf16.msra.mxu0 %v727
  %803 = vmatprep.subr.bf16.mxu0 0
  %804 = vmatpush1.bf16.msra.mxu0 %v728
  %805 = vmatprep.subr.bf16.mxu0 0
  %806 = vmatpush1.bf16.msra.mxu0 %v729
  %807 = vmatprep.subr.bf16.mxu0 0
  %808 = vmatpush1.bf16.msra.mxu0 %v730
  %809 = vmatprep.subr.bf16.mxu0 0
  %810 = vmatpush1.bf16.msra.mxu0 %v731
  %811 = vmatprep.subr.bf16.mxu0 0
  %812 = vmatpush1.bf16.msra.mxu0 %v732
  %813 = vmatprep.mubr.bf16.mxu0 %v207
  %814 = vmatmul.mubr.bf16.gmra.mrb[0].mxu0 %v206
  %v815 = vpop.f32.mrb[0].mxu0
  %v816 = vadd.f32 %v558, %v815
  %v817 = vpop.f32.mrb[0].mxu0
  %v818 = vpop.f32.mrb[0].mxu0
  %v819 = vadd.f32 %v561, %v818
  %v820 = vpop.f32.mrb[0].mxu0
  %821 = vmatprep.mubr.bf16.mxu0 %v578
  %822 = vmatmul.mubr.bf16.gmra.mrb[0].mxu0 %v577
  %v823 = vpop.f32.mrb[0].mxu0
  %v824 = vadd.f32 %v566, %v823
  %v825 = vpop.f32.mrb[0].mxu0
  %v826 = vpop.f32.mrb[0].mxu0
  %v827 = vpop.f32.mrb[0].mxu0
  %828 = vdwg.mxu0
  %829 = vmatprep.subr.bf16.mxu0 0
  %830 = vmatpush1.bf16.msra.mxu0 %v733
  %831 = vmatprep.subr.bf16.mxu0 0
  %832 = vmatpush1.bf16.msra.mxu0 %v734
  %833 = vmatprep.subr.bf16.mxu0 0
  %834 = vmatpush1.bf16.msra.mxu0 %v735
  %835 = vmatprep.subr.bf16.mxu0 0
  %836 = vmatpush1.bf16.msra.mxu0 %v736
  %837 = vmatprep.subr.bf16.mxu0 0
  %838 = vmatpush1.bf16.msra.mxu0 %v737
  %839 = vmatprep.subr.bf16.mxu0 0
  %840 = vmatpush1.bf16.msra.mxu0 %v738
  %841 = vmatprep.subr.bf16.mxu0 0
  %842 = vmatpush1.bf16.msra.mxu0 %v739
  %843 = vmatprep.subr.bf16.mxu0 0
  %844 = vmatpush1.bf16.msra.mxu0 %v740
  %845 = vmatprep.subr.bf16.mxu0 0
  %846 = vmatpush1.bf16.msra.mxu0 %v741
  %847 = vmatprep.subr.bf16.mxu0 0
  %848 = vmatpush1.bf16.msra.mxu0 %v742
  %849 = vmatprep.subr.bf16.mxu0 0
  %850 = vmatpush1.bf16.msra.mxu0 %v743
  %851 = vmatprep.subr.bf16.mxu0 0
  %852 = vmatpush1.bf16.msra.mxu0 %v744
  %853 = vmatprep.subr.bf16.mxu0 0
  %854 = vmatpush1.bf16.msra.mxu0 %v745
  %855 = vmatprep.subr.bf16.mxu0 0
  %856 = vmatpush1.bf16.msra.mxu0 %v746
  %857 = vmatprep.subr.bf16.mxu0 0
  %858 = vmatpush1.bf16.msra.mxu0 %v747
  %859 = vmatprep.subr.bf16.mxu0 0
  %860 = vmatpush1.bf16.msra.mxu0 %v748
  %861 = vmatprep.mubr.bf16.mxu0 %v209
  %862 = vmatmul.mubr.bf16.gmra.mrb[0].mxu0 %v208
  %v863 = vpop.f32.mrb[0].mxu0
  %v864 = vadd.f32 %v816, %v863
  %v865 = vpop.f32.mrb[0].mxu0
  %v866 = vpop.f32.mrb[0].mxu0
  %v867 = vadd.f32 %v819, %v866
  %v868 = vpop.f32.mrb[0].mxu0
  %869 = vmatprep.mubr.bf16.mxu0 %v580
  %870 = vmatmul.mubr.bf16.gmra.mrb[0].mxu0 %v579
  %v871 = vpop.f32.mrb[0].mxu0
  %v872 = vadd.f32 %v824, %v871
  %v873 = vpop.f32.mrb[0].mxu0
  %v874 = vpop.f32.mrb[0].mxu0
  %v875 = vpop.f32.mrb[0].mxu0
  %876 = vdwg.mxu0
  %v877 = vld [vmem:[%s0] sm:$0xee]
  %v878 = vld [vmem:[%s0 + $0x8] sm:$0xee]
  %s879 = scalar_lea.vmem %s1, 512
  %v880 = vld [vmem:[%s879] sm:$0xf]
  %v881 = vld [vmem:[%s879 + $0x4] sm:$0xf]
  %v882 = vld [vmem:[%s879 + $0x8] sm:$0xf]
  %v883 = vld [vmem:[%s879 + $0xc] sm:$0xf]
  %v884 = vld [vmem:[%s879 + $0x10] sm:$0xf]
  %v885 = vld [vmem:[%s879 + $0x14] sm:$0xf]
  %v886 = vld [vmem:[%s879 + $0x18] sm:$0xf]
  %v887 = vld [vmem:[%s879 + $0x1c] sm:$0xf]
  %v888 = vld [vmem:[%s879 + $0x20] sm:$0xf]
  %v889 = vld [vmem:[%s879 + $0x24] sm:$0xf]
  %v890 = vld [vmem:[%s879 + $0x28] sm:$0xf]
  %v891 = vld [vmem:[%s879 + $0x2c] sm:$0xf]
  %v892 = vld [vmem:[%s879 + $0x30] sm:$0xf]
  %v893 = vld [vmem:[%s879 + $0x34] sm:$0xf]
  %v894 = vld [vmem:[%s879 + $0x38] sm:$0xf]
  %v895 = vld [vmem:[%s879 + $0x3c] sm:$0xf]
  %v896 = vld [vmem:[%s879 + $0x40] sm:$0xf]
  %v897 = vld [vmem:[%s879 + $0x44] sm:$0xf]
  %v898 = vld [vmem:[%s879 + $0x48] sm:$0xf]
  %v899 = vld [vmem:[%s879 + $0x4c] sm:$0xf]
  %v900 = vld [vmem:[%s879 + $0x50] sm:$0xf]
  %v901 = vld [vmem:[%s879 + $0x54] sm:$0xf]
  %v902 = vld [vmem:[%s879 + $0x58] sm:$0xf]
  %v903 = vld [vmem:[%s879 + $0x5c] sm:$0xf]
  %v904 = vld [vmem:[%s879 + $0x60] sm:$0xf]
  %v905 = vld [vmem:[%s879 + $0x64] sm:$0xf]
  %v906 = vld [vmem:[%s879 + $0x68] sm:$0xf]
  %v907 = vld [vmem:[%s879 + $0x6c] sm:$0xf]
  %v908 = vld [vmem:[%s879 + $0x70] sm:$0xf]
  %v909 = vld [vmem:[%s879 + $0x74] sm:$0xf]
  %v910 = vld [vmem:[%s879 + $0x78] sm:$0xf]
  %v911 = vld [vmem:[%s879 + $0x7c] sm:$0xf]
  %v912 = vld [vmem:[%s879 + $0x80] sm:$0xf]
  %v913 = vld [vmem:[%s879 + $0x84] sm:$0xf]
  %v914 = vld [vmem:[%s879 + $0x88] sm:$0xf]
  %v915 = vld [vmem:[%s879 + $0x8c] sm:$0xf]
  %v916 = vld [vmem:[%s879 + $0x90] sm:$0xf]
  %v917 = vld [vmem:[%s879 + $0x94] sm:$0xf]
  %v918 = vld [vmem:[%s879 + $0x98] sm:$0xf]
  %v919 = vld [vmem:[%s879 + $0x9c] sm:$0xf]
  %v920 = vld [vmem:[%s879 + $0xa0] sm:$0xf]
  %v921 = vld [vmem:[%s879 + $0xa4] sm:$0xf]
  %v922 = vld [vmem:[%s879 + $0xa8] sm:$0xf]
  %v923 = vld [vmem:[%s879 + $0xac] sm:$0xf]
  %v924 = vld [vmem:[%s879 + $0xb0] sm:$0xf]
  %v925 = vld [vmem:[%s879 + $0xb4] sm:$0xf]
  %v926 = vld [vmem:[%s879 + $0xb8] sm:$0xf]
  %v927 = vld [vmem:[%s879 + $0xbc] sm:$0xf]
  %v928 = vld [vmem:[%s879 + $0xc0] sm:$0xf]
  %v929 = vld [vmem:[%s879 + $0xc4] sm:$0xf]
  %v930 = vld [vmem:[%s879 + $0xc8] sm:$0xf]
  %v931 = vld [vmem:[%s879 + $0xcc] sm:$0xf]
  %v932 = vld [vmem:[%s879 + $0xd0] sm:$0xf]
  %v933 = vld [vmem:[%s879 + $0xd4] sm:$0xf]
  %v934 = vld [vmem:[%s879 + $0xd8] sm:$0xf]
  %v935 = vld [vmem:[%s879 + $0xdc] sm:$0xf]
  %v936 = vld [vmem:[%s879 + $0xe0] sm:$0xf]
  %v937 = vld [vmem:[%s879 + $0xe4] sm:$0xf]
  %v938 = vld [vmem:[%s879 + $0xe8] sm:$0xf]
  %v939 = vld [vmem:[%s879 + $0xec] sm:$0xf]
  %v940 = vld [vmem:[%s879 + $0xf0] sm:$0xf]
  %v941 = vld [vmem:[%s879 + $0xf4] sm:$0xf]
  %v942 = vld [vmem:[%s879 + $0xf8] sm:$0xf]
  %v943 = vld [vmem:[%s879 + $0xfc] sm:$0xf]
  %v946 = vunpack.c.l.b16 %v877
  %v947 = vunpack.c.h.b16 %v877
  %v948 = vunpack.c.l.b16 %v878
  %v949 = vunpack.c.h.b16 %v878
  %v950 = vpack.c.b16 %v198, %v946
  %v951 = vpack.c.b16 %v199, %v947
  %v952 = vpack.c.b16 %v200, %v948
  %v953 = vpack.c.b16 %v201, %v949
  %vm954 = vcmask 1046528
  %v955 = vrot.slane %v950, 1
  %v956 = vrot.slane %v210, 1
  %v957 = vsel %vm954, %v955, %v956
  %v958 = vrot.slane %v951, 1
  %v959 = vrot.slane %v211, 1
  %v960 = vsel %vm954, %v958, %v959
  %v961 = vrot.slane %v952, 1
  %v962 = vrot.slane %v212, 1
  %v963 = vsel %vm954, %v961, %v962
  %v964 = vrot.slane %v953, 1
  %v965 = vrot.slane %v213, 1
  %v966 = vsel %vm954, %v964, %v965
  %v1039 = vunpack.c.l.b16 %v880
  %v1040 = vunpack.c.l.b16 %v881
  %v1041 = vunpack.c.l.b16 %v882
  %v1042 = vunpack.c.l.b16 %v883
  %v1043 = vunpack.c.l.b16 %v884
  %v1044 = vunpack.c.l.b16 %v885
  %v1045 = vunpack.c.l.b16 %v886
  %v1046 = vunpack.c.l.b16 %v887
  %v1047 = vunpack.c.l.b16 %v888
  %v1048 = vunpack.c.l.b16 %v889
  %v1049 = vunpack.c.l.b16 %v890
  %v1050 = vunpack.c.l.b16 %v891
  %v1051 = vunpack.c.l.b16 %v892
  %v1052 = vunpack.c.l.b16 %v893
  %v1053 = vunpack.c.l.b16 %v894
  %v1054 = vunpack.c.l.b16 %v895
  %v1055 = vunpack.c.l.b16 %v896
  %v1056 = vunpack.c.l.b16 %v897
  %v1057 = vunpack.c.l.b16 %v898
  %v1058 = vunpack.c.l.b16 %v899
  %v1059 = vunpack.c.l.b16 %v900
  %v1060 = vunpack.c.l.b16 %v901
  %v1061 = vunpack.c.l.b16 %v902
  %v1062 = vunpack.c.l.b16 %v903
  %v1063 = vunpack.c.l.b16 %v904
  %v1064 = vunpack.c.l.b16 %v905
  %v1065 = vunpack.c.l.b16 %v906
  %v1066 = vunpack.c.l.b16 %v907
  %v1067 = vunpack.c.l.b16 %v908
  %v1068 = vunpack.c.l.b16 %v909
  %v1069 = vunpack.c.l.b16 %v910
  %v1070 = vunpack.c.l.b16 %v911
  %v1071 = vunpack.c.l.b16 %v912
  %v1072 = vunpack.c.l.b16 %v913
  %v1073 = vunpack.c.l.b16 %v914
  %v1074 = vunpack.c.l.b16 %v915
  %v1075 = vunpack.c.l.b16 %v916
  %v1076 = vunpack.c.l.b16 %v917
  %v1077 = vunpack.c.l.b16 %v918
  %v1078 = vunpack.c.l.b16 %v919
  %v1079 = vunpack.c.l.b16 %v920
  %v1080 = vunpack.c.l.b16 %v921
  %v1081 = vunpack.c.l.b16 %v922
  %v1082 = vunpack.c.l.b16 %v923
  %v1083 = vunpack.c.l.b16 %v924
  %v1084 = vunpack.c.l.b16 %v925
  %v1085 = vunpack.c.l.b16 %v926
  %v1086 = vunpack.c.l.b16 %v927
  %v1087 = vunpack.c.l.b16 %v928
  %v1088 = vunpack.c.l.b16 %v929
  %v1089 = vunpack.c.l.b16 %v930
  %v1090 = vunpack.c.l.b16 %v931
  %v1091 = vunpack.c.l.b16 %v932
  %v1092 = vunpack.c.l.b16 %v933
  %v1093 = vunpack.c.l.b16 %v934
  %v1094 = vunpack.c.l.b16 %v935
  %v1095 = vunpack.c.l.b16 %v936
  %v1096 = vunpack.c.l.b16 %v937
  %v1097 = vunpack.c.l.b16 %v938
  %v1098 = vunpack.c.l.b16 %v939
  %v1099 = vunpack.c.l.b16 %v940
  %v1100 = vunpack.c.l.b16 %v941
  %v1101 = vunpack.c.l.b16 %v942
  %v1102 = vunpack.c.l.b16 %v943
  %v1103 = vpack.c.b16 %v1040, %v1039
  %v1104 = vpack.c.b16 %v1042, %v1041
  %v1105 = vpack.c.b16 %v1044, %v1043
  %v1106 = vpack.c.b16 %v1046, %v1045
  %v1107 = vpack.c.b16 %v1048, %v1047
  %v1108 = vpack.c.b16 %v1050, %v1049
  %v1109 = vpack.c.b16 %v1052, %v1051
  %v1110 = vpack.c.b16 %v1054, %v1053
  %v1111 = vpack.c.b16 %v1056, %v1055
  %v1112 = vpack.c.b16 %v1058, %v1057
  %v1113 = vpack.c.b16 %v1060, %v1059
  %v1114 = vpack.c.b16 %v1062, %v1061
  %v1115 = vpack.c.b16 %v1064, %v1063
  %v1116 = vpack.c.b16 %v1066, %v1065
  %v1117 = vpack.c.b16 %v1068, %v1067
  %v1118 = vpack.c.b16 %v1070, %v1069
  %v1119 = vpack.c.b16 %v1072, %v1071
  %v1120 = vpack.c.b16 %v1074, %v1073
  %v1121 = vpack.c.b16 %v1076, %v1075
  %v1122 = vpack.c.b16 %v1078, %v1077
  %v1123 = vpack.c.b16 %v1080, %v1079
  %v1124 = vpack.c.b16 %v1082, %v1081
  %v1125 = vpack.c.b16 %v1084, %v1083
  %v1126 = vpack.c.b16 %v1086, %v1085
  %v1127 = vpack.c.b16 %v1088, %v1087
  %v1128 = vpack.c.b16 %v1090, %v1089
  %v1129 = vpack.c.b16 %v1092, %v1091
  %v1130 = vpack.c.b16 %v1094, %v1093
  %v1131 = vpack.c.b16 %v1096, %v1095
  %v1132 = vpack.c.b16 %v1098, %v1097
  %v1133 = vpack.c.b16 %v1100, %v1099
  %v1134 = vpack.c.b16 %v1102, %v1101
  %1167 = vmatprep.subr.bf16.mxu0 0
  %1168 = vmatpush1.bf16.msra.mxu0 %v1103
  %1169 = vmatprep.subr.bf16.mxu0 0
  %1170 = vmatpush1.bf16.msra.mxu0 %v1104
  %1171 = vmatprep.subr.bf16.mxu0 0
  %1172 = vmatpush1.bf16.msra.mxu0 %v1105
  %1173 = vmatprep.subr.bf16.mxu0 0
  %1174 = vmatpush1.bf16.msra.mxu0 %v1106
  %1175 = vmatprep.subr.bf16.mxu0 0
  %1176 = vmatpush1.bf16.msra.mxu0 %v1107
  %1177 = vmatprep.subr.bf16.mxu0 0
  %1178 = vmatpush1.bf16.msra.mxu0 %v1108
  %1179 = vmatprep.subr.bf16.mxu0 0
  %1180 = vmatpush1.bf16.msra.mxu0 %v1109
  %1181 = vmatprep.subr.bf16.mxu0 0
  %1182 = vmatpush1.bf16.msra.mxu0 %v1110
  %1183 = vmatprep.subr.bf16.mxu0 0
  %1184 = vmatpush1.bf16.msra.mxu0 %v1111
  %1185 = vmatprep.subr.bf16.mxu0 0
  %1186 = vmatpush1.bf16.msra.mxu0 %v1112
  %1187 = vmatprep.subr.bf16.mxu0 0
  %1188 = vmatpush1.bf16.msra.mxu0 %v1113
  %1189 = vmatprep.subr.bf16.mxu0 0
  %1190 = vmatpush1.bf16.msra.mxu0 %v1114
  %1191 = vmatprep.subr.bf16.mxu0 0
  %1192 = vmatpush1.bf16.msra.mxu0 %v1115
  %1193 = vmatprep.subr.bf16.mxu0 0
  %1194 = vmatpush1.bf16.msra.mxu0 %v1116
  %1195 = vmatprep.subr.bf16.mxu0 0
  %1196 = vmatpush1.bf16.msra.mxu0 %v1117
  %1197 = vmatprep.subr.bf16.mxu0 0
  %1198 = vmatpush1.bf16.msra.mxu0 %v1118
  %1199 = vmatprep.mubr.bf16.mxu0 %v960
  %1200 = vmatmul.mubr.bf16.gmra.mrb[0].mxu0 %v957
  %v1201 = vpop.f32.mrb[0].mxu0
  %v1202 = vadd.f32 0.0, %v1201
  %v1203 = vpop.f32.mrb[0].mxu0
  %v1204 = vpop.f32.mrb[0].mxu0
  %v1205 = vadd.f32 0.0, %v1204
  %v1206 = vpop.f32.mrb[0].mxu0
  %1207 = vmatprep.mubr.bf16.mxu0 %v959
  %1208 = vmatmul.mubr.bf16.gmra.mrb[0].mxu0 %v956
  %v1209 = vpop.f32.mrb[0].mxu0
  %v1210 = vadd.f32 0.0, %v1209
  %v1211 = vpop.f32.mrb[0].mxu0
  %v1212 = vpop.f32.mrb[0].mxu0
  %v1213 = vpop.f32.mrb[0].mxu0
  %1214 = vdwg.mxu0
  %1215 = vmatprep.subr.bf16.mxu0 0
  %1216 = vmatpush1.bf16.msra.mxu0 %v1119
  %1217 = vmatprep.subr.bf16.mxu0 0
  %1218 = vmatpush1.bf16.msra.mxu0 %v1120
  %1219 = vmatprep.subr.bf16.mxu0 0
  %1220 = vmatpush1.bf16.msra.mxu0 %v1121
  %1221 = vmatprep.subr.bf16.mxu0 0
  %1222 = vmatpush1.bf16.msra.mxu0 %v1122
  %1223 = vmatprep.subr.bf16.mxu0 0
  %1224 = vmatpush1.bf16.msra.mxu0 %v1123
  %1225 = vmatprep.subr.bf16.mxu0 0
  %1226 = vmatpush1.bf16.msra.mxu0 %v1124
  %1227 = vmatprep.subr.bf16.mxu0 0
  %1228 = vmatpush1.bf16.msra.mxu0 %v1125
  %1229 = vmatprep.subr.bf16.mxu0 0
  %1230 = vmatpush1.bf16.msra.mxu0 %v1126
  %1231 = vmatprep.subr.bf16.mxu0 0
  %1232 = vmatpush1.bf16.msra.mxu0 %v1127
  %1233 = vmatprep.subr.bf16.mxu0 0
  %1234 = vmatpush1.bf16.msra.mxu0 %v1128
  %1235 = vmatprep.subr.bf16.mxu0 0
  %1236 = vmatpush1.bf16.msra.mxu0 %v1129
  %1237 = vmatprep.subr.bf16.mxu0 0
  %1238 = vmatpush1.bf16.msra.mxu0 %v1130
  %1239 = vmatprep.subr.bf16.mxu0 0
  %1240 = vmatpush1.bf16.msra.mxu0 %v1131
  %1241 = vmatprep.subr.bf16.mxu0 0
  %1242 = vmatpush1.bf16.msra.mxu0 %v1132
  %1243 = vmatprep.subr.bf16.mxu0 0
  %1244 = vmatpush1.bf16.msra.mxu0 %v1133
  %1245 = vmatprep.subr.bf16.mxu0 0
  %1246 = vmatpush1.bf16.msra.mxu0 %v1134
  %1247 = vmatprep.mubr.bf16.mxu0 %v966
  %1248 = vmatmul.mubr.bf16.gmra.mrb[0].mxu0 %v963
  %v1249 = vpop.f32.mrb[0].mxu0
  %v1250 = vadd.f32 %v1202, %v1249
  %v1251 = vpop.f32.mrb[0].mxu0
  %v1252 = vpop.f32.mrb[0].mxu0
  %v1253 = vadd.f32 %v1205, %v1252
  %v1254 = vpop.f32.mrb[0].mxu0
  %1255 = vmatprep.mubr.bf16.mxu0 %v965
  %1256 = vmatmul.mubr.bf16.gmra.mrb[0].mxu0 %v962
  %v1257 = vpop.f32.mrb[0].mxu0
  %v1258 = vadd.f32 %v1210, %v1257
  %v1259 = vpop.f32.mrb[0].mxu0
  %v1260 = vpop.f32.mrb[0].mxu0
  %v1261 = vpop.f32.mrb[0].mxu0
  %1262 = vdwg.mxu0
  %v1263 = vadd.f32 %v864, %v1250
  %v1264 = vadd.f32 %v867, %v1253
  %v1265 = vadd.f32 %v872, %v1258
  %v1266 = vld [vmem:[%s0 + $0x20] sm:$0xff]
  %v1267 = vld [vmem:[%s0 + $0x28] sm:$0xff]
  %s1268 = scalar_lea.vmem %s1, 768
  %v1269 = vld [vmem:[%s1268] sm:$0xf]
  %v1270 = vld [vmem:[%s1268 + $0x4] sm:$0xf]
  %v1271 = vld [vmem:[%s1268 + $0x8] sm:$0xf]
  %v1272 = vld [vmem:[%s1268 + $0xc] sm:$0xf]
  %v1273 = vld [vmem:[%s1268 + $0x10] sm:$0xf]
  %v1274 = vld [vmem:[%s1268 + $0x14] sm:$0xf]
  %v1275 = vld [vmem:[%s1268 + $0x18] sm:$0xf]
  %v1276 = vld [vmem:[%s1268 + $0x1c] sm:$0xf]
  %v1277 = vld [vmem:[%s1268 + $0x20] sm:$0xf]
  %v1278 = vld [vmem:[%s1268 + $0x24] sm:$0xf]
  %v1279 = vld [vmem:[%s1268 + $0x28] sm:$0xf]
  %v1280 = vld [vmem:[%s1268 + $0x2c] sm:$0xf]
  %v1281 = vld [vmem:[%s1268 + $0x30] sm:$0xf]
  %v1282 = vld [vmem:[%s1268 + $0x34] sm:$0xf]
  %v1283 = vld [vmem:[%s1268 + $0x38] sm:$0xf]
  %v1284 = vld [vmem:[%s1268 + $0x3c] sm:$0xf]
  %v1285 = vld [vmem:[%s1268 + $0x40] sm:$0xf]
  %v1286 = vld [vmem:[%s1268 + $0x44] sm:$0xf]
  %v1287 = vld [vmem:[%s1268 + $0x48] sm:$0xf]
  %v1288 = vld [vmem:[%s1268 + $0x4c] sm:$0xf]
  %v1289 = vld [vmem:[%s1268 + $0x50] sm:$0xf]
  %v1290 = vld [vmem:[%s1268 + $0x54] sm:$0xf]
  %v1291 = vld [vmem:[%s1268 + $0x58] sm:$0xf]
  %v1292 = vld [vmem:[%s1268 + $0x5c] sm:$0xf]
  %v1293 = vld [vmem:[%s1268 + $0x60] sm:$0xf]
  %v1294 = vld [vmem:[%s1268 + $0x64] sm:$0xf]
  %v1295 = vld [vmem:[%s1268 + $0x68] sm:$0xf]
  %v1296 = vld [vmem:[%s1268 + $0x6c] sm:$0xf]
  %v1297 = vld [vmem:[%s1268 + $0x70] sm:$0xf]
  %v1298 = vld [vmem:[%s1268 + $0x74] sm:$0xf]
  %v1299 = vld [vmem:[%s1268 + $0x78] sm:$0xf]
  %v1300 = vld [vmem:[%s1268 + $0x7c] sm:$0xf]
  %v1301 = vld [vmem:[%s1268 + $0x80] sm:$0xf]
  %v1302 = vld [vmem:[%s1268 + $0x84] sm:$0xf]
  %v1303 = vld [vmem:[%s1268 + $0x88] sm:$0xf]
  %v1304 = vld [vmem:[%s1268 + $0x8c] sm:$0xf]
  %v1305 = vld [vmem:[%s1268 + $0x90] sm:$0xf]
  %v1306 = vld [vmem:[%s1268 + $0x94] sm:$0xf]
  %v1307 = vld [vmem:[%s1268 + $0x98] sm:$0xf]
  %v1308 = vld [vmem:[%s1268 + $0x9c] sm:$0xf]
  %v1309 = vld [vmem:[%s1268 + $0xa0] sm:$0xf]
  %v1310 = vld [vmem:[%s1268 + $0xa4] sm:$0xf]
  %v1311 = vld [vmem:[%s1268 + $0xa8] sm:$0xf]
  %v1312 = vld [vmem:[%s1268 + $0xac] sm:$0xf]
  %v1313 = vld [vmem:[%s1268 + $0xb0] sm:$0xf]
  %v1314 = vld [vmem:[%s1268 + $0xb4] sm:$0xf]
  %v1315 = vld [vmem:[%s1268 + $0xb8] sm:$0xf]
  %v1316 = vld [vmem:[%s1268 + $0xbc] sm:$0xf]
  %v1317 = vld [vmem:[%s1268 + $0xc0] sm:$0xf]
  %v1318 = vld [vmem:[%s1268 + $0xc4] sm:$0xf]
  %v1319 = vld [vmem:[%s1268 + $0xc8] sm:$0xf]
  %v1320 = vld [vmem:[%s1268 + $0xcc] sm:$0xf]
  %v1321 = vld [vmem:[%s1268 + $0xd0] sm:$0xf]
  %v1322 = vld [vmem:[%s1268 + $0xd4] sm:$0xf]
  %v1323 = vld [vmem:[%s1268 + $0xd8] sm:$0xf]
  %v1324 = vld [vmem:[%s1268 + $0xdc] sm:$0xf]
  %v1325 = vld [vmem:[%s1268 + $0xe0] sm:$0xf]
  %v1326 = vld [vmem:[%s1268 + $0xe4] sm:$0xf]
  %v1327 = vld [vmem:[%s1268 + $0xe8] sm:$0xf]
  %v1328 = vld [vmem:[%s1268 + $0xec] sm:$0xf]
  %v1329 = vld [vmem:[%s1268 + $0xf0] sm:$0xf]
  %v1330 = vld [vmem:[%s1268 + $0xf4] sm:$0xf]
  %v1331 = vld [vmem:[%s1268 + $0xf8] sm:$0xf]
  %v1332 = vld [vmem:[%s1268 + $0xfc] sm:$0xf]
  %v1335 = vunpack.c.l.b16 %v1266
  %v1336 = vunpack.c.h.b16 %v1266
  %v1337 = vunpack.c.l.b16 %v1267
  %v1338 = vunpack.c.h.b16 %v1267
  %v1339 = vpack.c.b16 %v1335, %v1335
  %v1340 = vpack.c.b16 %v1336, %v1336
  %v1341 = vpack.c.b16 %v1337, %v1337
  %v1342 = vpack.c.b16 %v1338, %v1338
  %vm1343 = vsmask.f32 6400
  %v1345 = vshrl.u32 %v950, 16
  %v1347 = vrot.slane %v1345, 1
  %v1348 = vshll.u32 %v950, 16
  %v1350 = vrot.slane %v1348, 2
  %v1351 = vor.u32 %v1347, %v1350
  %v1353 = vshrl.u32 %v1339, 16
  %v1355 = vrot.slane %v1353, 1
  %v1356 = vshll.u32 %v1339, 16
  %v1358 = vrot.slane %v1356, 2
  %v1359 = vor.u32 %v1355, %v1358
  %v1360 = vsel %vm1343, %v1351, %v1359
  %v1362 = vshrl.u32 %v951, 16
  %v1364 = vrot.slane %v1362, 1
  %v1365 = vshll.u32 %v951, 16
  %v1367 = vrot.slane %v1365, 2
  %v1368 = vor.u32 %v1364, %v1367
  %v1370 = vshrl.u32 %v1340, 16
  %v1372 = vrot.slane %v1370, 1
  %v1373 = vshll.u32 %v1340, 16
  %v1375 = vrot.slane %v1373, 2
  %v1376 = vor.u32 %v1372, %v1375
  %v1377 = vsel %vm1343, %v1368, %v1376
  %v1379 = vshrl.u32 %v952, 16
  %v1381 = vrot.slane %v1379, 1
  %v1382 = vshll.u32 %v952, 16
  %v1384 = vrot.slane %v1382, 2
  %v1385 = vor.u32 %v1381, %v1384
  %v1387 = vshrl.u32 %v1341, 16
  %v1389 = vrot.slane %v1387, 1
  %v1390 = vshll.u32 %v1341, 16
  %v1392 = vrot.slane %v1390, 2
  %v1393 = vor.u32 %v1389, %v1392
  %v1394 = vsel %vm1343, %v1385, %v1393
  %v1396 = vshrl.u32 %v953, 16
  %v1398 = vrot.slane %v1396, 1
  %v1399 = vshll.u32 %v953, 16
  %v1401 = vrot.slane %v1399, 2
  %v1402 = vor.u32 %v1398, %v1401
  %v1404 = vshrl.u32 %v1342, 16
  %v1406 = vrot.slane %v1404, 1
  %v1407 = vshll.u32 %v1342, 16
  %v1409 = vrot.slane %v1407, 2
  %v1410 = vor.u32 %v1406, %v1409
  %v1411 = vsel %vm1343, %v1402, %v1410
  %v1484 = vunpack.c.l.b16 %v1269
  %v1485 = vunpack.c.l.b16 %v1270
  %v1486 = vunpack.c.l.b16 %v1271
  %v1487 = vunpack.c.l.b16 %v1272
  %v1488 = vunpack.c.l.b16 %v1273
  %v1489 = vunpack.c.l.b16 %v1274
  %v1490 = vunpack.c.l.b16 %v1275
  %v1491 = vunpack.c.l.b16 %v1276
  %v1492 = vunpack.c.l.b16 %v1277
  %v1493 = vunpack.c.l.b16 %v1278
  %v1494 = vunpack.c.l.b16 %v1279
  %v1495 = vunpack.c.l.b16 %v1280
  %v1496 = vunpack.c.l.b16 %v1281
  %v1497 = vunpack.c.l.b16 %v1282
  %v1498 = vunpack.c.l.b16 %v1283
  %v1499 = vunpack.c.l.b16 %v1284
  %v1500 = vunpack.c.l.b16 %v1285
  %v1501 = vunpack.c.l.b16 %v1286
  %v1502 = vunpack.c.l.b16 %v1287
  %v1503 = vunpack.c.l.b16 %v1288
  %v1504 = vunpack.c.l.b16 %v1289
  %v1505 = vunpack.c.l.b16 %v1290
  %v1506 = vunpack.c.l.b16 %v1291
  %v1507 = vunpack.c.l.b16 %v1292
  %v1508 = vunpack.c.l.b16 %v1293
  %v1509 = vunpack.c.l.b16 %v1294
  %v1510 = vunpack.c.l.b16 %v1295
  %v1511 = vunpack.c.l.b16 %v1296
  %v1512 = vunpack.c.l.b16 %v1297
  %v1513 = vunpack.c.l.b16 %v1298
  %v1514 = vunpack.c.l.b16 %v1299
  %v1515 = vunpack.c.l.b16 %v1300
  %v1516 = vunpack.c.l.b16 %v1301
  %v1517 = vunpack.c.l.b16 %v1302
  %v1518 = vunpack.c.l.b16 %v1303
  %v1519 = vunpack.c.l.b16 %v1304
  %v1520 = vunpack.c.l.b16 %v1305
  %v1521 = vunpack.c.l.b16 %v1306
  %v1522 = vunpack.c.l.b16 %v1307
  %v1523 = vunpack.c.l.b16 %v1308
  %v1524 = vunpack.c.l.b16 %v1309
  %v1525 = vunpack.c.l.b16 %v1310
  %v1526 = vunpack.c.l.b16 %v1311
  %v1527 = vunpack.c.l.b16 %v1312
  %v1528 = vunpack.c.l.b16 %v1313
  %v1529 = vunpack.c.l.b16 %v1314
  %v1530 = vunpack.c.l.b16 %v1315
  %v1531 = vunpack.c.l.b16 %v1316
  %v1532 = vunpack.c.l.b16 %v1317
  %v1533 = vunpack.c.l.b16 %v1318
  %v1534 = vunpack.c.l.b16 %v1319
  %v1535 = vunpack.c.l.b16 %v1320
  %v1536 = vunpack.c.l.b16 %v1321
  %v1537 = vunpack.c.l.b16 %v1322
  %v1538 = vunpack.c.l.b16 %v1323
  %v1539 = vunpack.c.l.b16 %v1324
  %v1540 = vunpack.c.l.b16 %v1325
  %v1541 = vunpack.c.l.b16 %v1326
  %v1542 = vunpack.c.l.b16 %v1327
  %v1543 = vunpack.c.l.b16 %v1328
  %v1544 = vunpack.c.l.b16 %v1329
  %v1545 = vunpack.c.l.b16 %v1330
  %v1546 = vunpack.c.l.b16 %v1331
  %v1547 = vunpack.c.l.b16 %v1332
  %v1548 = vpack.c.b16 %v1485, %v1484
  %v1549 = vpack.c.b16 %v1487, %v1486
  %v1550 = vpack.c.b16 %v1489, %v1488
  %v1551 = vpack.c.b16 %v1491, %v1490
  %v1552 = vpack.c.b16 %v1493, %v1492
  %v1553 = vpack.c.b16 %v1495, %v1494
  %v1554 = vpack.c.b16 %v1497, %v1496
  %v1555 = vpack.c.b16 %v1499, %v1498
  %v1556 = vpack.c.b16 %v1501, %v1500
  %v1557 = vpack.c.b16 %v1503, %v1502
  %v1558 = vpack.c.b16 %v1505, %v1504
  %v1559 = vpack.c.b16 %v1507, %v1506
  %v1560 = vpack.c.b16 %v1509, %v1508
  %v1561 = vpack.c.b16 %v1511, %v1510
  %v1562 = vpack.c.b16 %v1513, %v1512
  %v1563 = vpack.c.b16 %v1515, %v1514
  %v1564 = vpack.c.b16 %v1517, %v1516
  %v1565 = vpack.c.b16 %v1519, %v1518
  %v1566 = vpack.c.b16 %v1521, %v1520
  %v1567 = vpack.c.b16 %v1523, %v1522
  %v1568 = vpack.c.b16 %v1525, %v1524
  %v1569 = vpack.c.b16 %v1527, %v1526
  %v1570 = vpack.c.b16 %v1529, %v1528
  %v1571 = vpack.c.b16 %v1531, %v1530
  %v1572 = vpack.c.b16 %v1533, %v1532
  %v1573 = vpack.c.b16 %v1535, %v1534
  %v1574 = vpack.c.b16 %v1537, %v1536
  %v1575 = vpack.c.b16 %v1539, %v1538
  %v1576 = vpack.c.b16 %v1541, %v1540
  %v1577 = vpack.c.b16 %v1543, %v1542
  %v1578 = vpack.c.b16 %v1545, %v1544
  %v1579 = vpack.c.b16 %v1547, %v1546
  %1612 = vmatprep.subr.bf16.mxu0 0
  %1613 = vmatpush1.bf16.msra.mxu0 %v1548
  %1614 = vmatprep.subr.bf16.mxu0 0
  %1615 = vmatpush1.bf16.msra.mxu0 %v1549
  %1616 = vmatprep.subr.bf16.mxu0 0
  %1617 = vmatpush1.bf16.msra.mxu0 %v1550
  %1618 = vmatprep.subr.bf16.mxu0 0
  %1619 = vmatpush1.bf16.msra.mxu0 %v1551
  %1620 = vmatprep.subr.bf16.mxu0 0
  %1621 = vmatpush1.bf16.msra.mxu0 %v1552
  %1622 = vmatprep.subr.bf16.mxu0 0
  %1623 = vmatpush1.bf16.msra.mxu0 %v1553
  %1624 = vmatprep.subr.bf16.mxu0 0
  %1625 = vmatpush1.bf16.msra.mxu0 %v1554
  %1626 = vmatprep.subr.bf16.mxu0 0
  %1627 = vmatpush1.bf16.msra.mxu0 %v1555
  %1628 = vmatprep.subr.bf16.mxu0 0
  %1629 = vmatpush1.bf16.msra.mxu0 %v1556
  %1630 = vmatprep.subr.bf16.mxu0 0
  %1631 = vmatpush1.bf16.msra.mxu0 %v1557
  %1632 = vmatprep.subr.bf16.mxu0 0
  %1633 = vmatpush1.bf16.msra.mxu0 %v1558
  %1634 = vmatprep.subr.bf16.mxu0 0
  %1635 = vmatpush1.bf16.msra.mxu0 %v1559
  %1636 = vmatprep.subr.bf16.mxu0 0
  %1637 = vmatpush1.bf16.msra.mxu0 %v1560
  %1638 = vmatprep.subr.bf16.mxu0 0
  %1639 = vmatpush1.bf16.msra.mxu0 %v1561
  %1640 = vmatprep.subr.bf16.mxu0 0
  %1641 = vmatpush1.bf16.msra.mxu0 %v1562
  %1642 = vmatprep.subr.bf16.mxu0 0
  %1643 = vmatpush1.bf16.msra.mxu0 %v1563
  %1644 = vmatprep.mubr.bf16.mxu0 %v1377
  %1645 = vmatmul.mubr.bf16.gmra.mrb[0].mxu0 %v1360
  %v1646 = vpop.f32.mrb[0].mxu0
  %v1647 = vadd.f32 0.0, %v1646
  %v1648 = vpop.f32.mrb[0].mxu0
  %v1649 = vpop.f32.mrb[0].mxu0
  %v1650 = vadd.f32 0.0, %v1649
  %v1651 = vpop.f32.mrb[0].mxu0
  %1652 = vmatprep.mubr.bf16.mxu0 %v1376
  %1653 = vmatmul.mubr.bf16.gmra.mrb[0].mxu0 %v1359
  %v1654 = vpop.f32.mrb[0].mxu0
  %v1655 = vadd.f32 0.0, %v1654
  %v1656 = vpop.f32.mrb[0].mxu0
  %v1657 = vpop.f32.mrb[0].mxu0
  %v1658 = vpop.f32.mrb[0].mxu0
  %1659 = vdwg.mxu0
  %1660 = vmatprep.subr.bf16.mxu0 0
  %1661 = vmatpush1.bf16.msra.mxu0 %v1564
  %1662 = vmatprep.subr.bf16.mxu0 0
  %1663 = vmatpush1.bf16.msra.mxu0 %v1565
  %1664 = vmatprep.subr.bf16.mxu0 0
  %1665 = vmatpush1.bf16.msra.mxu0 %v1566
  %1666 = vmatprep.subr.bf16.mxu0 0
  %1667 = vmatpush1.bf16.msra.mxu0 %v1567
  %1668 = vmatprep.subr.bf16.mxu0 0
  %1669 = vmatpush1.bf16.msra.mxu0 %v1568
  %1670 = vmatprep.subr.bf16.mxu0 0
  %1671 = vmatpush1.bf16.msra.mxu0 %v1569
  %1672 = vmatprep.subr.bf16.mxu0 0
  %1673 = vmatpush1.bf16.msra.mxu0 %v1570
  %1674 = vmatprep.subr.bf16.mxu0 0
  %1675 = vmatpush1.bf16.msra.mxu0 %v1571
  %1676 = vmatprep.subr.bf16.mxu0 0
  %1677 = vmatpush1.bf16.msra.mxu0 %v1572
  %1678 = vmatprep.subr.bf16.mxu0 0
  %1679 = vmatpush1.bf16.msra.mxu0 %v1573
  %1680 = vmatprep.subr.bf16.mxu0 0
  %1681 = vmatpush1.bf16.msra.mxu0 %v1574
  %1682 = vmatprep.subr.bf16.mxu0 0
  %1683 = vmatpush1.bf16.msra.mxu0 %v1575
  %1684 = vmatprep.subr.bf16.mxu0 0
  %1685 = vmatpush1.bf16.msra.mxu0 %v1576
  %1686 = vmatprep.subr.bf16.mxu0 0
  %1687 = vmatpush1.bf16.msra.mxu0 %v1577
  %1688 = vmatprep.subr.bf16.mxu0 0
  %1689 = vmatpush1.bf16.msra.mxu0 %v1578
  %1690 = vmatprep.subr.bf16.mxu0 0
  %1691 = vmatpush1.bf16.msra.mxu0 %v1579
  %1692 = vmatprep.mubr.bf16.mxu0 %v1411
  %1693 = vmatmul.mubr.bf16.gmra.mrb[0].mxu0 %v1394
  %v1694 = vpop.f32.mrb[0].mxu0
  %v1695 = vadd.f32 %v1647, %v1694
  %v1696 = vpop.f32.mrb[0].mxu0
  %v1697 = vpop.f32.mrb[0].mxu0
  %v1698 = vadd.f32 %v1650, %v1697
  %v1699 = vpop.f32.mrb[0].mxu0
  %1700 = vmatprep.mubr.bf16.mxu0 %v1410
  %1701 = vmatmul.mubr.bf16.gmra.mrb[0].mxu0 %v1393
  %v1702 = vpop.f32.mrb[0].mxu0
  %v1703 = vadd.f32 %v1655, %v1702
  %v1704 = vpop.f32.mrb[0].mxu0
  %v1705 = vpop.f32.mrb[0].mxu0
  %v1706 = vpop.f32.mrb[0].mxu0
  %1707 = vdwg.mxu0
  %v1708 = vadd.f32 %v1263, %v1695
  %v1709 = vadd.f32 %v1264, %v1698
  %v1710 = vadd.f32 %v1265, %v1703
  %v1711 = vld [vmem:[%s0] sm:$0xcc]
  %v1712 = vld [vmem:[%s0 + $0x8] sm:$0xcc]
  %s1713 = scalar_lea.vmem %s1, 1024
  %v1714 = vld [vmem:[%s1713] sm:$0xf]
  %v1715 = vld [vmem:[%s1713 + $0x4] sm:$0xf]
  %v1716 = vld [vmem:[%s1713 + $0x8] sm:$0xf]
  %v1717 = vld [vmem:[%s1713 + $0xc] sm:$0xf]
  %v1718 = vld [vmem:[%s1713 + $0x10] sm:$0xf]
  %v1719 = vld [vmem:[%s1713 + $0x14] sm:$0xf]
  %v1720 = vld [vmem:[%s1713 + $0x18] sm:$0xf]
  %v1721 = vld [vmem:[%s1713 + $0x1c] sm:$0xf]
  %v1722 = vld [vmem:[%s1713 + $0x20] sm:$0xf]
  %v1723 = vld [vmem:[%s1713 + $0x24] sm:$0xf]
  %v1724 = vld [vmem:[%s1713 + $0x28] sm:$0xf]
  %v1725 = vld [vmem:[%s1713 + $0x2c] sm:$0xf]
  %v1726 = vld [vmem:[%s1713 + $0x30] sm:$0xf]
  %v1727 = vld [vmem:[%s1713 + $0x34] sm:$0xf]
  %v1728 = vld [vmem:[%s1713 + $0x38] sm:$0xf]
  %v1729 = vld [vmem:[%s1713 + $0x3c] sm:$0xf]
  %v1730 = vld [vmem:[%s1713 + $0x40] sm:$0xf]
  %v1731 = vld [vmem:[%s1713 + $0x44] sm:$0xf]
  %v1732 = vld [vmem:[%s1713 + $0x48] sm:$0xf]
  %v1733 = vld [vmem:[%s1713 + $0x4c] sm:$0xf]
  %v1734 = vld [vmem:[%s1713 + $0x50] sm:$0xf]
  %v1735 = vld [vmem:[%s1713 + $0x54] sm:$0xf]
  %v1736 = vld [vmem:[%s1713 + $0x58] sm:$0xf]
  %v1737 = vld [vmem:[%s1713 + $0x5c] sm:$0xf]
  %v1738 = vld [vmem:[%s1713 + $0x60] sm:$0xf]
  %v1739 = vld [vmem:[%s1713 + $0x64] sm:$0xf]
  %v1740 = vld [vmem:[%s1713 + $0x68] sm:$0xf]
  %v1741 = vld [vmem:[%s1713 + $0x6c] sm:$0xf]
  %v1742 = vld [vmem:[%s1713 + $0x70] sm:$0xf]
  %v1743 = vld [vmem:[%s1713 + $0x74] sm:$0xf]
  %v1744 = vld [vmem:[%s1713 + $0x78] sm:$0xf]
  %v1745 = vld [vmem:[%s1713 + $0x7c] sm:$0xf]
  %v1746 = vld [vmem:[%s1713 + $0x80] sm:$0xf]
  %v1747 = vld [vmem:[%s1713 + $0x84] sm:$0xf]
  %v1748 = vld [vmem:[%s1713 + $0x88] sm:$0xf]
  %v1749 = vld [vmem:[%s1713 + $0x8c] sm:$0xf]
  %v1750 = vld [vmem:[%s1713 + $0x90] sm:$0xf]
  %v1751 = vld [vmem:[%s1713 + $0x94] sm:$0xf]
  %v1752 = vld [vmem:[%s1713 + $0x98] sm:$0xf]
  %v1753 = vld [vmem:[%s1713 + $0x9c] sm:$0xf]
  %v1754 = vld [vmem:[%s1713 + $0xa0] sm:$0xf]
  %v1755 = vld [vmem:[%s1713 + $0xa4] sm:$0xf]
  %v1756 = vld [vmem:[%s1713 + $0xa8] sm:$0xf]
  %v1757 = vld [vmem:[%s1713 + $0xac] sm:$0xf]
  %v1758 = vld [vmem:[%s1713 + $0xb0] sm:$0xf]
  %v1759 = vld [vmem:[%s1713 + $0xb4] sm:$0xf]
  %v1760 = vld [vmem:[%s1713 + $0xb8] sm:$0xf]
  %v1761 = vld [vmem:[%s1713 + $0xbc] sm:$0xf]
  %v1762 = vld [vmem:[%s1713 + $0xc0] sm:$0xf]
  %v1763 = vld [vmem:[%s1713 + $0xc4] sm:$0xf]
  %v1764 = vld [vmem:[%s1713 + $0xc8] sm:$0xf]
  %v1765 = vld [vmem:[%s1713 + $0xcc] sm:$0xf]
  %v1766 = vld [vmem:[%s1713 + $0xd0] sm:$0xf]
  %v1767 = vld [vmem:[%s1713 + $0xd4] sm:$0xf]
  %v1768 = vld [vmem:[%s1713 + $0xd8] sm:$0xf]
  %v1769 = vld [vmem:[%s1713 + $0xdc] sm:$0xf]
  %v1770 = vld [vmem:[%s1713 + $0xe0] sm:$0xf]
  %v1771 = vld [vmem:[%s1713 + $0xe4] sm:$0xf]
  %v1772 = vld [vmem:[%s1713 + $0xe8] sm:$0xf]
  %v1773 = vld [vmem:[%s1713 + $0xec] sm:$0xf]
  %v1774 = vld [vmem:[%s1713 + $0xf0] sm:$0xf]
  %v1775 = vld [vmem:[%s1713 + $0xf4] sm:$0xf]
  %v1776 = vld [vmem:[%s1713 + $0xf8] sm:$0xf]
  %v1777 = vld [vmem:[%s1713 + $0xfc] sm:$0xf]
  %v1780 = vunpack.c.l.b16 %v1711
  %v1781 = vunpack.c.h.b16 %v1711
  %v1782 = vunpack.c.l.b16 %v1712
  %v1783 = vunpack.c.h.b16 %v1712
  %v1784 = vpack.c.b16 %v198, %v1780
  %v1785 = vpack.c.b16 %v199, %v1781
  %v1786 = vpack.c.b16 %v200, %v1782
  %v1787 = vpack.c.b16 %v201, %v1783
  %vm1788 = vcmask 1045504
  %v1789 = vrot.slane %v1784, 2
  %v1790 = vrot.slane %v1339, 2
  %v1791 = vsel %vm1788, %v1789, %v1790
  %v1792 = vrot.slane %v1785, 2
  %v1793 = vrot.slane %v1340, 2
  %v1794 = vsel %vm1788, %v1792, %v1793
  %v1795 = vrot.slane %v1786, 2
  %v1796 = vrot.slane %v1341, 2
  %v1797 = vsel %vm1788, %v1795, %v1796
  %v1798 = vrot.slane %v1787, 2
  %v1799 = vrot.slane %v1342, 2
  %v1800 = vsel %vm1788, %v1798, %v1799
  %v1873 = vunpack.c.l.b16 %v1714
  %v1874 = vunpack.c.l.b16 %v1715
  %v1875 = vunpack.c.l.b16 %v1716
  %v1876 = vunpack.c.l.b16 %v1717
  %v1877 = vunpack.c.l.b16 %v1718
  %v1878 = vunpack.c.l.b16 %v1719
  %v1879 = vunpack.c.l.b16 %v1720
  %v1880 = vunpack.c.l.b16 %v1721
  %v1881 = vunpack.c.l.b16 %v1722
  %v1882 = vunpack.c.l.b16 %v1723
  %v1883 = vunpack.c.l.b16 %v1724
  %v1884 = vunpack.c.l.b16 %v1725
  %v1885 = vunpack.c.l.b16 %v1726
  %v1886 = vunpack.c.l.b16 %v1727
  %v1887 = vunpack.c.l.b16 %v1728
  %v1888 = vunpack.c.l.b16 %v1729
  %v1889 = vunpack.c.l.b16 %v1730
  %v1890 = vunpack.c.l.b16 %v1731
  %v1891 = vunpack.c.l.b16 %v1732
  %v1892 = vunpack.c.l.b16 %v1733
  %v1893 = vunpack.c.l.b16 %v1734
  %v1894 = vunpack.c.l.b16 %v1735
  %v1895 = vunpack.c.l.b16 %v1736
  %v1896 = vunpack.c.l.b16 %v1737
  %v1897 = vunpack.c.l.b16 %v1738
  %v1898 = vunpack.c.l.b16 %v1739
  %v1899 = vunpack.c.l.b16 %v1740
  %v1900 = vunpack.c.l.b16 %v1741
  %v1901 = vunpack.c.l.b16 %v1742
  %v1902 = vunpack.c.l.b16 %v1743
  %v1903 = vunpack.c.l.b16 %v1744
  %v1904 = vunpack.c.l.b16 %v1745
  %v1905 = vunpack.c.l.b16 %v1746
  %v1906 = vunpack.c.l.b16 %v1747
  %v1907 = vunpack.c.l.b16 %v1748
  %v1908 = vunpack.c.l.b16 %v1749
  %v1909 = vunpack.c.l.b16 %v1750
  %v1910 = vunpack.c.l.b16 %v1751
  %v1911 = vunpack.c.l.b16 %v1752
  %v1912 = vunpack.c.l.b16 %v1753
  %v1913 = vunpack.c.l.b16 %v1754
  %v1914 = vunpack.c.l.b16 %v1755
  %v1915 = vunpack.c.l.b16 %v1756
  %v1916 = vunpack.c.l.b16 %v1757
  %v1917 = vunpack.c.l.b16 %v1758
  %v1918 = vunpack.c.l.b16 %v1759
  %v1919 = vunpack.c.l.b16 %v1760
  %v1920 = vunpack.c.l.b16 %v1761
  %v1921 = vunpack.c.l.b16 %v1762
  %v1922 = vunpack.c.l.b16 %v1763
  %v1923 = vunpack.c.l.b16 %v1764
  %v1924 = vunpack.c.l.b16 %v1765
  %v1925 = vunpack.c.l.b16 %v1766
  %v1926 = vunpack.c.l.b16 %v1767
  %v1927 = vunpack.c.l.b16 %v1768
  %v1928 = vunpack.c.l.b16 %v1769
  %v1929 = vunpack.c.l.b16 %v1770
  %v1930 = vunpack.c.l.b16 %v1771
  %v1931 = vunpack.c.l.b16 %v1772
  %v1932 = vunpack.c.l.b16 %v1773
  %v1933 = vunpack.c.l.b16 %v1774
  %v1934 = vunpack.c.l.b16 %v1775
  %v1935 = vunpack.c.l.b16 %v1776
  %v1936 = vunpack.c.l.b16 %v1777
  %v1937 = vpack.c.b16 %v1874, %v1873
  %v1938 = vpack.c.b16 %v1876, %v1875
  %v1939 = vpack.c.b16 %v1878, %v1877
  %v1940 = vpack.c.b16 %v1880, %v1879
  %v1941 = vpack.c.b16 %v1882, %v1881
  %v1942 = vpack.c.b16 %v1884, %v1883
  %v1943 = vpack.c.b16 %v1886, %v1885
  %v1944 = vpack.c.b16 %v1888, %v1887
  %v1945 = vpack.c.b16 %v1890, %v1889
  %v1946 = vpack.c.b16 %v1892, %v1891
  %v1947 = vpack.c.b16 %v1894, %v1893
  %v1948 = vpack.c.b16 %v1896, %v1895
  %v1949 = vpack.c.b16 %v1898, %v1897
  %v1950 = vpack.c.b16 %v1900, %v1899
  %v1951 = vpack.c.b16 %v1902, %v1901
  %v1952 = vpack.c.b16 %v1904, %v1903
  %v1953 = vpack.c.b16 %v1906, %v1905
  %v1954 = vpack.c.b16 %v1908, %v1907
  %v1955 = vpack.c.b16 %v1910, %v1909
  %v1956 = vpack.c.b16 %v1912, %v1911
  %v1957 = vpack.c.b16 %v1914, %v1913
  %v1958 = vpack.c.b16 %v1916, %v1915
  %v1959 = vpack.c.b16 %v1918, %v1917
  %v1960 = vpack.c.b16 %v1920, %v1919
  %v1961 = vpack.c.b16 %v1922, %v1921
  %v1962 = vpack.c.b16 %v1924, %v1923
  %v1963 = vpack.c.b16 %v1926, %v1925
  %v1964 = vpack.c.b16 %v1928, %v1927
  %v1965 = vpack.c.b16 %v1930, %v1929
  %v1966 = vpack.c.b16 %v1932, %v1931
  %v1967 = vpack.c.b16 %v1934, %v1933
  %v1968 = vpack.c.b16 %v1936, %v1935
  %2001 = vmatprep.subr.bf16.mxu0 0
  %2002 = vmatpush1.bf16.msra.mxu0 %v1937
  %2003 = vmatprep.subr.bf16.mxu0 0
  %2004 = vmatpush1.bf16.msra.mxu0 %v1938
  %2005 = vmatprep.subr.bf16.mxu0 0
  %2006 = vmatpush1.bf16.msra.mxu0 %v1939
  %2007 = vmatprep.subr.bf16.mxu0 0
  %2008 = vmatpush1.bf16.msra.mxu0 %v1940
  %2009 = vmatprep.subr.bf16.mxu0 0
  %2010 = vmatpush1.bf16.msra.mxu0 %v1941
  %2011 = vmatprep.subr.bf16.mxu0 0
  %2012 = vmatpush1.bf16.msra.mxu0 %v1942
  %2013 = vmatprep.subr.bf16.mxu0 0
  %2014 = vmatpush1.bf16.msra.mxu0 %v1943
  %2015 = vmatprep.subr.bf16.mxu0 0
  %2016 = vmatpush1.bf16.msra.mxu0 %v1944
  %2017 = vmatprep.subr.bf16.mxu0 0
  %2018 = vmatpush1.bf16.msra.mxu0 %v1945
  %2019 = vmatprep.subr.bf16.mxu0 0
  %2020 = vmatpush1.bf16.msra.mxu0 %v1946
  %2021 = vmatprep.subr.bf16.mxu0 0
  %2022 = vmatpush1.bf16.msra.mxu0 %v1947
  %2023 = vmatprep.subr.bf16.mxu0 0
  %2024 = vmatpush1.bf16.msra.mxu0 %v1948
  %2025 = vmatprep.subr.bf16.mxu0 0
  %2026 = vmatpush1.bf16.msra.mxu0 %v1949
  %2027 = vmatprep.subr.bf16.mxu0 0
  %2028 = vmatpush1.bf16.msra.mxu0 %v1950
  %2029 = vmatprep.subr.bf16.mxu0 0
  %2030 = vmatpush1.bf16.msra.mxu0 %v1951
  %2031 = vmatprep.subr.bf16.mxu0 0
  %2032 = vmatpush1.bf16.msra.mxu0 %v1952
  %2033 = vmatprep.mubr.bf16.mxu0 %v1794
  %2034 = vmatmul.mubr.bf16.gmra.mrb[0].mxu0 %v1791
  %v2035 = vpop.f32.mrb[0].mxu0
  %v2036 = vadd.f32 0.0, %v2035
  %v2037 = vpop.f32.mrb[0].mxu0
  %v2038 = vpop.f32.mrb[0].mxu0
  %v2039 = vadd.f32 0.0, %v2038
  %v2040 = vpop.f32.mrb[0].mxu0
  %2041 = vmatprep.mubr.bf16.mxu0 %v1793
  %2042 = vmatmul.mubr.bf16.gmra.mrb[0].mxu0 %v1790
  %v2043 = vpop.f32.mrb[0].mxu0
  %v2044 = vadd.f32 0.0, %v2043
  %v2045 = vpop.f32.mrb[0].mxu0
  %v2046 = vpop.f32.mrb[0].mxu0
  %v2047 = vpop.f32.mrb[0].mxu0
  %2048 = vdwg.mxu0
  %2049 = vmatprep.subr.bf16.mxu0 0
  %2050 = vmatpush1.bf16.msra.mxu0 %v1953
  %2051 = vmatprep.subr.bf16.mxu0 0
  %2052 = vmatpush1.bf16.msra.mxu0 %v1954
  %2053 = vmatprep.subr.bf16.mxu0 0
  %2054 = vmatpush1.bf16.msra.mxu0 %v1955
  %2055 = vmatprep.subr.bf16.mxu0 0
  %2056 = vmatpush1.bf16.msra.mxu0 %v1956
  %2057 = vmatprep.subr.bf16.mxu0 0
  %2058 = vmatpush1.bf16.msra.mxu0 %v1957
  %2059 = vmatprep.subr.bf16.mxu0 0
  %2060 = vmatpush1.bf16.msra.mxu0 %v1958
  %2061 = vmatprep.subr.bf16.mxu0 0
  %2062 = vmatpush1.bf16.msra.mxu0 %v1959
  %2063 = vmatprep.subr.bf16.mxu0 0
  %2064 = vmatpush1.bf16.msra.mxu0 %v1960
  %2065 = vmatprep.subr.bf16.mxu0 0
  %2066 = vmatpush1.bf16.msra.mxu0 %v1961
  %2067 = vmatprep.subr.bf16.mxu0 0
  %2068 = vmatpush1.bf16.msra.mxu0 %v1962
  %2069 = vmatprep.subr.bf16.mxu0 0
  %2070 = vmatpush1.bf16.msra.mxu0 %v1963
  %2071 = vmatprep.subr.bf16.mxu0 0
  %2072 = vmatpush1.bf16.msra.mxu0 %v1964
  %2073 = vmatprep.subr.bf16.mxu0 0
  %2074 = vmatpush1.bf16.msra.mxu0 %v1965
  %2075 = vmatprep.subr.bf16.mxu0 0
  %2076 = vmatpush1.bf16.msra.mxu0 %v1966
  %2077 = vmatprep.subr.bf16.mxu0 0
  %2078 = vmatpush1.bf16.msra.mxu0 %v1967
  %2079 = vmatprep.subr.bf16.mxu0 0
  %2080 = vmatpush1.bf16.msra.mxu0 %v1968
  %2081 = vmatprep.mubr.bf16.mxu0 %v1800
  %2082 = vmatmul.mubr.bf16.gmra.mrb[0].mxu0 %v1797
  %v2083 = vpop.f32.mrb[0].mxu0
  %v2084 = vadd.f32 %v2036, %v2083
  %v2085 = vpop.f32.mrb[0].mxu0
  %v2086 = vpop.f32.mrb[0].mxu0
  %v2087 = vadd.f32 %v2039, %v2086
  %v2088 = vpop.f32.mrb[0].mxu0
  %2089 = vmatprep.mubr.bf16.mxu0 %v1799
  %2090 = vmatmul.mubr.bf16.gmra.mrb[0].mxu0 %v1796
  %v2091 = vpop.f32.mrb[0].mxu0
  %v2092 = vadd.f32 %v2044, %v2091
  %v2093 = vpop.f32.mrb[0].mxu0
  %v2094 = vpop.f32.mrb[0].mxu0
  %v2095 = vpop.f32.mrb[0].mxu0
  %2096 = vdwg.mxu0
  %v2097 = vadd.f32 %v1708, %v2084
  %v2098 = vadd.f32 %v1709, %v2087
  %v2099 = vadd.f32 %v1710, %v2092
  %v2100 = vld [vmem:[%s2] sm:$0x1]
  %v2102 = vlaneseq
  %v2103 = vshrl.u32 %v2102, 7
  %v2104 = vsub.s32 0, %v2103
  %v2105 = vrot.slane %v2100, %v2104
  %v2107 = vadd.f32 %v2097, %v2105
  %v2108 = vadd.f32 %v2098, %v2105
  %v2109 = vadd.f32 %v2099, %v2105
  %s2110 = scalar_lea.vmem %s0, 48
  %v2111 = vld [vmem:[%s2110] sm:$0xff]
  %v2112 = vld [vmem:[%s2110 + $0x8] sm:$0xff]
  %v2113 = vld [vmem:[%s2110 + $0x10] sm:$0xff]
  %v2114 = vld [vmem:[%s2110 + $0x18] sm:$0xff]
  %v2115 = vld [vmem:[%s2110 + $0x20] sm:$0x33]
  %v2116 = vld [vmem:[%s2110 + $0x28] sm:$0x33]
  %v2117 = vld [vmem:[%s2110 + $0x20] sm:$0x77]
  %v2118 = vld [vmem:[%s2110 + $0x28] sm:$0x77]
  %v2125 = vunpack.c.l.b16 %v2111
  %v2126 = vunpack.c.h.b16 %v2111
  %v2127 = vunpack.c.l.b16 %v2112
  %v2128 = vunpack.c.h.b16 %v2112
  %v2129 = vunpack.c.l.b16 %v2113
  %v2130 = vunpack.c.h.b16 %v2113
  %v2131 = vunpack.c.l.b16 %v2114
  %v2132 = vunpack.c.h.b16 %v2114
  %v2133 = vunpack.c.l.b16 %v2117
  %v2134 = vunpack.c.h.b16 %v2117
  %v2135 = vunpack.c.l.b16 %v2118
  %v2136 = vunpack.c.h.b16 %v2118
  %v2137 = vpack.c.b16 %v2129, %v2125
  %v2138 = vpack.c.b16 %v2130, %v2126
  %v2139 = vpack.c.b16 %v2131, %v2127
  %v2140 = vpack.c.b16 %v2132, %v2128
  %v2141 = vpack.c.b16 %v2133, %v2133
  %v2142 = vpack.c.b16 %v2134, %v2134
  %v2143 = vpack.c.b16 %v2135, %v2135
  %v2144 = vpack.c.b16 %v2136, %v2136
  %v2146 = vshrl.u32 %v2137, 16
  %v2148 = vshll.u32 %v2137, 16
  %v2150 = vrot.slane %v2148, 1
  %v2151 = vor.u32 %v2146, %v2150
  %v2153 = vshll.u32 %v2141, 16
  %v2155 = vrot.slane %v2153, 1
  %v2156 = vsel %vm214, %v2151, %v2155
  %v2158 = vshrl.u32 %v2138, 16
  %v2160 = vshll.u32 %v2138, 16
  %v2162 = vrot.slane %v2160, 1
  %v2163 = vor.u32 %v2158, %v2162
  %v2165 = vshll.u32 %v2142, 16
  %v2167 = vrot.slane %v2165, 1
  %v2168 = vsel %vm214, %v2163, %v2167
  %v2170 = vshrl.u32 %v2139, 16
  %v2172 = vshll.u32 %v2139, 16
  %v2174 = vrot.slane %v2172, 1
  %v2175 = vor.u32 %v2170, %v2174
  %v2177 = vshll.u32 %v2143, 16
  %v2179 = vrot.slane %v2177, 1
  %v2180 = vsel %vm214, %v2175, %v2179
  %v2182 = vshrl.u32 %v2140, 16
  %v2184 = vshll.u32 %v2140, 16
  %v2186 = vrot.slane %v2184, 1
  %v2187 = vor.u32 %v2182, %v2186
  %v2189 = vshll.u32 %v2144, 16
  %v2191 = vrot.slane %v2189, 1
  %v2192 = vsel %vm214, %v2187, %v2191
  %v2193 = vshrl.u32 %v2141, 16
  %v2195 = vor.u32 %v2193, %v2155
  %v2196 = vshrl.u32 %v2142, 16
  %v2198 = vor.u32 %v2196, %v2167
  %v2199 = vshrl.u32 %v2143, 16
  %v2201 = vor.u32 %v2199, %v2179
  %v2202 = vshrl.u32 %v2144, 16
  %v2204 = vor.u32 %v2202, %v2191
  %2213 = vmatprep.subr.bf16.mxu0 0
  %2214 = vmatpush1.bf16.msra.mxu0 %v411
  %2215 = vmatprep.subr.bf16.mxu0 0
  %2216 = vmatpush1.bf16.msra.mxu0 %v412
  %2217 = vmatprep.subr.bf16.mxu0 0
  %2218 = vmatpush1.bf16.msra.mxu0 %v413
  %2219 = vmatprep.subr.bf16.mxu0 0
  %2220 = vmatpush1.bf16.msra.mxu0 %v414
  %2221 = vmatprep.subr.bf16.mxu0 0
  %2222 = vmatpush1.bf16.msra.mxu0 %v415
  %2223 = vmatprep.subr.bf16.mxu0 0
  %2224 = vmatpush1.bf16.msra.mxu0 %v416
  %2225 = vmatprep.subr.bf16.mxu0 0
  %2226 = vmatpush1.bf16.msra.mxu0 %v417
  %2227 = vmatprep.subr.bf16.mxu0 0
  %2228 = vmatpush1.bf16.msra.mxu0 %v418
  %2229 = vmatprep.subr.bf16.mxu0 0
  %2230 = vmatpush1.bf16.msra.mxu0 %v419
  %2231 = vmatprep.subr.bf16.mxu0 0
  %2232 = vmatpush1.bf16.msra.mxu0 %v420
  %2233 = vmatprep.subr.bf16.mxu0 0
  %2234 = vmatpush1.bf16.msra.mxu0 %v421
  %2235 = vmatprep.subr.bf16.mxu0 0
  %2236 = vmatpush1.bf16.msra.mxu0 %v422
  %2237 = vmatprep.subr.bf16.mxu0 0
  %2238 = vmatpush1.bf16.msra.mxu0 %v423
  %2239 = vmatprep.subr.bf16.mxu0 0
  %2240 = vmatpush1.bf16.msra.mxu0 %v424
  %2241 = vmatprep.subr.bf16.mxu0 0
  %2242 = vmatpush1.bf16.msra.mxu0 %v425
  %2243 = vmatprep.subr.bf16.mxu0 0
  %2244 = vmatpush1.bf16.msra.mxu0 %v426
  %2245 = vmatprep.mubr.bf16.mxu0 %v2168
  %2246 = vmatmul.mubr.bf16.gmra.mrb[0].mxu0 %v2156
  %v2247 = vpop.f32.mrb[0].mxu0
  %v2248 = vadd.f32 0.0, %v2247
  %v2249 = vpop.f32.mrb[0].mxu0
  %v2250 = vpop.f32.mrb[0].mxu0
  %v2251 = vadd.f32 0.0, %v2250
  %v2252 = vpop.f32.mrb[0].mxu0
  %2253 = vmatprep.mubr.bf16.mxu0 %v2198
  %2254 = vmatmul.mubr.bf16.gmra.mrb[0].mxu0 %v2195
  %v2255 = vpop.f32.mrb[0].mxu0
  %v2256 = vadd.f32 0.0, %v2255
  %v2257 = vpop.f32.mrb[0].mxu0
  %v2258 = vpop.f32.mrb[0].mxu0
  %v2259 = vpop.f32.mrb[0].mxu0
  %2260 = vdwg.mxu0
  %2261 = vmatprep.subr.bf16.mxu0 0
  %2262 = vmatpush1.bf16.msra.mxu0 %v427
  %2263 = vmatprep.subr.bf16.mxu0 0
  %2264 = vmatpush1.bf16.msra.mxu0 %v428
  %2265 = vmatprep.subr.bf16.mxu0 0
  %2266 = vmatpush1.bf16.msra.mxu0 %v429
  %2267 = vmatprep.subr.bf16.mxu0 0
  %2268 = vmatpush1.bf16.msra.mxu0 %v430
  %2269 = vmatprep.subr.bf16.mxu0 0
  %2270 = vmatpush1.bf16.msra.mxu0 %v431
  %2271 = vmatprep.subr.bf16.mxu0 0
  %2272 = vmatpush1.bf16.msra.mxu0 %v432
  %2273 = vmatprep.subr.bf16.mxu0 0
  %2274 = vmatpush1.bf16.msra.mxu0 %v433
  %2275 = vmatprep.subr.bf16.mxu0 0
  %2276 = vmatpush1.bf16.msra.mxu0 %v434
  %2277 = vmatprep.subr.bf16.mxu0 0
  %2278 = vmatpush1.bf16.msra.mxu0 %v435
  %2279 = vmatprep.subr.bf16.mxu0 0
  %2280 = vmatpush1.bf16.msra.mxu0 %v436
  %2281 = vmatprep.subr.bf16.mxu0 0
  %2282 = vmatpush1.bf16.msra.mxu0 %v437
  %2283 = vmatprep.subr.bf16.mxu0 0
  %2284 = vmatpush1.bf16.msra.mxu0 %v438
  %2285 = vmatprep.subr.bf16.mxu0 0
  %2286 = vmatpush1.bf16.msra.mxu0 %v439
  %2287 = vmatprep.subr.bf16.mxu0 0
  %2288 = vmatpush1.bf16.msra.mxu0 %v440
  %2289 = vmatprep.subr.bf16.mxu0 0
  %2290 = vmatpush1.bf16.msra.mxu0 %v441
  %2291 = vmatprep.subr.bf16.mxu0 0
  %2292 = vmatpush1.bf16.msra.mxu0 %v442
  %2293 = vmatprep.mubr.bf16.mxu0 %v2192
  %2294 = vmatmul.mubr.bf16.gmra.mrb[0].mxu0 %v2180
  %v2295 = vpop.f32.mrb[0].mxu0
  %v2296 = vadd.f32 %v2248, %v2295
  %v2297 = vpop.f32.mrb[0].mxu0
  %v2298 = vpop.f32.mrb[0].mxu0
  %v2299 = vadd.f32 %v2251, %v2298
  %v2300 = vpop.f32.mrb[0].mxu0
  %2301 = vmatprep.mubr.bf16.mxu0 %v2204
  %2302 = vmatmul.mubr.bf16.gmra.mrb[0].mxu0 %v2201
  %v2303 = vpop.f32.mrb[0].mxu0
  %v2304 = vadd.f32 %v2256, %v2303
  %v2305 = vpop.f32.mrb[0].mxu0
  %v2306 = vpop.f32.mrb[0].mxu0
  %v2307 = vpop.f32.mrb[0].mxu0
  %2308 = vdwg.mxu0
  %v2311 = vunpack.c.l.b16 %v2115
  %v2312 = vunpack.c.h.b16 %v2115
  %v2313 = vunpack.c.l.b16 %v2116
  %v2314 = vunpack.c.h.b16 %v2116
  %v2315 = vpack.c.b16 %v2311, %v2311
  %v2316 = vpack.c.b16 %v2312, %v2312
  %v2317 = vpack.c.b16 %v2313, %v2313
  %v2318 = vpack.c.b16 %v2314, %v2314
  %2327 = vmatprep.subr.bf16.mxu0 0
  %2328 = vmatpush1.bf16.msra.mxu0 %v717
  %2329 = vmatprep.subr.bf16.mxu0 0
  %2330 = vmatpush1.bf16.msra.mxu0 %v718
  %2331 = vmatprep.subr.bf16.mxu0 0
  %2332 = vmatpush1.bf16.msra.mxu0 %v719
  %2333 = vmatprep.subr.bf16.mxu0 0
  %2334 = vmatpush1.bf16.msra.mxu0 %v720
  %2335 = vmatprep.subr.bf16.mxu0 0
  %2336 = vmatpush1.bf16.msra.mxu0 %v721
  %2337 = vmatprep.subr.bf16.mxu0 0
  %2338 = vmatpush1.bf16.msra.mxu0 %v722
  %2339 = vmatprep.subr.bf16.mxu0 0
  %2340 = vmatpush1.bf16.msra.mxu0 %v723
  %2341 = vmatprep.subr.bf16.mxu0 0
  %2342 = vmatpush1.bf16.msra.mxu0 %v724
  %2343 = vmatprep.subr.bf16.mxu0 0
  %2344 = vmatpush1.bf16.msra.mxu0 %v725
  %2345 = vmatprep.subr.bf16.mxu0 0
  %2346 = vmatpush1.bf16.msra.mxu0 %v726
  %2347 = vmatprep.subr.bf16.mxu0 0
  %2348 = vmatpush1.bf16.msra.mxu0 %v727
  %2349 = vmatprep.subr.bf16.mxu0 0
  %2350 = vmatpush1.bf16.msra.mxu0 %v728
  %2351 = vmatprep.subr.bf16.mxu0 0
  %2352 = vmatpush1.bf16.msra.mxu0 %v729
  %2353 = vmatprep.subr.bf16.mxu0 0
  %2354 = vmatpush1.bf16.msra.mxu0 %v730
  %2355 = vmatprep.subr.bf16.mxu0 0
  %2356 = vmatpush1.bf16.msra.mxu0 %v731
  %2357 = vmatprep.subr.bf16.mxu0 0
  %2358 = vmatpush1.bf16.msra.mxu0 %v732
  %2359 = vmatprep.mubr.bf16.mxu0 %v2138
  %2360 = vmatmul.mubr.bf16.gmra.mrb[0].mxu0 %v2137
  %v2361 = vpop.f32.mrb[0].mxu0
  %v2362 = vadd.f32 %v2296, %v2361
  %v2363 = vpop.f32.mrb[0].mxu0
  %v2364 = vpop.f32.mrb[0].mxu0
  %v2365 = vadd.f32 %v2299, %v2364
  %v2366 = vpop.f32.mrb[0].mxu0
  %2367 = vmatprep.mubr.bf16.mxu0 %v2316
  %2368 = vmatmul.mubr.bf16.gmra.mrb[0].mxu0 %v2315
  %v2369 = vpop.f32.mrb[0].mxu0
  %v2370 = vadd.f32 %v2304, %v2369
  %v2371 = vpop.f32.mrb[0].mxu0
  %v2372 = vpop.f32.mrb[0].mxu0
  %v2373 = vpop.f32.mrb[0].mxu0
  %2374 = vdwg.mxu0
  %2375 = vmatprep.subr.bf16.mxu0 0
  %2376 = vmatpush1.bf16.msra.mxu0 %v733
  %2377 = vmatprep.subr.bf16.mxu0 0
  %2378 = vmatpush1.bf16.msra.mxu0 %v734
  %2379 = vmatprep.subr.bf16.mxu0 0
  %2380 = vmatpush1.bf16.msra.mxu0 %v735
  %2381 = vmatprep.subr.bf16.mxu0 0
  %2382 = vmatpush1.bf16.msra.mxu0 %v736
  %2383 = vmatprep.subr.bf16.mxu0 0
  %2384 = vmatpush1.bf16.msra.mxu0 %v737
  %2385 = vmatprep.subr.bf16.mxu0 0
  %2386 = vmatpush1.bf16.msra.mxu0 %v738
  %2387 = vmatprep.subr.bf16.mxu0 0
  %2388 = vmatpush1.bf16.msra.mxu0 %v739
  %2389 = vmatprep.subr.bf16.mxu0 0
  %2390 = vmatpush1.bf16.msra.mxu0 %v740
  %2391 = vmatprep.subr.bf16.mxu0 0
  %2392 = vmatpush1.bf16.msra.mxu0 %v741
  %2393 = vmatprep.subr.bf16.mxu0 0
  %2394 = vmatpush1.bf16.msra.mxu0 %v742
  %2395 = vmatprep.subr.bf16.mxu0 0
  %2396 = vmatpush1.bf16.msra.mxu0 %v743
  %2397 = vmatprep.subr.bf16.mxu0 0
  %2398 = vmatpush1.bf16.msra.mxu0 %v744
  %2399 = vmatprep.subr.bf16.mxu0 0
  %2400 = vmatpush1.bf16.msra.mxu0 %v745
  %2401 = vmatprep.subr.bf16.mxu0 0
  %2402 = vmatpush1.bf16.msra.mxu0 %v746
  %2403 = vmatprep.subr.bf16.mxu0 0
  %2404 = vmatpush1.bf16.msra.mxu0 %v747
  %2405 = vmatprep.subr.bf16.mxu0 0
  %2406 = vmatpush1.bf16.msra.mxu0 %v748
  %2407 = vmatprep.mubr.bf16.mxu0 %v2140
  %2408 = vmatmul.mubr.bf16.gmra.mrb[0].mxu0 %v2139
  %v2409 = vpop.f32.mrb[0].mxu0
  %v2410 = vadd.f32 %v2362, %v2409
  %v2411 = vpop.f32.mrb[0].mxu0
  %v2412 = vpop.f32.mrb[0].mxu0
  %v2413 = vadd.f32 %v2365, %v2412
  %v2414 = vpop.f32.mrb[0].mxu0
  %2415 = vmatprep.mubr.bf16.mxu0 %v2318
  %2416 = vmatmul.mubr.bf16.gmra.mrb[0].mxu0 %v2317
  %v2417 = vpop.f32.mrb[0].mxu0
  %v2418 = vadd.f32 %v2370, %v2417
  %v2419 = vpop.f32.mrb[0].mxu0
  %v2420 = vpop.f32.mrb[0].mxu0
  %v2421 = vpop.f32.mrb[0].mxu0
  %2422 = vdwg.mxu0
  %v2423 = vld [vmem:[%s2110] sm:$0xee]
  %v2424 = vld [vmem:[%s2110 + $0x8] sm:$0xee]
  %v2427 = vunpack.c.l.b16 %v2423
  %v2428 = vunpack.c.h.b16 %v2423
  %v2429 = vunpack.c.l.b16 %v2424
  %v2430 = vunpack.c.h.b16 %v2424
  %v2431 = vpack.c.b16 %v2129, %v2427
  %v2432 = vpack.c.b16 %v2130, %v2428
  %v2433 = vpack.c.b16 %v2131, %v2429
  %v2434 = vpack.c.b16 %v2132, %v2430
  %v2435 = vrot.slane %v2431, 1
  %v2436 = vrot.slane %v2141, 1
  %v2437 = vsel %vm954, %v2435, %v2436
  %v2438 = vrot.slane %v2432, 1
  %v2439 = vrot.slane %v2142, 1
  %v2440 = vsel %vm954, %v2438, %v2439
  %v2441 = vrot.slane %v2433, 1
  %v2442 = vrot.slane %v2143, 1
  %v2443 = vsel %vm954, %v2441, %v2442
  %v2444 = vrot.slane %v2434, 1
  %v2445 = vrot.slane %v2144, 1
  %v2446 = vsel %vm954, %v2444, %v2445
  %2455 = vmatprep.subr.bf16.mxu0 0
  %2456 = vmatpush1.bf16.msra.mxu0 %v1103
  %2457 = vmatprep.subr.bf16.mxu0 0
  %2458 = vmatpush1.bf16.msra.mxu0 %v1104
  %2459 = vmatprep.subr.bf16.mxu0 0
  %2460 = vmatpush1.bf16.msra.mxu0 %v1105
  %2461 = vmatprep.subr.bf16.mxu0 0
  %2462 = vmatpush1.bf16.msra.mxu0 %v1106
  %2463 = vmatprep.subr.bf16.mxu0 0
  %2464 = vmatpush1.bf16.msra.mxu0 %v1107
  %2465 = vmatprep.subr.bf16.mxu0 0
  %2466 = vmatpush1.bf16.msra.mxu0 %v1108
  %2467 = vmatprep.subr.bf16.mxu0 0
  %2468 = vmatpush1.bf16.msra.mxu0 %v1109
  %2469 = vmatprep.subr.bf16.mxu0 0
  %2470 = vmatpush1.bf16.msra.mxu0 %v1110
  %2471 = vmatprep.subr.bf16.mxu0 0
  %2472 = vmatpush1.bf16.msra.mxu0 %v1111
  %2473 = vmatprep.subr.bf16.mxu0 0
  %2474 = vmatpush1.bf16.msra.mxu0 %v1112
  %2475 = vmatprep.subr.bf16.mxu0 0
  %2476 = vmatpush1.bf16.msra.mxu0 %v1113
  %2477 = vmatprep.subr.bf16.mxu0 0
  %2478 = vmatpush1.bf16.msra.mxu0 %v1114
  %2479 = vmatprep.subr.bf16.mxu0 0
  %2480 = vmatpush1.bf16.msra.mxu0 %v1115
  %2481 = vmatprep.subr.bf16.mxu0 0
  %2482 = vmatpush1.bf16.msra.mxu0 %v1116
  %2483 = vmatprep.subr.bf16.mxu0 0
  %2484 = vmatpush1.bf16.msra.mxu0 %v1117
  %2485 = vmatprep.subr.bf16.mxu0 0
  %2486 = vmatpush1.bf16.msra.mxu0 %v1118
  %2487 = vmatprep.mubr.bf16.mxu0 %v2440
  %2488 = vmatmul.mubr.bf16.gmra.mrb[0].mxu0 %v2437
  %v2489 = vpop.f32.mrb[0].mxu0
  %v2490 = vadd.f32 0.0, %v2489
  %v2491 = vpop.f32.mrb[0].mxu0
  %v2492 = vpop.f32.mrb[0].mxu0
  %v2493 = vadd.f32 0.0, %v2492
  %v2494 = vpop.f32.mrb[0].mxu0
  %2495 = vmatprep.mubr.bf16.mxu0 %v2439
  %2496 = vmatmul.mubr.bf16.gmra.mrb[0].mxu0 %v2436
  %v2497 = vpop.f32.mrb[0].mxu0
  %v2498 = vadd.f32 0.0, %v2497
  %v2499 = vpop.f32.mrb[0].mxu0
  %v2500 = vpop.f32.mrb[0].mxu0
  %v2501 = vpop.f32.mrb[0].mxu0
  %2502 = vdwg.mxu0
  %2503 = vmatprep.subr.bf16.mxu0 0
  %2504 = vmatpush1.bf16.msra.mxu0 %v1119
  %2505 = vmatprep.subr.bf16.mxu0 0
  %2506 = vmatpush1.bf16.msra.mxu0 %v1120
  %2507 = vmatprep.subr.bf16.mxu0 0
  %2508 = vmatpush1.bf16.msra.mxu0 %v1121
  %2509 = vmatprep.subr.bf16.mxu0 0
  %2510 = vmatpush1.bf16.msra.mxu0 %v1122
  %2511 = vmatprep.subr.bf16.mxu0 0
  %2512 = vmatpush1.bf16.msra.mxu0 %v1123
  %2513 = vmatprep.subr.bf16.mxu0 0
  %2514 = vmatpush1.bf16.msra.mxu0 %v1124
  %2515 = vmatprep.subr.bf16.mxu0 0
  %2516 = vmatpush1.bf16.msra.mxu0 %v1125
  %2517 = vmatprep.subr.bf16.mxu0 0
  %2518 = vmatpush1.bf16.msra.mxu0 %v1126
  %2519 = vmatprep.subr.bf16.mxu0 0
  %2520 = vmatpush1.bf16.msra.mxu0 %v1127
  %2521 = vmatprep.subr.bf16.mxu0 0
  %2522 = vmatpush1.bf16.msra.mxu0 %v1128
  %2523 = vmatprep.subr.bf16.mxu0 0
  %2524 = vmatpush1.bf16.msra.mxu0 %v1129
  %2525 = vmatprep.subr.bf16.mxu0 0
  %2526 = vmatpush1.bf16.msra.mxu0 %v1130
  %2527 = vmatprep.subr.bf16.mxu0 0
  %2528 = vmatpush1.bf16.msra.mxu0 %v1131
  %2529 = vmatprep.subr.bf16.mxu0 0
  %2530 = vmatpush1.bf16.msra.mxu0 %v1132
  %2531 = vmatprep.subr.bf16.mxu0 0
  %2532 = vmatpush1.bf16.msra.mxu0 %v1133
  %2533 = vmatprep.subr.bf16.mxu0 0
  %2534 = vmatpush1.bf16.msra.mxu0 %v1134
  %2535 = vmatprep.mubr.bf16.mxu0 %v2446
  %2536 = vmatmul.mubr.bf16.gmra.mrb[0].mxu0 %v2443
  %v2537 = vpop.f32.mrb[0].mxu0
  %v2538 = vadd.f32 %v2490, %v2537
  %v2539 = vpop.f32.mrb[0].mxu0
  %v2540 = vpop.f32.mrb[0].mxu0
  %v2541 = vadd.f32 %v2493, %v2540
  %v2542 = vpop.f32.mrb[0].mxu0
  %2543 = vmatprep.mubr.bf16.mxu0 %v2445
  %2544 = vmatmul.mubr.bf16.gmra.mrb[0].mxu0 %v2442
  %v2545 = vpop.f32.mrb[0].mxu0
  %v2546 = vadd.f32 %v2498, %v2545
  %v2547 = vpop.f32.mrb[0].mxu0
  %v2548 = vpop.f32.mrb[0].mxu0
  %v2549 = vpop.f32.mrb[0].mxu0
  %2550 = vdwg.mxu0
  %v2551 = vadd.f32 %v2410, %v2538
  %v2552 = vadd.f32 %v2413, %v2541
  %v2553 = vadd.f32 %v2418, %v2546
  %v2554 = vld [vmem:[%s2110 + $0x20] sm:$0xff]
  %v2555 = vld [vmem:[%s2110 + $0x28] sm:$0xff]
  %v2558 = vunpack.c.l.b16 %v2554
  %v2559 = vunpack.c.h.b16 %v2554
  %v2560 = vunpack.c.l.b16 %v2555
  %v2561 = vunpack.c.h.b16 %v2555
  %v2562 = vpack.c.b16 %v2558, %v2558
  %v2563 = vpack.c.b16 %v2559, %v2559
  %v2564 = vpack.c.b16 %v2560, %v2560
  %v2565 = vpack.c.b16 %v2561, %v2561
  %v2567 = vshrl.u32 %v2431, 16
  %v2569 = vrot.slane %v2567, 1
  %v2570 = vshll.u32 %v2431, 16
  %v2572 = vrot.slane %v2570, 2
  %v2573 = vor.u32 %v2569, %v2572
  %v2575 = vshrl.u32 %v2562, 16
  %v2577 = vrot.slane %v2575, 1
  %v2578 = vshll.u32 %v2562, 16
  %v2580 = vrot.slane %v2578, 2
  %v2581 = vor.u32 %v2577, %v2580
  %v2582 = vsel %vm1343, %v2573, %v2581
  %v2584 = vshrl.u32 %v2432, 16
  %v2586 = vrot.slane %v2584, 1
  %v2587 = vshll.u32 %v2432, 16
  %v2589 = vrot.slane %v2587, 2
  %v2590 = vor.u32 %v2586, %v2589
  %v2592 = vshrl.u32 %v2563, 16
  %v2594 = vrot.slane %v2592, 1
  %v2595 = vshll.u32 %v2563, 16
  %v2597 = vrot.slane %v2595, 2
  %v2598 = vor.u32 %v2594, %v2597
  %v2599 = vsel %vm1343, %v2590, %v2598
  %v2601 = vshrl.u32 %v2433, 16
  %v2603 = vrot.slane %v2601, 1
  %v2604 = vshll.u32 %v2433, 16
  %v2606 = vrot.slane %v2604, 2
  %v2607 = vor.u32 %v2603, %v2606
  %v2609 = vshrl.u32 %v2564, 16
  %v2611 = vrot.slane %v2609, 1
  %v2612 = vshll.u32 %v2564, 16
  %v2614 = vrot.slane %v2612, 2
  %v2615 = vor.u32 %v2611, %v2614
  %v2616 = vsel %vm1343, %v2607, %v2615
  %v2618 = vshrl.u32 %v2434, 16
  %v2620 = vrot.slane %v2618, 1
  %v2621 = vshll.u32 %v2434, 16
  %v2623 = vrot.slane %v2621, 2
  %v2624 = vor.u32 %v2620, %v2623
  %v2626 = vshrl.u32 %v2565, 16
  %v2628 = vrot.slane %v2626, 1
  %v2629 = vshll.u32 %v2565, 16
  %v2631 = vrot.slane %v2629, 2
  %v2632 = vor.u32 %v2628, %v2631
  %v2633 = vsel %vm1343, %v2624, %v2632
  %2642 = vmatprep.subr.bf16.mxu0 0
  %2643 = vmatpush1.bf16.msra.mxu0 %v1548
  %2644 = vmatprep.subr.bf16.mxu0 0
  %2645 = vmatpush1.bf16.msra.mxu0 %v1549
  %2646 = vmatprep.subr.bf16.mxu0 0
  %2647 = vmatpush1.bf16.msra.mxu0 %v1550
  %2648 = vmatprep.subr.bf16.mxu0 0
  %2649 = vmatpush1.bf16.msra.mxu0 %v1551
  %2650 = vmatprep.subr.bf16.mxu0 0
  %2651 = vmatpush1.bf16.msra.mxu0 %v1552
  %2652 = vmatprep.subr.bf16.mxu0 0
  %2653 = vmatpush1.bf16.msra.mxu0 %v1553
  %2654 = vmatprep.subr.bf16.mxu0 0
  %2655 = vmatpush1.bf16.msra.mxu0 %v1554
  %2656 = vmatprep.subr.bf16.mxu0 0
  %2657 = vmatpush1.bf16.msra.mxu0 %v1555
  %2658 = vmatprep.subr.bf16.mxu0 0
  %2659 = vmatpush1.bf16.msra.mxu0 %v1556
  %2660 = vmatprep.subr.bf16.mxu0 0
  %2661 = vmatpush1.bf16.msra.mxu0 %v1557
  %2662 = vmatprep.subr.bf16.mxu0 0
  %2663 = vmatpush1.bf16.msra.mxu0 %v1558
  %2664 = vmatprep.subr.bf16.mxu0 0
  %2665 = vmatpush1.bf16.msra.mxu0 %v1559
  %2666 = vmatprep.subr.bf16.mxu0 0
  %2667 = vmatpush1.bf16.msra.mxu0 %v1560
  %2668 = vmatprep.subr.bf16.mxu0 0
  %2669 = vmatpush1.bf16.msra.mxu0 %v1561
  %2670 = vmatprep.subr.bf16.mxu0 0
  %2671 = vmatpush1.bf16.msra.mxu0 %v1562
  %2672 = vmatprep.subr.bf16.mxu0 0
  %2673 = vmatpush1.bf16.msra.mxu0 %v1563
  %2674 = vmatprep.mubr.bf16.mxu0 %v2599
  %2675 = vmatmul.mubr.bf16.gmra.mrb[0].mxu0 %v2582
  %v2676 = vpop.f32.mrb[0].mxu0
  %v2677 = vadd.f32 0.0, %v2676
  %v2678 = vpop.f32.mrb[0].mxu0
  %v2679 = vpop.f32.mrb[0].mxu0
  %v2680 = vadd.f32 0.0, %v2679
  %v2681 = vpop.f32.mrb[0].mxu0
  %2682 = vmatprep.mubr.bf16.mxu0 %v2598
  %2683 = vmatmul.mubr.bf16.gmra.mrb[0].mxu0 %v2581
  %v2684 = vpop.f32.mrb[0].mxu0
  %v2685 = vadd.f32 0.0, %v2684
  %v2686 = vpop.f32.mrb[0].mxu0
  %v2687 = vpop.f32.mrb[0].mxu0
  %v2688 = vpop.f32.mrb[0].mxu0
  %2689 = vdwg.mxu0
  %2690 = vmatprep.subr.bf16.mxu0 0
  %2691 = vmatpush1.bf16.msra.mxu0 %v1564
  %2692 = vmatprep.subr.bf16.mxu0 0
  %2693 = vmatpush1.bf16.msra.mxu0 %v1565
  %2694 = vmatprep.subr.bf16.mxu0 0
  %2695 = vmatpush1.bf16.msra.mxu0 %v1566
  %2696 = vmatprep.subr.bf16.mxu0 0
  %2697 = vmatpush1.bf16.msra.mxu0 %v1567
  %2698 = vmatprep.subr.bf16.mxu0 0
  %2699 = vmatpush1.bf16.msra.mxu0 %v1568
  %2700 = vmatprep.subr.bf16.mxu0 0
  %2701 = vmatpush1.bf16.msra.mxu0 %v1569
  %2702 = vmatprep.subr.bf16.mxu0 0
  %2703 = vmatpush1.bf16.msra.mxu0 %v1570
  %2704 = vmatprep.subr.bf16.mxu0 0
  %2705 = vmatpush1.bf16.msra.mxu0 %v1571
  %2706 = vmatprep.subr.bf16.mxu0 0
  %2707 = vmatpush1.bf16.msra.mxu0 %v1572
  %2708 = vmatprep.subr.bf16.mxu0 0
  %2709 = vmatpush1.bf16.msra.mxu0 %v1573
  %2710 = vmatprep.subr.bf16.mxu0 0
  %2711 = vmatpush1.bf16.msra.mxu0 %v1574
  %2712 = vmatprep.subr.bf16.mxu0 0
  %2713 = vmatpush1.bf16.msra.mxu0 %v1575
  %2714 = vmatprep.subr.bf16.mxu0 0
  %2715 = vmatpush1.bf16.msra.mxu0 %v1576
  %2716 = vmatprep.subr.bf16.mxu0 0
  %2717 = vmatpush1.bf16.msra.mxu0 %v1577
  %2718 = vmatprep.subr.bf16.mxu0 0
  %2719 = vmatpush1.bf16.msra.mxu0 %v1578
  %2720 = vmatprep.subr.bf16.mxu0 0
  %2721 = vmatpush1.bf16.msra.mxu0 %v1579
  %2722 = vmatprep.mubr.bf16.mxu0 %v2633
  %2723 = vmatmul.mubr.bf16.gmra.mrb[0].mxu0 %v2616
  %v2724 = vpop.f32.mrb[0].mxu0
  %v2725 = vadd.f32 %v2677, %v2724
  %v2726 = vpop.f32.mrb[0].mxu0
  %v2727 = vpop.f32.mrb[0].mxu0
  %v2728 = vadd.f32 %v2680, %v2727
  %v2729 = vpop.f32.mrb[0].mxu0
  %2730 = vmatprep.mubr.bf16.mxu0 %v2632
  %2731 = vmatmul.mubr.bf16.gmra.mrb[0].mxu0 %v2615
  %v2732 = vpop.f32.mrb[0].mxu0
  %v2733 = vadd.f32 %v2685, %v2732
  %v2734 = vpop.f32.mrb[0].mxu0
  %v2735 = vpop.f32.mrb[0].mxu0
  %v2736 = vpop.f32.mrb[0].mxu0
  %2737 = vdwg.mxu0
  %v2738 = vadd.f32 %v2551, %v2725
  %v2739 = vadd.f32 %v2552, %v2728
  %v2740 = vadd.f32 %v2553, %v2733
  %v2741 = vld [vmem:[%s2110] sm:$0xcc]
  %v2742 = vld [vmem:[%s2110 + $0x8] sm:$0xcc]
  %v2745 = vunpack.c.l.b16 %v2741
  %v2746 = vunpack.c.h.b16 %v2741
  %v2747 = vunpack.c.l.b16 %v2742
  %v2748 = vunpack.c.h.b16 %v2742
  %v2749 = vpack.c.b16 %v2129, %v2745
  %v2750 = vpack.c.b16 %v2130, %v2746
  %v2751 = vpack.c.b16 %v2131, %v2747
  %v2752 = vpack.c.b16 %v2132, %v2748
  %v2753 = vrot.slane %v2749, 2
  %v2754 = vrot.slane %v2562, 2
  %v2755 = vsel %vm1788, %v2753, %v2754
  %v2756 = vrot.slane %v2750, 2
  %v2757 = vrot.slane %v2563, 2
  %v2758 = vsel %vm1788, %v2756, %v2757
  %v2759 = vrot.slane %v2751, 2
  %v2760 = vrot.slane %v2564, 2
  %v2761 = vsel %vm1788, %v2759, %v2760
  %v2762 = vrot.slane %v2752, 2
  %v2763 = vrot.slane %v2565, 2
  %v2764 = vsel %vm1788, %v2762, %v2763
  %2773 = vmatprep.subr.bf16.mxu0 0
  %2774 = vmatpush1.bf16.msra.mxu0 %v1937
  %2775 = vmatprep.subr.bf16.mxu0 0
  %2776 = vmatpush1.bf16.msra.mxu0 %v1938
  %2777 = vmatprep.subr.bf16.mxu0 0
  %2778 = vmatpush1.bf16.msra.mxu0 %v1939
  %2779 = vmatprep.subr.bf16.mxu0 0
  %2780 = vmatpush1.bf16.msra.mxu0 %v1940
  %2781 = vmatprep.subr.bf16.mxu0 0
  %2782 = vmatpush1.bf16.msra.mxu0 %v1941
  %2783 = vmatprep.subr.bf16.mxu0 0
  %2784 = vmatpush1.bf16.msra.mxu0 %v1942
  %2785 = vmatprep.subr.bf16.mxu0 0
  %2786 = vmatpush1.bf16.msra.mxu0 %v1943
  %2787 = vmatprep.subr.bf16.mxu0 0
  %2788 = vmatpush1.bf16.msra.mxu0 %v1944
  %2789 = vmatprep.subr.bf16.mxu0 0
  %2790 = vmatpush1.bf16.msra.mxu0 %v1945
  %2791 = vmatprep.subr.bf16.mxu0 0
  %2792 = vmatpush1.bf16.msra.mxu0 %v1946
  %2793 = vmatprep.subr.bf16.mxu0 0
  %2794 = vmatpush1.bf16.msra.mxu0 %v1947
  %2795 = vmatprep.subr.bf16.mxu0 0
  %2796 = vmatpush1.bf16.msra.mxu0 %v1948
  %2797 = vmatprep.subr.bf16.mxu0 0
  %2798 = vmatpush1.bf16.msra.mxu0 %v1949
  %2799 = vmatprep.subr.bf16.mxu0 0
  %2800 = vmatpush1.bf16.msra.mxu0 %v1950
  %2801 = vmatprep.subr.bf16.mxu0 0
  %2802 = vmatpush1.bf16.msra.mxu0 %v1951
  %2803 = vmatprep.subr.bf16.mxu0 0
  %2804 = vmatpush1.bf16.msra.mxu0 %v1952
  %2805 = vmatprep.mubr.bf16.mxu0 %v2758
  %2806 = vmatmul.mubr.bf16.gmra.mrb[0].mxu0 %v2755
  %v2807 = vpop.f32.mrb[0].mxu0
  %v2808 = vadd.f32 0.0, %v2807
  %v2809 = vpop.f32.mrb[0].mxu0
  %v2810 = vpop.f32.mrb[0].mxu0
  %v2811 = vadd.f32 0.0, %v2810
  %v2812 = vpop.f32.mrb[0].mxu0
  %2813 = vmatprep.mubr.bf16.mxu0 %v2757
  %2814 = vmatmul.mubr.bf16.gmra.mrb[0].mxu0 %v2754
  %v2815 = vpop.f32.mrb[0].mxu0
  %v2816 = vadd.f32 0.0, %v2815
  %v2817 = vpop.f32.mrb[0].mxu0
  %v2818 = vpop.f32.mrb[0].mxu0
  %v2819 = vpop.f32.mrb[0].mxu0
  %2820 = vdwg.mxu0
  %2821 = vmatprep.subr.bf16.mxu0 0
  %2822 = vmatpush1.bf16.msra.mxu0 %v1953
  %2823 = vmatprep.subr.bf16.mxu0 0
  %2824 = vmatpush1.bf16.msra.mxu0 %v1954
  %2825 = vmatprep.subr.bf16.mxu0 0
  %2826 = vmatpush1.bf16.msra.mxu0 %v1955
  %2827 = vmatprep.subr.bf16.mxu0 0
  %2828 = vmatpush1.bf16.msra.mxu0 %v1956
  %2829 = vmatprep.subr.bf16.mxu0 0
  %2830 = vmatpush1.bf16.msra.mxu0 %v1957
  %2831 = vmatprep.subr.bf16.mxu0 0
  %2832 = vmatpush1.bf16.msra.mxu0 %v1958
  %2833 = vmatprep.subr.bf16.mxu0 0
  %2834 = vmatpush1.bf16.msra.mxu0 %v1959
  %2835 = vmatprep.subr.bf16.mxu0 0
  %2836 = vmatpush1.bf16.msra.mxu0 %v1960
  %2837 = vmatprep.subr.bf16.mxu0 0
  %2838 = vmatpush1.bf16.msra.mxu0 %v1961
  %2839 = vmatprep.subr.bf16.mxu0 0
  %2840 = vmatpush1.bf16.msra.mxu0 %v1962
  %2841 = vmatprep.subr.bf16.mxu0 0
  %2842 = vmatpush1.bf16.msra.mxu0 %v1963
  %2843 = vmatprep.subr.bf16.mxu0 0
  %2844 = vmatpush1.bf16.msra.mxu0 %v1964
  %2845 = vmatprep.subr.bf16.mxu0 0
  %2846 = vmatpush1.bf16.msra.mxu0 %v1965
  %2847 = vmatprep.subr.bf16.mxu0 0
  %2848 = vmatpush1.bf16.msra.mxu0 %v1966
  %2849 = vmatprep.subr.bf16.mxu0 0
  %2850 = vmatpush1.bf16.msra.mxu0 %v1967
  %2851 = vmatprep.subr.bf16.mxu0 0
  %2852 = vmatpush1.bf16.msra.mxu0 %v1968
  %2853 = vmatprep.mubr.bf16.mxu0 %v2764
  %2854 = vmatmul.mubr.bf16.gmra.mrb[0].mxu0 %v2761
  %v2855 = vpop.f32.mrb[0].mxu0
  %v2856 = vadd.f32 %v2808, %v2855
  %v2857 = vpop.f32.mrb[0].mxu0
  %v2858 = vpop.f32.mrb[0].mxu0
  %v2859 = vadd.f32 %v2811, %v2858
  %v2860 = vpop.f32.mrb[0].mxu0
  %2861 = vmatprep.mubr.bf16.mxu0 %v2763
  %2862 = vmatmul.mubr.bf16.gmra.mrb[0].mxu0 %v2760
  %v2863 = vpop.f32.mrb[0].mxu0
  %v2864 = vadd.f32 %v2816, %v2863
  %v2865 = vpop.f32.mrb[0].mxu0
  %v2866 = vpop.f32.mrb[0].mxu0
  %v2867 = vpop.f32.mrb[0].mxu0
  %2868 = vdwg.mxu0
  %v2869 = vadd.f32 %v2738, %v2856
  %v2870 = vadd.f32 %v2739, %v2859
  %v2871 = vadd.f32 %v2740, %v2864
  %v2872 = vadd.f32 %v2869, %v2105
  %v2873 = vadd.f32 %v2870, %v2105
  %v2874 = vadd.f32 %v2871, %v2105
  %v2875 = vld [vmem:[%s3] sm:$0x1]
  %v2876 = vld [vmem:[%s4] sm:$0x1]
  %v2877 = vadd.f32 %v2107, %v2108
  %vm2878 = vcmask 1043456
  %v2879 = vsel %vm2878, %v2109, 0.0
  %v2880 = vadd.f32 %v2877, %v2879
  %v2881 = vrot.slane %v2880, 4
  %v2882 = vadd.f32 %v2880, %v2881
  %v2883 = vrot.slane %v2882, 2
  %v2884 = vadd.f32 %v2882, %v2883
  %v2885 = vrot.slane %v2884, 1
  %v2886 = vadd.f32 %v2884, %v2885
  %v2887 = vadd.f32 %v2886, 0.0
  %v2888 = vadd.f32 %v2872, %v2873
  %v2889 = vsel %vm2878, %v2874, 0.0
  %v2890 = vadd.f32 %v2888, %v2889
  %v2891 = vrot.slane %v2890, 4
  %v2892 = vadd.f32 %v2890, %v2891
  %v2893 = vrot.slane %v2892, 2
  %v2894 = vadd.f32 %v2892, %v2893
  %v2895 = vrot.slane %v2894, 1
  %v2896 = vadd.f32 %v2894, %v2895
  %v2897 = vadd.f32 %v2887, %v2896
  %v2898 = vmul.f32 %v2107, %v2107
  %v2899 = vmul.f32 %v2108, %v2108
  %v2900 = vmul.f32 %v2109, %v2109
  %v2901 = vadd.f32 %v2898, %v2899
  %v2902 = vsel %vm2878, %v2900, 0.0
  %v2903 = vadd.f32 %v2901, %v2902
  %v2904 = vrot.slane %v2903, 4
  %v2905 = vadd.f32 %v2903, %v2904
  %v2906 = vrot.slane %v2905, 2
  %v2907 = vadd.f32 %v2905, %v2906
  %v2908 = vrot.slane %v2907, 1
  %v2909 = vadd.f32 %v2907, %v2908
  %v2910 = vadd.f32 %v2909, 0.0
  %v2911 = vmul.f32 %v2872, %v2872
  %v2912 = vmul.f32 %v2873, %v2873
  %v2913 = vmul.f32 %v2874, %v2874
  %v2914 = vadd.f32 %v2911, %v2912
  %v2915 = vsel %vm2878, %v2913, 0.0
  %v2916 = vadd.f32 %v2914, %v2915
  %v2917 = vrot.slane %v2916, 4
  %v2918 = vadd.f32 %v2916, %v2917
  %v2919 = vrot.slane %v2918, 2
  %v2920 = vadd.f32 %v2918, %v2919
  %v2921 = vrot.slane %v2920, 1
  %v2922 = vadd.f32 %v2920, %v2921
  %v2923 = vadd.f32 %v2910, %v2922
  %v2924 = vmul.f32 %v2897, 0.025
  %v2925 = vmul.f32 %v2923, 0.025
  %v2926 = vmul.f32 %v2924, %v2924
  %v2927 = vsub.f32 %v2925, %v2926
  %v2928 = vadd.f32 %v2927, 1e-05
  %v2929 = vrsqrt.pop %v2928
  %v2930 = vmul.f32 %v2929, %v2875
  %v2931 = vmul.f32 %v2924, %v2930
  %v2932 = vsub.f32 %v2876, %v2931
  %v2933 = vlaneseq
  %v2934 = vshrl.u32 %v2933, 7
  %v2935 = vsub.s32 0, %v2934
  %v2936 = vrot.slane %v2930, %v2935
  %v2937 = vmul.f32 %v2107, %v2936
  %v2938 = vmul.f32 %v2108, %v2936
  %v2939 = vmul.f32 %v2109, %v2936
  %v2941 = vlaneseq
  %v2942 = vshrl.u32 %v2941, 7
  %v2943 = vsub.s32 0, %v2942
  %v2944 = vrot.slane %v2932, %v2943
  %v2946 = vadd.f32 %v2937, %v2944
  %v2947 = vadd.f32 %v2938, %v2944
  %v2948 = vadd.f32 %v2939, %v2944
  %v2949 = vmax.f32 %v2946, 0.0
  %v2950 = vmax.f32 %v2947, 0.0
  %v2951 = vmax.f32 %v2948, 0.0
  %v2952 = vmul.f32 %v2872, %v2936
  %v2953 = vmul.f32 %v2873, %v2936
  %v2954 = vmul.f32 %v2874, %v2936
  %v2955 = vadd.f32 %v2952, %v2944
  %v2956 = vadd.f32 %v2953, %v2944
  %v2957 = vadd.f32 %v2954, %v2944
  %v2958 = vmax.f32 %v2955, 0.0
  %v2959 = vmax.f32 %v2956, 0.0
  %v2960 = vmax.f32 %v2957, 0.0
  %2961 = vst [vmem:[#allocation2] sm:$0xff] %v2949
  %2962 = vst [vmem:[#allocation2 + $0x8] sm:$0xff] %v2950
  %2963 = vst [vmem:[#allocation2 + $0x10] sm:$0xf] %v2951
  %v2964 = vld [vmem:[#allocation2] ss:$2 sm:$0xff]
  %s2965 = scalar_lea.vmem [#allocation2], 16
  %v2966 = vld [vmem:[%s2965] ss:$2 sm:$0x3]
  %s2967 = scalar_lea.vmem [#allocation2], 1
  %v2968 = vld [vmem:[%s2967] ss:$2 sm:$0xff]
  %s2969 = scalar_lea.vmem [#allocation2], 17
  %v2970 = vld [vmem:[%s2969] ss:$2 sm:$0x3]
  %v2971 = vmax.f32 %v2964, %v2968
  %v2972 = vmax.f32 %v2966, %v2970
  %2973 = vst [vmem:[#allocation2] sm:$0xff] %v2958
  %2974 = vst [vmem:[#allocation2 + $0x8] sm:$0xff] %v2959
  %2975 = vst [vmem:[#allocation2 + $0x10] sm:$0xf] %v2960
  %v2976 = vld [vmem:[#allocation2] ss:$2 sm:$0xff]
  %v2977 = vld [vmem:[%s2965] ss:$2 sm:$0x3]
  %v2978 = vld [vmem:[%s2967] ss:$2 sm:$0xff]
  %v2979 = vld [vmem:[%s2969] ss:$2 sm:$0x3]
  %v2980 = vmax.f32 %v2976, %v2978
  %v2981 = vmax.f32 %v2977, %v2979
  %v2982 = vpack.c.bf16 %v2972, %v2971
  %v2983 = vld [vmem:[%s5] sm:$0xf]
  %v2984 = vld [vmem:[%s5 + $0x4] sm:$0xf]
  %v2985 = vld [vmem:[%s5 + $0x8] sm:$0xf]
  %v2986 = vld [vmem:[%s5 + $0xc] sm:$0xf]
  %v2987 = vld [vmem:[%s5 + $0x10] sm:$0xf]
  %v2988 = vld [vmem:[%s5 + $0x14] sm:$0xf]
  %v2989 = vld [vmem:[%s5 + $0x18] sm:$0xf]
  %v2990 = vld [vmem:[%s5 + $0x1c] sm:$0xf]
  %v2991 = vld [vmem:[%s5 + $0x20] sm:$0xf]
  %v2992 = vld [vmem:[%s5 + $0x24] sm:$0xf]
  %v2993 = vld [vmem:[%s5 + $0x28] sm:$0xf]
  %v2994 = vld [vmem:[%s5 + $0x2c] sm:$0xf]
  %v2995 = vld [vmem:[%s5 + $0x30] sm:$0xf]
  %v2996 = vld [vmem:[%s5 + $0x34] sm:$0xf]
  %v2997 = vld [vmem:[%s5 + $0x38] sm:$0xf]
  %v2998 = vld [vmem:[%s5 + $0x3c] sm:$0xf]
  %s2999 = scalar_lea.vmem %s5, 64
  %v3000 = vld [vmem:[%s2999] sm:$0xf]
  %v3001 = vld [vmem:[%s2999 + $0x4] sm:$0xf]
  %v3002 = vld [vmem:[%s2999 + $0x8] sm:$0xf]
  %v3003 = vld [vmem:[%s2999 + $0xc] sm:$0xf]
  %v3004 = vld [vmem:[%s2999 + $0x10] sm:$0xf]
  %v3005 = vld [vmem:[%s2999 + $0x14] sm:$0xf]
  %v3006 = vld [vmem:[%s2999 + $0x18] sm:$0xf]
  %v3007 = vld [vmem:[%s2999 + $0x1c] sm:$0xf]
  %v3008 = vld [vmem:[%s2999 + $0x20] sm:$0xf]
  %v3009 = vld [vmem:[%s2999 + $0x24] sm:$0xf]
  %v3010 = vld [vmem:[%s2999 + $0x28] sm:$0xf]
  %v3011 = vld [vmem:[%s2999 + $0x2c] sm:$0xf]
  %v3012 = vld [vmem:[%s2999 + $0x30] sm:$0xf]
  %v3013 = vld [vmem:[%s2999 + $0x34] sm:$0xf]
  %v3014 = vld [vmem:[%s2999 + $0x38] sm:$0xf]
  %v3015 = vld [vmem:[%s2999 + $0x3c] sm:$0xf]
  %v3017 = vshrl.u32 %v2982, 16
  %v3019 = vshll.u32 %v2982, 16
  %v3021 = vrot.slane %v3019, 1
  %v3022 = vor.u32 %v3017, %v3021
  %v3040 = vunpack.c.l.b16 %v3000
  %v3041 = vunpack.c.l.b16 %v3001
  %v3042 = vunpack.c.l.b16 %v3002
  %v3043 = vunpack.c.l.b16 %v3003
  %v3044 = vunpack.c.l.b16 %v3004
  %v3045 = vunpack.c.l.b16 %v3005
  %v3046 = vunpack.c.l.b16 %v3006
  %v3047 = vunpack.c.l.b16 %v3007
  %v3048 = vunpack.c.l.b16 %v3008
  %v3049 = vunpack.c.l.b16 %v3009
  %v3050 = vunpack.c.l.b16 %v3010
  %v3051 = vunpack.c.l.b16 %v3011
  %v3052 = vunpack.c.l.b16 %v3012
  %v3053 = vunpack.c.l.b16 %v3013
  %v3054 = vunpack.c.l.b16 %v3014
  %v3055 = vunpack.c.l.b16 %v3015
  %v3056 = vpack.c.b16 %v3041, %v3040
  %v3057 = vpack.c.b16 %v3043, %v3042
  %v3058 = vpack.c.b16 %v3045, %v3044
  %v3059 = vpack.c.b16 %v3047, %v3046
  %v3060 = vpack.c.b16 %v3049, %v3048
  %v3061 = vpack.c.b16 %v3051, %v3050
  %v3062 = vpack.c.b16 %v3053, %v3052
  %v3063 = vpack.c.b16 %v3055, %v3054
  %3072 = vmatprep.subr.bf16.mxu0 0
  %3073 = vmatpush1.bf16.msra.mxu0 %v3056
  %3074 = vmatprep.subr.bf16.mxu0 0
  %3075 = vmatpush1.bf16.msra.mxu0 %v3057
  %3076 = vmatprep.subr.bf16.mxu0 0
  %3077 = vmatpush1.bf16.msra.mxu0 %v3058
  %3078 = vmatprep.subr.bf16.mxu0 0
  %3079 = vmatpush1.bf16.msra.mxu0 %v3059
  %3080 = vmatprep.subr.bf16.mxu0 0
  %3081 = vmatpush1.bf16.msra.mxu0 %v3060
  %3082 = vmatprep.subr.bf16.mxu0 0
  %3083 = vmatpush1.bf16.msra.mxu0 %v3061
  %3084 = vmatprep.subr.bf16.mxu0 0
  %3085 = vmatpush1.bf16.msra.mxu0 %v3062
  %3086 = vmatprep.subr.bf16.mxu0 0
  %3087 = vmatpush1.bf16.msra.mxu0 %v3063
  %3088 = vmatprep.subr.bf16.mxu0 0
  %3089 = vmatpush1.bf16.msra.mxu0 0
  %3090 = vmatprep.subr.bf16.mxu0 0
  %3091 = vmatpush1.bf16.msra.mxu0 0
  %3092 = vmatprep.subr.bf16.mxu0 0
  %3093 = vmatpush1.bf16.msra.mxu0 0
  %3094 = vmatprep.subr.bf16.mxu0 0
  %3095 = vmatpush1.bf16.msra.mxu0 0
  %3096 = vmatprep.subr.bf16.mxu0 0
  %3097 = vmatpush1.bf16.msra.mxu0 0
  %3098 = vmatprep.subr.bf16.mxu0 0
  %3099 = vmatpush1.bf16.msra.mxu0 0
  %3100 = vmatprep.subr.bf16.mxu0 0
  %3101 = vmatpush1.bf16.msra.mxu0 0
  %3102 = vmatprep.subr.bf16.mxu0 0
  %3103 = vmatpush1.bf16.msra.mxu0 0
  %3104 = vmatprep.mubr.bf16.mxu0 0
  %3105 = vmatmul.mubr.bf16.gmra.mrb[0].mxu0 %v3022
  %v3106 = vpop.f32.mrb[0].mxu0
  %v3107 = vadd.f32 0.0, %v3106
  %v3108 = vpop.f32.mrb[0].mxu0
  %v3109 = vpop.f32.mrb[0].mxu0
  %v3110 = vpop.f32.mrb[0].mxu0
  %3111 = vdwg.mxu0
  %v3128 = vunpack.c.l.b16 %v2983
  %v3129 = vunpack.c.l.b16 %v2984
  %v3130 = vunpack.c.l.b16 %v2985
  %v3131 = vunpack.c.l.b16 %v2986
  %v3132 = vunpack.c.l.b16 %v2987
  %v3133 = vunpack.c.l.b16 %v2988
  %v3134 = vunpack.c.l.b16 %v2989
  %v3135 = vunpack.c.l.b16 %v2990
  %v3136 = vunpack.c.l.b16 %v2991
  %v3137 = vunpack.c.l.b16 %v2992
  %v3138 = vunpack.c.l.b16 %v2993
  %v3139 = vunpack.c.l.b16 %v2994
  %v3140 = vunpack.c.l.b16 %v2995
  %v3141 = vunpack.c.l.b16 %v2996
  %v3142 = vunpack.c.l.b16 %v2997
  %v3143 = vunpack.c.l.b16 %v2998
  %v3144 = vpack.c.b16 %v3129, %v3128
  %v3145 = vpack.c.b16 %v3131, %v3130
  %v3146 = vpack.c.b16 %v3133, %v3132
  %v3147 = vpack.c.b16 %v3135, %v3134
  %v3148 = vpack.c.b16 %v3137, %v3136
  %v3149 = vpack.c.b16 %v3139, %v3138
  %v3150 = vpack.c.b16 %v3141, %v3140
  %v3151 = vpack.c.b16 %v3143, %v3142
  %3160 = vmatprep.subr.bf16.mxu0 0
  %3161 = vmatpush1.bf16.msra.mxu0 %v3144
  %3162 = vmatprep.subr.bf16.mxu0 0
  %3163 = vmatpush1.bf16.msra.mxu0 %v3145
  %3164 = vmatprep.subr.bf16.mxu0 0
  %3165 = vmatpush1.bf16.msra.mxu0 %v3146
  %3166 = vmatprep.subr.bf16.mxu0 0
  %3167 = vmatpush1.bf16.msra.mxu0 %v3147
  %3168 = vmatprep.subr.bf16.mxu0 0
  %3169 = vmatpush1.bf16.msra.mxu0 %v3148
  %3170 = vmatprep.subr.bf16.mxu0 0
  %3171 = vmatpush1.bf16.msra.mxu0 %v3149
  %3172 = vmatprep.subr.bf16.mxu0 0
  %3173 = vmatpush1.bf16.msra.mxu0 %v3150
  %3174 = vmatprep.subr.bf16.mxu0 0
  %3175 = vmatpush1.bf16.msra.mxu0 %v3151
  %3176 = vmatprep.subr.bf16.mxu0 0
  %3177 = vmatpush1.bf16.msra.mxu0 0
  %3178 = vmatprep.subr.bf16.mxu0 0
  %3179 = vmatpush1.bf16.msra.mxu0 0
  %3180 = vmatprep.subr.bf16.mxu0 0
  %3181 = vmatpush1.bf16.msra.mxu0 0
  %3182 = vmatprep.subr.bf16.mxu0 0
  %3183 = vmatpush1.bf16.msra.mxu0 0
  %3184 = vmatprep.subr.bf16.mxu0 0
  %3185 = vmatpush1.bf16.msra.mxu0 0
  %3186 = vmatprep.subr.bf16.mxu0 0
  %3187 = vmatpush1.bf16.msra.mxu0 0
  %3188 = vmatprep.subr.bf16.mxu0 0
  %3189 = vmatpush1.bf16.msra.mxu0 0
  %3190 = vmatprep.subr.bf16.mxu0 0
  %3191 = vmatpush1.bf16.msra.mxu0 0
  %3192 = vmatprep.mubr.bf16.mxu0 0
  %3193 = vmatmul.mubr.bf16.gmra.mrb[0].mxu0 %v2982
  %v3194 = vpop.f32.mrb[0].mxu0
  %v3195 = vadd.f32 %v3107, %v3194
  %v3196 = vpop.f32.mrb[0].mxu0
  %v3197 = vpop.f32.mrb[0].mxu0
  %v3198 = vpop.f32.mrb[0].mxu0
  %3199 = vdwg.mxu0
  %s3200 = scalar_lea.vmem %s5, 128
  %v3201 = vld [vmem:[%s3200] sm:$0xf]
  %v3202 = vld [vmem:[%s3200 + $0x4] sm:$0xf]
  %v3203 = vld [vmem:[%s3200 + $0x8] sm:$0xf]
  %v3204 = vld [vmem:[%s3200 + $0xc] sm:$0xf]
  %v3205 = vld [vmem:[%s3200 + $0x10] sm:$0xf]
  %v3206 = vld [vmem:[%s3200 + $0x14] sm:$0xf]
  %v3207 = vld [vmem:[%s3200 + $0x18] sm:$0xf]
  %v3208 = vld [vmem:[%s3200 + $0x1c] sm:$0xf]
  %v3209 = vld [vmem:[%s3200 + $0x20] sm:$0xf]
  %v3210 = vld [vmem:[%s3200 + $0x24] sm:$0xf]
  %v3211 = vld [vmem:[%s3200 + $0x28] sm:$0xf]
  %v3212 = vld [vmem:[%s3200 + $0x2c] sm:$0xf]
  %v3213 = vld [vmem:[%s3200 + $0x30] sm:$0xf]
  %v3214 = vld [vmem:[%s3200 + $0x34] sm:$0xf]
  %v3215 = vld [vmem:[%s3200 + $0x38] sm:$0xf]
  %v3216 = vld [vmem:[%s3200 + $0x3c] sm:$0xf]
  %v3218 = vrot.slane %v2982, 1
  %v3236 = vunpack.c.l.b16 %v3201
  %v3237 = vunpack.c.l.b16 %v3202
  %v3238 = vunpack.c.l.b16 %v3203
  %v3239 = vunpack.c.l.b16 %v3204
  %v3240 = vunpack.c.l.b16 %v3205
  %v3241 = vunpack.c.l.b16 %v3206
  %v3242 = vunpack.c.l.b16 %v3207
  %v3243 = vunpack.c.l.b16 %v3208
  %v3244 = vunpack.c.l.b16 %v3209
  %v3245 = vunpack.c.l.b16 %v3210
  %v3246 = vunpack.c.l.b16 %v3211
  %v3247 = vunpack.c.l.b16 %v3212
  %v3248 = vunpack.c.l.b16 %v3213
  %v3249 = vunpack.c.l.b16 %v3214
  %v3250 = vunpack.c.l.b16 %v3215
  %v3251 = vunpack.c.l.b16 %v3216
  %v3252 = vpack.c.b16 %v3237, %v3236
  %v3253 = vpack.c.b16 %v3239, %v3238
  %v3254 = vpack.c.b16 %v3241, %v3240
  %v3255 = vpack.c.b16 %v3243, %v3242
  %v3256 = vpack.c.b16 %v3245, %v3244
  %v3257 = vpack.c.b16 %v3247, %v3246
  %v3258 = vpack.c.b16 %v3249, %v3248
  %v3259 = vpack.c.b16 %v3251, %v3250
  %3268 = vmatprep.subr.bf16.mxu0 0
  %3269 = vmatpush1.bf16.msra.mxu0 %v3252
  %3270 = vmatprep.subr.bf16.mxu0 0
  %3271 = vmatpush1.bf16.msra.mxu0 %v3253
  %3272 = vmatprep.subr.bf16.mxu0 0
  %3273 = vmatpush1.bf16.msra.mxu0 %v3254
  %3274 = vmatprep.subr.bf16.mxu0 0
  %3275 = vmatpush1.bf16.msra.mxu0 %v3255
  %3276 = vmatprep.subr.bf16.mxu0 0
  %3277 = vmatpush1.bf16.msra.mxu0 %v3256
  %3278 = vmatprep.subr.bf16.mxu0 0
  %3279 = vmatpush1.bf16.msra.mxu0 %v3257
  %3280 = vmatprep.subr.bf16.mxu0 0
  %3281 = vmatpush1.bf16.msra.mxu0 %v3258
  %3282 = vmatprep.subr.bf16.mxu0 0
  %3283 = vmatpush1.bf16.msra.mxu0 %v3259
  %3284 = vmatprep.subr.bf16.mxu0 0
  %3285 = vmatpush1.bf16.msra.mxu0 0
  %3286 = vmatprep.subr.bf16.mxu0 0
  %3287 = vmatpush1.bf16.msra.mxu0 0
  %3288 = vmatprep.subr.bf16.mxu0 0
  %3289 = vmatpush1.bf16.msra.mxu0 0
  %3290 = vmatprep.subr.bf16.mxu0 0
  %3291 = vmatpush1.bf16.msra.mxu0 0
  %3292 = vmatprep.subr.bf16.mxu0 0
  %3293 = vmatpush1.bf16.msra.mxu0 0
  %3294 = vmatprep.subr.bf16.mxu0 0
  %3295 = vmatpush1.bf16.msra.mxu0 0
  %3296 = vmatprep.subr.bf16.mxu0 0
  %3297 = vmatpush1.bf16.msra.mxu0 0
  %3298 = vmatprep.subr.bf16.mxu0 0
  %3299 = vmatpush1.bf16.msra.mxu0 0
  %3300 = vmatprep.mubr.bf16.mxu0 0
  %3301 = vmatmul.mubr.bf16.gmra.mrb[0].mxu0 %v3218
  %v3302 = vpop.f32.mrb[0].mxu0
  %v3303 = vadd.f32 0.0, %v3302
  %v3304 = vpop.f32.mrb[0].mxu0
  %v3305 = vpop.f32.mrb[0].mxu0
  %v3306 = vpop.f32.mrb[0].mxu0
  %3307 = vdwg.mxu0
  %v3308 = vadd.f32 %v3195, %v3303
  %s3309 = scalar_lea.vmem %s5, 192
  %v3310 = vld [vmem:[%s3309] sm:$0xf]
  %v3311 = vld [vmem:[%s3309 + $0x4] sm:$0xf]
  %v3312 = vld [vmem:[%s3309 + $0x8] sm:$0xf]
  %v3313 = vld [vmem:[%s3309 + $0xc] sm:$0xf]
  %v3314 = vld [vmem:[%s3309 + $0x10] sm:$0xf]
  %v3315 = vld [vmem:[%s3309 + $0x14] sm:$0xf]
  %v3316 = vld [vmem:[%s3309 + $0x18] sm:$0xf]
  %v3317 = vld [vmem:[%s3309 + $0x1c] sm:$0xf]
  %v3318 = vld [vmem:[%s3309 + $0x20] sm:$0xf]
  %v3319 = vld [vmem:[%s3309 + $0x24] sm:$0xf]
  %v3320 = vld [vmem:[%s3309 + $0x28] sm:$0xf]
  %v3321 = vld [vmem:[%s3309 + $0x2c] sm:$0xf]
  %v3322 = vld [vmem:[%s3309 + $0x30] sm:$0xf]
  %v3323 = vld [vmem:[%s3309 + $0x34] sm:$0xf]
  %v3324 = vld [vmem:[%s3309 + $0x38] sm:$0xf]
  %v3325 = vld [vmem:[%s3309 + $0x3c] sm:$0xf]
  %v3326 = vrot.slane %v3017, 1
  %v3327 = vrot.slane %v3019, 2
  %v3328 = vor.u32 %v3326, %v3327
  %v3346 = vunpack.c.l.b16 %v3310
  %v3347 = vunpack.c.l.b16 %v3311
  %v3348 = vunpack.c.l.b16 %v3312
  %v3349 = vunpack.c.l.b16 %v3313
  %v3350 = vunpack.c.l.b16 %v3314
  %v3351 = vunpack.c.l.b16 %v3315
  %v3352 = vunpack.c.l.b16 %v3316
  %v3353 = vunpack.c.l.b16 %v3317
  %v3354 = vunpack.c.l.b16 %v3318
  %v3355 = vunpack.c.l.b16 %v3319
  %v3356 = vunpack.c.l.b16 %v3320
  %v3357 = vunpack.c.l.b16 %v3321
  %v3358 = vunpack.c.l.b16 %v3322
  %v3359 = vunpack.c.l.b16 %v3323
  %v3360 = vunpack.c.l.b16 %v3324
  %v3361 = vunpack.c.l.b16 %v3325
  %v3362 = vpack.c.b16 %v3347, %v3346
  %v3363 = vpack.c.b16 %v3349, %v3348
  %v3364 = vpack.c.b16 %v3351, %v3350
  %v3365 = vpack.c.b16 %v3353, %v3352
  %v3366 = vpack.c.b16 %v3355, %v3354
  %v3367 = vpack.c.b16 %v3357, %v3356
  %v3368 = vpack.c.b16 %v3359, %v3358
  %v3369 = vpack.c.b16 %v3361, %v3360
  %3378 = vmatprep.subr.bf16.mxu0 0
  %3379 = vmatpush1.bf16.msra.mxu0 %v3362
  %3380 = vmatprep.subr.bf16.mxu0 0
  %3381 = vmatpush1.bf16.msra.mxu0 %v3363
  %3382 = vmatprep.subr.bf16.mxu0 0
  %3383 = vmatpush1.bf16.msra.mxu0 %v3364
  %3384 = vmatprep.subr.bf16.mxu0 0
  %3385 = vmatpush1.bf16.msra.mxu0 %v3365
  %3386 = vmatprep.subr.bf16.mxu0 0
  %3387 = vmatpush1.bf16.msra.mxu0 %v3366
  %3388 = vmatprep.subr.bf16.mxu0 0
  %3389 = vmatpush1.bf16.msra.mxu0 %v3367
  %3390 = vmatprep.subr.bf16.mxu0 0
  %3391 = vmatpush1.bf16.msra.mxu0 %v3368
  %3392 = vmatprep.subr.bf16.mxu0 0
  %3393 = vmatpush1.bf16.msra.mxu0 %v3369
  %3394 = vmatprep.subr.bf16.mxu0 0
  %3395 = vmatpush1.bf16.msra.mxu0 0
  %3396 = vmatprep.subr.bf16.mxu0 0
  %3397 = vmatpush1.bf16.msra.mxu0 0
  %3398 = vmatprep.subr.bf16.mxu0 0
  %3399 = vmatpush1.bf16.msra.mxu0 0
  %3400 = vmatprep.subr.bf16.mxu0 0
  %3401 = vmatpush1.bf16.msra.mxu0 0
  %3402 = vmatprep.subr.bf16.mxu0 0
  %3403 = vmatpush1.bf16.msra.mxu0 0
  %3404 = vmatprep.subr.bf16.mxu0 0
  %3405 = vmatpush1.bf16.msra.mxu0 0
  %3406 = vmatprep.subr.bf16.mxu0 0
  %3407 = vmatpush1.bf16.msra.mxu0 0
  %3408 = vmatprep.subr.bf16.mxu0 0
  %3409 = vmatpush1.bf16.msra.mxu0 0
  %3410 = vmatprep.mubr.bf16.mxu0 0
  %3411 = vmatmul.mubr.bf16.gmra.mrb[0].mxu0 %v3328
  %v3412 = vpop.f32.mrb[0].mxu0
  %v3413 = vadd.f32 0.0, %v3412
  %v3414 = vpop.f32.mrb[0].mxu0
  %v3415 = vpop.f32.mrb[0].mxu0
  %v3416 = vpop.f32.mrb[0].mxu0
  %3417 = vdwg.mxu0
  %v3418 = vadd.f32 %v3308, %v3413
  %s3419 = scalar_lea.vmem %s5, 256
  %v3420 = vld [vmem:[%s3419] sm:$0xf]
  %v3421 = vld [vmem:[%s3419 + $0x4] sm:$0xf]
  %v3422 = vld [vmem:[%s3419 + $0x8] sm:$0xf]
  %v3423 = vld [vmem:[%s3419 + $0xc] sm:$0xf]
  %v3424 = vld [vmem:[%s3419 + $0x10] sm:$0xf]
  %v3425 = vld [vmem:[%s3419 + $0x14] sm:$0xf]
  %v3426 = vld [vmem:[%s3419 + $0x18] sm:$0xf]
  %v3427 = vld [vmem:[%s3419 + $0x1c] sm:$0xf]
  %v3428 = vld [vmem:[%s3419 + $0x20] sm:$0xf]
  %v3429 = vld [vmem:[%s3419 + $0x24] sm:$0xf]
  %v3430 = vld [vmem:[%s3419 + $0x28] sm:$0xf]
  %v3431 = vld [vmem:[%s3419 + $0x2c] sm:$0xf]
  %v3432 = vld [vmem:[%s3419 + $0x30] sm:$0xf]
  %v3433 = vld [vmem:[%s3419 + $0x34] sm:$0xf]
  %v3434 = vld [vmem:[%s3419 + $0x38] sm:$0xf]
  %v3435 = vld [vmem:[%s3419 + $0x3c] sm:$0xf]
  %v3436 = vrot.slane %v2982, 2
  %v3454 = vunpack.c.l.b16 %v3420
  %v3455 = vunpack.c.l.b16 %v3421
  %v3456 = vunpack.c.l.b16 %v3422
  %v3457 = vunpack.c.l.b16 %v3423
  %v3458 = vunpack.c.l.b16 %v3424
  %v3459 = vunpack.c.l.b16 %v3425
  %v3460 = vunpack.c.l.b16 %v3426
  %v3461 = vunpack.c.l.b16 %v3427
  %v3462 = vunpack.c.l.b16 %v3428
  %v3463 = vunpack.c.l.b16 %v3429
  %v3464 = vunpack.c.l.b16 %v3430
  %v3465 = vunpack.c.l.b16 %v3431
  %v3466 = vunpack.c.l.b16 %v3432
  %v3467 = vunpack.c.l.b16 %v3433
  %v3468 = vunpack.c.l.b16 %v3434
  %v3469 = vunpack.c.l.b16 %v3435
  %v3470 = vpack.c.b16 %v3455, %v3454
  %v3471 = vpack.c.b16 %v3457, %v3456
  %v3472 = vpack.c.b16 %v3459, %v3458
  %v3473 = vpack.c.b16 %v3461, %v3460
  %v3474 = vpack.c.b16 %v3463, %v3462
  %v3475 = vpack.c.b16 %v3465, %v3464
  %v3476 = vpack.c.b16 %v3467, %v3466
  %v3477 = vpack.c.b16 %v3469, %v3468
  %3486 = vmatprep.subr.bf16.mxu0 0
  %3487 = vmatpush1.bf16.msra.mxu0 %v3470
  %3488 = vmatprep.subr.bf16.mxu0 0
  %3489 = vmatpush1.bf16.msra.mxu0 %v3471
  %3490 = vmatprep.subr.bf16.mxu0 0
  %3491 = vmatpush1.bf16.msra.mxu0 %v3472
  %3492 = vmatprep.subr.bf16.mxu0 0
  %3493 = vmatpush1.bf16.msra.mxu0 %v3473
  %3494 = vmatprep.subr.bf16.mxu0 0
  %3495 = vmatpush1.bf16.msra.mxu0 %v3474
  %3496 = vmatprep.subr.bf16.mxu0 0
  %3497 = vmatpush1.bf16.msra.mxu0 %v3475
  %3498 = vmatprep.subr.bf16.mxu0 0
  %3499 = vmatpush1.bf16.msra.mxu0 %v3476
  %3500 = vmatprep.subr.bf16.mxu0 0
  %3501 = vmatpush1.bf16.msra.mxu0 %v3477
  %3502 = vmatprep.subr.bf16.mxu0 0
  %3503 = vmatpush1.bf16.msra.mxu0 0
  %3504 = vmatprep.subr.bf16.mxu0 0
  %3505 = vmatpush1.bf16.msra.mxu0 0
  %3506 = vmatprep.subr.bf16.mxu0 0
  %3507 = vmatpush1.bf16.msra.mxu0 0
  %3508 = vmatprep.subr.bf16.mxu0 0
  %3509 = vmatpush1.bf16.msra.mxu0 0
  %3510 = vmatprep.subr.bf16.mxu0 0
  %3511 = vmatpush1.bf16.msra.mxu0 0
  %3512 = vmatprep.subr.bf16.mxu0 0
  %3513 = vmatpush1.bf16.msra.mxu0 0
  %3514 = vmatprep.subr.bf16.mxu0 0
  %3515 = vmatpush1.bf16.msra.mxu0 0
  %3516 = vmatprep.subr.bf16.mxu0 0
  %3517 = vmatpush1.bf16.msra.mxu0 0
  %3518 = vmatprep.mubr.bf16.mxu0 0
  %3519 = vmatmul.mubr.bf16.gmra.mrb[0].mxu0 %v3436
  %v3520 = vpop.f32.mrb[0].mxu0
  %v3521 = vadd.f32 0.0, %v3520
  %v3522 = vpop.f32.mrb[0].mxu0
  %v3523 = vpop.f32.mrb[0].mxu0
  %v3524 = vpop.f32.mrb[0].mxu0
  %3525 = vdwg.mxu0
  %v3526 = vadd.f32 %v3418, %v3521
  %v3527 = vld [vmem:[%s6] sm:$0x1]
  %v3529 = vlaneseq
  %v3530 = vshrl.u32 %v3529, 7
  %v3531 = vsub.s32 0, %v3530
  %v3532 = vrot.slane %v3527, %v3531
  %v3534 = vadd.f32 %v3526, %v3532
  %v3535 = vpack.c.bf16 %v2981, %v2980
  %v3537 = vshrl.u32 %v3535, 16
  %v3539 = vshll.u32 %v3535, 16
  %v3541 = vrot.slane %v3539, 1
  %v3542 = vor.u32 %v3537, %v3541
  %3544 = vmatprep.subr.bf16.mxu0 0
  %3545 = vmatpush1.bf16.msra.mxu0 %v3056
  %3546 = vmatprep.subr.bf16.mxu0 0
  %3547 = vmatpush1.bf16.msra.mxu0 %v3057
  %3548 = vmatprep.subr.bf16.mxu0 0
  %3549 = vmatpush1.bf16.msra.mxu0 %v3058
  %3550 = vmatprep.subr.bf16.mxu0 0
  %3551 = vmatpush1.bf16.msra.mxu0 %v3059
  %3552 = vmatprep.subr.bf16.mxu0 0
  %3553 = vmatpush1.bf16.msra.mxu0 %v3060
  %3554 = vmatprep.subr.bf16.mxu0 0
  %3555 = vmatpush1.bf16.msra.mxu0 %v3061
  %3556 = vmatprep.subr.bf16.mxu0 0
  %3557 = vmatpush1.bf16.msra.mxu0 %v3062
  %3558 = vmatprep.subr.bf16.mxu0 0
  %3559 = vmatpush1.bf16.msra.mxu0 %v3063
  %3560 = vmatprep.subr.bf16.mxu0 0
  %3561 = vmatpush1.bf16.msra.mxu0 0
  %3562 = vmatprep.subr.bf16.mxu0 0
  %3563 = vmatpush1.bf16.msra.mxu0 0
  %3564 = vmatprep.subr.bf16.mxu0 0
  %3565 = vmatpush1.bf16.msra.mxu0 0
  %3566 = vmatprep.subr.bf16.mxu0 0
  %3567 = vmatpush1.bf16.msra.mxu0 0
  %3568 = vmatprep.subr.bf16.mxu0 0
  %3569 = vmatpush1.bf16.msra.mxu0 0
  %3570 = vmatprep.subr.bf16.mxu0 0
  %3571 = vmatpush1.bf16.msra.mxu0 0
  %3572 = vmatprep.subr.bf16.mxu0 0
  %3573 = vmatpush1.bf16.msra.mxu0 0
  %3574 = vmatprep.subr.bf16.mxu0 0
  %3575 = vmatpush1.bf16.msra.mxu0 0
  %3576 = vmatprep.mubr.bf16.mxu0 0
  %3577 = vmatmul.mubr.bf16.gmra.mrb[0].mxu0 %v3542
  %v3578 = vpop.f32.mrb[0].mxu0
  %v3579 = vadd.f32 0.0, %v3578
  %v3580 = vpop.f32.mrb[0].mxu0
  %v3581 = vpop.f32.mrb[0].mxu0
  %v3582 = vpop.f32.mrb[0].mxu0
  %3583 = vdwg.mxu0
  %3584 = vmatprep.subr.bf16.mxu0 0
  %3585 = vmatpush1.bf16.msra.mxu0 %v3144
  %3586 = vmatprep.subr.bf16.mxu0 0
  %3587 = vmatpush1.bf16.msra.mxu0 %v3145
  %3588 = vmatprep.subr.bf16.mxu0 0
  %3589 = vmatpush1.bf16.msra.mxu0 %v3146
  %3590 = vmatprep.subr.bf16.mxu0 0
  %3591 = vmatpush1.bf16.msra.mxu0 %v3147
  %3592 = vmatprep.subr.bf16.mxu0 0
  %3593 = vmatpush1.bf16.msra.mxu0 %v3148
  %3594 = vmatprep.subr.bf16.mxu0 0
  %3595 = vmatpush1.bf16.msra.mxu0 %v3149
  %3596 = vmatprep.subr.bf16.mxu0 0
  %3597 = vmatpush1.bf16.msra.mxu0 %v3150
  %3598 = vmatprep.subr.bf16.mxu0 0
  %3599 = vmatpush1.bf16.msra.mxu0 %v3151
  %3600 = vmatprep.subr.bf16.mxu0 0
  %3601 = vmatpush1.bf16.msra.mxu0 0
  %3602 = vmatprep.subr.bf16.mxu0 0
  %3603 = vmatpush1.bf16.msra.mxu0 0
  %3604 = vmatprep.subr.bf16.mxu0 0
  %3605 = vmatpush1.bf16.msra.mxu0 0
  %3606 = vmatprep.subr.bf16.mxu0 0
  %3607 = vmatpush1.bf16.msra.mxu0 0
  %3608 = vmatprep.subr.bf16.mxu0 0
  %3609 = vmatpush1.bf16.msra.mxu0 0
  %3610 = vmatprep.subr.bf16.mxu0 0
  %3611 = vmatpush1.bf16.msra.mxu0 0
  %3612 = vmatprep.subr.bf16.mxu0 0
  %3613 = vmatpush1.bf16.msra.mxu0 0
  %3614 = vmatprep.subr.bf16.mxu0 0
  %3615 = vmatpush1.bf16.msra.mxu0 0
  %3616 = vmatprep.mubr.bf16.mxu0 0
  %3617 = vmatmul.mubr.bf16.gmra.mrb[0].mxu0 %v3535
  %v3618 = vpop.f32.mrb[0].mxu0
  %v3619 = vadd.f32 %v3579, %v3618
  %v3620 = vpop.f32.mrb[0].mxu0
  %v3621 = vpop.f32.mrb[0].mxu0
  %v3622 = vpop.f32.mrb[0].mxu0
  %3623 = vdwg.mxu0
  %v3625 = vrot.slane %v3535, 1
  %3627 = vmatprep.subr.bf16.mxu0 0
  %3628 = vmatpush1.bf16.msra.mxu0 %v3252
  %3629 = vmatprep.subr.bf16.mxu0 0
  %3630 = vmatpush1.bf16.msra.mxu0 %v3253
  %3631 = vmatprep.subr.bf16.mxu0 0
  %3632 = vmatpush1.bf16.msra.mxu0 %v3254
  %3633 = vmatprep.subr.bf16.mxu0 0
  %3634 = vmatpush1.bf16.msra.mxu0 %v3255
  %3635 = vmatprep.subr.bf16.mxu0 0
  %3636 = vmatpush1.bf16.msra.mxu0 %v3256
  %3637 = vmatprep.subr.bf16.mxu0 0
  %3638 = vmatpush1.bf16.msra.mxu0 %v3257
  %3639 = vmatprep.subr.bf16.mxu0 0
  %3640 = vmatpush1.bf16.msra.mxu0 %v3258
  %3641 = vmatprep.subr.bf16.mxu0 0
  %3642 = vmatpush1.bf16.msra.mxu0 %v3259
  %3643 = vmatprep.subr.bf16.mxu0 0
  %3644 = vmatpush1.bf16.msra.mxu0 0
  %3645 = vmatprep.subr.bf16.mxu0 0
  %3646 = vmatpush1.bf16.msra.mxu0 0
  %3647 = vmatprep.subr.bf16.mxu0 0
  %3648 = vmatpush1.bf16.msra.mxu0 0
  %3649 = vmatprep.subr.bf16.mxu0 0
  %3650 = vmatpush1.bf16.msra.mxu0 0
  %3651 = vmatprep.subr.bf16.mxu0 0
  %3652 = vmatpush1.bf16.msra.mxu0 0
  %3653 = vmatprep.subr.bf16.mxu0 0
  %3654 = vmatpush1.bf16.msra.mxu0 0
  %3655 = vmatprep.subr.bf16.mxu0 0
  %3656 = vmatpush1.bf16.msra.mxu0 0
  %3657 = vmatprep.subr.bf16.mxu0 0
  %3658 = vmatpush1.bf16.msra.mxu0 0
  %3659 = vmatprep.mubr.bf16.mxu0 0
  %3660 = vmatmul.mubr.bf16.gmra.mrb[0].mxu0 %v3625
  %v3661 = vpop.f32.mrb[0].mxu0
  %v3662 = vadd.f32 0.0, %v3661
  %v3663 = vpop.f32.mrb[0].mxu0
  %v3664 = vpop.f32.mrb[0].mxu0
  %v3665 = vpop.f32.mrb[0].mxu0
  %3666 = vdwg.mxu0
  %v3667 = vadd.f32 %v3619, %v3662
  %v3668 = vrot.slane %v3537, 1
  %v3669 = vrot.slane %v3539, 2
  %v3670 = vor.u32 %v3668, %v3669
  %3672 = vmatprep.subr.bf16.mxu0 0
  %3673 = vmatpush1.bf16.msra.mxu0 %v3362
  %3674 = vmatprep.subr.bf16.mxu0 0
  %3675 = vmatpush1.bf16.msra.mxu0 %v3363
  %3676 = vmatprep.subr.bf16.mxu0 0
  %3677 = vmatpush1.bf16.msra.mxu0 %v3364
  %3678 = vmatprep.subr.bf16.mxu0 0
  %3679 = vmatpush1.bf16.msra.mxu0 %v3365
  %3680 = vmatprep.subr.bf16.mxu0 0
  %3681 = vmatpush1.bf16.msra.mxu0 %v3366
  %3682 = vmatprep.subr.bf16.mxu0 0
  %3683 = vmatpush1.bf16.msra.mxu0 %v3367
  %3684 = vmatprep.subr.bf16.mxu0 0
  %3685 = vmatpush1.bf16.msra.mxu0 %v3368
  %3686 = vmatprep.subr.bf16.mxu0 0
  %3687 = vmatpush1.bf16.msra.mxu0 %v3369
  %3688 = vmatprep.subr.bf16.mxu0 0
  %3689 = vmatpush1.bf16.msra.mxu0 0
  %3690 = vmatprep.subr.bf16.mxu0 0
  %3691 = vmatpush1.bf16.msra.mxu0 0
  %3692 = vmatprep.subr.bf16.mxu0 0
  %3693 = vmatpush1.bf16.msra.mxu0 0
  %3694 = vmatprep.subr.bf16.mxu0 0
  %3695 = vmatpush1.bf16.msra.mxu0 0
  %3696 = vmatprep.subr.bf16.mxu0 0
  %3697 = vmatpush1.bf16.msra.mxu0 0
  %3698 = vmatprep.subr.bf16.mxu0 0
  %3699 = vmatpush1.bf16.msra.mxu0 0
  %3700 = vmatprep.subr.bf16.mxu0 0
  %3701 = vmatpush1.bf16.msra.mxu0 0
  %3702 = vmatprep.subr.bf16.mxu0 0
  %3703 = vmatpush1.bf16.msra.mxu0 0
  %3704 = vmatprep.mubr.bf16.mxu0 0
  %3705 = vmatmul.mubr.bf16.gmra.mrb[0].mxu0 %v3670
  %v3706 = vpop.f32.mrb[0].mxu0
  %v3707 = vadd.f32 0.0, %v3706
  %v3708 = vpop.f32.mrb[0].mxu0
  %v3709 = vpop.f32.mrb[0].mxu0
  %v3710 = vpop.f32.mrb[0].mxu0
  %3711 = vdwg.mxu0
  %v3712 = vadd.f32 %v3667, %v3707
  %v3713 = vrot.slane %v3535, 2
  %3715 = vmatprep.subr.bf16.mxu0 0
  %3716 = vmatpush1.bf16.msra.mxu0 %v3470
  %3717 = vmatprep.subr.bf16.mxu0 0
  %3718 = vmatpush1.bf16.msra.mxu0 %v3471
  %3719 = vmatprep.subr.bf16.mxu0 0
  %3720 = vmatpush1.bf16.msra.mxu0 %v3472
  %3721 = vmatprep.subr.bf16.mxu0 0
  %3722 = vmatpush1.bf16.msra.mxu0 %v3473
  %3723 = vmatprep.subr.bf16.mxu0 0
  %3724 = vmatpush1.bf16.msra.mxu0 %v3474
  %3725 = vmatprep.subr.bf16.mxu0 0
  %3726 = vmatpush1.bf16.msra.mxu0 %v3475
  %3727 = vmatprep.subr.bf16.mxu0 0
  %3728 = vmatpush1.bf16.msra.mxu0 %v3476
  %3729 = vmatprep.subr.bf16.mxu0 0
  %3730 = vmatpush1.bf16.msra.mxu0 %v3477
  %3731 = vmatprep.subr.bf16.mxu0 0
  %3732 = vmatpush1.bf16.msra.mxu0 0
  %3733 = vmatprep.subr.bf16.mxu0 0
  %3734 = vmatpush1.bf16.msra.mxu0 0
  %3735 = vmatprep.subr.bf16.mxu0 0
  %3736 = vmatpush1.bf16.msra.mxu0 0
  %3737 = vmatprep.subr.bf16.mxu0 0
  %3738 = vmatpush1.bf16.msra.mxu0 0
  %3739 = vmatprep.subr.bf16.mxu0 0
  %3740 = vmatpush1.bf16.msra.mxu0 0
  %3741 = vmatprep.subr.bf16.mxu0 0
  %3742 = vmatpush1.bf16.msra.mxu0 0
  %3743 = vmatprep.subr.bf16.mxu0 0
  %3744 = vmatpush1.bf16.msra.mxu0 0
  %3745 = vmatprep.subr.bf16.mxu0 0
  %3746 = vmatpush1.bf16.msra.mxu0 0
  %3747 = vmatprep.mubr.bf16.mxu0 0
  %3748 = vmatmul.mubr.bf16.gmra.mrb[0].mxu0 %v3713
  %v3749 = vpop.f32.mrb[0].mxu0
  %v3750 = vadd.f32 0.0, %v3749
  %v3751 = vpop.f32.mrb[0].mxu0
  %v3752 = vpop.f32.mrb[0].mxu0
  %v3753 = vpop.f32.mrb[0].mxu0
  %3754 = vdwg.mxu0
  %v3755 = vadd.f32 %v3712, %v3750
  %v3756 = vadd.f32 %v3755, %v3532
  %v3757 = vld [vmem:[%s7] sm:$0x1]
  %v3758 = vld [vmem:[%s8] sm:$0x1]
  %vm3759 = vcmask 1045504
  %v3760 = vsel %vm3759, %v3534, 0.0
  %v3761 = vrot.slane %v3760, 4
  %v3762 = vadd.f32 %v3760, %v3761
  %v3763 = vrot.slane %v3762, 2
  %v3764 = vadd.f32 %v3762, %v3763
  %v3765 = vrot.slane %v3764, 1
  %v3766 = vadd.f32 %v3764, %v3765
  %v3767 = vadd.f32 %v3766, 0.0
  %v3768 = vsel %vm3759, %v3756, 0.0
  %v3769 = vrot.slane %v3768, 4
  %v3770 = vadd.f32 %v3768, %v3769
  %v3771 = vrot.slane %v3770, 2
  %v3772 = vadd.f32 %v3770, %v3771
  %v3773 = vrot.slane %v3772, 1
  %v3774 = vadd.f32 %v3772, %v3773
  %v3775 = vadd.f32 %v3767, %v3774
  %v3776 = vmul.f32 %v3534, %v3534
  %v3777 = vsel %vm3759, %v3776, 0.0
  %v3778 = vrot.slane %v3777, 4
  %v3779 = vadd.f32 %v3777, %v3778
  %v3780 = vrot.slane %v3779, 2
  %v3781 = vadd.f32 %v3779, %v3780
  %v3782 = vrot.slane %v3781, 1
  %v3783 = vadd.f32 %v3781, %v3782
  %v3784 = vadd.f32 %v3783, 0.0
  %v3785 = vmul.f32 %v3756, %v3756
  %v3786 = vsel %vm3759, %v3785, 0.0
  %v3787 = vrot.slane %v3786, 4
  %v3788 = vadd.f32 %v3786, %v3787
  %v3789 = vrot.slane %v3788, 2
  %v3790 = vadd.f32 %v3788, %v3789
  %v3791 = vrot.slane %v3790, 1
  %v3792 = vadd.f32 %v3790, %v3791
  %v3793 = vadd.f32 %v3784, %v3792
  %v3794 = vmul.f32 %v3775, 0.083333336
  %v3795 = vmul.f32 %v3793, 0.083333336
  %v3796 = vmul.f32 %v3794, %v3794
  %v3797 = vsub.f32 %v3795, %v3796
  %v3798 = vadd.f32 %v3797, 1e-05
  %v3799 = vrsqrt.pop %v3798
  %v3800 = vmul.f32 %v3799, %v3757
  %v3801 = vmul.f32 %v3794, %v3800
  %v3802 = vsub.f32 %v3758, %v3801
  %v3803 = vlaneseq
  %v3804 = vshrl.u32 %v3803, 7
  %v3805 = vsub.s32 0, %v3804
  %v3806 = vrot.slane %v3800, %v3805
  %v3807 = vmul.f32 %v3534, %v3806
  %v3809 = vlaneseq
  %v3810 = vshrl.u32 %v3809, 7
  %v3811 = vsub.s32 0, %v3810
  %v3812 = vrot.slane %v3802, %v3811
  %v3814 = vadd.f32 %v3807, %v3812
  %v3815 = vmax.f32 %v3814, 0.0
  %v3816 = vmul.f32 %v3756, %v3806
  %v3817 = vadd.f32 %v3816, %v3812
  %v3818 = vmax.f32 %v3817, 0.0
  %3819 = vst [vmem:[#allocation2] sm:$0x3f] %v3815
  %v3820 = vld [vmem:[#allocation2] ss:$2 sm:$0x7]
  %v3821 = vld [vmem:[%s2967] ss:$2 sm:$0x7]
  %v3822 = vmax.f32 %v3820, %v3821
  %3823 = vst [vmem:[#allocation2] sm:$0x3f] %v3818
  %v3824 = vld [vmem:[#allocation2] ss:$2 sm:$0x7]
  %v3825 = vld [vmem:[%s2967] ss:$2 sm:$0x7]
  %v3826 = vmax.f32 %v3824, %v3825
  %v3827 = vlaneseq
  %v3828 = vshrl.u32 %v3827, 7
  %vm3829 = vcmp.gt.s32.totalorder %v3828, 0
  %v3830 = vsel %vm3829, 1, 0
  %v3831 = vcvt.s32.f32 %v3830
  %v3832 = vadd.f32 %v3831, 1.0
  %vm3833 = vcmp.lt.s32.totalorder %v3828, 2
  %v3834 = vsel %vm3833, 1, 0
  %v3835 = vcvt.s32.f32 %v3834
  %v3836 = vadd.f32 %v3832, %v3835
  %v3837 = vrcp.pop %v3836
  %v3838 = vmul.f32 1.0, %v3837
  %v3839 = vpack.c.bf16 %v3822, %v3822
  %v3840 = vld [vmem:[%s9] sm:$0xf]
  %v3841 = vld [vmem:[%s9 + $0x4] sm:$0xf]
  %v3842 = vld [vmem:[%s9 + $0x8] sm:$0xf]
  %v3843 = vld [vmem:[%s9 + $0xc] sm:$0xf]
  %v3844 = vld [vmem:[%s9 + $0x10] sm:$0xf]
  %v3845 = vld [vmem:[%s9 + $0x14] sm:$0xf]
  %v3846 = vld [vmem:[%s9 + $0x18] sm:$0xf]
  %v3847 = vld [vmem:[%s9 + $0x1c] sm:$0xf]
  %v3848 = vld [vmem:[%s9 + $0x20] sm:$0xf]
  %v3849 = vld [vmem:[%s9 + $0x24] sm:$0xf]
  %v3850 = vld [vmem:[%s9 + $0x28] sm:$0xf]
  %v3851 = vld [vmem:[%s9 + $0x2c] sm:$0xf]
  %v3852 = vld [vmem:[%s9 + $0x30] sm:$0xf]
  %v3853 = vld [vmem:[%s9 + $0x34] sm:$0xf]
  %v3854 = vld [vmem:[%s9 + $0x38] sm:$0xf]
  %v3855 = vld [vmem:[%s9 + $0x3c] sm:$0xf]
  %v3872 = vunpack.c.l.b16 %v3840
  %v3873 = vunpack.c.l.b16 %v3841
  %v3874 = vunpack.c.l.b16 %v3842
  %v3875 = vunpack.c.l.b16 %v3843
  %v3876 = vunpack.c.l.b16 %v3844
  %v3877 = vunpack.c.l.b16 %v3845
  %v3878 = vunpack.c.l.b16 %v3846
  %v3879 = vunpack.c.l.b16 %v3847
  %v3880 = vunpack.c.l.b16 %v3848
  %v3881 = vunpack.c.l.b16 %v3849
  %v3882 = vunpack.c.l.b16 %v3850
  %v3883 = vunpack.c.l.b16 %v3851
  %v3884 = vunpack.c.l.b16 %v3852
  %v3885 = vunpack.c.l.b16 %v3853
  %v3886 = vunpack.c.l.b16 %v3854
  %v3887 = vunpack.c.l.b16 %v3855
  %v3888 = vpack.c.b16 %v3873, %v3872
  %v3889 = vpack.c.b16 %v3875, %v3874
  %v3890 = vpack.c.b16 %v3877, %v3876
  %v3891 = vpack.c.b16 %v3879, %v3878
  %v3892 = vpack.c.b16 %v3881, %v3880
  %v3893 = vpack.c.b16 %v3883, %v3882
  %v3894 = vpack.c.b16 %v3885, %v3884
  %v3895 = vpack.c.b16 %v3887, %v3886
  %3904 = vmatprep.subr.bf16.mxu0 0
  %3905 = vmatpush1.bf16.msra.mxu0 %v3888
  %3906 = vmatprep.subr.bf16.mxu0 0
  %3907 = vmatpush1.bf16.msra.mxu0 %v3889
  %3908 = vmatprep.subr.bf16.mxu0 0
  %3909 = vmatpush1.bf16.msra.mxu0 %v3890
  %3910 = vmatprep.subr.bf16.mxu0 0
  %3911 = vmatpush1.bf16.msra.mxu0 %v3891
  %3912 = vmatprep.subr.bf16.mxu0 0
  %3913 = vmatpush1.bf16.msra.mxu0 %v3892
  %3914 = vmatprep.subr.bf16.mxu0 0
  %3915 = vmatpush1.bf16.msra.mxu0 %v3893
  %3916 = vmatprep.subr.bf16.mxu0 0
  %3917 = vmatpush1.bf16.msra.mxu0 %v3894
  %3918 = vmatprep.subr.bf16.mxu0 0
  %3919 = vmatpush1.bf16.msra.mxu0 %v3895
  %3920 = vmatprep.subr.bf16.mxu0 0
  %3921 = vmatpush1.bf16.msra.mxu0 0
  %3922 = vmatprep.subr.bf16.mxu0 0
  %3923 = vmatpush1.bf16.msra.mxu0 0
  %3924 = vmatprep.subr.bf16.mxu0 0
  %3925 = vmatpush1.bf16.msra.mxu0 0
  %3926 = vmatprep.subr.bf16.mxu0 0
  %3927 = vmatpush1.bf16.msra.mxu0 0
  %3928 = vmatprep.subr.bf16.mxu0 0
  %3929 = vmatpush1.bf16.msra.mxu0 0
  %3930 = vmatprep.subr.bf16.mxu0 0
  %3931 = vmatpush1.bf16.msra.mxu0 0
  %3932 = vmatprep.subr.bf16.mxu0 0
  %3933 = vmatpush1.bf16.msra.mxu0 0
  %3934 = vmatprep.subr.bf16.mxu0 0
  %3935 = vmatpush1.bf16.msra.mxu0 0
  %3936 = vmatprep.mubr.bf16.mxu0 0
  %3937 = vmatmul.mubr.bf16.gmra.mrb[0].mxu0 %v3839
  %v3938 = vpop.f32.mrb[0].mxu0
  %v3939 = vadd.f32 0.0, %v3938
  %v3940 = vpop.f32.mrb[0].mxu0
  %v3941 = vpop.f32.mrb[0].mxu0
  %v3942 = vpop.f32.mrb[0].mxu0
  %3943 = vdwg.mxu0
  %v3945 = vrot.slane %v3939, 7
  %vm3947 = vcmask 1040384
  %v3948 = vsel %vm3947, 0.0, %v3945
  %v3949 = vrot.slane %v3939, 1
  %vm3951 = vcmask 1041408
  %v3952 = vsel %vm3951, %v3949, 0.0
  %v3953 = vadd.f32 %v3939, %v3948
  %v3954 = vadd.f32 %v3953, %v3952
  %v3955 = vmul.f32 %v3954, %v3838
  %v3956 = vld [vmem:[%s10] sm:$0x1]
  %v3958 = vlaneseq
  %v3959 = vshrl.u32 %v3958, 7
  %v3960 = vsub.s32 0, %v3959
  %v3961 = vrot.slane %v3956, %v3960
  %v3963 = vadd.f32 %v3955, %v3961
  %v3964 = vpack.c.bf16 %v3826, %v3826
  %3965 = vmatprep.subr.bf16.mxu0 0
  %3966 = vmatpush1.bf16.msra.mxu0 %v3888
  %3967 = vmatprep.subr.bf16.mxu0 0
  %3968 = vmatpush1.bf16.msra.mxu0 %v3889
  %3969 = vmatprep.subr.bf16.mxu0 0
  %3970 = vmatpush1.bf16.msra.mxu0 %v3890
  %3971 = vmatprep.subr.bf16.mxu0 0
  %3972 = vmatpush1.bf16.msra.mxu0 %v3891
  %3973 = vmatprep.subr.bf16.mxu0 0
  %3974 = vmatpush1.bf16.msra.mxu0 %v3892
  %3975 = vmatprep.subr.bf16.mxu0 0
  %3976 = vmatpush1.bf16.msra.mxu0 %v3893
  %3977 = vmatprep.subr.bf16.mxu0 0
  %3978 = vmatpush1.bf16.msra.mxu0 %v3894
  %3979 = vmatprep.subr.bf16.mxu0 0
  %3980 = vmatpush1.bf16.msra.mxu0 %v3895
  %3981 = vmatprep.subr.bf16.mxu0 0
  %3982 = vmatpush1.bf16.msra.mxu0 0
  %3983 = vmatprep.subr.bf16.mxu0 0
  %3984 = vmatpush1.bf16.msra.mxu0 0
  %3985 = vmatprep.subr.bf16.mxu0 0
  %3986 = vmatpush1.bf16.msra.mxu0 0
  %3987 = vmatprep.subr.bf16.mxu0 0
  %3988 = vmatpush1.bf16.msra.mxu0 0
  %3989 = vmatprep.subr.bf16.mxu0 0
  %3990 = vmatpush1.bf16.msra.mxu0 0
  %3991 = vmatprep.subr.bf16.mxu0 0
  %3992 = vmatpush1.bf16.msra.mxu0 0
  %3993 = vmatprep.subr.bf16.mxu0 0
  %3994 = vmatpush1.bf16.msra.mxu0 0
  %3995 = vmatprep.subr.bf16.mxu0 0
  %3996 = vmatpush1.bf16.msra.mxu0 0
  %3997 = vmatprep.mubr.bf16.mxu0 0
  %3998 = vmatmul.mubr.bf16.gmra.mrb[0].mxu0 %v3964
  %v3999 = vpop.f32.mrb[0].mxu0
  %v4000 = vadd.f32 0.0, %v3999
  %v4001 = vpop.f32.mrb[0].mxu0
  %v4002 = vpop.f32.mrb[0].mxu0
  %v4003 = vpop.f32.mrb[0].mxu0
  %4004 = vdwg.mxu0
  %v4006 = vrot.slane %v4000, 7
  %v4008 = vsel %vm3947, 0.0, %v4006
  %v4009 = vrot.slane %v4000, 1
  %v4011 = vsel %vm3951, %v4009, 0.0
  %v4012 = vadd.f32 %v4000, %v4008
  %v4013 = vadd.f32 %v4012, %v4011
  %v4014 = vmul.f32 %v4013, %v3838
  %v4015 = vadd.f32 %v4014, %v3961
  %v4016 = vld [vmem:[%s11] sm:$0x1]
  %v4017 = vld [vmem:[%s12] sm:$0x1]
  %vm4018 = vcmask 1042432
  %v4019 = vsel %vm4018, %v3963, 0.0
  %v4020 = vrot.slane %v4019, 4
  %v4021 = vadd.f32 %v4019, %v4020
  %v4022 = vrot.slane %v4021, 2
  %v4023 = vadd.f32 %v4021, %v4022
  %v4024 = vrot.slane %v4023, 1
  %v4025 = vadd.f32 %v4023, %v4024
  %v4026 = vadd.f32 %v4025, 0.0
  %v4027 = vsel %vm4018, %v4015, 0.0
  %v4028 = vrot.slane %v4027, 4
  %v4029 = vadd.f32 %v4027, %v4028
  %v4030 = vrot.slane %v4029, 2
  %v4031 = vadd.f32 %v4029, %v4030
  %v4032 = vrot.slane %v4031, 1
  %v4033 = vadd.f32 %v4031, %v4032
  %v4034 = vadd.f32 %v4026, %v4033
  %v4035 = vmul.f32 %v3963, %v3963
  %v4036 = vsel %vm4018, %v4035, 0.0
  %v4037 = vrot.slane %v4036, 4
  %v4038 = vadd.f32 %v4036, %v4037
  %v4039 = vrot.slane %v4038, 2
  %v4040 = vadd.f32 %v4038, %v4039
  %v4041 = vrot.slane %v4040, 1
  %v4042 = vadd.f32 %v4040, %v4041
  %v4043 = vadd.f32 %v4042, 0.0
  %v4044 = vmul.f32 %v4015, %v4015
  %v4045 = vsel %vm4018, %v4044, 0.0
  %v4046 = vrot.slane %v4045, 4
  %v4047 = vadd.f32 %v4045, %v4046
  %v4048 = vrot.slane %v4047, 2
  %v4049 = vadd.f32 %v4047, %v4048
  %v4050 = vrot.slane %v4049, 1
  %v4051 = vadd.f32 %v4049, %v4050
  %v4052 = vadd.f32 %v4043, %v4051
  %v4053 = vmul.f32 %v4034, 0.16666667
  %v4054 = vmul.f32 %v4052, 0.16666667
  %v4055 = vmul.f32 %v4053, %v4053
  %v4056 = vsub.f32 %v4054, %v4055
  %v4057 = vadd.f32 %v4056, 1e-05
  %v4058 = vrsqrt.pop %v4057
  %v4059 = vmul.f32 %v4058, %v4016
  %v4060 = vmul.f32 %v4053, %v4059
  %v4061 = vsub.f32 %v4017, %v4060
  %v4062 = vlaneseq
  %v4063 = vshrl.u32 %v4062, 7
  %v4064 = vsub.s32 0, %v4063
  %v4065 = vrot.slane %v4059, %v4064
  %v4066 = vmul.f32 %v3963, %v4065
  %v4068 = vlaneseq
  %v4069 = vshrl.u32 %v4068, 7
  %v4070 = vsub.s32 0, %v4069
  %v4071 = vrot.slane %v4061, %v4070
  %v4073 = vadd.f32 %v4066, %v4071
  %v4074 = vmax.f32 %v4073, 0.0
  %v4075 = vmul.f32 %v4015, %v4065
  %v4076 = vadd.f32 %v4075, %v4071
  %v4077 = vmax.f32 %v4076, 0.0
  %v4078 = vpack.c.bf16 %v4074, %v4074
  %v4079 = vld [vmem:[%s13] sm:$0xf]
  %v4080 = vld [vmem:[%s13 + $0x4] sm:$0xf]
  %v4081 = vld [vmem:[%s13 + $0x8] sm:$0xf]
  %v4082 = vld [vmem:[%s13 + $0xc] sm:$0xf]
  %v4083 = vld [vmem:[%s13 + $0x10] sm:$0xf]
  %v4084 = vld [vmem:[%s13 + $0x14] sm:$0xf]
  %v4085 = vld [vmem:[%s13 + $0x18] sm:$0xf]
  %v4086 = vld [vmem:[%s13 + $0x1c] sm:$0xf]
  %v4087 = vld [vmem:[%s13 + $0x20] sm:$0xf]
  %v4088 = vld [vmem:[%s13 + $0x24] sm:$0xf]
  %v4089 = vld [vmem:[%s13 + $0x28] sm:$0xf]
  %v4090 = vld [vmem:[%s13 + $0x2c] sm:$0xf]
  %v4091 = vld [vmem:[%s13 + $0x30] sm:$0xf]
  %v4092 = vld [vmem:[%s13 + $0x34] sm:$0xf]
  %v4093 = vld [vmem:[%s13 + $0x38] sm:$0xf]
  %v4094 = vld [vmem:[%s13 + $0x3c] sm:$0xf]
  %v4095 = vld [vmem:[%s14] sm:$0x1]
  %v4097 = vlaneseq
  %v4098 = vshrl.u32 %v4097, 7
  %v4099 = vsub.s32 0, %v4098
  %v4100 = vrot.slane %v4095, %v4099
  %v4118 = vunpack.c.l.b16 %v4079
  %v4119 = vunpack.c.l.b16 %v4080
  %v4120 = vunpack.c.l.b16 %v4081
  %v4121 = vunpack.c.l.b16 %v4082
  %v4122 = vunpack.c.l.b16 %v4083
  %v4123 = vunpack.c.l.b16 %v4084
  %v4124 = vunpack.c.l.b16 %v4085
  %v4125 = vunpack.c.l.b16 %v4086
  %v4126 = vunpack.c.l.b16 %v4087
  %v4127 = vunpack.c.l.b16 %v4088
  %v4128 = vunpack.c.l.b16 %v4089
  %v4129 = vunpack.c.l.b16 %v4090
  %v4130 = vunpack.c.l.b16 %v4091
  %v4131 = vunpack.c.l.b16 %v4092
  %v4132 = vunpack.c.l.b16 %v4093
  %v4133 = vunpack.c.l.b16 %v4094
  %v4134 = vpack.c.b16 %v4119, %v4118
  %v4135 = vpack.c.b16 %v4121, %v4120
  %v4136 = vpack.c.b16 %v4123, %v4122
  %v4137 = vpack.c.b16 %v4125, %v4124
  %v4138 = vpack.c.b16 %v4127, %v4126
  %v4139 = vpack.c.b16 %v4129, %v4128
  %v4140 = vpack.c.b16 %v4131, %v4130
  %v4141 = vpack.c.b16 %v4133, %v4132
  %4150 = vmatprep.subr.bf16.mxu0 0
  %4151 = vmatpush1.bf16.msra.mxu0 %v4134
  %4152 = vmatprep.subr.bf16.mxu0 0
  %4153 = vmatpush1.bf16.msra.mxu0 %v4135
  %4154 = vmatprep.subr.bf16.mxu0 0
  %4155 = vmatpush1.bf16.msra.mxu0 %v4136
  %4156 = vmatprep.subr.bf16.mxu0 0
  %4157 = vmatpush1.bf16.msra.mxu0 %v4137
  %4158 = vmatprep.subr.bf16.mxu0 0
  %4159 = vmatpush1.bf16.msra.mxu0 %v4138
  %4160 = vmatprep.subr.bf16.mxu0 0
  %4161 = vmatpush1.bf16.msra.mxu0 %v4139
  %4162 = vmatprep.subr.bf16.mxu0 0
  %4163 = vmatpush1.bf16.msra.mxu0 %v4140
  %4164 = vmatprep.subr.bf16.mxu0 0
  %4165 = vmatpush1.bf16.msra.mxu0 %v4141
  %4166 = vmatprep.subr.bf16.mxu0 0
  %4167 = vmatpush1.bf16.msra.mxu0 0
  %4168 = vmatprep.subr.bf16.mxu0 0
  %4169 = vmatpush1.bf16.msra.mxu0 0
  %4170 = vmatprep.subr.bf16.mxu0 0
  %4171 = vmatpush1.bf16.msra.mxu0 0
  %4172 = vmatprep.subr.bf16.mxu0 0
  %4173 = vmatpush1.bf16.msra.mxu0 0
  %4174 = vmatprep.subr.bf16.mxu0 0
  %4175 = vmatpush1.bf16.msra.mxu0 0
  %4176 = vmatprep.subr.bf16.mxu0 0
  %4177 = vmatpush1.bf16.msra.mxu0 0
  %4178 = vmatprep.subr.bf16.mxu0 0
  %4179 = vmatpush1.bf16.msra.mxu0 0
  %4180 = vmatprep.subr.bf16.mxu0 0
  %4181 = vmatpush1.bf16.msra.mxu0 0
  %4182 = vmatprep.mubr.bf16.mxu0 0
  %4183 = vmatmul.mubr.bf16.gmra.mrb[0].mxu0 %v4078
  %v4184 = vpop.f32.mrb[0].mxu0
  %v4185 = vadd.f32 %v4100, %v4184
  %v4186 = vpop.f32.mrb[0].mxu0
  %v4187 = vpop.f32.mrb[0].mxu0
  %v4188 = vpop.f32.mrb[0].mxu0
  %4189 = vdwg.mxu0
  %4190 = vst [vmem:[%s15] sm:$0x7] %v4185
  %v4191 = vpack.c.bf16 %v4077, %v4077
  %v4192 = vld [vmem:[%s13] sm:$0xf]
  %v4193 = vld [vmem:[%s13 + $0x4] sm:$0xf]
  %v4194 = vld [vmem:[%s13 + $0x8] sm:$0xf]
  %v4195 = vld [vmem:[%s13 + $0xc] sm:$0xf]
  %v4196 = vld [vmem:[%s13 + $0x10] sm:$0xf]
  %v4197 = vld [vmem:[%s13 + $0x14] sm:$0xf]
  %v4198 = vld [vmem:[%s13 + $0x18] sm:$0xf]
  %v4199 = vld [vmem:[%s13 + $0x1c] sm:$0xf]
  %v4200 = vld [vmem:[%s13 + $0x20] sm:$0xf]
  %v4201 = vld [vmem:[%s13 + $0x24] sm:$0xf]
  %v4202 = vld [vmem:[%s13 + $0x28] sm:$0xf]
  %v4203 = vld [vmem:[%s13 + $0x2c] sm:$0xf]
  %v4204 = vld [vmem:[%s13 + $0x30] sm:$0xf]
  %v4205 = vld [vmem:[%s13 + $0x34] sm:$0xf]
  %v4206 = vld [vmem:[%s13 + $0x38] sm:$0xf]
  %v4207 = vld [vmem:[%s13 + $0x3c] sm:$0xf]
  %v4208 = vld [vmem:[%s14] sm:$0x1]
  %v4210 = vlaneseq
  %v4211 = vshrl.u32 %v4210, 7
  %v4212 = vsub.s32 0, %v4211
  %v4213 = vrot.slane %v4208, %v4212
  %v4231 = vunpack.c.l.b16 %v4192
  %v4232 = vunpack.c.l.b16 %v4193
  %v4233 = vunpack.c.l.b16 %v4194
  %v4234 = vunpack.c.l.b16 %v4195
  %v4235 = vunpack.c.l.b16 %v4196
  %v4236 = vunpack.c.l.b16 %v4197
  %v4237 = vunpack.c.l.b16 %v4198
  %v4238 = vunpack.c.l.b16 %v4199
  %v4239 = vunpack.c.l.b16 %v4200
  %v4240 = vunpack.c.l.b16 %v4201
  %v4241 = vunpack.c.l.b16 %v4202
  %v4242 = vunpack.c.l.b16 %v4203
  %v4243 = vunpack.c.l.b16 %v4204
  %v4244 = vunpack.c.l.b16 %v4205
  %v4245 = vunpack.c.l.b16 %v4206
  %v4246 = vunpack.c.l.b16 %v4207
  %v4247 = vpack.c.b16 %v4232, %v4231
  %v4248 = vpack.c.b16 %v4234, %v4233
  %v4249 = vpack.c.b16 %v4236, %v4235
  %v4250 = vpack.c.b16 %v4238, %v4237
  %v4251 = vpack.c.b16 %v4240, %v4239
  %v4252 = vpack.c.b16 %v4242, %v4241
  %v4253 = vpack.c.b16 %v4244, %v4243
  %v4254 = vpack.c.b16 %v4246, %v4245
  %4263 = vmatprep.subr.bf16.mxu0 0
  %4264 = vmatpush1.bf16.msra.mxu0 %v4247
  %4265 = vmatprep.subr.bf16.mxu0 0
  %4266 = vmatpush1.bf16.msra.mxu0 %v4248
  %4267 = vmatprep.subr.bf16.mxu0 0
  %4268 = vmatpush1.bf16.msra.mxu0 %v4249
  %4269 = vmatprep.subr.bf16.mxu0 0
  %4270 = vmatpush1.bf16.msra.mxu0 %v4250
  %4271 = vmatprep.subr.bf16.mxu0 0
  %4272 = vmatpush1.bf16.msra.mxu0 %v4251
  %4273 = vmatprep.subr.bf16.mxu0 0
  %4274 = vmatpush1.bf16.msra.mxu0 %v4252
  %4275 = vmatprep.subr.bf16.mxu0 0
  %4276 = vmatpush1.bf16.msra.mxu0 %v4253
  %4277 = vmatprep.subr.bf16.mxu0 0
  %4278 = vmatpush1.bf16.msra.mxu0 %v4254
  %4279 = vmatprep.subr.bf16.mxu0 0
  %4280 = vmatpush1.bf16.msra.mxu0 0
  %4281 = vmatprep.subr.bf16.mxu0 0
  %4282 = vmatpush1.bf16.msra.mxu0 0
  %4283 = vmatprep.subr.bf16.mxu0 0
  %4284 = vmatpush1.bf16.msra.mxu0 0
  %4285 = vmatprep.subr.bf16.mxu0 0
  %4286 = vmatpush1.bf16.msra.mxu0 0
  %4287 = vmatprep.subr.bf16.mxu0 0
  %4288 = vmatpush1.bf16.msra.mxu0 0
  %4289 = vmatprep.subr.bf16.mxu0 0
  %4290 = vmatpush1.bf16.msra.mxu0 0
  %4291 = vmatprep.subr.bf16.mxu0 0
  %4292 = vmatpush1.bf16.msra.mxu0 0
  %4293 = vmatprep.subr.bf16.mxu0 0
  %4294 = vmatpush1.bf16.msra.mxu0 0
  %4295 = vmatprep.mubr.bf16.mxu0 0
  %4296 = vmatmul.mubr.bf16.gmra.mrb[0].mxu0 %v4191
  %v4297 = vpop.f32.mrb[0].mxu0
  %v4298 = vadd.f32 %v4213, %v4297
  %v4299 = vpop.f32.mrb[0].mxu0
  %v4300 = vpop.f32.mrb[0].mxu0
  %v4301 = vpop.f32.mrb[0].mxu0
  %4302 = vdwg.mxu0
  %s4303 = scalar_lea.vmem %s15, 4
  %4304 = vst [vmem:[%s4303] sm:$0x7] %v4298
  // Predicated region
  $region62: #{combined_model_tconv_forward.3} parent=0 // pred_check
    _
  $region63: #{combined_model_tconv_forward.3} parent=0 // pred_check_branch
    %4306 = sbr.rel (0) target = $region65
  $region64: #{combined_model_tconv_forward.3} parent=0 // pred_region
    _
  $region65: #{combined_model_tconv_forward.3} parent=0 // pred_fallthru
    _
  // Predicated region
  $region66: #{combined_model_tconv_forward.3} parent=0 // pred_check
    _
  $region67: #{combined_model_tconv_forward.3} parent=0 // pred_check_branch
    %4308 = sbr.rel (0) target = $region69
  $region68: #{combined_model_tconv_forward.3} parent=0 // pred_region
    _
  $region69: #{combined_model_tconv_forward.3} parent=0 // pred_fallthru
    _

</llo_original>
